<compile_context>
chip_gen: v7x
topology: tpu7x:2x2x1
jax: 0.10.0
libtpu: 0.0.40
codegen_flags: <defaults>
</compile_context>

<pallas_src>
import jax
import jax.numpy as jnp
from jax.experimental import pallas as pl
from jax.experimental.pallas import tpu as pltpu

BN_EPS = 1e-5   # nn.BatchNorm2d default
LANE = 128      # TPU lane width
SUB = 8         # TPU sublane tile


def _round_up(x, m):
    return (x + m - 1) // m * m


def triple_conv_kernel(x_ref,
                       w1_ref, g1_ref, b1_ref,
                       w2_ref, g2_ref, b2_ref,
                       w3_ref, g3_ref, b3_ref,
                       o_ref,
                       act_ref):
    """Fully fused TripleConv forward.

    x_ref  : (N, H, W, C)      channel-padded NHWC input (C multiple of 128)
    w*_ref : (9*C, C)          packed im2col weights, (kh, kw, cin) flattened
    g*/b*  : (1, C)            BN gamma / beta (padded chans: gamma=1, beta=0)
    o_ref  : (N, H, W, C)      channel-padded output (lane-dense stores)
    act_ref: (N, H+2, WP, C)   VMEM scratch: activation + zero halo.  The
                               interior lives at W offset SUB so interior
                               reads/writes are sublane-tile aligned.
    """
    N, H, W, C = x_ref.shape
    M = N * H * W
    inv_m = 1.0 / M
    W0 = SUB                       # aligned start column of the interior
    WP = act_ref.shape[2]

    # ---- halo init: zero only the frame, once ------------------------------
    act_ref[:, :, 0:W0, :] = jnp.zeros((N, H + 2, W0, C), jnp.float32)
    act_ref[:, :, W0 + W:, :] = jnp.zeros((N, H + 2, WP - (W0 + W), C),
                                          jnp.float32)
    act_ref[:, 0:1, W0:W0 + W, :] = jnp.zeros((N, 1, W, C), jnp.float32)
    act_ref[:, H + 1:H + 2, W0:W0 + W, :] = jnp.zeros((N, 1, W, C), jnp.float32)
    # aligned interior write of the input
    act_ref[:, 1:H + 1, W0:W0 + W, :] = x_ref[...]

    layers = ((w1_ref, g1_ref, b1_ref),
              (w2_ref, g2_ref, b2_ref),
              (w3_ref, g3_ref, b3_ref))

    for li, (w_ref, g_ref, b_ref) in enumerate(layers):
        # ---- hoisted kw shifts: 3 W-shifted slabs, reused for every kh ------
        # kw=1 is tile-aligned; kw=0 / kw=2 are the only sublane-shifted reads.
        slabs = [act_ref[:, :, W0 - 1 + kw:W0 - 1 + kw + W, :]
                 for kw in range(3)]                       # each (N, H+2, W, C)

        # ---- im2col: lane-dense (M, 9C) buffer -> one big-K MXU matmul ------
        cols = []
        for kh in range(3):
            for kw in range(3):
                cols.append(slabs[kw][:, kh:kh + H].reshape(M, C))
        patches = jnp.concatenate(cols, axis=-1)           # (M, 9C)
        a = jnp.dot(patches, w_ref[...],
                    preferred_element_type=jnp.float32)    # (M, C) f32

        # ---- BatchNorm2d (training mode, batch stats), two-pass -------------
        mean = jnp.sum(a, axis=0, keepdims=True) * inv_m   # (1, C)
        cen = a - mean
        var = jnp.sum(cen * cen, axis=0, keepdims=True) * inv_m
        scale = g_ref[...] * jax.lax.rsqrt(var + BN_EPS)
        y = jnp.maximum(cen * scale + b_ref[...], 0.0)     # BN + ReLU

        if li < 2:
            # keep the intermediate on-chip: aligned interior rewrite
            act_ref[:, 1:H + 1, W0:W0 + W, :] = y.reshape(N, H, W, C)
        else:
            o_ref[...] = y.reshape(N, H, W, C).astype(o_ref.dtype)


def triple_conv(x_nchw, params):
    """Pallas implementation of TripleConv.forward. Input/output are NCHW."""
    N, Cin, H, W = x_nchw.shape
    Cout = params["w1"].shape[-1]
    C = _round_up(max(Cin, Cout, LANE), LANE)   # lane-dense channel width

    # NCHW -> NHWC, zero-pad channels to the lane width.
    x = jnp.transpose(x_nchw, (0, 2, 3, 1)).astype(jnp.float32)
    x = jnp.pad(x, ((0, 0), (0, 0), (0, 0), (0, C - Cin)))

    def pack_w(w):   # HWIO (3,3,ci,co) -> (9*C, C), (kh,kw,cin) flattened rows
        ci, co = w.shape[2], w.shape[3]
        w = jnp.pad(w.astype(jnp.float32),
                    ((0, 0), (0, 0), (0, C - ci), (0, C - co)))
        return w.reshape(9 * C, C)

    def pad_g(g):    # pad gamma with 1 (padded channels stay exactly zero)
        g = g.reshape(1, -1).astype(jnp.float32)
        return jnp.pad(g, ((0, 0), (0, C - g.shape[1])), constant_values=1.0)

    def pad_b(b):    # pad beta with 0
        b = b.reshape(1, -1).astype(jnp.float32)
        return jnp.pad(b, ((0, 0), (0, C - b.shape[1])))

    args = (x,
            pack_w(params["w1"]), pad_g(params["g1"]), pad_b(params["b1"]),
            pack_w(params["w2"]), pad_g(params["g2"]), pad_b(params["b2"]),
            pack_w(params["w3"]), pad_g(params["g3"]), pad_b(params["b3"]))

    def full(shape):
        zeros = (0,) * len(shape)
        return pl.BlockSpec(shape, lambda i, _z=zeros: _z)

    WP = SUB + W + SUB   # left halo tile + interior + right halo tile

    out = pl.pallas_call(
        triple_conv_kernel,
        out_shape=jax.ShapeDtypeStruct((N, H, W, C), jnp.float32),
        grid=(1,),
        in_specs=[full(a.shape) for a in args],
        out_specs=full((N, H, W, C)),
        scratch_shapes=[
            pltpu.VMEM((N, H + 2, WP, C), jnp.float32),   # halo'd activation
        ],
        compiler_params=pltpu.CompilerParams(
            dimension_semantics=("arbitrary",),
            vmem_limit_bytes=48 * 1024 * 1024,
        ),
    )(*args)

    # Drop the channel padding, back to NCHW.
    return jnp.transpose(out[..., :Cout], (0, 3, 1, 2))


# ---------------- pure-JAX reference for a correctness check ----------------
def _ref_conv_bn_relu(x_nhwc, w_hwio, gamma, beta):
    y = jax.lax.conv_general_dilated(
        x_nhwc, w_hwio, window_strides=(1, 1), padding=((1, 1), (1, 1)),
        dimension_numbers=("NHWC", "HWIO", "NHWC"))
    mean = jnp.mean(y, axis=(0, 1, 2), keepdims=True)
    var = jnp.mean((y - mean) ** 2, axis=(0, 1, 2), keepdims=True)
    y = (y - mean) * jax.lax.rsqrt(var + BN_EPS)
    y = y * gamma.reshape(1, 1, 1, -1) + beta.reshape(1, 1, 1, -1)
    return jnp.maximum(y, 0.0)


def triple_conv_ref(x_nchw, params):
    x = jnp.transpose(x_nchw, (0, 2, 3, 1))
    y = _ref_conv_bn_relu(x, params["w1"], params["g1"], params["b1"])
    y = _ref_conv_bn_relu(y, params["w2"], params["g2"], params["b2"])
    y = _ref_conv_bn_relu(y, params["w3"], params["g3"], params["b3"])
    return jnp.transpose(y, (0, 3, 1, 2))


if __name__ == "__main__":
    # Small shapes: batch=2, in_channels=4, out_channels=8, spatial=16x16.
    N, C_IN, C_OUT, H, W = 2, 4, 8, 16, 16

    key = jax.random.PRNGKey(0)
    kx, kw1, kw2, kw3 = jax.random.split(key, 4)

    x = jax.random.normal(kx, (N, C_IN, H, W), dtype=jnp.float32)  # NCHW, torch-like

    # HWIO weights; BN gamma=1, beta=0 as in torch default init.
    params = {
        "w1": 0.1 * jax.random.normal(kw1, (3, 3, C_IN, C_OUT), dtype=jnp.float32),
        "g1": jnp.ones((C_OUT,), dtype=jnp.float32),
        "b1": jnp.zeros((C_OUT,), dtype=jnp.float32),
        "w2": 0.1 * jax.random.normal(kw2, (3, 3, C_OUT, C_OUT), dtype=jnp.float32),
        "g2": jnp.ones((C_OUT,), dtype=jnp.float32),
        "b2": jnp.zeros((C_OUT,), dtype=jnp.float32),
        "w3": 0.1 * jax.random.normal(kw3, (3, 3, C_OUT, C_OUT), dtype=jnp.float32),
        "g3": jnp.ones((C_OUT,), dtype=jnp.float32),
        "b3": jnp.zeros((C_OUT,), dtype=jnp.float32),
    }

    out = jax.block_until_ready(triple_conv(x, params))
    ref = jax.block_until_ready(triple_conv_ref(x, params))

    assert out.shape == (N, C_OUT, H, W), out.shape
    assert jnp.allclose(out, ref, atol=2e-4, rtol=2e-4), (
        float(jnp.max(jnp.abs(out - ref))))
    print("KERNEL_OK")
</pallas_src>

<mosaic_0001>
module attributes {stable_mosaic.version = 11 : i64} {
  func.func @triple_conv_kernel(%arg0: i32, %arg1: memref<2x16x16x128xf32, #tpu.memory_space<vmem>>, %arg2: memref<1152x128xf32, #tpu.memory_space<vmem>>, %arg3: memref<1x128xf32, #tpu.memory_space<vmem>>, %arg4: memref<1x128xf32, #tpu.memory_space<vmem>>, %arg5: memref<1152x128xf32, #tpu.memory_space<vmem>>, %arg6: memref<1x128xf32, #tpu.memory_space<vmem>>, %arg7: memref<1x128xf32, #tpu.memory_space<vmem>>, %arg8: memref<1152x128xf32, #tpu.memory_space<vmem>>, %arg9: memref<1x128xf32, #tpu.memory_space<vmem>>, %arg10: memref<1x128xf32, #tpu.memory_space<vmem>>, %arg11: memref<2x16x16x128xf32, #tpu.memory_space<vmem>>, %arg12: memref<2x18x32x128xf32, #tpu.memory_space<vmem>>) attributes {dimension_semantics = [#tpu.dimension_semantics<arbitrary>], iteration_bounds = array<i64: 1>, scalar_prefetch = 0 : i64, scratch_operands = 1 : i64, tpu.core_type = #tpu.core_type<tc>, window_params = [{pipeline_mode = #tpu.pipeline_mode<synchronous>, transform_indices = @transform_0, window_bounds = array<i64: 2, 16, 16, 128>}, {pipeline_mode = #tpu.pipeline_mode<synchronous>, transform_indices = @transform_1, window_bounds = array<i64: 1152, 128>}, {pipeline_mode = #tpu.pipeline_mode<synchronous>, transform_indices = @transform_2, window_bounds = array<i64: 1, 128>}, {pipeline_mode = #tpu.pipeline_mode<synchronous>, transform_indices = @transform_3, window_bounds = array<i64: 1, 128>}, {pipeline_mode = #tpu.pipeline_mode<synchronous>, transform_indices = @transform_4, window_bounds = array<i64: 1152, 128>}, {pipeline_mode = #tpu.pipeline_mode<synchronous>, transform_indices = @transform_5, window_bounds = array<i64: 1, 128>}, {pipeline_mode = #tpu.pipeline_mode<synchronous>, transform_indices = @transform_6, window_bounds = array<i64: 1, 128>}, {pipeline_mode = #tpu.pipeline_mode<synchronous>, transform_indices = @transform_7, window_bounds = array<i64: 1152, 128>}, {pipeline_mode = #tpu.pipeline_mode<synchronous>, transform_indices = @transform_8, window_bounds = array<i64: 1, 128>}, {pipeline_mode = #tpu.pipeline_mode<synchronous>, transform_indices = @transform_9, window_bounds = array<i64: 1, 128>}, {pipeline_mode = #tpu.pipeline_mode<synchronous>, transform_indices = @transform_10, window_bounds = array<i64: 2, 16, 16, 128>}]} {
    %cst = arith.constant 0.000000e+00 : f32
    %0 = vector.broadcast %cst : f32 to vector<2x18x8x128xf32>
    %c0 = arith.constant 0 : index
    %c0_0 = arith.constant 0 : index
    %c0_1 = arith.constant 0 : index
    %c0_2 = arith.constant 0 : index
    %1 = vector.load %arg12[%c0, %c0_0, %c0_1, %c0_2] : memref<2x18x32x128xf32, #tpu.memory_space<vmem>>, vector<2x18x8x128xf32>
    tpu.vector_store %arg12[%c0, %c0_0, %c0_1, %c0_2], %0 {strides = array<i32>} : memref<2x18x32x128xf32, #tpu.memory_space<vmem>>, vector<2x18x8x128xf32>,
    %cst_3 = arith.constant 0.000000e+00 : f32
    %2 = vector.broadcast %cst_3 : f32 to vector<2x18x8x128xf32>
    %c0_4 = arith.constant 0 : index
    %c0_5 = arith.constant 0 : index
    %c24 = arith.constant 24 : index
    %c0_6 = arith.constant 0 : index
    %3 = vector.load %arg12[%c0_4, %c0_5, %c24, %c0_6] : memref<2x18x32x128xf32, #tpu.memory_space<vmem>>, vector<2x18x8x128xf32>
    tpu.vector_store %arg12[%c0_4, %c0_5, %c24, %c0_6], %2 {strides = array<i32>} : memref<2x18x32x128xf32, #tpu.memory_space<vmem>>, vector<2x18x8x128xf32>,
    %cst_7 = arith.constant 0.000000e+00 : f32
    %4 = vector.broadcast %cst_7 : f32 to vector<2x1x16x128xf32>
    %c0_8 = arith.constant 0 : index
    %c0_9 = arith.constant 0 : index
    %c8 = arith.constant 8 : index
    %c0_10 = arith.constant 0 : index
    %5 = vector.load %arg12[%c0_8, %c0_9, %c8, %c0_10] : memref<2x18x32x128xf32, #tpu.memory_space<vmem>>, vector<2x1x16x128xf32>
    tpu.vector_store %arg12[%c0_8, %c0_9, %c8, %c0_10], %4 {strides = array<i32>} : memref<2x18x32x128xf32, #tpu.memory_space<vmem>>, vector<2x1x16x128xf32>,
    %cst_11 = arith.constant 0.000000e+00 : f32
    %6 = vector.broadcast %cst_11 : f32 to vector<2x1x16x128xf32>
    %c0_12 = arith.constant 0 : index
    %c17 = arith.constant 17 : index
    %c8_13 = arith.constant 8 : index
    %c0_14 = arith.constant 0 : index
    %7 = vector.load %arg12[%c0_12, %c17, %c8_13, %c0_14] : memref<2x18x32x128xf32, #tpu.memory_space<vmem>>, vector<2x1x16x128xf32>
    tpu.vector_store %arg12[%c0_12, %c17, %c8_13, %c0_14], %6 {strides = array<i32>} : memref<2x18x32x128xf32, #tpu.memory_space<vmem>>, vector<2x1x16x128xf32>,
    %c0_15 = arith.constant 0 : index
    %c0_16 = arith.constant 0 : index
    %c0_17 = arith.constant 0 : index
    %c0_18 = arith.constant 0 : index
    %8 = vector.load %arg1[%c0_15, %c0_16, %c0_17, %c0_18] : memref<2x16x16x128xf32, #tpu.memory_space<vmem>>, vector<2x16x16x128xf32>
    %c0_19 = arith.constant 0 : index
    %c1 = arith.constant 1 : index
    %c8_20 = arith.constant 8 : index
    %c0_21 = arith.constant 0 : index
    %9 = vector.load %arg12[%c0_19, %c1, %c8_20, %c0_21] : memref<2x18x32x128xf32, #tpu.memory_space<vmem>>, vector<2x16x16x128xf32>
    tpu.vector_store %arg12[%c0_19, %c1, %c8_20, %c0_21], %8 {strides = array<i32>} : memref<2x18x32x128xf32, #tpu.memory_space<vmem>>, vector<2x16x16x128xf32>,
    %c0_22 = arith.constant 0 : index
    %c0_23 = arith.constant 0 : index
    %c7 = arith.constant 7 : index
    %c0_24 = arith.constant 0 : index
    %10 = vector.load %arg12[%c0_22, %c0_23, %c7, %c0_24] : memref<2x18x32x128xf32, #tpu.memory_space<vmem>>, vector<2x18x16x128xf32>
    %c0_25 = arith.constant 0 : index
    %c0_26 = arith.constant 0 : index
    %c8_27 = arith.constant 8 : index
    %c0_28 = arith.constant 0 : index
    %11 = vector.load %arg12[%c0_25, %c0_26, %c8_27, %c0_28] : memref<2x18x32x128xf32, #tpu.memory_space<vmem>>, vector<2x18x16x128xf32>
    %c0_29 = arith.constant 0 : index
    %c0_30 = arith.constant 0 : index
    %c9 = arith.constant 9 : index
    %c0_31 = arith.constant 0 : index
    %12 = vector.load %arg12[%c0_29, %c0_30, %c9, %c0_31] : memref<2x18x32x128xf32, #tpu.memory_space<vmem>>, vector<2x18x16x128xf32>
    %13 = vector.extract_strided_slice %10 {offsets = [0, 0, 0, 0], sizes = [2, 16, 16, 128], strides = [1, 1, 1, 1]} : vector<2x18x16x128xf32> to vector<2x16x16x128xf32>
    %14 = vector.shape_cast %13 : vector<2x16x16x128xf32> to vector<512x128xf32>
    %15 = vector.extract_strided_slice %11 {offsets = [0, 0, 0, 0], sizes = [2, 16, 16, 128], strides = [1, 1, 1, 1]} : vector<2x18x16x128xf32> to vector<2x16x16x128xf32>
    %16 = vector.shape_cast %15 : vector<2x16x16x128xf32> to vector<512x128xf32>
    %17 = vector.extract_strided_slice %12 {offsets = [0, 0, 0, 0], sizes = [2, 16, 16, 128], strides = [1, 1, 1, 1]} : vector<2x18x16x128xf32> to vector<2x16x16x128xf32>
    %18 = vector.shape_cast %17 : vector<2x16x16x128xf32> to vector<512x128xf32>
    %19 = vector.extract_strided_slice %10 {offsets = [0, 1, 0, 0], sizes = [2, 16, 16, 128], strides = [1, 1, 1, 1]} : vector<2x18x16x128xf32> to vector<2x16x16x128xf32>
    %20 = vector.shape_cast %19 : vector<2x16x16x128xf32> to vector<512x128xf32>
    %21 = vector.extract_strided_slice %11 {offsets = [0, 1, 0, 0], sizes = [2, 16, 16, 128], strides = [1, 1, 1, 1]} : vector<2x18x16x128xf32> to vector<2x16x16x128xf32>
    %22 = vector.shape_cast %21 : vector<2x16x16x128xf32> to vector<512x128xf32>
    %23 = vector.extract_strided_slice %12 {offsets = [0, 1, 0, 0], sizes = [2, 16, 16, 128], strides = [1, 1, 1, 1]} : vector<2x18x16x128xf32> to vector<2x16x16x128xf32>
    %24 = vector.shape_cast %23 : vector<2x16x16x128xf32> to vector<512x128xf32>
    %25 = vector.extract_strided_slice %10 {offsets = [0, 2, 0, 0], sizes = [2, 16, 16, 128], strides = [1, 1, 1, 1]} : vector<2x18x16x128xf32> to vector<2x16x16x128xf32>
    %26 = vector.shape_cast %25 : vector<2x16x16x128xf32> to vector<512x128xf32>
    %27 = vector.extract_strided_slice %11 {offsets = [0, 2, 0, 0], sizes = [2, 16, 16, 128], strides = [1, 1, 1, 1]} : vector<2x18x16x128xf32> to vector<2x16x16x128xf32>
    %28 = vector.shape_cast %27 : vector<2x16x16x128xf32> to vector<512x128xf32>
    %29 = vector.extract_strided_slice %12 {offsets = [0, 2, 0, 0], sizes = [2, 16, 16, 128], strides = [1, 1, 1, 1]} : vector<2x18x16x128xf32> to vector<2x16x16x128xf32>
    %30 = vector.shape_cast %29 : vector<2x16x16x128xf32> to vector<512x128xf32>
    %31 = tpu.concatenate %14, %16, %18, %20, %22, %24, %26, %28, %30 in 1 : vector<512x128xf32>, vector<512x128xf32>, vector<512x128xf32>, vector<512x128xf32>, vector<512x128xf32>, vector<512x128xf32>, vector<512x128xf32>, vector<512x128xf32>, vector<512x128xf32> -> vector<512x1152xf32>
    %c0_32 = arith.constant 0 : index
    %c0_33 = arith.constant 0 : index
    %32 = vector.load %arg2[%c0_32, %c0_33] : memref<1152x128xf32, #tpu.memory_space<vmem>>, vector<1152x128xf32>
    %cst_34 = arith.constant dense<0.000000e+00> : vector<512x128xf32>
    %33 = tpu.matmul %31, %32, %cst_34 {dimension_numbers = #tpu.dot_dimension_numbers<[1], [0], [0], [1], [0, 0, 1, 1], [], []>} : vector<512x1152xf32>, vector<1152x128xf32>, vector<512x128xf32> -> vector<512x128xf32>
    %cst_35 = arith.constant dense<0.000000e+00> : vector<128xf32>
    %34 = vector.multi_reduction <add>, %33, %cst_35 [0] : vector<512x128xf32> to vector<128xf32>
    %35 = vector.shape_cast %34 : vector<128xf32> to vector<1x128xf32>
    %cst_36 = arith.constant 0.001953125 : f32
    %36 = vector.broadcast %cst_36 : f32 to vector<1x128xf32>
    %37 = arith.mulf %35, %36 : vector<1x128xf32>
    %38 = vector.broadcast %37 : vector<1x128xf32> to vector<512x128xf32>
    %39 = arith.subf %33, %38 : vector<512x128xf32>
    %40 = arith.mulf %39, %39 : vector<512x128xf32>
    %cst_37 = arith.constant dense<0.000000e+00> : vector<128xf32>
    %41 = vector.multi_reduction <add>, %40, %cst_37 [0] : vector<512x128xf32> to vector<128xf32>
    %42 = vector.shape_cast %41 : vector<128xf32> to vector<1x128xf32>
    %cst_38 = arith.constant 0.001953125 : f32
    %43 = vector.broadcast %cst_38 : f32 to vector<1x128xf32>
    %44 = arith.mulf %42, %43 : vector<1x128xf32>
    %c0_39 = arith.constant 0 : index
    %c0_40 = arith.constant 0 : index
    %45 = vector.load %arg3[%c0_39, %c0_40] : memref<1x128xf32, #tpu.memory_space<vmem>>, vector<1x128xf32>
    %cst_41 = arith.constant 9.99999974E-6 : f32
    %46 = vector.broadcast %cst_41 : f32 to vector<1x128xf32>
    %47 = arith.addf %44, %46 : vector<1x128xf32>
    %48 = math.rsqrt %47 : vector<1x128xf32>
    %49 = arith.mulf %45, %48 : vector<1x128xf32>
    %50 = vector.broadcast %49 : vector<1x128xf32> to vector<512x128xf32>
    %51 = arith.mulf %39, %50 : vector<512x128xf32>
    %c0_42 = arith.constant 0 : index
    %c0_43 = arith.constant 0 : index
    %52 = vector.load %arg4[%c0_42, %c0_43] : memref<1x128xf32, #tpu.memory_space<vmem>>, vector<1x128xf32>
    %53 = vector.broadcast %52 : vector<1x128xf32> to vector<512x128xf32>
    %54 = arith.addf %51, %53 : vector<512x128xf32>
    %cst_44 = arith.constant 0.000000e+00 : f32
    %55 = vector.broadcast %cst_44 : f32 to vector<512x128xf32>
    %56 = arith.maximumf %54, %55 : vector<512x128xf32>
    %57 = vector.shape_cast %56 : vector<512x128xf32> to vector<2x16x16x128xf32>
    %c0_45 = arith.constant 0 : index
    %c1_46 = arith.constant 1 : index
    %c8_47 = arith.constant 8 : index
    %c0_48 = arith.constant 0 : index
    %58 = vector.load %arg12[%c0_45, %c1_46, %c8_47, %c0_48] : memref<2x18x32x128xf32, #tpu.memory_space<vmem>>, vector<2x16x16x128xf32>
    tpu.vector_store %arg12[%c0_45, %c1_46, %c8_47, %c0_48], %57 {strides = array<i32>} : memref<2x18x32x128xf32, #tpu.memory_space<vmem>>, vector<2x16x16x128xf32>,
    %c0_49 = arith.constant 0 : index
    %c0_50 = arith.constant 0 : index
    %c7_51 = arith.constant 7 : index
    %c0_52 = arith.constant 0 : index
    %59 = vector.load %arg12[%c0_49, %c0_50, %c7_51, %c0_52] : memref<2x18x32x128xf32, #tpu.memory_space<vmem>>, vector<2x18x16x128xf32>
    %c0_53 = arith.constant 0 : index
    %c0_54 = arith.constant 0 : index
    %c8_55 = arith.constant 8 : index
    %c0_56 = arith.constant 0 : index
    %60 = vector.load %arg12[%c0_53, %c0_54, %c8_55, %c0_56] : memref<2x18x32x128xf32, #tpu.memory_space<vmem>>, vector<2x18x16x128xf32>
    %c0_57 = arith.constant 0 : index
    %c0_58 = arith.constant 0 : index
    %c9_59 = arith.constant 9 : index
    %c0_60 = arith.constant 0 : index
    %61 = vector.load %arg12[%c0_57, %c0_58, %c9_59, %c0_60] : memref<2x18x32x128xf32, #tpu.memory_space<vmem>>, vector<2x18x16x128xf32>
    %62 = vector.extract_strided_slice %59 {offsets = [0, 0, 0, 0], sizes = [2, 16, 16, 128], strides = [1, 1, 1, 1]} : vector<2x18x16x128xf32> to vector<2x16x16x128xf32>
    %63 = vector.shape_cast %62 : vector<2x16x16x128xf32> to vector<512x128xf32>
    %64 = vector.extract_strided_slice %60 {offsets = [0, 0, 0, 0], sizes = [2, 16, 16, 128], strides = [1, 1, 1, 1]} : vector<2x18x16x128xf32> to vector<2x16x16x128xf32>
    %65 = vector.shape_cast %64 : vector<2x16x16x128xf32> to vector<512x128xf32>
    %66 = vector.extract_strided_slice %61 {offsets = [0, 0, 0, 0], sizes = [2, 16, 16, 128], strides = [1, 1, 1, 1]} : vector<2x18x16x128xf32> to vector<2x16x16x128xf32>
    %67 = vector.shape_cast %66 : vector<2x16x16x128xf32> to vector<512x128xf32>
    %68 = vector.extract_strided_slice %59 {offsets = [0, 1, 0, 0], sizes = [2, 16, 16, 128], strides = [1, 1, 1, 1]} : vector<2x18x16x128xf32> to vector<2x16x16x128xf32>
    %69 = vector.shape_cast %68 : vector<2x16x16x128xf32> to vector<512x128xf32>
    %70 = vector.extract_strided_slice %60 {offsets = [0, 1, 0, 0], sizes = [2, 16, 16, 128], strides = [1, 1, 1, 1]} : vector<2x18x16x128xf32> to vector<2x16x16x128xf32>
    %71 = vector.shape_cast %70 : vector<2x16x16x128xf32> to vector<512x128xf32>
    %72 = vector.extract_strided_slice %61 {offsets = [0, 1, 0, 0], sizes = [2, 16, 16, 128], strides = [1, 1, 1, 1]} : vector<2x18x16x128xf32> to vector<2x16x16x128xf32>
    %73 = vector.shape_cast %72 : vector<2x16x16x128xf32> to vector<512x128xf32>
    %74 = vector.extract_strided_slice %59 {offsets = [0, 2, 0, 0], sizes = [2, 16, 16, 128], strides = [1, 1, 1, 1]} : vector<2x18x16x128xf32> to vector<2x16x16x128xf32>
    %75 = vector.shape_cast %74 : vector<2x16x16x128xf32> to vector<512x128xf32>
    %76 = vector.extract_strided_slice %60 {offsets = [0, 2, 0, 0], sizes = [2, 16, 16, 128], strides = [1, 1, 1, 1]} : vector<2x18x16x128xf32> to vector<2x16x16x128xf32>
    %77 = vector.shape_cast %76 : vector<2x16x16x128xf32> to vector<512x128xf32>
    %78 = vector.extract_strided_slice %61 {offsets = [0, 2, 0, 0], sizes = [2, 16, 16, 128], strides = [1, 1, 1, 1]} : vector<2x18x16x128xf32> to vector<2x16x16x128xf32>
    %79 = vector.shape_cast %78 : vector<2x16x16x128xf32> to vector<512x128xf32>
    %80 = tpu.concatenate %63, %65, %67, %69, %71, %73, %75, %77, %79 in 1 : vector<512x128xf32>, vector<512x128xf32>, vector<512x128xf32>, vector<512x128xf32>, vector<512x128xf32>, vector<512x128xf32>, vector<512x128xf32>, vector<512x128xf32>, vector<512x128xf32> -> vector<512x1152xf32>
    %c0_61 = arith.constant 0 : index
    %c0_62 = arith.constant 0 : index
    %81 = vector.load %arg5[%c0_61, %c0_62] : memref<1152x128xf32, #tpu.memory_space<vmem>>, vector<1152x128xf32>
    %cst_63 = arith.constant dense<0.000000e+00> : vector<512x128xf32>
    %82 = tpu.matmul %80, %81, %cst_63 {dimension_numbers = #tpu.dot_dimension_numbers<[1], [0], [0], [1], [0, 0, 1, 1], [], []>} : vector<512x1152xf32>, vector<1152x128xf32>, vector<512x128xf32> -> vector<512x128xf32>
    %cst_64 = arith.constant dense<0.000000e+00> : vector<128xf32>
    %83 = vector.multi_reduction <add>, %82, %cst_64 [0] : vector<512x128xf32> to vector<128xf32>
    %84 = vector.shape_cast %83 : vector<128xf32> to vector<1x128xf32>
    %cst_65 = arith.constant 0.001953125 : f32
    %85 = vector.broadcast %cst_65 : f32 to vector<1x128xf32>
    %86 = arith.mulf %84, %85 : vector<1x128xf32>
    %87 = vector.broadcast %86 : vector<1x128xf32> to vector<512x128xf32>
    %88 = arith.subf %82, %87 : vector<512x128xf32>
    %89 = arith.mulf %88, %88 : vector<512x128xf32>
    %cst_66 = arith.constant dense<0.000000e+00> : vector<128xf32>
    %90 = vector.multi_reduction <add>, %89, %cst_66 [0] : vector<512x128xf32> to vector<128xf32>
    %91 = vector.shape_cast %90 : vector<128xf32> to vector<1x128xf32>
    %cst_67 = arith.constant 0.001953125 : f32
    %92 = vector.broadcast %cst_67 : f32 to vector<1x128xf32>
    %93 = arith.mulf %91, %92 : vector<1x128xf32>
    %c0_68 = arith.constant 0 : index
    %c0_69 = arith.constant 0 : index
    %94 = vector.load %arg6[%c0_68, %c0_69] : memref<1x128xf32, #tpu.memory_space<vmem>>, vector<1x128xf32>
    %cst_70 = arith.constant 9.99999974E-6 : f32
    %95 = vector.broadcast %cst_70 : f32 to vector<1x128xf32>
    %96 = arith.addf %93, %95 : vector<1x128xf32>
    %97 = math.rsqrt %96 : vector<1x128xf32>
    %98 = arith.mulf %94, %97 : vector<1x128xf32>
    %99 = vector.broadcast %98 : vector<1x128xf32> to vector<512x128xf32>
    %100 = arith.mulf %88, %99 : vector<512x128xf32>
    %c0_71 = arith.constant 0 : index
    %c0_72 = arith.constant 0 : index
    %101 = vector.load %arg7[%c0_71, %c0_72] : memref<1x128xf32, #tpu.memory_space<vmem>>, vector<1x128xf32>
    %102 = vector.broadcast %101 : vector<1x128xf32> to vector<512x128xf32>
    %103 = arith.addf %100, %102 : vector<512x128xf32>
    %cst_73 = arith.constant 0.000000e+00 : f32
    %104 = vector.broadcast %cst_73 : f32 to vector<512x128xf32>
    %105 = arith.maximumf %103, %104 : vector<512x128xf32>
    %106 = vector.shape_cast %105 : vector<512x128xf32> to vector<2x16x16x128xf32>
    %c0_74 = arith.constant 0 : index
    %c1_75 = arith.constant 1 : index
    %c8_76 = arith.constant 8 : index
    %c0_77 = arith.constant 0 : index
    %107 = vector.load %arg12[%c0_74, %c1_75, %c8_76, %c0_77] : memref<2x18x32x128xf32, #tpu.memory_space<vmem>>, vector<2x16x16x128xf32>
    tpu.vector_store %arg12[%c0_74, %c1_75, %c8_76, %c0_77], %106 {strides = array<i32>} : memref<2x18x32x128xf32, #tpu.memory_space<vmem>>, vector<2x16x16x128xf32>,
    %c0_78 = arith.constant 0 : index
    %c0_79 = arith.constant 0 : index
    %c7_80 = arith.constant 7 : index
    %c0_81 = arith.constant 0 : index
    %108 = vector.load %arg12[%c0_78, %c0_79, %c7_80, %c0_81] : memref<2x18x32x128xf32, #tpu.memory_space<vmem>>, vector<2x18x16x128xf32>
    %c0_82 = arith.constant 0 : index
    %c0_83 = arith.constant 0 : index
    %c8_84 = arith.constant 8 : index
    %c0_85 = arith.constant 0 : index
    %109 = vector.load %arg12[%c0_82, %c0_83, %c8_84, %c0_85] : memref<2x18x32x128xf32, #tpu.memory_space<vmem>>, vector<2x18x16x128xf32>
    %c0_86 = arith.constant 0 : index
    %c0_87 = arith.constant 0 : index
    %c9_88 = arith.constant 9 : index
    %c0_89 = arith.constant 0 : index
    %110 = vector.load %arg12[%c0_86, %c0_87, %c9_88, %c0_89] : memref<2x18x32x128xf32, #tpu.memory_space<vmem>>, vector<2x18x16x128xf32>
    %111 = vector.extract_strided_slice %108 {offsets = [0, 0, 0, 0], sizes = [2, 16, 16, 128], strides = [1, 1, 1, 1]} : vector<2x18x16x128xf32> to vector<2x16x16x128xf32>
    %112 = vector.shape_cast %111 : vector<2x16x16x128xf32> to vector<512x128xf32>
    %113 = vector.extract_strided_slice %109 {offsets = [0, 0, 0, 0], sizes = [2, 16, 16, 128], strides = [1, 1, 1, 1]} : vector<2x18x16x128xf32> to vector<2x16x16x128xf32>
    %114 = vector.shape_cast %113 : vector<2x16x16x128xf32> to vector<512x128xf32>
    %115 = vector.extract_strided_slice %110 {offsets = [0, 0, 0, 0], sizes = [2, 16, 16, 128], strides = [1, 1, 1, 1]} : vector<2x18x16x128xf32> to vector<2x16x16x128xf32>
    %116 = vector.shape_cast %115 : vector<2x16x16x128xf32> to vector<512x128xf32>
    %117 = vector.extract_strided_slice %108 {offsets = [0, 1, 0, 0], sizes = [2, 16, 16, 128], strides = [1, 1, 1, 1]} : vector<2x18x16x128xf32> to vector<2x16x16x128xf32>
    %118 = vector.shape_cast %117 : vector<2x16x16x128xf32> to vector<512x128xf32>
    %119 = vector.extract_strided_slice %109 {offsets = [0, 1, 0, 0], sizes = [2, 16, 16, 128], strides = [1, 1, 1, 1]} : vector<2x18x16x128xf32> to vector<2x16x16x128xf32>
    %120 = vector.shape_cast %119 : vector<2x16x16x128xf32> to vector<512x128xf32>
    %121 = vector.extract_strided_slice %110 {offsets = [0, 1, 0, 0], sizes = [2, 16, 16, 128], strides = [1, 1, 1, 1]} : vector<2x18x16x128xf32> to vector<2x16x16x128xf32>
    %122 = vector.shape_cast %121 : vector<2x16x16x128xf32> to vector<512x128xf32>
    %123 = vector.extract_strided_slice %108 {offsets = [0, 2, 0, 0], sizes = [2, 16, 16, 128], strides = [1, 1, 1, 1]} : vector<2x18x16x128xf32> to vector<2x16x16x128xf32>
    %124 = vector.shape_cast %123 : vector<2x16x16x128xf32> to vector<512x128xf32>
    %125 = vector.extract_strided_slice %109 {offsets = [0, 2, 0, 0], sizes = [2, 16, 16, 128], strides = [1, 1, 1, 1]} : vector<2x18x16x128xf32> to vector<2x16x16x128xf32>
    %126 = vector.shape_cast %125 : vector<2x16x16x128xf32> to vector<512x128xf32>
    %127 = vector.extract_strided_slice %110 {offsets = [0, 2, 0, 0], sizes = [2, 16, 16, 128], strides = [1, 1, 1, 1]} : vector<2x18x16x128xf32> to vector<2x16x16x128xf32>
    %128 = vector.shape_cast %127 : vector<2x16x16x128xf32> to vector<512x128xf32>
    %129 = tpu.concatenate %112, %114, %116, %118, %120, %122, %124, %126, %128 in 1 : vector<512x128xf32>, vector<512x128xf32>, vector<512x128xf32>, vector<512x128xf32>, vector<512x128xf32>, vector<512x128xf32>, vector<512x128xf32>, vector<512x128xf32>, vector<512x128xf32> -> vector<512x1152xf32>
    %c0_90 = arith.constant 0 : index
    %c0_91 = arith.constant 0 : index
    %130 = vector.load %arg8[%c0_90, %c0_91] : memref<1152x128xf32, #tpu.memory_space<vmem>>, vector<1152x128xf32>
    %cst_92 = arith.constant dense<0.000000e+00> : vector<512x128xf32>
    %131 = tpu.matmul %129, %130, %cst_92 {dimension_numbers = #tpu.dot_dimension_numbers<[1], [0], [0], [1], [0, 0, 1, 1], [], []>} : vector<512x1152xf32>, vector<1152x128xf32>, vector<512x128xf32> -> vector<512x128xf32>
    %cst_93 = arith.constant dense<0.000000e+00> : vector<128xf32>
    %132 = vector.multi_reduction <add>, %131, %cst_93 [0] : vector<512x128xf32> to vector<128xf32>
    %133 = vector.shape_cast %132 : vector<128xf32> to vector<1x128xf32>
    %cst_94 = arith.constant 0.001953125 : f32
    %134 = vector.broadcast %cst_94 : f32 to vector<1x128xf32>
    %135 = arith.mulf %133, %134 : vector<1x128xf32>
    %136 = vector.broadcast %135 : vector<1x128xf32> to vector<512x128xf32>
    %137 = arith.subf %131, %136 : vector<512x128xf32>
    %138 = arith.mulf %137, %137 : vector<512x128xf32>
    %cst_95 = arith.constant dense<0.000000e+00> : vector<128xf32>
    %139 = vector.multi_reduction <add>, %138, %cst_95 [0] : vector<512x128xf32> to vector<128xf32>
    %140 = vector.shape_cast %139 : vector<128xf32> to vector<1x128xf32>
    %cst_96 = arith.constant 0.001953125 : f32
    %141 = vector.broadcast %cst_96 : f32 to vector<1x128xf32>
    %142 = arith.mulf %140, %141 : vector<1x128xf32>
    %c0_97 = arith.constant 0 : index
    %c0_98 = arith.constant 0 : index
    %143 = vector.load %arg9[%c0_97, %c0_98] : memref<1x128xf32, #tpu.memory_space<vmem>>, vector<1x128xf32>
    %cst_99 = arith.constant 9.99999974E-6 : f32
    %144 = vector.broadcast %cst_99 : f32 to vector<1x128xf32>
    %145 = arith.addf %142, %144 : vector<1x128xf32>
    %146 = math.rsqrt %145 : vector<1x128xf32>
    %147 = arith.mulf %143, %146 : vector<1x128xf32>
    %148 = vector.broadcast %147 : vector<1x128xf32> to vector<512x128xf32>
    %149 = arith.mulf %137, %148 : vector<512x128xf32>
    %c0_100 = arith.constant 0 : index
    %c0_101 = arith.constant 0 : index
    %150 = vector.load %arg10[%c0_100, %c0_101] : memref<1x128xf32, #tpu.memory_space<vmem>>, vector<1x128xf32>
    %151 = vector.broadcast %150 : vector<1x128xf32> to vector<512x128xf32>
    %152 = arith.addf %149, %151 : vector<512x128xf32>
    %cst_102 = arith.constant 0.000000e+00 : f32
    %153 = vector.broadcast %cst_102 : f32 to vector<512x128xf32>
    %154 = arith.maximumf %152, %153 : vector<512x128xf32>
    %155 = vector.shape_cast %154 : vector<512x128xf32> to vector<2x16x16x128xf32>
    %c0_103 = arith.constant 0 : index
    %c0_104 = arith.constant 0 : index
    %c0_105 = arith.constant 0 : index
    %c0_106 = arith.constant 0 : index
    %156 = vector.load %arg11[%c0_103, %c0_104, %c0_105, %c0_106] : memref<2x16x16x128xf32, #tpu.memory_space<vmem>>, vector<2x16x16x128xf32>
    tpu.vector_store %arg11[%c0_103, %c0_104, %c0_105, %c0_106], %155 {strides = array<i32>} : memref<2x16x16x128xf32, #tpu.memory_space<vmem>>, vector<2x16x16x128xf32>,
    return
  }
  func.func @transform_0(%arg0: i32) -> (i32, i32, i32, i32) {
    %c0_i32 = arith.constant 0 : i32
    %c0_i32_0 = arith.constant 0 : i32
    %c0_i32_1 = arith.constant 0 : i32
    %c0_i32_2 = arith.constant 0 : i32
    %c0_i32_3 = arith.constant 0 : i32
    return %c0_i32, %c0_i32_0, %c0_i32_1, %c0_i32_2 : i32, i32, i32, i32
  }
  func.func @transform_1(%arg0: i32) -> (i32, i32) {
    %c0_i32 = arith.constant 0 : i32
    %c0_i32_0 = arith.constant 0 : i32
    %c0_i32_1 = arith.constant 0 : i32
    return %c0_i32, %c0_i32_0 : i32, i32
  }
  func.func @transform_2(%arg0: i32) -> (i32, i32) {
    %c0_i32 = arith.constant 0 : i32
    %c0_i32_0 = arith.constant 0 : i32
    %c0_i32_1 = arith.constant 0 : i32
    return %c0_i32, %c0_i32_0 : i32, i32
  }
  func.func @transform_3(%arg0: i32) -> (i32, i32) {
    %c0_i32 = arith.constant 0 : i32
    %c0_i32_0 = arith.constant 0 : i32
    %c0_i32_1 = arith.constant 0 : i32
    return %c0_i32, %c0_i32_0 : i32, i32
  }
  func.func @transform_4(%arg0: i32) -> (i32, i32) {
    %c0_i32 = arith.constant 0 : i32
    %c0_i32_0 = arith.constant 0 : i32
    %c0_i32_1 = arith.constant 0 : i32
    return %c0_i32, %c0_i32_0 : i32, i32
  }
  func.func @transform_5(%arg0: i32) -> (i32, i32) {
    %c0_i32 = arith.constant 0 : i32
    %c0_i32_0 = arith.constant 0 : i32
    %c0_i32_1 = arith.constant 0 : i32
    return %c0_i32, %c0_i32_0 : i32, i32
  }
  func.func @transform_6(%arg0: i32) -> (i32, i32) {
    %c0_i32 = arith.constant 0 : i32
    %c0_i32_0 = arith.constant 0 : i32
    %c0_i32_1 = arith.constant 0 : i32
    return %c0_i32, %c0_i32_0 : i32, i32
  }
  func.func @transform_7(%arg0: i32) -> (i32, i32) {
    %c0_i32 = arith.constant 0 : i32
    %c0_i32_0 = arith.constant 0 : i32
    %c0_i32_1 = arith.constant 0 : i32
    return %c0_i32, %c0_i32_0 : i32, i32
  }
  func.func @transform_8(%arg0: i32) -> (i32, i32) {
    %c0_i32 = arith.constant 0 : i32
    %c0_i32_0 = arith.constant 0 : i32
    %c0_i32_1 = arith.constant 0 : i32
    return %c0_i32, %c0_i32_0 : i32, i32
  }
  func.func @transform_9(%arg0: i32) -> (i32, i32) {
    %c0_i32 = arith.constant 0 : i32
    %c0_i32_0 = arith.constant 0 : i32
    %c0_i32_1 = arith.constant 0 : i32
    return %c0_i32, %c0_i32_0 : i32, i32
  }
  func.func @transform_10(%arg0: i32) -> (i32, i32, i32, i32) {
    %c0_i32 = arith.constant 0 : i32
    %c0_i32_0 = arith.constant 0 : i32
    %c0_i32_1 = arith.constant 0 : i32
    %c0_i32_2 = arith.constant 0 : i32
    %c0_i32_3 = arith.constant 0 : i32
    return %c0_i32, %c0_i32_0, %c0_i32_1, %c0_i32_2 : i32, i32, i32, i32
  }
}

</mosaic_0001>

<llo_original>
// kernel: tpu_custom_call.1
$region0: #{tpu_custom_call.1}
  #allocation0 [shape = 'u32[]', space=smem, size = 0x4, offset = 0x4, fixed_abs, tag = 'smem constant byte address 0x4 - core index']
  #allocation1 [shape = 'u32[144,128]{1,0:T(1,128)}', space=vmem, size = 0x12000, scoped, tag = 'internal scratch']
  #allocation2 [shape = 'f32[2,18,32,128]{3,2,1,0:T(8,128)}', space=vmem, size = 0x90000, scoped, tag = 'scratch operand']
  %s0 = inlined_call_operand.hbm [shape: f32[2,16,16,128], index: 0, kind: input, shape index: {}]
  %s1 = inlined_call_operand.hbm [shape: f32[1152,128], index: 1, kind: input, shape index: {}]
  %s2 = inlined_call_operand.vmem [shape: f32[1,128], index: 2, kind: input, shape index: {}]
  %s3 = inlined_call_operand.vmem [shape: f32[1,128], index: 3, kind: input, shape index: {}]
  %s4 = inlined_call_operand.hbm [shape: f32[1152,128], index: 4, kind: input, shape index: {}]
  %s5 = inlined_call_operand.vmem [shape: f32[1,128], index: 5, kind: input, shape index: {}]
  %s6 = inlined_call_operand.vmem [shape: f32[1,128], index: 6, kind: input, shape index: {}]
  %s7 = inlined_call_operand.hbm [shape: f32[1152,128], index: 7, kind: input, shape index: {}]
  %s8 = inlined_call_operand.vmem [shape: f32[1,128], index: 8, kind: input, shape index: {}]
  %s9 = inlined_call_operand.vmem [shape: f32[1,128], index: 9, kind: input, shape index: {}]
  %s10 = inlined_call_operand.hbm [shape: f32[2,16,16,128], index: 10, kind: output, shape index: {}]
  %s11 = sld [smem:[#allocation0]]
  $region66: #{tpu_custom_call.1} parent=0
    _
  %s13 = ssub.s32 1, %s11
  %s14 = scalar_select 0, %s13, %s11
  $region1: #{tpu_custom_call.1} parent=0
    #allocation3 [shape = 'u8[262144]{0}', space=vmem, size = 0x40000, scoped, tag = 'input window, operand 0, single buffered']
    #allocation4 [shape = 's32[1]{0}', space=sflag, size = 0x4, scoped, tag = 'scoped memory for tpu_custom_call.1']
    #allocation5 [shape = 's32[1]{0}', space=sflag, size = 0x4, scoped, tag = 'scoped memory for tpu_custom_call.1']
    #allocation6 [shape = 'u8[589824]{0}', space=vmem, size = 0x90000, scoped, tag = 'input window, operand 1, single buffered']
    #allocation7 [shape = 's32[1]{0}', space=sflag, size = 0x4, scoped, tag = 'scoped memory for tpu_custom_call.1']
    #allocation8 [shape = 'u8[589824]{0}', space=vmem, size = 0x90000, scoped, tag = 'input window, operand 4, single buffered']
    #allocation9 [shape = 'u8[589824]{0}', space=vmem, size = 0x90000, scoped, tag = 'input window, operand 7, single buffered']
    #allocation10 [shape = 's32[1]{0}', space=sflag, size = 0x4, scoped, tag = 'scoped memory for tpu_custom_call.1']
    #allocation11 [shape = 'u8[262144]{0}', space=vmem, size = 0x40000, scoped, tag = 'output window, operand 0, single buffered']
    %15 = vsyncpa [#allocation4], 0
    %16 = vsyncpa [#allocation7], 0
    %17 = vsyncpa [#allocation10], 0
    %18 = vsyncpa [#allocation5], 0
    // Predicated region
    $region2: #{tpu_custom_call.1} parent=1 // pred_check
      _
    $region3: #{tpu_custom_call.1} parent=1 // pred_check_branch
      %20 = sbr.rel (0) target = $region5
    $region4: #{tpu_custom_call.1} parent=1 // pred_region
      %s22 = ssub.s32 8192, 8192
      %23 = vsyncadd [#allocation4], %s22
      %s24 = sshll.u32 [#allocation3], 4
      %s25 = int_to_ptr.vmem [resolvable:$true] %s24
      %30 = dma.hbm_to_vmem [thread:$0]  %s0, 8192, %s25, [#allocation4], 128, 128, 8
    $region5: #{tpu_custom_call.1} parent=1 // pred_fallthru
      _
    // Predicated region
    $region6: #{tpu_custom_call.1} parent=1 // pred_check
      _
    $region7: #{tpu_custom_call.1} parent=1 // pred_check_branch
      %32 = sbr.rel (0) target = $region9
    $region8: #{tpu_custom_call.1} parent=1 // pred_region
      %s34 = ssub.s32 18432, 18432
      %35 = vsyncadd [#allocation7], %s34
      %s36 = sshll.u32 [#allocation6], 4
      %s37 = int_to_ptr.vmem [resolvable:$true] %s36
      %42 = dma.hbm_to_vmem [thread:$0]  %s1, 18432, %s37, [#allocation7], 128, 128, 8
    $region9: #{tpu_custom_call.1} parent=1 // pred_fallthru
      _
    // Predicated region
    $region10: #{tpu_custom_call.1} parent=1 // pred_check
      _
    $region11: #{tpu_custom_call.1} parent=1 // pred_check_branch
      %44 = sbr.rel (0) target = $region13
    $region12: #{tpu_custom_call.1} parent=1 // pred_region
      _
    $region13: #{tpu_custom_call.1} parent=1 // pred_fallthru
      _
    // Predicated region
    $region14: #{tpu_custom_call.1} parent=1 // pred_check
      _
    $region15: #{tpu_custom_call.1} parent=1 // pred_check_branch
      %46 = sbr.rel (0) target = $region17
    $region16: #{tpu_custom_call.1} parent=1 // pred_region
      _
    $region17: #{tpu_custom_call.1} parent=1 // pred_fallthru
      _
    // Predicated region
    $region18: #{tpu_custom_call.1} parent=1 // pred_check
      _
    $region19: #{tpu_custom_call.1} parent=1 // pred_check_branch
      %48 = sbr.rel (0) target = $region21
    $region20: #{tpu_custom_call.1} parent=1 // pred_region
      %s50 = ssub.s32 18432, 18432
      %51 = vsyncadd [#allocation7], %s50
      %s52 = sshll.u32 [#allocation8], 4
      %s53 = int_to_ptr.vmem [resolvable:$true] %s52
      %58 = dma.hbm_to_vmem [thread:$0]  %s4, 18432, %s53, [#allocation7], 128, 128, 8
    $region21: #{tpu_custom_call.1} parent=1 // pred_fallthru
      _
    // Predicated region
    $region22: #{tpu_custom_call.1} parent=1 // pred_check
      _
    $region23: #{tpu_custom_call.1} parent=1 // pred_check_branch
      %60 = sbr.rel (0) target = $region25
    $region24: #{tpu_custom_call.1} parent=1 // pred_region
      _
    $region25: #{tpu_custom_call.1} parent=1 // pred_fallthru
      _
    // Predicated region
    $region26: #{tpu_custom_call.1} parent=1 // pred_check
      _
    $region27: #{tpu_custom_call.1} parent=1 // pred_check_branch
      %62 = sbr.rel (0) target = $region29
    $region28: #{tpu_custom_call.1} parent=1 // pred_region
      _
    $region29: #{tpu_custom_call.1} parent=1 // pred_fallthru
      _
    // Predicated region
    $region30: #{tpu_custom_call.1} parent=1 // pred_check
      _
    $region31: #{tpu_custom_call.1} parent=1 // pred_check_branch
      %64 = sbr.rel (0) target = $region33
    $region32: #{tpu_custom_call.1} parent=1 // pred_region
      %s66 = ssub.s32 18432, 18432
      %67 = vsyncadd [#allocation10], %s66
      %s68 = sshll.u32 [#allocation9], 4
      %s69 = int_to_ptr.vmem [resolvable:$true] %s68
      %74 = dma.hbm_to_vmem [thread:$0]  %s7, 18432, %s69, [#allocation10], 128, 128, 8
    $region33: #{tpu_custom_call.1} parent=1 // pred_fallthru
      _
    // Predicated region
    $region34: #{tpu_custom_call.1} parent=1 // pred_check
      _
    $region35: #{tpu_custom_call.1} parent=1 // pred_check_branch
      %76 = sbr.rel (0) target = $region37
    $region36: #{tpu_custom_call.1} parent=1 // pred_region
      _
    $region37: #{tpu_custom_call.1} parent=1 // pred_fallthru
      _
    // Predicated region
    $region38: #{tpu_custom_call.1} parent=1 // pred_check
      _
    $region39: #{tpu_custom_call.1} parent=1 // pred_check_branch
      %78 = sbr.rel (0) target = $region41
    $region40: #{tpu_custom_call.1} parent=1 // pred_region
      _
    $region41: #{tpu_custom_call.1} parent=1 // pred_fallthru
      _
    // Predicated region
    $region42: #{tpu_custom_call.1} parent=1 // pred_check
      _
    $region43: #{tpu_custom_call.1} parent=1 // pred_check_branch
      %80 = sbr.rel (0) target = $region45
    $region44: #{tpu_custom_call.1} parent=1 // pred_region
      %81 = dma.done [#allocation4], 8192
    $region45: #{tpu_custom_call.1} parent=1 // pred_fallthru
      _
    // Predicated region
    $region46: #{tpu_custom_call.1} parent=1 // pred_check
      _
    $region47: #{tpu_custom_call.1} parent=1 // pred_check_branch
      %83 = sbr.rel (0) target = $region49
    $region48: #{tpu_custom_call.1} parent=1 // pred_region
      %84 = dma.done [#allocation7], 18432
    $region49: #{tpu_custom_call.1} parent=1 // pred_fallthru
      _
    // Predicated region
    $region50: #{tpu_custom_call.1} parent=1 // pred_check
      _
    $region51: #{tpu_custom_call.1} parent=1 // pred_check_branch
      %86 = sbr.rel (0) target = $region53
    $region52: #{tpu_custom_call.1} parent=1 // pred_region
      %87 = dma.done [#allocation7], 18432
    $region53: #{tpu_custom_call.1} parent=1 // pred_fallthru
      _
    // Predicated region
    $region54: #{tpu_custom_call.1} parent=1 // pred_check
      _
    $region55: #{tpu_custom_call.1} parent=1 // pred_check_branch
      %89 = sbr.rel (0) target = $region57
    $region56: #{tpu_custom_call.1} parent=1 // pred_region
      %90 = dma.done [#allocation10], 18432
    $region57: #{tpu_custom_call.1} parent=1 // pred_fallthru
      _
    %91 = vst [vmem:[#allocation2] sm:$0xff] 0.0
    %92 = vst [vmem:[#allocation2 + $0x20] sm:$0xff] 0.0
    %93 = vst [vmem:[#allocation2 + $0x40] sm:$0xff] 0.0
    %94 = vst [vmem:[#allocation2 + $0x60] sm:$0xff] 0.0
    %95 = vst [vmem:[#allocation2 + $0x80] sm:$0xff] 0.0
    %96 = vst [vmem:[#allocation2 + $0xa0] sm:$0xff] 0.0
    %97 = vst [vmem:[#allocation2 + $0xc0] sm:$0xff] 0.0
    %98 = vst [vmem:[#allocation2 + $0xe0] sm:$0xff] 0.0
    %99 = vst [vmem:[#allocation2 + $0x100] sm:$0xff] 0.0
    %100 = vst [vmem:[#allocation2 + $0x120] sm:$0xff] 0.0
    %101 = vst [vmem:[#allocation2 + $0x140] sm:$0xff] 0.0
    %102 = vst [vmem:[#allocation2 + $0x160] sm:$0xff] 0.0
    %103 = vst [vmem:[#allocation2 + $0x180] sm:$0xff] 0.0
    %104 = vst [vmem:[#allocation2 + $0x1a0] sm:$0xff] 0.0
    %105 = vst [vmem:[#allocation2 + $0x1c0] sm:$0xff] 0.0
    %106 = vst [vmem:[#allocation2 + $0x1e0] sm:$0xff] 0.0
    %107 = vst [vmem:[#allocation2 + $0x200] sm:$0xff] 0.0
    %108 = vst [vmem:[#allocation2 + $0x220] sm:$0xff] 0.0
    %109 = vst [vmem:[#allocation2 + $0x240] sm:$0xff] 0.0
    %110 = vst [vmem:[#allocation2 + $0x260] sm:$0xff] 0.0
    %111 = vst [vmem:[#allocation2 + $0x280] sm:$0xff] 0.0
    %112 = vst [vmem:[#allocation2 + $0x2a0] sm:$0xff] 0.0
    %113 = vst [vmem:[#allocation2 + $0x2c0] sm:$0xff] 0.0
    %114 = vst [vmem:[#allocation2 + $0x2e0] sm:$0xff] 0.0
    %115 = vst [vmem:[#allocation2 + $0x300] sm:$0xff] 0.0
    %116 = vst [vmem:[#allocation2 + $0x320] sm:$0xff] 0.0
    %117 = vst [vmem:[#allocation2 + $0x340] sm:$0xff] 0.0
    %118 = vst [vmem:[#allocation2 + $0x360] sm:$0xff] 0.0
    %119 = vst [vmem:[#allocation2 + $0x380] sm:$0xff] 0.0
    %120 = vst [vmem:[#allocation2 + $0x3a0] sm:$0xff] 0.0
    %121 = vst [vmem:[#allocation2 + $0x3c0] sm:$0xff] 0.0
    %122 = vst [vmem:[#allocation2 + $0x3e0] sm:$0xff] 0.0
    %123 = vst [vmem:[#allocation2 + $0x400] sm:$0xff] 0.0
    %124 = vst [vmem:[#allocation2 + $0x420] sm:$0xff] 0.0
    %125 = vst [vmem:[#allocation2 + $0x440] sm:$0xff] 0.0
    %126 = vst [vmem:[#allocation2 + $0x460] sm:$0xff] 0.0
    %127 = vst [vmem:[#allocation2 + $0x18] sm:$0xff] 0.0
    %128 = vst [vmem:[#allocation2 + $0x38] sm:$0xff] 0.0
    %129 = vst [vmem:[#allocation2 + $0x58] sm:$0xff] 0.0
    %130 = vst [vmem:[#allocation2 + $0x78] sm:$0xff] 0.0
    %131 = vst [vmem:[#allocation2 + $0x98] sm:$0xff] 0.0
    %132 = vst [vmem:[#allocation2 + $0xb8] sm:$0xff] 0.0
    %133 = vst [vmem:[#allocation2 + $0xd8] sm:$0xff] 0.0
    %134 = vst [vmem:[#allocation2 + $0xf8] sm:$0xff] 0.0
    %135 = vst [vmem:[#allocation2 + $0x118] sm:$0xff] 0.0
    %136 = vst [vmem:[#allocation2 + $0x138] sm:$0xff] 0.0
    %137 = vst [vmem:[#allocation2 + $0x158] sm:$0xff] 0.0
    %138 = vst [vmem:[#allocation2 + $0x178] sm:$0xff] 0.0
    %139 = vst [vmem:[#allocation2 + $0x198] sm:$0xff] 0.0
    %140 = vst [vmem:[#allocation2 + $0x1b8] sm:$0xff] 0.0
    %141 = vst [vmem:[#allocation2 + $0x1d8] sm:$0xff] 0.0
    %142 = vst [vmem:[#allocation2 + $0x1f8] sm:$0xff] 0.0
    %143 = vst [vmem:[#allocation2 + $0x218] sm:$0xff] 0.0
    %144 = vst [vmem:[#allocation2 + $0x238] sm:$0xff] 0.0
    %145 = vst [vmem:[#allocation2 + $0x258] sm:$0xff] 0.0
    %146 = vst [vmem:[#allocation2 + $0x278] sm:$0xff] 0.0
    %147 = vst [vmem:[#allocation2 + $0x298] sm:$0xff] 0.0
    %148 = vst [vmem:[#allocation2 + $0x2b8] sm:$0xff] 0.0
    %149 = vst [vmem:[#allocation2 + $0x2d8] sm:$0xff] 0.0
    %150 = vst [vmem:[#allocation2 + $0x2f8] sm:$0xff] 0.0
    %151 = vst [vmem:[#allocation2 + $0x318] sm:$0xff] 0.0
    %152 = vst [vmem:[#allocation2 + $0x338] sm:$0xff] 0.0
    %153 = vst [vmem:[#allocation2 + $0x358] sm:$0xff] 0.0
    %154 = vst [vmem:[#allocation2 + $0x378] sm:$0xff] 0.0
    %155 = vst [vmem:[#allocation2 + $0x398] sm:$0xff] 0.0
    %156 = vst [vmem:[#allocation2 + $0x3b8] sm:$0xff] 0.0
    %157 = vst [vmem:[#allocation2 + $0x3d8] sm:$0xff] 0.0
    %158 = vst [vmem:[#allocation2 + $0x3f8] sm:$0xff] 0.0
    %159 = vst [vmem:[#allocation2 + $0x418] sm:$0xff] 0.0
    %160 = vst [vmem:[#allocation2 + $0x438] sm:$0xff] 0.0
    %161 = vst [vmem:[#allocation2 + $0x458] sm:$0xff] 0.0
    %162 = vst [vmem:[#allocation2 + $0x478] sm:$0xff] 0.0
    %163 = vst [vmem:[#allocation2 + $0x8] sm:$0xff] 0.0
    %164 = vst [vmem:[#allocation2 + $0x10] sm:$0xff] 0.0
    %165 = vst [vmem:[#allocation2 + $0x248] sm:$0xff] 0.0
    %166 = vst [vmem:[#allocation2 + $0x250] sm:$0xff] 0.0
    %s167 = scalar_lea.vmem [#allocation2], 544
    %168 = vst [vmem:[%s167 + $0x8] sm:$0xff] 0.0
    %169 = vst [vmem:[%s167 + $0x10] sm:$0xff] 0.0
    %170 = vst [vmem:[%s167 + $0x248] sm:$0xff] 0.0
    %171 = vst [vmem:[%s167 + $0x250] sm:$0xff] 0.0
    %v172 = vld [vmem:[#allocation3] sm:$0xff]
    %v173 = vld [vmem:[#allocation3 + $0x8] sm:$0xff]
    %v174 = vld [vmem:[#allocation3 + $0x10] sm:$0xff]
    %v175 = vld [vmem:[#allocation3 + $0x18] sm:$0xff]
    %v176 = vld [vmem:[#allocation3 + $0x20] sm:$0xff]
    %v177 = vld [vmem:[#allocation3 + $0x28] sm:$0xff]
    %v178 = vld [vmem:[#allocation3 + $0x30] sm:$0xff]
    %v179 = vld [vmem:[#allocation3 + $0x38] sm:$0xff]
    %v180 = vld [vmem:[#allocation3 + $0x40] sm:$0xff]
    %v181 = vld [vmem:[#allocation3 + $0x48] sm:$0xff]
    %v182 = vld [vmem:[#allocation3 + $0x50] sm:$0xff]
    %v183 = vld [vmem:[#allocation3 + $0x58] sm:$0xff]
    %v184 = vld [vmem:[#allocation3 + $0x60] sm:$0xff]
    %v185 = vld [vmem:[#allocation3 + $0x68] sm:$0xff]
    %v186 = vld [vmem:[#allocation3 + $0x70] sm:$0xff]
    %v187 = vld [vmem:[#allocation3 + $0x78] sm:$0xff]
    %v188 = vld [vmem:[#allocation3 + $0x80] sm:$0xff]
    %v189 = vld [vmem:[#allocation3 + $0x88] sm:$0xff]
    %v190 = vld [vmem:[#allocation3 + $0x90] sm:$0xff]
    %v191 = vld [vmem:[#allocation3 + $0x98] sm:$0xff]
    %v192 = vld [vmem:[#allocation3 + $0xa0] sm:$0xff]
    %v193 = vld [vmem:[#allocation3 + $0xa8] sm:$0xff]
    %v194 = vld [vmem:[#allocation3 + $0xb0] sm:$0xff]
    %v195 = vld [vmem:[#allocation3 + $0xb8] sm:$0xff]
    %v196 = vld [vmem:[#allocation3 + $0xc0] sm:$0xff]
    %v197 = vld [vmem:[#allocation3 + $0xc8] sm:$0xff]
    %v198 = vld [vmem:[#allocation3 + $0xd0] sm:$0xff]
    %v199 = vld [vmem:[#allocation3 + $0xd8] sm:$0xff]
    %v200 = vld [vmem:[#allocation3 + $0xe0] sm:$0xff]
    %v201 = vld [vmem:[#allocation3 + $0xe8] sm:$0xff]
    %v202 = vld [vmem:[#allocation3 + $0xf0] sm:$0xff]
    %v203 = vld [vmem:[#allocation3 + $0xf8] sm:$0xff]
    %v204 = vld [vmem:[#allocation3 + $0x100] sm:$0xff]
    %v205 = vld [vmem:[#allocation3 + $0x108] sm:$0xff]
    %v206 = vld [vmem:[#allocation3 + $0x110] sm:$0xff]
    %v207 = vld [vmem:[#allocation3 + $0x118] sm:$0xff]
    %v208 = vld [vmem:[#allocation3 + $0x120] sm:$0xff]
    %v209 = vld [vmem:[#allocation3 + $0x128] sm:$0xff]
    %v210 = vld [vmem:[#allocation3 + $0x130] sm:$0xff]
    %v211 = vld [vmem:[#allocation3 + $0x138] sm:$0xff]
    %v212 = vld [vmem:[#allocation3 + $0x140] sm:$0xff]
    %v213 = vld [vmem:[#allocation3 + $0x148] sm:$0xff]
    %v214 = vld [vmem:[#allocation3 + $0x150] sm:$0xff]
    %v215 = vld [vmem:[#allocation3 + $0x158] sm:$0xff]
    %v216 = vld [vmem:[#allocation3 + $0x160] sm:$0xff]
    %v217 = vld [vmem:[#allocation3 + $0x168] sm:$0xff]
    %v218 = vld [vmem:[#allocation3 + $0x170] sm:$0xff]
    %v219 = vld [vmem:[#allocation3 + $0x178] sm:$0xff]
    %v220 = vld [vmem:[#allocation3 + $0x180] sm:$0xff]
    %v221 = vld [vmem:[#allocation3 + $0x188] sm:$0xff]
    %v222 = vld [vmem:[#allocation3 + $0x190] sm:$0xff]
    %v223 = vld [vmem:[#allocation3 + $0x198] sm:$0xff]
    %v224 = vld [vmem:[#allocation3 + $0x1a0] sm:$0xff]
    %v225 = vld [vmem:[#allocation3 + $0x1a8] sm:$0xff]
    %v226 = vld [vmem:[#allocation3 + $0x1b0] sm:$0xff]
    %v227 = vld [vmem:[#allocation3 + $0x1b8] sm:$0xff]
    %v228 = vld [vmem:[#allocation3 + $0x1c0] sm:$0xff]
    %v229 = vld [vmem:[#allocation3 + $0x1c8] sm:$0xff]
    %v230 = vld [vmem:[#allocation3 + $0x1d0] sm:$0xff]
    %v231 = vld [vmem:[#allocation3 + $0x1d8] sm:$0xff]
    %v232 = vld [vmem:[#allocation3 + $0x1e0] sm:$0xff]
    %v233 = vld [vmem:[#allocation3 + $0x1e8] sm:$0xff]
    %v234 = vld [vmem:[#allocation3 + $0x1f0] sm:$0xff]
    %v235 = vld [vmem:[#allocation3 + $0x1f8] sm:$0xff]
    %s236 = scalar_lea.vmem [#allocation2], 32
    %237 = vst [vmem:[%s236 + $0x8] sm:$0xff] %v172
    %238 = vst [vmem:[%s236 + $0x10] sm:$0xff] %v173
    %239 = vst [vmem:[%s236 + $0x28] sm:$0xff] %v174
    %240 = vst [vmem:[%s236 + $0x30] sm:$0xff] %v175
    %241 = vst [vmem:[%s236 + $0x48] sm:$0xff] %v176
    %242 = vst [vmem:[%s236 + $0x50] sm:$0xff] %v177
    %243 = vst [vmem:[%s236 + $0x68] sm:$0xff] %v178
    %244 = vst [vmem:[%s236 + $0x70] sm:$0xff] %v179
    %245 = vst [vmem:[%s236 + $0x88] sm:$0xff] %v180
    %246 = vst [vmem:[%s236 + $0x90] sm:$0xff] %v181
    %247 = vst [vmem:[%s236 + $0xa8] sm:$0xff] %v182
    %248 = vst [vmem:[%s236 + $0xb0] sm:$0xff] %v183
    %249 = vst [vmem:[%s236 + $0xc8] sm:$0xff] %v184
    %250 = vst [vmem:[%s236 + $0xd0] sm:$0xff] %v185
    %251 = vst [vmem:[%s236 + $0xe8] sm:$0xff] %v186
    %252 = vst [vmem:[%s236 + $0xf0] sm:$0xff] %v187
    %253 = vst [vmem:[%s236 + $0x108] sm:$0xff] %v188
    %254 = vst [vmem:[%s236 + $0x110] sm:$0xff] %v189
    %255 = vst [vmem:[%s236 + $0x128] sm:$0xff] %v190
    %256 = vst [vmem:[%s236 + $0x130] sm:$0xff] %v191
    %257 = vst [vmem:[%s236 + $0x148] sm:$0xff] %v192
    %258 = vst [vmem:[%s236 + $0x150] sm:$0xff] %v193
    %259 = vst [vmem:[%s236 + $0x168] sm:$0xff] %v194
    %260 = vst [vmem:[%s236 + $0x170] sm:$0xff] %v195
    %261 = vst [vmem:[%s236 + $0x188] sm:$0xff] %v196
    %262 = vst [vmem:[%s236 + $0x190] sm:$0xff] %v197
    %263 = vst [vmem:[%s236 + $0x1a8] sm:$0xff] %v198
    %264 = vst [vmem:[%s236 + $0x1b0] sm:$0xff] %v199
    %265 = vst [vmem:[%s236 + $0x1c8] sm:$0xff] %v200
    %266 = vst [vmem:[%s236 + $0x1d0] sm:$0xff] %v201
    %267 = vst [vmem:[%s236 + $0x1e8] sm:$0xff] %v202
    %268 = vst [vmem:[%s236 + $0x1f0] sm:$0xff] %v203
    %269 = vst [vmem:[%s236 + $0x248] sm:$0xff] %v204
    %270 = vst [vmem:[%s236 + $0x250] sm:$0xff] %v205
    %271 = vst [vmem:[%s236 + $0x268] sm:$0xff] %v206
    %272 = vst [vmem:[%s236 + $0x270] sm:$0xff] %v207
    %273 = vst [vmem:[%s236 + $0x288] sm:$0xff] %v208
    %274 = vst [vmem:[%s236 + $0x290] sm:$0xff] %v209
    %275 = vst [vmem:[%s236 + $0x2a8] sm:$0xff] %v210
    %276 = vst [vmem:[%s236 + $0x2b0] sm:$0xff] %v211
    %277 = vst [vmem:[%s236 + $0x2c8] sm:$0xff] %v212
    %278 = vst [vmem:[%s236 + $0x2d0] sm:$0xff] %v213
    %279 = vst [vmem:[%s236 + $0x2e8] sm:$0xff] %v214
    %280 = vst [vmem:[%s236 + $0x2f0] sm:$0xff] %v215
    %281 = vst [vmem:[%s236 + $0x308] sm:$0xff] %v216
    %282 = vst [vmem:[%s236 + $0x310] sm:$0xff] %v217
    %283 = vst [vmem:[%s236 + $0x328] sm:$0xff] %v218
    %284 = vst [vmem:[%s236 + $0x330] sm:$0xff] %v219
    %285 = vst [vmem:[%s236 + $0x348] sm:$0xff] %v220
    %286 = vst [vmem:[%s236 + $0x350] sm:$0xff] %v221
    %287 = vst [vmem:[%s236 + $0x368] sm:$0xff] %v222
    %288 = vst [vmem:[%s236 + $0x370] sm:$0xff] %v223
    %289 = vst [vmem:[%s236 + $0x388] sm:$0xff] %v224
    %290 = vst [vmem:[%s236 + $0x390] sm:$0xff] %v225
    %291 = vst [vmem:[%s236 + $0x3a8] sm:$0xff] %v226
    %292 = vst [vmem:[%s236 + $0x3b0] sm:$0xff] %v227
    %293 = vst [vmem:[%s236 + $0x3c8] sm:$0xff] %v228
    %294 = vst [vmem:[%s236 + $0x3d0] sm:$0xff] %v229
    %295 = vst [vmem:[%s236 + $0x3e8] sm:$0xff] %v230
    %296 = vst [vmem:[%s236 + $0x3f0] sm:$0xff] %v231
    %297 = vst [vmem:[%s236 + $0x408] sm:$0xff] %v232
    %298 = vst [vmem:[%s236 + $0x410] sm:$0xff] %v233
    %299 = vst [vmem:[%s236 + $0x428] sm:$0xff] %v234
    %300 = vst [vmem:[%s236 + $0x430] sm:$0xff] %v235
    %v301 = vld [vmem:[#allocation2 + $0x7] sm:$0xff]
    %v302 = vld [vmem:[#allocation2 + $0xf] sm:$0xff]
    %v303 = vld [vmem:[#allocation2 + $0x27] sm:$0xff]
    %v304 = vld [vmem:[#allocation2 + $0x2f] sm:$0xff]
    %v305 = vld [vmem:[#allocation2 + $0x47] sm:$0xff]
    %v306 = vld [vmem:[#allocation2 + $0x4f] sm:$0xff]
    %v307 = vld [vmem:[#allocation2 + $0x67] sm:$0xff]
    %v308 = vld [vmem:[#allocation2 + $0x6f] sm:$0xff]
    %v309 = vld [vmem:[#allocation2 + $0x87] sm:$0xff]
    %v310 = vld [vmem:[#allocation2 + $0x8f] sm:$0xff]
    %v311 = vld [vmem:[#allocation2 + $0xa7] sm:$0xff]
    %v312 = vld [vmem:[#allocation2 + $0xaf] sm:$0xff]
    %v313 = vld [vmem:[#allocation2 + $0xc7] sm:$0xff]
    %v314 = vld [vmem:[#allocation2 + $0xcf] sm:$0xff]
    %v315 = vld [vmem:[#allocation2 + $0xe7] sm:$0xff]
    %v316 = vld [vmem:[#allocation2 + $0xef] sm:$0xff]
    %v317 = vld [vmem:[#allocation2 + $0x107] sm:$0xff]
    %v318 = vld [vmem:[#allocation2 + $0x10f] sm:$0xff]
    %v319 = vld [vmem:[#allocation2 + $0x127] sm:$0xff]
    %v320 = vld [vmem:[#allocation2 + $0x12f] sm:$0xff]
    %v321 = vld [vmem:[#allocation2 + $0x147] sm:$0xff]
    %v322 = vld [vmem:[#allocation2 + $0x14f] sm:$0xff]
    %v323 = vld [vmem:[#allocation2 + $0x167] sm:$0xff]
    %v324 = vld [vmem:[#allocation2 + $0x16f] sm:$0xff]
    %v325 = vld [vmem:[#allocation2 + $0x187] sm:$0xff]
    %v326 = vld [vmem:[#allocation2 + $0x18f] sm:$0xff]
    %v327 = vld [vmem:[#allocation2 + $0x1a7] sm:$0xff]
    %v328 = vld [vmem:[#allocation2 + $0x1af] sm:$0xff]
    %v329 = vld [vmem:[#allocation2 + $0x1c7] sm:$0xff]
    %v330 = vld [vmem:[#allocation2 + $0x1cf] sm:$0xff]
    %v331 = vld [vmem:[#allocation2 + $0x1e7] sm:$0xff]
    %v332 = vld [vmem:[#allocation2 + $0x1ef] sm:$0xff]
    %v333 = vld [vmem:[#allocation2 + $0x207] sm:$0xff]
    %v334 = vld [vmem:[#allocation2 + $0x20f] sm:$0xff]
    %v335 = vld [vmem:[#allocation2 + $0x227] sm:$0xff]
    %v336 = vld [vmem:[#allocation2 + $0x22f] sm:$0xff]
    %v337 = vld [vmem:[#allocation2 + $0x247] sm:$0xff]
    %v338 = vld [vmem:[#allocation2 + $0x24f] sm:$0xff]
    %v339 = vld [vmem:[#allocation2 + $0x267] sm:$0xff]
    %v340 = vld [vmem:[#allocation2 + $0x26f] sm:$0xff]
    %v341 = vld [vmem:[#allocation2 + $0x287] sm:$0xff]
    %v342 = vld [vmem:[#allocation2 + $0x28f] sm:$0xff]
    %v343 = vld [vmem:[#allocation2 + $0x2a7] sm:$0xff]
    %v344 = vld [vmem:[#allocation2 + $0x2af] sm:$0xff]
    %v345 = vld [vmem:[#allocation2 + $0x2c7] sm:$0xff]
    %v346 = vld [vmem:[#allocation2 + $0x2cf] sm:$0xff]
    %v347 = vld [vmem:[#allocation2 + $0x2e7] sm:$0xff]
    %v348 = vld [vmem:[#allocation2 + $0x2ef] sm:$0xff]
    %v349 = vld [vmem:[#allocation2 + $0x307] sm:$0xff]
    %v350 = vld [vmem:[#allocation2 + $0x30f] sm:$0xff]
    %v351 = vld [vmem:[#allocation2 + $0x327] sm:$0xff]
    %v352 = vld [vmem:[#allocation2 + $0x32f] sm:$0xff]
    %v353 = vld [vmem:[#allocation2 + $0x347] sm:$0xff]
    %v354 = vld [vmem:[#allocation2 + $0x34f] sm:$0xff]
    %v355 = vld [vmem:[#allocation2 + $0x367] sm:$0xff]
    %v356 = vld [vmem:[#allocation2 + $0x36f] sm:$0xff]
    %v357 = vld [vmem:[#allocation2 + $0x387] sm:$0xff]
    %v358 = vld [vmem:[#allocation2 + $0x38f] sm:$0xff]
    %v359 = vld [vmem:[#allocation2 + $0x3a7] sm:$0xff]
    %v360 = vld [vmem:[#allocation2 + $0x3af] sm:$0xff]
    %v361 = vld [vmem:[#allocation2 + $0x3c7] sm:$0xff]
    %v362 = vld [vmem:[#allocation2 + $0x3cf] sm:$0xff]
    %v363 = vld [vmem:[#allocation2 + $0x3e7] sm:$0xff]
    %v364 = vld [vmem:[#allocation2 + $0x3ef] sm:$0xff]
    %v365 = vld [vmem:[#allocation2 + $0x407] sm:$0xff]
    %v366 = vld [vmem:[#allocation2 + $0x40f] sm:$0xff]
    %v367 = vld [vmem:[#allocation2 + $0x427] sm:$0xff]
    %v368 = vld [vmem:[#allocation2 + $0x42f] sm:$0xff]
    %v369 = vld [vmem:[#allocation2 + $0x447] sm:$0xff]
    %v370 = vld [vmem:[#allocation2 + $0x44f] sm:$0xff]
    %v371 = vld [vmem:[#allocation2 + $0x467] sm:$0xff]
    %v372 = vld [vmem:[#allocation2 + $0x46f] sm:$0xff]
    %v373 = vld [vmem:[#allocation2 + $0x8] sm:$0xff]
    %v374 = vld [vmem:[#allocation2 + $0x10] sm:$0xff]
    %v375 = vld [vmem:[#allocation2 + $0x28] sm:$0xff]
    %v376 = vld [vmem:[#allocation2 + $0x30] sm:$0xff]
    %v377 = vld [vmem:[#allocation2 + $0x48] sm:$0xff]
    %v378 = vld [vmem:[#allocation2 + $0x50] sm:$0xff]
    %v379 = vld [vmem:[#allocation2 + $0x68] sm:$0xff]
    %v380 = vld [vmem:[#allocation2 + $0x70] sm:$0xff]
    %v381 = vld [vmem:[#allocation2 + $0x88] sm:$0xff]
    %v382 = vld [vmem:[#allocation2 + $0x90] sm:$0xff]
    %v383 = vld [vmem:[#allocation2 + $0xa8] sm:$0xff]
    %v384 = vld [vmem:[#allocation2 + $0xb0] sm:$0xff]
    %v385 = vld [vmem:[#allocation2 + $0xc8] sm:$0xff]
    %v386 = vld [vmem:[#allocation2 + $0xd0] sm:$0xff]
    %v387 = vld [vmem:[#allocation2 + $0xe8] sm:$0xff]
    %v388 = vld [vmem:[#allocation2 + $0xf0] sm:$0xff]
    %v389 = vld [vmem:[#allocation2 + $0x108] sm:$0xff]
    %v390 = vld [vmem:[#allocation2 + $0x110] sm:$0xff]
    %v391 = vld [vmem:[#allocation2 + $0x128] sm:$0xff]
    %v392 = vld [vmem:[#allocation2 + $0x130] sm:$0xff]
    %v393 = vld [vmem:[#allocation2 + $0x148] sm:$0xff]
    %v394 = vld [vmem:[#allocation2 + $0x150] sm:$0xff]
    %v395 = vld [vmem:[#allocation2 + $0x168] sm:$0xff]
    %v396 = vld [vmem:[#allocation2 + $0x170] sm:$0xff]
    %v397 = vld [vmem:[#allocation2 + $0x188] sm:$0xff]
    %v398 = vld [vmem:[#allocation2 + $0x190] sm:$0xff]
    %v399 = vld [vmem:[#allocation2 + $0x1a8] sm:$0xff]
    %v400 = vld [vmem:[#allocation2 + $0x1b0] sm:$0xff]
    %v401 = vld [vmem:[#allocation2 + $0x1c8] sm:$0xff]
    %v402 = vld [vmem:[#allocation2 + $0x1d0] sm:$0xff]
    %v403 = vld [vmem:[#allocation2 + $0x1e8] sm:$0xff]
    %v404 = vld [vmem:[#allocation2 + $0x1f0] sm:$0xff]
    %v405 = vld [vmem:[#allocation2 + $0x208] sm:$0xff]
    %v406 = vld [vmem:[#allocation2 + $0x210] sm:$0xff]
    %v407 = vld [vmem:[#allocation2 + $0x228] sm:$0xff]
    %v408 = vld [vmem:[#allocation2 + $0x230] sm:$0xff]
    %v409 = vld [vmem:[#allocation2 + $0x248] sm:$0xff]
    %v410 = vld [vmem:[#allocation2 + $0x250] sm:$0xff]
    %v411 = vld [vmem:[#allocation2 + $0x268] sm:$0xff]
    %v412 = vld [vmem:[#allocation2 + $0x270] sm:$0xff]
    %v413 = vld [vmem:[#allocation2 + $0x288] sm:$0xff]
    %v414 = vld [vmem:[#allocation2 + $0x290] sm:$0xff]
    %v415 = vld [vmem:[#allocation2 + $0x2a8] sm:$0xff]
    %v416 = vld [vmem:[#allocation2 + $0x2b0] sm:$0xff]
    %v417 = vld [vmem:[#allocation2 + $0x2c8] sm:$0xff]
    %v418 = vld [vmem:[#allocation2 + $0x2d0] sm:$0xff]
    %v419 = vld [vmem:[#allocation2 + $0x2e8] sm:$0xff]
    %v420 = vld [vmem:[#allocation2 + $0x2f0] sm:$0xff]
    %v421 = vld [vmem:[#allocation2 + $0x308] sm:$0xff]
    %v422 = vld [vmem:[#allocation2 + $0x310] sm:$0xff]
    %v423 = vld [vmem:[#allocation2 + $0x328] sm:$0xff]
    %v424 = vld [vmem:[#allocation2 + $0x330] sm:$0xff]
    %v425 = vld [vmem:[#allocation2 + $0x348] sm:$0xff]
    %v426 = vld [vmem:[#allocation2 + $0x350] sm:$0xff]
    %v427 = vld [vmem:[#allocation2 + $0x368] sm:$0xff]
    %v428 = vld [vmem:[#allocation2 + $0x370] sm:$0xff]
    %v429 = vld [vmem:[#allocation2 + $0x388] sm:$0xff]
    %v430 = vld [vmem:[#allocation2 + $0x390] sm:$0xff]
    %v431 = vld [vmem:[#allocation2 + $0x3a8] sm:$0xff]
    %v432 = vld [vmem:[#allocation2 + $0x3b0] sm:$0xff]
    %v433 = vld [vmem:[#allocation2 + $0x3c8] sm:$0xff]
    %v434 = vld [vmem:[#allocation2 + $0x3d0] sm:$0xff]
    %v435 = vld [vmem:[#allocation2 + $0x3e8] sm:$0xff]
    %v436 = vld [vmem:[#allocation2 + $0x3f0] sm:$0xff]
    %v437 = vld [vmem:[#allocation2 + $0x408] sm:$0xff]
    %v438 = vld [vmem:[#allocation2 + $0x410] sm:$0xff]
    %v439 = vld [vmem:[#allocation2 + $0x428] sm:$0xff]
    %v440 = vld [vmem:[#allocation2 + $0x430] sm:$0xff]
    %v441 = vld [vmem:[#allocation2 + $0x448] sm:$0xff]
    %v442 = vld [vmem:[#allocation2 + $0x450] sm:$0xff]
    %v443 = vld [vmem:[#allocation2 + $0x468] sm:$0xff]
    %v444 = vld [vmem:[#allocation2 + $0x470] sm:$0xff]
    %v445 = vld [vmem:[#allocation2 + $0x9] sm:$0xff]
    %v446 = vld [vmem:[#allocation2 + $0x11] sm:$0xff]
    %v447 = vld [vmem:[#allocation2 + $0x29] sm:$0xff]
    %v448 = vld [vmem:[#allocation2 + $0x31] sm:$0xff]
    %v449 = vld [vmem:[#allocation2 + $0x49] sm:$0xff]
    %v450 = vld [vmem:[#allocation2 + $0x51] sm:$0xff]
    %v451 = vld [vmem:[#allocation2 + $0x69] sm:$0xff]
    %v452 = vld [vmem:[#allocation2 + $0x71] sm:$0xff]
    %v453 = vld [vmem:[#allocation2 + $0x89] sm:$0xff]
    %v454 = vld [vmem:[#allocation2 + $0x91] sm:$0xff]
    %v455 = vld [vmem:[#allocation2 + $0xa9] sm:$0xff]
    %v456 = vld [vmem:[#allocation2 + $0xb1] sm:$0xff]
    %v457 = vld [vmem:[#allocation2 + $0xc9] sm:$0xff]
    %v458 = vld [vmem:[#allocation2 + $0xd1] sm:$0xff]
    %v459 = vld [vmem:[#allocation2 + $0xe9] sm:$0xff]
    %v460 = vld [vmem:[#allocation2 + $0xf1] sm:$0xff]
    %v461 = vld [vmem:[#allocation2 + $0x109] sm:$0xff]
    %v462 = vld [vmem:[#allocation2 + $0x111] sm:$0xff]
    %v463 = vld [vmem:[#allocation2 + $0x129] sm:$0xff]
    %v464 = vld [vmem:[#allocation2 + $0x131] sm:$0xff]
    %v465 = vld [vmem:[#allocation2 + $0x149] sm:$0xff]
    %v466 = vld [vmem:[#allocation2 + $0x151] sm:$0xff]
    %v467 = vld [vmem:[#allocation2 + $0x169] sm:$0xff]
    %v468 = vld [vmem:[#allocation2 + $0x171] sm:$0xff]
    %v469 = vld [vmem:[#allocation2 + $0x189] sm:$0xff]
    %v470 = vld [vmem:[#allocation2 + $0x191] sm:$0xff]
    %v471 = vld [vmem:[#allocation2 + $0x1a9] sm:$0xff]
    %v472 = vld [vmem:[#allocation2 + $0x1b1] sm:$0xff]
    %v473 = vld [vmem:[#allocation2 + $0x1c9] sm:$0xff]
    %v474 = vld [vmem:[#allocation2 + $0x1d1] sm:$0xff]
    %v475 = vld [vmem:[#allocation2 + $0x1e9] sm:$0xff]
    %v476 = vld [vmem:[#allocation2 + $0x1f1] sm:$0xff]
    %v477 = vld [vmem:[#allocation2 + $0x209] sm:$0xff]
    %v478 = vld [vmem:[#allocation2 + $0x211] sm:$0xff]
    %v479 = vld [vmem:[#allocation2 + $0x229] sm:$0xff]
    %v480 = vld [vmem:[#allocation2 + $0x231] sm:$0xff]
    %v481 = vld [vmem:[#allocation2 + $0x249] sm:$0xff]
    %v482 = vld [vmem:[#allocation2 + $0x251] sm:$0xff]
    %v483 = vld [vmem:[#allocation2 + $0x269] sm:$0xff]
    %v484 = vld [vmem:[#allocation2 + $0x271] sm:$0xff]
    %v485 = vld [vmem:[#allocation2 + $0x289] sm:$0xff]
    %v486 = vld [vmem:[#allocation2 + $0x291] sm:$0xff]
    %v487 = vld [vmem:[#allocation2 + $0x2a9] sm:$0xff]
    %v488 = vld [vmem:[#allocation2 + $0x2b1] sm:$0xff]
    %v489 = vld [vmem:[#allocation2 + $0x2c9] sm:$0xff]
    %v490 = vld [vmem:[#allocation2 + $0x2d1] sm:$0xff]
    %v491 = vld [vmem:[#allocation2 + $0x2e9] sm:$0xff]
    %v492 = vld [vmem:[#allocation2 + $0x2f1] sm:$0xff]
    %v493 = vld [vmem:[#allocation2 + $0x309] sm:$0xff]
    %v494 = vld [vmem:[#allocation2 + $0x311] sm:$0xff]
    %v495 = vld [vmem:[#allocation2 + $0x329] sm:$0xff]
    %v496 = vld [vmem:[#allocation2 + $0x331] sm:$0xff]
    %v497 = vld [vmem:[#allocation2 + $0x349] sm:$0xff]
    %v498 = vld [vmem:[#allocation2 + $0x351] sm:$0xff]
    %v499 = vld [vmem:[#allocation2 + $0x369] sm:$0xff]
    %v500 = vld [vmem:[#allocation2 + $0x371] sm:$0xff]
    %v501 = vld [vmem:[#allocation2 + $0x389] sm:$0xff]
    %v502 = vld [vmem:[#allocation2 + $0x391] sm:$0xff]
    %v503 = vld [vmem:[#allocation2 + $0x3a9] sm:$0xff]
    %v504 = vld [vmem:[#allocation2 + $0x3b1] sm:$0xff]
    %v505 = vld [vmem:[#allocation2 + $0x3c9] sm:$0xff]
    %v506 = vld [vmem:[#allocation2 + $0x3d1] sm:$0xff]
    %v507 = vld [vmem:[#allocation2 + $0x3e9] sm:$0xff]
    %v508 = vld [vmem:[#allocation2 + $0x3f1] sm:$0xff]
    %v509 = vld [vmem:[#allocation2 + $0x409] sm:$0xff]
    %v510 = vld [vmem:[#allocation2 + $0x411] sm:$0xff]
    %v511 = vld [vmem:[#allocation2 + $0x429] sm:$0xff]
    %v512 = vld [vmem:[#allocation2 + $0x431] sm:$0xff]
    %v513 = vld [vmem:[#allocation2 + $0x449] sm:$0xff]
    %v514 = vld [vmem:[#allocation2 + $0x451] sm:$0xff]
    %v515 = vld [vmem:[#allocation2 + $0x469] sm:$0xff]
    %v516 = vld [vmem:[#allocation2 + $0x471] sm:$0xff]
    %v517 = vld [vmem:[#allocation6] sm:$0xff]
    %v518 = vld [vmem:[#allocation6 + $0x8] sm:$0xff]
    %v519 = vld [vmem:[#allocation6 + $0x10] sm:$0xff]
    %v520 = vld [vmem:[#allocation6 + $0x18] sm:$0xff]
    %v521 = vld [vmem:[#allocation6 + $0x20] sm:$0xff]
    %v522 = vld [vmem:[#allocation6 + $0x28] sm:$0xff]
    %v523 = vld [vmem:[#allocation6 + $0x30] sm:$0xff]
    %v524 = vld [vmem:[#allocation6 + $0x38] sm:$0xff]
    %v525 = vld [vmem:[#allocation6 + $0x40] sm:$0xff]
    %v526 = vld [vmem:[#allocation6 + $0x48] sm:$0xff]
    %v527 = vld [vmem:[#allocation6 + $0x50] sm:$0xff]
    %v528 = vld [vmem:[#allocation6 + $0x58] sm:$0xff]
    %v529 = vld [vmem:[#allocation6 + $0x60] sm:$0xff]
    %v530 = vld [vmem:[#allocation6 + $0x68] sm:$0xff]
    %v531 = vld [vmem:[#allocation6 + $0x70] sm:$0xff]
    %v532 = vld [vmem:[#allocation6 + $0x78] sm:$0xff]
    %v533 = vld [vmem:[#allocation6 + $0x80] sm:$0xff]
    %v534 = vld [vmem:[#allocation6 + $0x88] sm:$0xff]
    %v535 = vld [vmem:[#allocation6 + $0x90] sm:$0xff]
    %v536 = vld [vmem:[#allocation6 + $0x98] sm:$0xff]
    %v537 = vld [vmem:[#allocation6 + $0xa0] sm:$0xff]
    %v538 = vld [vmem:[#allocation6 + $0xa8] sm:$0xff]
    %v539 = vld [vmem:[#allocation6 + $0xb0] sm:$0xff]
    %v540 = vld [vmem:[#allocation6 + $0xb8] sm:$0xff]
    %v541 = vld [vmem:[#allocation6 + $0xc0] sm:$0xff]
    %v542 = vld [vmem:[#allocation6 + $0xc8] sm:$0xff]
    %v543 = vld [vmem:[#allocation6 + $0xd0] sm:$0xff]
    %v544 = vld [vmem:[#allocation6 + $0xd8] sm:$0xff]
    %v545 = vld [vmem:[#allocation6 + $0xe0] sm:$0xff]
    %v546 = vld [vmem:[#allocation6 + $0xe8] sm:$0xff]
    %v547 = vld [vmem:[#allocation6 + $0xf0] sm:$0xff]
    %v548 = vld [vmem:[#allocation6 + $0xf8] sm:$0xff]
    %v549 = vld [vmem:[#allocation6 + $0x100] sm:$0xff]
    %v550 = vld [vmem:[#allocation6 + $0x108] sm:$0xff]
    %v551 = vld [vmem:[#allocation6 + $0x110] sm:$0xff]
    %v552 = vld [vmem:[#allocation6 + $0x118] sm:$0xff]
    %v553 = vld [vmem:[#allocation6 + $0x120] sm:$0xff]
    %v554 = vld [vmem:[#allocation6 + $0x128] sm:$0xff]
    %v555 = vld [vmem:[#allocation6 + $0x130] sm:$0xff]
    %v556 = vld [vmem:[#allocation6 + $0x138] sm:$0xff]
    %v557 = vld [vmem:[#allocation6 + $0x140] sm:$0xff]
    %v558 = vld [vmem:[#allocation6 + $0x148] sm:$0xff]
    %v559 = vld [vmem:[#allocation6 + $0x150] sm:$0xff]
    %v560 = vld [vmem:[#allocation6 + $0x158] sm:$0xff]
    %v561 = vld [vmem:[#allocation6 + $0x160] sm:$0xff]
    %v562 = vld [vmem:[#allocation6 + $0x168] sm:$0xff]
    %v563 = vld [vmem:[#allocation6 + $0x170] sm:$0xff]
    %v564 = vld [vmem:[#allocation6 + $0x178] sm:$0xff]
    %v565 = vld [vmem:[#allocation6 + $0x180] sm:$0xff]
    %v566 = vld [vmem:[#allocation6 + $0x188] sm:$0xff]
    %v567 = vld [vmem:[#allocation6 + $0x190] sm:$0xff]
    %v568 = vld [vmem:[#allocation6 + $0x198] sm:$0xff]
    %v569 = vld [vmem:[#allocation6 + $0x1a0] sm:$0xff]
    %v570 = vld [vmem:[#allocation6 + $0x1a8] sm:$0xff]
    %v571 = vld [vmem:[#allocation6 + $0x1b0] sm:$0xff]
    %v572 = vld [vmem:[#allocation6 + $0x1b8] sm:$0xff]
    %v573 = vld [vmem:[#allocation6 + $0x1c0] sm:$0xff]
    %v574 = vld [vmem:[#allocation6 + $0x1c8] sm:$0xff]
    %v575 = vld [vmem:[#allocation6 + $0x1d0] sm:$0xff]
    %v576 = vld [vmem:[#allocation6 + $0x1d8] sm:$0xff]
    %v577 = vld [vmem:[#allocation6 + $0x1e0] sm:$0xff]
    %v578 = vld [vmem:[#allocation6 + $0x1e8] sm:$0xff]
    %v579 = vld [vmem:[#allocation6 + $0x1f0] sm:$0xff]
    %v580 = vld [vmem:[#allocation6 + $0x1f8] sm:$0xff]
    %v581 = vld [vmem:[#allocation6 + $0x200] sm:$0xff]
    %v582 = vld [vmem:[#allocation6 + $0x208] sm:$0xff]
    %v583 = vld [vmem:[#allocation6 + $0x210] sm:$0xff]
    %v584 = vld [vmem:[#allocation6 + $0x218] sm:$0xff]
    %v585 = vld [vmem:[#allocation6 + $0x220] sm:$0xff]
    %v586 = vld [vmem:[#allocation6 + $0x228] sm:$0xff]
    %v587 = vld [vmem:[#allocation6 + $0x230] sm:$0xff]
    %v588 = vld [vmem:[#allocation6 + $0x238] sm:$0xff]
    %v589 = vld [vmem:[#allocation6 + $0x240] sm:$0xff]
    %v590 = vld [vmem:[#allocation6 + $0x248] sm:$0xff]
    %v591 = vld [vmem:[#allocation6 + $0x250] sm:$0xff]
    %v592 = vld [vmem:[#allocation6 + $0x258] sm:$0xff]
    %v593 = vld [vmem:[#allocation6 + $0x260] sm:$0xff]
    %v594 = vld [vmem:[#allocation6 + $0x268] sm:$0xff]
    %v595 = vld [vmem:[#allocation6 + $0x270] sm:$0xff]
    %v596 = vld [vmem:[#allocation6 + $0x278] sm:$0xff]
    %v597 = vld [vmem:[#allocation6 + $0x280] sm:$0xff]
    %v598 = vld [vmem:[#allocation6 + $0x288] sm:$0xff]
    %v599 = vld [vmem:[#allocation6 + $0x290] sm:$0xff]
    %v600 = vld [vmem:[#allocation6 + $0x298] sm:$0xff]
    %v601 = vld [vmem:[#allocation6 + $0x2a0] sm:$0xff]
    %v602 = vld [vmem:[#allocation6 + $0x2a8] sm:$0xff]
    %v603 = vld [vmem:[#allocation6 + $0x2b0] sm:$0xff]
    %v604 = vld [vmem:[#allocation6 + $0x2b8] sm:$0xff]
    %v605 = vld [vmem:[#allocation6 + $0x2c0] sm:$0xff]
    %v606 = vld [vmem:[#allocation6 + $0x2c8] sm:$0xff]
    %v607 = vld [vmem:[#allocation6 + $0x2d0] sm:$0xff]
    %v608 = vld [vmem:[#allocation6 + $0x2d8] sm:$0xff]
    %v609 = vld [vmem:[#allocation6 + $0x2e0] sm:$0xff]
    %v610 = vld [vmem:[#allocation6 + $0x2e8] sm:$0xff]
    %v611 = vld [vmem:[#allocation6 + $0x2f0] sm:$0xff]
    %v612 = vld [vmem:[#allocation6 + $0x2f8] sm:$0xff]
    %v613 = vld [vmem:[#allocation6 + $0x300] sm:$0xff]
    %v614 = vld [vmem:[#allocation6 + $0x308] sm:$0xff]
    %v615 = vld [vmem:[#allocation6 + $0x310] sm:$0xff]
    %v616 = vld [vmem:[#allocation6 + $0x318] sm:$0xff]
    %v617 = vld [vmem:[#allocation6 + $0x320] sm:$0xff]
    %v618 = vld [vmem:[#allocation6 + $0x328] sm:$0xff]
    %v619 = vld [vmem:[#allocation6 + $0x330] sm:$0xff]
    %v620 = vld [vmem:[#allocation6 + $0x338] sm:$0xff]
    %v621 = vld [vmem:[#allocation6 + $0x340] sm:$0xff]
    %v622 = vld [vmem:[#allocation6 + $0x348] sm:$0xff]
    %v623 = vld [vmem:[#allocation6 + $0x350] sm:$0xff]
    %v624 = vld [vmem:[#allocation6 + $0x358] sm:$0xff]
    %v625 = vld [vmem:[#allocation6 + $0x360] sm:$0xff]
    %v626 = vld [vmem:[#allocation6 + $0x368] sm:$0xff]
    %v627 = vld [vmem:[#allocation6 + $0x370] sm:$0xff]
    %v628 = vld [vmem:[#allocation6 + $0x378] sm:$0xff]
    %v629 = vld [vmem:[#allocation6 + $0x380] sm:$0xff]
    %v630 = vld [vmem:[#allocation6 + $0x388] sm:$0xff]
    %v631 = vld [vmem:[#allocation6 + $0x390] sm:$0xff]
    %v632 = vld [vmem:[#allocation6 + $0x398] sm:$0xff]
    %v633 = vld [vmem:[#allocation6 + $0x3a0] sm:$0xff]
    %v634 = vld [vmem:[#allocation6 + $0x3a8] sm:$0xff]
    %v635 = vld [vmem:[#allocation6 + $0x3b0] sm:$0xff]
    %v636 = vld [vmem:[#allocation6 + $0x3b8] sm:$0xff]
    %v637 = vld [vmem:[#allocation6 + $0x3c0] sm:$0xff]
    %v638 = vld [vmem:[#allocation6 + $0x3c8] sm:$0xff]
    %v639 = vld [vmem:[#allocation6 + $0x3d0] sm:$0xff]
    %v640 = vld [vmem:[#allocation6 + $0x3d8] sm:$0xff]
    %v641 = vld [vmem:[#allocation6 + $0x3e0] sm:$0xff]
    %v642 = vld [vmem:[#allocation6 + $0x3e8] sm:$0xff]
    %v643 = vld [vmem:[#allocation6 + $0x3f0] sm:$0xff]
    %v644 = vld [vmem:[#allocation6 + $0x3f8] sm:$0xff]
    %v645 = vld [vmem:[#allocation6 + $0x400] sm:$0xff]
    %v646 = vld [vmem:[#allocation6 + $0x408] sm:$0xff]
    %v647 = vld [vmem:[#allocation6 + $0x410] sm:$0xff]
    %v648 = vld [vmem:[#allocation6 + $0x418] sm:$0xff]
    %v649 = vld [vmem:[#allocation6 + $0x420] sm:$0xff]
    %v650 = vld [vmem:[#allocation6 + $0x428] sm:$0xff]
    %v651 = vld [vmem:[#allocation6 + $0x430] sm:$0xff]
    %v652 = vld [vmem:[#allocation6 + $0x438] sm:$0xff]
    %v653 = vld [vmem:[#allocation6 + $0x440] sm:$0xff]
    %v654 = vld [vmem:[#allocation6 + $0x448] sm:$0xff]
    %v655 = vld [vmem:[#allocation6 + $0x450] sm:$0xff]
    %v656 = vld [vmem:[#allocation6 + $0x458] sm:$0xff]
    %v657 = vld [vmem:[#allocation6 + $0x460] sm:$0xff]
    %v658 = vld [vmem:[#allocation6 + $0x468] sm:$0xff]
    %v659 = vld [vmem:[#allocation6 + $0x470] sm:$0xff]
    %v660 = vld [vmem:[#allocation6 + $0x478] sm:$0xff]
    %661 = vmatprep.subr.mxu0 0.0
    %662 = vmatpush1.msra.mxu0 %v517
    %663 = vmatprep.subr.mxu0 0.0
    %664 = vmatpush1.msra.mxu0 %v518
    %665 = vmatprep.subr.mxu0 0.0
    %666 = vmatpush1.msra.mxu0 %v519
    %667 = vmatprep.subr.mxu0 0.0
    %668 = vmatpush1.msra.mxu0 %v520
    %669 = vmatprep.subr.mxu0 0.0
    %670 = vmatpush1.msra.mxu0 %v521
    %671 = vmatprep.subr.mxu0 0.0
    %672 = vmatpush1.msra.mxu0 %v522
    %673 = vmatprep.subr.mxu0 0.0
    %674 = vmatpush1.msra.mxu0 %v523
    %675 = vmatprep.subr.mxu0 0.0
    %676 = vmatpush1.msra.mxu0 %v524
    %677 = vmatprep.subr.mxu0 0.0
    %678 = vmatpush1.msra.mxu0 %v525
    %679 = vmatprep.subr.mxu0 0.0
    %680 = vmatpush1.msra.mxu0 %v526
    %681 = vmatprep.subr.mxu0 0.0
    %682 = vmatpush1.msra.mxu0 %v527
    %683 = vmatprep.subr.mxu0 0.0
    %684 = vmatpush1.msra.mxu0 %v528
    %685 = vmatprep.subr.mxu0 0.0
    %686 = vmatpush1.msra.mxu0 %v529
    %687 = vmatprep.subr.mxu0 0.0
    %688 = vmatpush1.msra.mxu0 %v530
    %689 = vmatprep.subr.mxu0 0.0
    %690 = vmatpush1.msra.mxu0 %v531
    %691 = vmatprep.subr.mxu0 0.0
    %692 = vmatpush1.msra.mxu0 %v532
    %693 = vmatprep.subr.mxu0 0.0
    %694 = vmatpush1.msra.mxu0 %v533
    %695 = vmatprep.subr.mxu0 0.0
    %696 = vmatpush1.msra.mxu0 %v534
    %697 = vmatprep.subr.mxu0 0.0
    %698 = vmatpush1.msra.mxu0 %v535
    %699 = vmatprep.subr.mxu0 0.0
    %700 = vmatpush1.msra.mxu0 %v536
    %701 = vmatprep.subr.mxu0 0.0
    %702 = vmatpush1.msra.mxu0 %v537
    %703 = vmatprep.subr.mxu0 0.0
    %704 = vmatpush1.msra.mxu0 %v538
    %705 = vmatprep.subr.mxu0 0.0
    %706 = vmatpush1.msra.mxu0 %v539
    %707 = vmatprep.subr.mxu0 0.0
    %708 = vmatpush1.msra.mxu0 %v540
    %709 = vmatprep.subr.mxu0 0.0
    %710 = vmatpush1.msra.mxu0 %v541
    %711 = vmatprep.subr.mxu0 0.0
    %712 = vmatpush1.msra.mxu0 %v542
    %713 = vmatprep.subr.mxu0 0.0
    %714 = vmatpush1.msra.mxu0 %v543
    %715 = vmatprep.subr.mxu0 0.0
    %716 = vmatpush1.msra.mxu0 %v544
    %717 = vmatprep.subr.mxu0 0.0
    %718 = vmatpush1.msra.mxu0 %v545
    %719 = vmatprep.subr.mxu0 0.0
    %720 = vmatpush1.msra.mxu0 %v546
    %721 = vmatprep.subr.mxu0 0.0
    %722 = vmatpush1.msra.mxu0 %v547
    %723 = vmatprep.subr.mxu0 0.0
    %724 = vmatpush1.msra.mxu0 %v548
    %725 = vmatprep.mubr.f32.mxu0 %v373
    %726 = vmatmul.mubr.f32.gmra.mrb[0].mxu0 %v301
    %v727 = vpop.f32.mrb[0].mxu0
    %v728 = vadd.f32 0.0, %v727
    %v729 = vpop.f32.mrb[0].mxu0
    %730 = vmatprep.mubr.f32.mxu0 %v374
    %731 = vmatmul.mubr.f32.gmra.mrb[0].mxu0 %v302
    %v732 = vpop.f32.mrb[0].mxu0
    %v733 = vadd.f32 0.0, %v732
    %v734 = vpop.f32.mrb[0].mxu0
    %735 = vmatprep.mubr.f32.mxu0 %v375
    %736 = vmatmul.mubr.f32.gmra.mrb[0].mxu0 %v303
    %v737 = vpop.f32.mrb[0].mxu0
    %v738 = vadd.f32 0.0, %v737
    %v739 = vpop.f32.mrb[0].mxu0
    %740 = vmatprep.mubr.f32.mxu0 %v376
    %741 = vmatmul.mubr.f32.gmra.mrb[0].mxu0 %v304
    %v742 = vpop.f32.mrb[0].mxu0
    %v743 = vadd.f32 0.0, %v742
    %v744 = vpop.f32.mrb[0].mxu0
    %745 = vmatprep.mubr.f32.mxu0 %v377
    %746 = vmatmul.mubr.f32.gmra.mrb[0].mxu0 %v305
    %v747 = vpop.f32.mrb[0].mxu0
    %v748 = vadd.f32 0.0, %v747
    %v749 = vpop.f32.mrb[0].mxu0
    %750 = vmatprep.mubr.f32.mxu0 %v378
    %751 = vmatmul.mubr.f32.gmra.mrb[0].mxu0 %v306
    %v752 = vpop.f32.mrb[0].mxu0
    %v753 = vadd.f32 0.0, %v752
    %v754 = vpop.f32.mrb[0].mxu0
    %755 = vmatprep.mubr.f32.mxu0 %v379
    %756 = vmatmul.mubr.f32.gmra.mrb[0].mxu0 %v307
    %v757 = vpop.f32.mrb[0].mxu0
    %v758 = vadd.f32 0.0, %v757
    %v759 = vpop.f32.mrb[0].mxu0
    %760 = vmatprep.mubr.f32.mxu0 %v380
    %761 = vmatmul.mubr.f32.gmra.mrb[0].mxu0 %v308
    %v762 = vpop.f32.mrb[0].mxu0
    %v763 = vadd.f32 0.0, %v762
    %v764 = vpop.f32.mrb[0].mxu0
    %765 = vmatprep.mubr.f32.mxu0 %v381
    %766 = vmatmul.mubr.f32.gmra.mrb[0].mxu0 %v309
    %v767 = vpop.f32.mrb[0].mxu0
    %v768 = vadd.f32 0.0, %v767
    %v769 = vpop.f32.mrb[0].mxu0
    %770 = vmatprep.mubr.f32.mxu0 %v382
    %771 = vmatmul.mubr.f32.gmra.mrb[0].mxu0 %v310
    %v772 = vpop.f32.mrb[0].mxu0
    %v773 = vadd.f32 0.0, %v772
    %v774 = vpop.f32.mrb[0].mxu0
    %775 = vmatprep.mubr.f32.mxu0 %v383
    %776 = vmatmul.mubr.f32.gmra.mrb[0].mxu0 %v311
    %v777 = vpop.f32.mrb[0].mxu0
    %v778 = vadd.f32 0.0, %v777
    %v779 = vpop.f32.mrb[0].mxu0
    %780 = vmatprep.mubr.f32.mxu0 %v384
    %781 = vmatmul.mubr.f32.gmra.mrb[0].mxu0 %v312
    %v782 = vpop.f32.mrb[0].mxu0
    %v783 = vadd.f32 0.0, %v782
    %v784 = vpop.f32.mrb[0].mxu0
    %785 = vmatprep.mubr.f32.mxu0 %v385
    %786 = vmatmul.mubr.f32.gmra.mrb[0].mxu0 %v313
    %v787 = vpop.f32.mrb[0].mxu0
    %v788 = vadd.f32 0.0, %v787
    %v789 = vpop.f32.mrb[0].mxu0
    %790 = vmatprep.mubr.f32.mxu0 %v386
    %791 = vmatmul.mubr.f32.gmra.mrb[0].mxu0 %v314
    %v792 = vpop.f32.mrb[0].mxu0
    %v793 = vadd.f32 0.0, %v792
    %v794 = vpop.f32.mrb[0].mxu0
    %795 = vmatprep.mubr.f32.mxu0 %v387
    %796 = vmatmul.mubr.f32.gmra.mrb[0].mxu0 %v315
    %v797 = vpop.f32.mrb[0].mxu0
    %v798 = vadd.f32 0.0, %v797
    %v799 = vpop.f32.mrb[0].mxu0
    %800 = vmatprep.mubr.f32.mxu0 %v388
    %801 = vmatmul.mubr.f32.gmra.mrb[0].mxu0 %v316
    %v802 = vpop.f32.mrb[0].mxu0
    %v803 = vadd.f32 0.0, %v802
    %v804 = vpop.f32.mrb[0].mxu0
    %805 = vmatprep.mubr.f32.mxu0 %v389
    %806 = vmatmul.mubr.f32.gmra.mrb[0].mxu0 %v317
    %v807 = vpop.f32.mrb[0].mxu0
    %v808 = vadd.f32 0.0, %v807
    %v809 = vpop.f32.mrb[0].mxu0
    %810 = vmatprep.mubr.f32.mxu0 %v390
    %811 = vmatmul.mubr.f32.gmra.mrb[0].mxu0 %v318
    %v812 = vpop.f32.mrb[0].mxu0
    %v813 = vadd.f32 0.0, %v812
    %v814 = vpop.f32.mrb[0].mxu0
    %815 = vmatprep.mubr.f32.mxu0 %v391
    %816 = vmatmul.mubr.f32.gmra.mrb[0].mxu0 %v319
    %v817 = vpop.f32.mrb[0].mxu0
    %v818 = vadd.f32 0.0, %v817
    %v819 = vpop.f32.mrb[0].mxu0
    %820 = vmatprep.mubr.f32.mxu0 %v392
    %821 = vmatmul.mubr.f32.gmra.mrb[0].mxu0 %v320
    %v822 = vpop.f32.mrb[0].mxu0
    %v823 = vadd.f32 0.0, %v822
    %v824 = vpop.f32.mrb[0].mxu0
    %825 = vmatprep.mubr.f32.mxu0 %v393
    %826 = vmatmul.mubr.f32.gmra.mrb[0].mxu0 %v321
    %v827 = vpop.f32.mrb[0].mxu0
    %v828 = vadd.f32 0.0, %v827
    %v829 = vpop.f32.mrb[0].mxu0
    %830 = vmatprep.mubr.f32.mxu0 %v394
    %831 = vmatmul.mubr.f32.gmra.mrb[0].mxu0 %v322
    %v832 = vpop.f32.mrb[0].mxu0
    %v833 = vadd.f32 0.0, %v832
    %v834 = vpop.f32.mrb[0].mxu0
    %835 = vmatprep.mubr.f32.mxu0 %v395
    %836 = vmatmul.mubr.f32.gmra.mrb[0].mxu0 %v323
    %v837 = vpop.f32.mrb[0].mxu0
    %v838 = vadd.f32 0.0, %v837
    %v839 = vpop.f32.mrb[0].mxu0
    %840 = vmatprep.mubr.f32.mxu0 %v396
    %841 = vmatmul.mubr.f32.gmra.mrb[0].mxu0 %v324
    %v842 = vpop.f32.mrb[0].mxu0
    %v843 = vadd.f32 0.0, %v842
    %v844 = vpop.f32.mrb[0].mxu0
    %845 = vmatprep.mubr.f32.mxu0 %v397
    %846 = vmatmul.mubr.f32.gmra.mrb[0].mxu0 %v325
    %v847 = vpop.f32.mrb[0].mxu0
    %v848 = vadd.f32 0.0, %v847
    %v849 = vpop.f32.mrb[0].mxu0
    %850 = vmatprep.mubr.f32.mxu0 %v398
    %851 = vmatmul.mubr.f32.gmra.mrb[0].mxu0 %v326
    %v852 = vpop.f32.mrb[0].mxu0
    %v853 = vadd.f32 0.0, %v852
    %v854 = vpop.f32.mrb[0].mxu0
    %855 = vmatprep.mubr.f32.mxu0 %v399
    %856 = vmatmul.mubr.f32.gmra.mrb[0].mxu0 %v327
    %v857 = vpop.f32.mrb[0].mxu0
    %v858 = vadd.f32 0.0, %v857
    %v859 = vpop.f32.mrb[0].mxu0
    %860 = vmatprep.mubr.f32.mxu0 %v400
    %861 = vmatmul.mubr.f32.gmra.mrb[0].mxu0 %v328
    %v862 = vpop.f32.mrb[0].mxu0
    %v863 = vadd.f32 0.0, %v862
    %v864 = vpop.f32.mrb[0].mxu0
    %865 = vmatprep.mubr.f32.mxu0 %v401
    %866 = vmatmul.mubr.f32.gmra.mrb[0].mxu0 %v329
    %v867 = vpop.f32.mrb[0].mxu0
    %v868 = vadd.f32 0.0, %v867
    %v869 = vpop.f32.mrb[0].mxu0
    %870 = vmatprep.mubr.f32.mxu0 %v402
    %871 = vmatmul.mubr.f32.gmra.mrb[0].mxu0 %v330
    %v872 = vpop.f32.mrb[0].mxu0
    %v873 = vadd.f32 0.0, %v872
    %v874 = vpop.f32.mrb[0].mxu0
    %875 = vmatprep.mubr.f32.mxu0 %v403
    %876 = vmatmul.mubr.f32.gmra.mrb[0].mxu0 %v331
    %v877 = vpop.f32.mrb[0].mxu0
    %v878 = vadd.f32 0.0, %v877
    %v879 = vpop.f32.mrb[0].mxu0
    %880 = vmatprep.mubr.f32.mxu0 %v404
    %881 = vmatmul.mubr.f32.gmra.mrb[0].mxu0 %v332
    %v882 = vpop.f32.mrb[0].mxu0
    %v883 = vadd.f32 0.0, %v882
    %v884 = vpop.f32.mrb[0].mxu0
    %885 = vmatprep.mubr.f32.mxu0 %v409
    %886 = vmatmul.mubr.f32.gmra.mrb[0].mxu0 %v337
    %v887 = vpop.f32.mrb[0].mxu0
    %v888 = vadd.f32 0.0, %v887
    %v889 = vpop.f32.mrb[0].mxu0
    %890 = vmatprep.mubr.f32.mxu0 %v410
    %891 = vmatmul.mubr.f32.gmra.mrb[0].mxu0 %v338
    %v892 = vpop.f32.mrb[0].mxu0
    %v893 = vadd.f32 0.0, %v892
    %v894 = vpop.f32.mrb[0].mxu0
    %895 = vmatprep.mubr.f32.mxu0 %v411
    %896 = vmatmul.mubr.f32.gmra.mrb[0].mxu0 %v339
    %v897 = vpop.f32.mrb[0].mxu0
    %v898 = vadd.f32 0.0, %v897
    %v899 = vpop.f32.mrb[0].mxu0
    %900 = vmatprep.mubr.f32.mxu0 %v412
    %901 = vmatmul.mubr.f32.gmra.mrb[0].mxu0 %v340
    %v902 = vpop.f32.mrb[0].mxu0
    %v903 = vadd.f32 0.0, %v902
    %v904 = vpop.f32.mrb[0].mxu0
    %905 = vmatprep.mubr.f32.mxu0 %v413
    %906 = vmatmul.mubr.f32.gmra.mrb[0].mxu0 %v341
    %v907 = vpop.f32.mrb[0].mxu0
    %v908 = vadd.f32 0.0, %v907
    %v909 = vpop.f32.mrb[0].mxu0
    %910 = vmatprep.mubr.f32.mxu0 %v414
    %911 = vmatmul.mubr.f32.gmra.mrb[0].mxu0 %v342
    %v912 = vpop.f32.mrb[0].mxu0
    %v913 = vadd.f32 0.0, %v912
    %v914 = vpop.f32.mrb[0].mxu0
    %915 = vmatprep.mubr.f32.mxu0 %v415
    %916 = vmatmul.mubr.f32.gmra.mrb[0].mxu0 %v343
    %v917 = vpop.f32.mrb[0].mxu0
    %v918 = vadd.f32 0.0, %v917
    %v919 = vpop.f32.mrb[0].mxu0
    %920 = vmatprep.mubr.f32.mxu0 %v416
    %921 = vmatmul.mubr.f32.gmra.mrb[0].mxu0 %v344
    %v922 = vpop.f32.mrb[0].mxu0
    %v923 = vadd.f32 0.0, %v922
    %v924 = vpop.f32.mrb[0].mxu0
    %925 = vmatprep.mubr.f32.mxu0 %v417
    %926 = vmatmul.mubr.f32.gmra.mrb[0].mxu0 %v345
    %v927 = vpop.f32.mrb[0].mxu0
    %v928 = vadd.f32 0.0, %v927
    %v929 = vpop.f32.mrb[0].mxu0
    %930 = vmatprep.mubr.f32.mxu0 %v418
    %931 = vmatmul.mubr.f32.gmra.mrb[0].mxu0 %v346
    %v932 = vpop.f32.mrb[0].mxu0
    %v933 = vadd.f32 0.0, %v932
    %v934 = vpop.f32.mrb[0].mxu0
    %935 = vmatprep.mubr.f32.mxu0 %v419
    %936 = vmatmul.mubr.f32.gmra.mrb[0].mxu0 %v347
    %v937 = vpop.f32.mrb[0].mxu0
    %v938 = vadd.f32 0.0, %v937
    %v939 = vpop.f32.mrb[0].mxu0
    %940 = vmatprep.mubr.f32.mxu0 %v420
    %941 = vmatmul.mubr.f32.gmra.mrb[0].mxu0 %v348
    %v942 = vpop.f32.mrb[0].mxu0
    %v943 = vadd.f32 0.0, %v942
    %v944 = vpop.f32.mrb[0].mxu0
    %945 = vmatprep.mubr.f32.mxu0 %v421
    %946 = vmatmul.mubr.f32.gmra.mrb[0].mxu0 %v349
    %v947 = vpop.f32.mrb[0].mxu0
    %v948 = vadd.f32 0.0, %v947
    %v949 = vpop.f32.mrb[0].mxu0
    %950 = vmatprep.mubr.f32.mxu0 %v422
    %951 = vmatmul.mubr.f32.gmra.mrb[0].mxu0 %v350
    %v952 = vpop.f32.mrb[0].mxu0
    %v953 = vadd.f32 0.0, %v952
    %v954 = vpop.f32.mrb[0].mxu0
    %955 = vmatprep.mubr.f32.mxu0 %v423
    %956 = vmatmul.mubr.f32.gmra.mrb[0].mxu0 %v351
    %v957 = vpop.f32.mrb[0].mxu0
    %v958 = vadd.f32 0.0, %v957
    %v959 = vpop.f32.mrb[0].mxu0
    %960 = vmatprep.mubr.f32.mxu0 %v424
    %961 = vmatmul.mubr.f32.gmra.mrb[0].mxu0 %v352
    %v962 = vpop.f32.mrb[0].mxu0
    %v963 = vadd.f32 0.0, %v962
    %v964 = vpop.f32.mrb[0].mxu0
    %965 = vmatprep.mubr.f32.mxu0 %v425
    %966 = vmatmul.mubr.f32.gmra.mrb[0].mxu0 %v353
    %v967 = vpop.f32.mrb[0].mxu0
    %v968 = vadd.f32 0.0, %v967
    %v969 = vpop.f32.mrb[0].mxu0
    %970 = vmatprep.mubr.f32.mxu0 %v426
    %971 = vmatmul.mubr.f32.gmra.mrb[0].mxu0 %v354
    %v972 = vpop.f32.mrb[0].mxu0
    %v973 = vadd.f32 0.0, %v972
    %v974 = vpop.f32.mrb[0].mxu0
    %975 = vmatprep.mubr.f32.mxu0 %v427
    %976 = vmatmul.mubr.f32.gmra.mrb[0].mxu0 %v355
    %v977 = vpop.f32.mrb[0].mxu0
    %v978 = vadd.f32 0.0, %v977
    %v979 = vpop.f32.mrb[0].mxu0
    %980 = vmatprep.mubr.f32.mxu0 %v428
    %981 = vmatmul.mubr.f32.gmra.mrb[0].mxu0 %v356
    %v982 = vpop.f32.mrb[0].mxu0
    %v983 = vadd.f32 0.0, %v982
    %v984 = vpop.f32.mrb[0].mxu0
    %985 = vmatprep.mubr.f32.mxu0 %v429
    %986 = vmatmul.mubr.f32.gmra.mrb[0].mxu0 %v357
    %v987 = vpop.f32.mrb[0].mxu0
    %v988 = vadd.f32 0.0, %v987
    %v989 = vpop.f32.mrb[0].mxu0
    %990 = vmatprep.mubr.f32.mxu0 %v430
    %991 = vmatmul.mubr.f32.gmra.mrb[0].mxu0 %v358
    %v992 = vpop.f32.mrb[0].mxu0
    %v993 = vadd.f32 0.0, %v992
    %v994 = vpop.f32.mrb[0].mxu0
    %995 = vmatprep.mubr.f32.mxu0 %v431
    %996 = vmatmul.mubr.f32.gmra.mrb[0].mxu0 %v359
    %v997 = vpop.f32.mrb[0].mxu0
    %v998 = vadd.f32 0.0, %v997
    %v999 = vpop.f32.mrb[0].mxu0
    %1000 = vmatprep.mubr.f32.mxu0 %v432
    %1001 = vmatmul.mubr.f32.gmra.mrb[0].mxu0 %v360
    %v1002 = vpop.f32.mrb[0].mxu0
    %v1003 = vadd.f32 0.0, %v1002
    %v1004 = vpop.f32.mrb[0].mxu0
    %1005 = vmatprep.mubr.f32.mxu0 %v433
    %1006 = vmatmul.mubr.f32.gmra.mrb[0].mxu0 %v361
    %v1007 = vpop.f32.mrb[0].mxu0
    %v1008 = vadd.f32 0.0, %v1007
    %v1009 = vpop.f32.mrb[0].mxu0
    %1010 = vmatprep.mubr.f32.mxu0 %v434
    %1011 = vmatmul.mubr.f32.gmra.mrb[0].mxu0 %v362
    %v1012 = vpop.f32.mrb[0].mxu0
    %v1013 = vadd.f32 0.0, %v1012
    %v1014 = vpop.f32.mrb[0].mxu0
    %1015 = vmatprep.mubr.f32.mxu0 %v435
    %1016 = vmatmul.mubr.f32.gmra.mrb[0].mxu0 %v363
    %v1017 = vpop.f32.mrb[0].mxu0
    %v1018 = vadd.f32 0.0, %v1017
    %v1019 = vpop.f32.mrb[0].mxu0
    %1020 = vmatprep.mubr.f32.mxu0 %v436
    %1021 = vmatmul.mubr.f32.gmra.mrb[0].mxu0 %v364
    %v1022 = vpop.f32.mrb[0].mxu0
    %v1023 = vadd.f32 0.0, %v1022
    %v1024 = vpop.f32.mrb[0].mxu0
    %1025 = vmatprep.mubr.f32.mxu0 %v437
    %1026 = vmatmul.mubr.f32.gmra.mrb[0].mxu0 %v365
    %v1027 = vpop.f32.mrb[0].mxu0
    %v1028 = vadd.f32 0.0, %v1027
    %v1029 = vpop.f32.mrb[0].mxu0
    %1030 = vmatprep.mubr.f32.mxu0 %v438
    %1031 = vmatmul.mubr.f32.gmra.mrb[0].mxu0 %v366
    %v1032 = vpop.f32.mrb[0].mxu0
    %v1033 = vadd.f32 0.0, %v1032
    %v1034 = vpop.f32.mrb[0].mxu0
    %1035 = vmatprep.mubr.f32.mxu0 %v439
    %1036 = vmatmul.mubr.f32.gmra.mrb[0].mxu0 %v367
    %v1037 = vpop.f32.mrb[0].mxu0
    %v1038 = vadd.f32 0.0, %v1037
    %v1039 = vpop.f32.mrb[0].mxu0
    %1040 = vmatprep.mubr.f32.mxu0 %v440
    %1041 = vmatmul.mubr.f32.gmra.mrb[0].mxu0 %v368
    %v1042 = vpop.f32.mrb[0].mxu0
    %v1043 = vadd.f32 0.0, %v1042
    %v1044 = vpop.f32.mrb[0].mxu0
    %1045 = vdwg.mxu0
    %1046 = vmatprep.subr.mxu0 0.0
    %1047 = vmatpush1.msra.mxu0 %v549
    %1048 = vmatprep.subr.mxu0 0.0
    %1049 = vmatpush1.msra.mxu0 %v550
    %1050 = vmatprep.subr.mxu0 0.0
    %1051 = vmatpush1.msra.mxu0 %v551
    %1052 = vmatprep.subr.mxu0 0.0
    %1053 = vmatpush1.msra.mxu0 %v552
    %1054 = vmatprep.subr.mxu0 0.0
    %1055 = vmatpush1.msra.mxu0 %v553
    %1056 = vmatprep.subr.mxu0 0.0
    %1057 = vmatpush1.msra.mxu0 %v554
    %1058 = vmatprep.subr.mxu0 0.0
    %1059 = vmatpush1.msra.mxu0 %v555
    %1060 = vmatprep.subr.mxu0 0.0
    %1061 = vmatpush1.msra.mxu0 %v556
    %1062 = vmatprep.subr.mxu0 0.0
    %1063 = vmatpush1.msra.mxu0 %v557
    %1064 = vmatprep.subr.mxu0 0.0
    %1065 = vmatpush1.msra.mxu0 %v558
    %1066 = vmatprep.subr.mxu0 0.0
    %1067 = vmatpush1.msra.mxu0 %v559
    %1068 = vmatprep.subr.mxu0 0.0
    %1069 = vmatpush1.msra.mxu0 %v560
    %1070 = vmatprep.subr.mxu0 0.0
    %1071 = vmatpush1.msra.mxu0 %v561
    %1072 = vmatprep.subr.mxu0 0.0
    %1073 = vmatpush1.msra.mxu0 %v562
    %1074 = vmatprep.subr.mxu0 0.0
    %1075 = vmatpush1.msra.mxu0 %v563
    %1076 = vmatprep.subr.mxu0 0.0
    %1077 = vmatpush1.msra.mxu0 %v564
    %1078 = vmatprep.subr.mxu0 0.0
    %1079 = vmatpush1.msra.mxu0 %v565
    %1080 = vmatprep.subr.mxu0 0.0
    %1081 = vmatpush1.msra.mxu0 %v566
    %1082 = vmatprep.subr.mxu0 0.0
    %1083 = vmatpush1.msra.mxu0 %v567
    %1084 = vmatprep.subr.mxu0 0.0
    %1085 = vmatpush1.msra.mxu0 %v568
    %1086 = vmatprep.subr.mxu0 0.0
    %1087 = vmatpush1.msra.mxu0 %v569
    %1088 = vmatprep.subr.mxu0 0.0
    %1089 = vmatpush1.msra.mxu0 %v570
    %1090 = vmatprep.subr.mxu0 0.0
    %1091 = vmatpush1.msra.mxu0 %v571
    %1092 = vmatprep.subr.mxu0 0.0
    %1093 = vmatpush1.msra.mxu0 %v572
    %1094 = vmatprep.subr.mxu0 0.0
    %1095 = vmatpush1.msra.mxu0 %v573
    %1096 = vmatprep.subr.mxu0 0.0
    %1097 = vmatpush1.msra.mxu0 %v574
    %1098 = vmatprep.subr.mxu0 0.0
    %1099 = vmatpush1.msra.mxu0 %v575
    %1100 = vmatprep.subr.mxu0 0.0
    %1101 = vmatpush1.msra.mxu0 %v576
    %1102 = vmatprep.subr.mxu0 0.0
    %1103 = vmatpush1.msra.mxu0 %v577
    %1104 = vmatprep.subr.mxu0 0.0
    %1105 = vmatpush1.msra.mxu0 %v578
    %1106 = vmatprep.subr.mxu0 0.0
    %1107 = vmatpush1.msra.mxu0 %v579
    %1108 = vmatprep.subr.mxu0 0.0
    %1109 = vmatpush1.msra.mxu0 %v580
    %1110 = vmatprep.mubr.f32.mxu0 %v303
    %1111 = vmatmul.mubr.f32.gmra.mrb[0].mxu0 %v445
    %v1112 = vpop.f32.mrb[0].mxu0
    %v1113 = vadd.f32 %v728, %v1112
    %v1114 = vpop.f32.mrb[0].mxu0
    %1115 = vmatprep.mubr.f32.mxu0 %v304
    %1116 = vmatmul.mubr.f32.gmra.mrb[0].mxu0 %v446
    %v1117 = vpop.f32.mrb[0].mxu0
    %v1118 = vadd.f32 %v733, %v1117
    %v1119 = vpop.f32.mrb[0].mxu0
    %1120 = vmatprep.mubr.f32.mxu0 %v305
    %1121 = vmatmul.mubr.f32.gmra.mrb[0].mxu0 %v447
    %v1122 = vpop.f32.mrb[0].mxu0
    %v1123 = vadd.f32 %v738, %v1122
    %v1124 = vpop.f32.mrb[0].mxu0
    %1125 = vmatprep.mubr.f32.mxu0 %v306
    %1126 = vmatmul.mubr.f32.gmra.mrb[0].mxu0 %v448
    %v1127 = vpop.f32.mrb[0].mxu0
    %v1128 = vadd.f32 %v743, %v1127
    %v1129 = vpop.f32.mrb[0].mxu0
    %1130 = vmatprep.mubr.f32.mxu0 %v307
    %1131 = vmatmul.mubr.f32.gmra.mrb[0].mxu0 %v449
    %v1132 = vpop.f32.mrb[0].mxu0
    %v1133 = vadd.f32 %v748, %v1132
    %v1134 = vpop.f32.mrb[0].mxu0
    %1135 = vmatprep.mubr.f32.mxu0 %v308
    %1136 = vmatmul.mubr.f32.gmra.mrb[0].mxu0 %v450
    %v1137 = vpop.f32.mrb[0].mxu0
    %v1138 = vadd.f32 %v753, %v1137
    %v1139 = vpop.f32.mrb[0].mxu0
    %1140 = vmatprep.mubr.f32.mxu0 %v309
    %1141 = vmatmul.mubr.f32.gmra.mrb[0].mxu0 %v451
    %v1142 = vpop.f32.mrb[0].mxu0
    %v1143 = vadd.f32 %v758, %v1142
    %v1144 = vpop.f32.mrb[0].mxu0
    %1145 = vmatprep.mubr.f32.mxu0 %v310
    %1146 = vmatmul.mubr.f32.gmra.mrb[0].mxu0 %v452
    %v1147 = vpop.f32.mrb[0].mxu0
    %v1148 = vadd.f32 %v763, %v1147
    %v1149 = vpop.f32.mrb[0].mxu0
    %1150 = vmatprep.mubr.f32.mxu0 %v311
    %1151 = vmatmul.mubr.f32.gmra.mrb[0].mxu0 %v453
    %v1152 = vpop.f32.mrb[0].mxu0
    %v1153 = vadd.f32 %v768, %v1152
    %v1154 = vpop.f32.mrb[0].mxu0
    %1155 = vmatprep.mubr.f32.mxu0 %v312
    %1156 = vmatmul.mubr.f32.gmra.mrb[0].mxu0 %v454
    %v1157 = vpop.f32.mrb[0].mxu0
    %v1158 = vadd.f32 %v773, %v1157
    %v1159 = vpop.f32.mrb[0].mxu0
    %1160 = vmatprep.mubr.f32.mxu0 %v313
    %1161 = vmatmul.mubr.f32.gmra.mrb[0].mxu0 %v455
    %v1162 = vpop.f32.mrb[0].mxu0
    %v1163 = vadd.f32 %v778, %v1162
    %v1164 = vpop.f32.mrb[0].mxu0
    %1165 = vmatprep.mubr.f32.mxu0 %v314
    %1166 = vmatmul.mubr.f32.gmra.mrb[0].mxu0 %v456
    %v1167 = vpop.f32.mrb[0].mxu0
    %v1168 = vadd.f32 %v783, %v1167
    %v1169 = vpop.f32.mrb[0].mxu0
    %1170 = vmatprep.mubr.f32.mxu0 %v315
    %1171 = vmatmul.mubr.f32.gmra.mrb[0].mxu0 %v457
    %v1172 = vpop.f32.mrb[0].mxu0
    %v1173 = vadd.f32 %v788, %v1172
    %v1174 = vpop.f32.mrb[0].mxu0
    %1175 = vmatprep.mubr.f32.mxu0 %v316
    %1176 = vmatmul.mubr.f32.gmra.mrb[0].mxu0 %v458
    %v1177 = vpop.f32.mrb[0].mxu0
    %v1178 = vadd.f32 %v793, %v1177
    %v1179 = vpop.f32.mrb[0].mxu0
    %1180 = vmatprep.mubr.f32.mxu0 %v317
    %1181 = vmatmul.mubr.f32.gmra.mrb[0].mxu0 %v459
    %v1182 = vpop.f32.mrb[0].mxu0
    %v1183 = vadd.f32 %v798, %v1182
    %v1184 = vpop.f32.mrb[0].mxu0
    %1185 = vmatprep.mubr.f32.mxu0 %v318
    %1186 = vmatmul.mubr.f32.gmra.mrb[0].mxu0 %v460
    %v1187 = vpop.f32.mrb[0].mxu0
    %v1188 = vadd.f32 %v803, %v1187
    %v1189 = vpop.f32.mrb[0].mxu0
    %1190 = vmatprep.mubr.f32.mxu0 %v319
    %1191 = vmatmul.mubr.f32.gmra.mrb[0].mxu0 %v461
    %v1192 = vpop.f32.mrb[0].mxu0
    %v1193 = vadd.f32 %v808, %v1192
    %v1194 = vpop.f32.mrb[0].mxu0
    %1195 = vmatprep.mubr.f32.mxu0 %v320
    %1196 = vmatmul.mubr.f32.gmra.mrb[0].mxu0 %v462
    %v1197 = vpop.f32.mrb[0].mxu0
    %v1198 = vadd.f32 %v813, %v1197
    %v1199 = vpop.f32.mrb[0].mxu0
    %1200 = vmatprep.mubr.f32.mxu0 %v321
    %1201 = vmatmul.mubr.f32.gmra.mrb[0].mxu0 %v463
    %v1202 = vpop.f32.mrb[0].mxu0
    %v1203 = vadd.f32 %v818, %v1202
    %v1204 = vpop.f32.mrb[0].mxu0
    %1205 = vmatprep.mubr.f32.mxu0 %v322
    %1206 = vmatmul.mubr.f32.gmra.mrb[0].mxu0 %v464
    %v1207 = vpop.f32.mrb[0].mxu0
    %v1208 = vadd.f32 %v823, %v1207
    %v1209 = vpop.f32.mrb[0].mxu0
    %1210 = vmatprep.mubr.f32.mxu0 %v323
    %1211 = vmatmul.mubr.f32.gmra.mrb[0].mxu0 %v465
    %v1212 = vpop.f32.mrb[0].mxu0
    %v1213 = vadd.f32 %v828, %v1212
    %v1214 = vpop.f32.mrb[0].mxu0
    %1215 = vmatprep.mubr.f32.mxu0 %v324
    %1216 = vmatmul.mubr.f32.gmra.mrb[0].mxu0 %v466
    %v1217 = vpop.f32.mrb[0].mxu0
    %v1218 = vadd.f32 %v833, %v1217
    %v1219 = vpop.f32.mrb[0].mxu0
    %1220 = vmatprep.mubr.f32.mxu0 %v325
    %1221 = vmatmul.mubr.f32.gmra.mrb[0].mxu0 %v467
    %v1222 = vpop.f32.mrb[0].mxu0
    %v1223 = vadd.f32 %v838, %v1222
    %v1224 = vpop.f32.mrb[0].mxu0
    %1225 = vmatprep.mubr.f32.mxu0 %v326
    %1226 = vmatmul.mubr.f32.gmra.mrb[0].mxu0 %v468
    %v1227 = vpop.f32.mrb[0].mxu0
    %v1228 = vadd.f32 %v843, %v1227
    %v1229 = vpop.f32.mrb[0].mxu0
    %1230 = vmatprep.mubr.f32.mxu0 %v327
    %1231 = vmatmul.mubr.f32.gmra.mrb[0].mxu0 %v469
    %v1232 = vpop.f32.mrb[0].mxu0
    %v1233 = vadd.f32 %v848, %v1232
    %v1234 = vpop.f32.mrb[0].mxu0
    %1235 = vmatprep.mubr.f32.mxu0 %v328
    %1236 = vmatmul.mubr.f32.gmra.mrb[0].mxu0 %v470
    %v1237 = vpop.f32.mrb[0].mxu0
    %v1238 = vadd.f32 %v853, %v1237
    %v1239 = vpop.f32.mrb[0].mxu0
    %1240 = vmatprep.mubr.f32.mxu0 %v329
    %1241 = vmatmul.mubr.f32.gmra.mrb[0].mxu0 %v471
    %v1242 = vpop.f32.mrb[0].mxu0
    %v1243 = vadd.f32 %v858, %v1242
    %v1244 = vpop.f32.mrb[0].mxu0
    %1245 = vmatprep.mubr.f32.mxu0 %v330
    %1246 = vmatmul.mubr.f32.gmra.mrb[0].mxu0 %v472
    %v1247 = vpop.f32.mrb[0].mxu0
    %v1248 = vadd.f32 %v863, %v1247
    %v1249 = vpop.f32.mrb[0].mxu0
    %1250 = vmatprep.mubr.f32.mxu0 %v331
    %1251 = vmatmul.mubr.f32.gmra.mrb[0].mxu0 %v473
    %v1252 = vpop.f32.mrb[0].mxu0
    %v1253 = vadd.f32 %v868, %v1252
    %v1254 = vpop.f32.mrb[0].mxu0
    %1255 = vmatprep.mubr.f32.mxu0 %v332
    %1256 = vmatmul.mubr.f32.gmra.mrb[0].mxu0 %v474
    %v1257 = vpop.f32.mrb[0].mxu0
    %v1258 = vadd.f32 %v873, %v1257
    %v1259 = vpop.f32.mrb[0].mxu0
    %1260 = vmatprep.mubr.f32.mxu0 %v333
    %1261 = vmatmul.mubr.f32.gmra.mrb[0].mxu0 %v475
    %v1262 = vpop.f32.mrb[0].mxu0
    %v1263 = vadd.f32 %v878, %v1262
    %v1264 = vpop.f32.mrb[0].mxu0
    %1265 = vmatprep.mubr.f32.mxu0 %v334
    %1266 = vmatmul.mubr.f32.gmra.mrb[0].mxu0 %v476
    %v1267 = vpop.f32.mrb[0].mxu0
    %v1268 = vadd.f32 %v883, %v1267
    %v1269 = vpop.f32.mrb[0].mxu0
    %1270 = vmatprep.mubr.f32.mxu0 %v339
    %1271 = vmatmul.mubr.f32.gmra.mrb[0].mxu0 %v481
    %v1272 = vpop.f32.mrb[0].mxu0
    %v1273 = vadd.f32 %v888, %v1272
    %v1274 = vpop.f32.mrb[0].mxu0
    %1275 = vmatprep.mubr.f32.mxu0 %v340
    %1276 = vmatmul.mubr.f32.gmra.mrb[0].mxu0 %v482
    %v1277 = vpop.f32.mrb[0].mxu0
    %v1278 = vadd.f32 %v893, %v1277
    %v1279 = vpop.f32.mrb[0].mxu0
    %1280 = vmatprep.mubr.f32.mxu0 %v341
    %1281 = vmatmul.mubr.f32.gmra.mrb[0].mxu0 %v483
    %v1282 = vpop.f32.mrb[0].mxu0
    %v1283 = vadd.f32 %v898, %v1282
    %v1284 = vpop.f32.mrb[0].mxu0
    %1285 = vmatprep.mubr.f32.mxu0 %v342
    %1286 = vmatmul.mubr.f32.gmra.mrb[0].mxu0 %v484
    %v1287 = vpop.f32.mrb[0].mxu0
    %v1288 = vadd.f32 %v903, %v1287
    %v1289 = vpop.f32.mrb[0].mxu0
    %1290 = vmatprep.mubr.f32.mxu0 %v343
    %1291 = vmatmul.mubr.f32.gmra.mrb[0].mxu0 %v485
    %v1292 = vpop.f32.mrb[0].mxu0
    %v1293 = vadd.f32 %v908, %v1292
    %v1294 = vpop.f32.mrb[0].mxu0
    %1295 = vmatprep.mubr.f32.mxu0 %v344
    %1296 = vmatmul.mubr.f32.gmra.mrb[0].mxu0 %v486
    %v1297 = vpop.f32.mrb[0].mxu0
    %v1298 = vadd.f32 %v913, %v1297
    %v1299 = vpop.f32.mrb[0].mxu0
    %1300 = vmatprep.mubr.f32.mxu0 %v345
    %1301 = vmatmul.mubr.f32.gmra.mrb[0].mxu0 %v487
    %v1302 = vpop.f32.mrb[0].mxu0
    %v1303 = vadd.f32 %v918, %v1302
    %v1304 = vpop.f32.mrb[0].mxu0
    %1305 = vmatprep.mubr.f32.mxu0 %v346
    %1306 = vmatmul.mubr.f32.gmra.mrb[0].mxu0 %v488
    %v1307 = vpop.f32.mrb[0].mxu0
    %v1308 = vadd.f32 %v923, %v1307
    %v1309 = vpop.f32.mrb[0].mxu0
    %1310 = vmatprep.mubr.f32.mxu0 %v347
    %1311 = vmatmul.mubr.f32.gmra.mrb[0].mxu0 %v489
    %v1312 = vpop.f32.mrb[0].mxu0
    %v1313 = vadd.f32 %v928, %v1312
    %v1314 = vpop.f32.mrb[0].mxu0
    %1315 = vmatprep.mubr.f32.mxu0 %v348
    %1316 = vmatmul.mubr.f32.gmra.mrb[0].mxu0 %v490
    %v1317 = vpop.f32.mrb[0].mxu0
    %v1318 = vadd.f32 %v933, %v1317
    %v1319 = vpop.f32.mrb[0].mxu0
    %1320 = vmatprep.mubr.f32.mxu0 %v349
    %1321 = vmatmul.mubr.f32.gmra.mrb[0].mxu0 %v491
    %v1322 = vpop.f32.mrb[0].mxu0
    %v1323 = vadd.f32 %v938, %v1322
    %v1324 = vpop.f32.mrb[0].mxu0
    %1325 = vmatprep.mubr.f32.mxu0 %v350
    %1326 = vmatmul.mubr.f32.gmra.mrb[0].mxu0 %v492
    %v1327 = vpop.f32.mrb[0].mxu0
    %v1328 = vadd.f32 %v943, %v1327
    %v1329 = vpop.f32.mrb[0].mxu0
    %1330 = vmatprep.mubr.f32.mxu0 %v351
    %1331 = vmatmul.mubr.f32.gmra.mrb[0].mxu0 %v493
    %v1332 = vpop.f32.mrb[0].mxu0
    %v1333 = vadd.f32 %v948, %v1332
    %v1334 = vpop.f32.mrb[0].mxu0
    %1335 = vmatprep.mubr.f32.mxu0 %v352
    %1336 = vmatmul.mubr.f32.gmra.mrb[0].mxu0 %v494
    %v1337 = vpop.f32.mrb[0].mxu0
    %v1338 = vadd.f32 %v953, %v1337
    %v1339 = vpop.f32.mrb[0].mxu0
    %1340 = vmatprep.mubr.f32.mxu0 %v353
    %1341 = vmatmul.mubr.f32.gmra.mrb[0].mxu0 %v495
    %v1342 = vpop.f32.mrb[0].mxu0
    %v1343 = vadd.f32 %v958, %v1342
    %v1344 = vpop.f32.mrb[0].mxu0
    %1345 = vmatprep.mubr.f32.mxu0 %v354
    %1346 = vmatmul.mubr.f32.gmra.mrb[0].mxu0 %v496
    %v1347 = vpop.f32.mrb[0].mxu0
    %v1348 = vadd.f32 %v963, %v1347
    %v1349 = vpop.f32.mrb[0].mxu0
    %1350 = vmatprep.mubr.f32.mxu0 %v355
    %1351 = vmatmul.mubr.f32.gmra.mrb[0].mxu0 %v497
    %v1352 = vpop.f32.mrb[0].mxu0
    %v1353 = vadd.f32 %v968, %v1352
    %v1354 = vpop.f32.mrb[0].mxu0
    %1355 = vmatprep.mubr.f32.mxu0 %v356
    %1356 = vmatmul.mubr.f32.gmra.mrb[0].mxu0 %v498
    %v1357 = vpop.f32.mrb[0].mxu0
    %v1358 = vadd.f32 %v973, %v1357
    %v1359 = vpop.f32.mrb[0].mxu0
    %1360 = vmatprep.mubr.f32.mxu0 %v357
    %1361 = vmatmul.mubr.f32.gmra.mrb[0].mxu0 %v499
    %v1362 = vpop.f32.mrb[0].mxu0
    %v1363 = vadd.f32 %v978, %v1362
    %v1364 = vpop.f32.mrb[0].mxu0
    %1365 = vmatprep.mubr.f32.mxu0 %v358
    %1366 = vmatmul.mubr.f32.gmra.mrb[0].mxu0 %v500
    %v1367 = vpop.f32.mrb[0].mxu0
    %v1368 = vadd.f32 %v983, %v1367
    %v1369 = vpop.f32.mrb[0].mxu0
    %1370 = vmatprep.mubr.f32.mxu0 %v359
    %1371 = vmatmul.mubr.f32.gmra.mrb[0].mxu0 %v501
    %v1372 = vpop.f32.mrb[0].mxu0
    %v1373 = vadd.f32 %v988, %v1372
    %v1374 = vpop.f32.mrb[0].mxu0
    %1375 = vmatprep.mubr.f32.mxu0 %v360
    %1376 = vmatmul.mubr.f32.gmra.mrb[0].mxu0 %v502
    %v1377 = vpop.f32.mrb[0].mxu0
    %v1378 = vadd.f32 %v993, %v1377
    %v1379 = vpop.f32.mrb[0].mxu0
    %1380 = vmatprep.mubr.f32.mxu0 %v361
    %1381 = vmatmul.mubr.f32.gmra.mrb[0].mxu0 %v503
    %v1382 = vpop.f32.mrb[0].mxu0
    %v1383 = vadd.f32 %v998, %v1382
    %v1384 = vpop.f32.mrb[0].mxu0
    %1385 = vmatprep.mubr.f32.mxu0 %v362
    %1386 = vmatmul.mubr.f32.gmra.mrb[0].mxu0 %v504
    %v1387 = vpop.f32.mrb[0].mxu0
    %v1388 = vadd.f32 %v1003, %v1387
    %v1389 = vpop.f32.mrb[0].mxu0
    %1390 = vmatprep.mubr.f32.mxu0 %v363
    %1391 = vmatmul.mubr.f32.gmra.mrb[0].mxu0 %v505
    %v1392 = vpop.f32.mrb[0].mxu0
    %v1393 = vadd.f32 %v1008, %v1392
    %v1394 = vpop.f32.mrb[0].mxu0
    %1395 = vmatprep.mubr.f32.mxu0 %v364
    %1396 = vmatmul.mubr.f32.gmra.mrb[0].mxu0 %v506
    %v1397 = vpop.f32.mrb[0].mxu0
    %v1398 = vadd.f32 %v1013, %v1397
    %v1399 = vpop.f32.mrb[0].mxu0
    %1400 = vmatprep.mubr.f32.mxu0 %v365
    %1401 = vmatmul.mubr.f32.gmra.mrb[0].mxu0 %v507
    %v1402 = vpop.f32.mrb[0].mxu0
    %v1403 = vadd.f32 %v1018, %v1402
    %v1404 = vpop.f32.mrb[0].mxu0
    %1405 = vmatprep.mubr.f32.mxu0 %v366
    %1406 = vmatmul.mubr.f32.gmra.mrb[0].mxu0 %v508
    %v1407 = vpop.f32.mrb[0].mxu0
    %v1408 = vadd.f32 %v1023, %v1407
    %v1409 = vpop.f32.mrb[0].mxu0
    %1410 = vmatprep.mubr.f32.mxu0 %v367
    %1411 = vmatmul.mubr.f32.gmra.mrb[0].mxu0 %v509
    %v1412 = vpop.f32.mrb[0].mxu0
    %v1413 = vadd.f32 %v1028, %v1412
    %v1414 = vpop.f32.mrb[0].mxu0
    %1415 = vmatprep.mubr.f32.mxu0 %v368
    %1416 = vmatmul.mubr.f32.gmra.mrb[0].mxu0 %v510
    %v1417 = vpop.f32.mrb[0].mxu0
    %v1418 = vadd.f32 %v1033, %v1417
    %v1419 = vpop.f32.mrb[0].mxu0
    %1420 = vmatprep.mubr.f32.mxu0 %v369
    %1421 = vmatmul.mubr.f32.gmra.mrb[0].mxu0 %v511
    %v1422 = vpop.f32.mrb[0].mxu0
    %v1423 = vadd.f32 %v1038, %v1422
    %v1424 = vpop.f32.mrb[0].mxu0
    %1425 = vmatprep.mubr.f32.mxu0 %v370
    %1426 = vmatmul.mubr.f32.gmra.mrb[0].mxu0 %v512
    %v1427 = vpop.f32.mrb[0].mxu0
    %v1428 = vadd.f32 %v1043, %v1427
    %v1429 = vpop.f32.mrb[0].mxu0
    %1430 = vdwg.mxu0
    %1431 = vmatprep.subr.mxu0 0.0
    %1432 = vmatpush1.msra.mxu0 %v581
    %1433 = vmatprep.subr.mxu0 0.0
    %1434 = vmatpush1.msra.mxu0 %v582
    %1435 = vmatprep.subr.mxu0 0.0
    %1436 = vmatpush1.msra.mxu0 %v583
    %1437 = vmatprep.subr.mxu0 0.0
    %1438 = vmatpush1.msra.mxu0 %v584
    %1439 = vmatprep.subr.mxu0 0.0
    %1440 = vmatpush1.msra.mxu0 %v585
    %1441 = vmatprep.subr.mxu0 0.0
    %1442 = vmatpush1.msra.mxu0 %v586
    %1443 = vmatprep.subr.mxu0 0.0
    %1444 = vmatpush1.msra.mxu0 %v587
    %1445 = vmatprep.subr.mxu0 0.0
    %1446 = vmatpush1.msra.mxu0 %v588
    %1447 = vmatprep.subr.mxu0 0.0
    %1448 = vmatpush1.msra.mxu0 %v589
    %1449 = vmatprep.subr.mxu0 0.0
    %1450 = vmatpush1.msra.mxu0 %v590
    %1451 = vmatprep.subr.mxu0 0.0
    %1452 = vmatpush1.msra.mxu0 %v591
    %1453 = vmatprep.subr.mxu0 0.0
    %1454 = vmatpush1.msra.mxu0 %v592
    %1455 = vmatprep.subr.mxu0 0.0
    %1456 = vmatpush1.msra.mxu0 %v593
    %1457 = vmatprep.subr.mxu0 0.0
    %1458 = vmatpush1.msra.mxu0 %v594
    %1459 = vmatprep.subr.mxu0 0.0
    %1460 = vmatpush1.msra.mxu0 %v595
    %1461 = vmatprep.subr.mxu0 0.0
    %1462 = vmatpush1.msra.mxu0 %v596
    %1463 = vmatprep.subr.mxu0 0.0
    %1464 = vmatpush1.msra.mxu0 %v597
    %1465 = vmatprep.subr.mxu0 0.0
    %1466 = vmatpush1.msra.mxu0 %v598
    %1467 = vmatprep.subr.mxu0 0.0
    %1468 = vmatpush1.msra.mxu0 %v599
    %1469 = vmatprep.subr.mxu0 0.0
    %1470 = vmatpush1.msra.mxu0 %v600
    %1471 = vmatprep.subr.mxu0 0.0
    %1472 = vmatpush1.msra.mxu0 %v601
    %1473 = vmatprep.subr.mxu0 0.0
    %1474 = vmatpush1.msra.mxu0 %v602
    %1475 = vmatprep.subr.mxu0 0.0
    %1476 = vmatpush1.msra.mxu0 %v603
    %1477 = vmatprep.subr.mxu0 0.0
    %1478 = vmatpush1.msra.mxu0 %v604
    %1479 = vmatprep.subr.mxu0 0.0
    %1480 = vmatpush1.msra.mxu0 %v605
    %1481 = vmatprep.subr.mxu0 0.0
    %1482 = vmatpush1.msra.mxu0 %v606
    %1483 = vmatprep.subr.mxu0 0.0
    %1484 = vmatpush1.msra.mxu0 %v607
    %1485 = vmatprep.subr.mxu0 0.0
    %1486 = vmatpush1.msra.mxu0 %v608
    %1487 = vmatprep.subr.mxu0 0.0
    %1488 = vmatpush1.msra.mxu0 %v609
    %1489 = vmatprep.subr.mxu0 0.0
    %1490 = vmatpush1.msra.mxu0 %v610
    %1491 = vmatprep.subr.mxu0 0.0
    %1492 = vmatpush1.msra.mxu0 %v611
    %1493 = vmatprep.subr.mxu0 0.0
    %1494 = vmatpush1.msra.mxu0 %v612
    %1495 = vmatprep.mubr.f32.mxu0 %v447
    %1496 = vmatmul.mubr.f32.gmra.mrb[0].mxu0 %v375
    %v1497 = vpop.f32.mrb[0].mxu0
    %v1498 = vadd.f32 %v1113, %v1497
    %v1499 = vpop.f32.mrb[0].mxu0
    %1500 = vmatprep.mubr.f32.mxu0 %v448
    %1501 = vmatmul.mubr.f32.gmra.mrb[0].mxu0 %v376
    %v1502 = vpop.f32.mrb[0].mxu0
    %v1503 = vadd.f32 %v1118, %v1502
    %v1504 = vpop.f32.mrb[0].mxu0
    %1505 = vmatprep.mubr.f32.mxu0 %v449
    %1506 = vmatmul.mubr.f32.gmra.mrb[0].mxu0 %v377
    %v1507 = vpop.f32.mrb[0].mxu0
    %v1508 = vadd.f32 %v1123, %v1507
    %v1509 = vpop.f32.mrb[0].mxu0
    %1510 = vmatprep.mubr.f32.mxu0 %v450
    %1511 = vmatmul.mubr.f32.gmra.mrb[0].mxu0 %v378
    %v1512 = vpop.f32.mrb[0].mxu0
    %v1513 = vadd.f32 %v1128, %v1512
    %v1514 = vpop.f32.mrb[0].mxu0
    %1515 = vmatprep.mubr.f32.mxu0 %v451
    %1516 = vmatmul.mubr.f32.gmra.mrb[0].mxu0 %v379
    %v1517 = vpop.f32.mrb[0].mxu0
    %v1518 = vadd.f32 %v1133, %v1517
    %v1519 = vpop.f32.mrb[0].mxu0
    %1520 = vmatprep.mubr.f32.mxu0 %v452
    %1521 = vmatmul.mubr.f32.gmra.mrb[0].mxu0 %v380
    %v1522 = vpop.f32.mrb[0].mxu0
    %v1523 = vadd.f32 %v1138, %v1522
    %v1524 = vpop.f32.mrb[0].mxu0
    %1525 = vmatprep.mubr.f32.mxu0 %v453
    %1526 = vmatmul.mubr.f32.gmra.mrb[0].mxu0 %v381
    %v1527 = vpop.f32.mrb[0].mxu0
    %v1528 = vadd.f32 %v1143, %v1527
    %v1529 = vpop.f32.mrb[0].mxu0
    %1530 = vmatprep.mubr.f32.mxu0 %v454
    %1531 = vmatmul.mubr.f32.gmra.mrb[0].mxu0 %v382
    %v1532 = vpop.f32.mrb[0].mxu0
    %v1533 = vadd.f32 %v1148, %v1532
    %v1534 = vpop.f32.mrb[0].mxu0
    %1535 = vmatprep.mubr.f32.mxu0 %v455
    %1536 = vmatmul.mubr.f32.gmra.mrb[0].mxu0 %v383
    %v1537 = vpop.f32.mrb[0].mxu0
    %v1538 = vadd.f32 %v1153, %v1537
    %v1539 = vpop.f32.mrb[0].mxu0
    %1540 = vmatprep.mubr.f32.mxu0 %v456
    %1541 = vmatmul.mubr.f32.gmra.mrb[0].mxu0 %v384
    %v1542 = vpop.f32.mrb[0].mxu0
    %v1543 = vadd.f32 %v1158, %v1542
    %v1544 = vpop.f32.mrb[0].mxu0
    %1545 = vmatprep.mubr.f32.mxu0 %v457
    %1546 = vmatmul.mubr.f32.gmra.mrb[0].mxu0 %v385
    %v1547 = vpop.f32.mrb[0].mxu0
    %v1548 = vadd.f32 %v1163, %v1547
    %v1549 = vpop.f32.mrb[0].mxu0
    %1550 = vmatprep.mubr.f32.mxu0 %v458
    %1551 = vmatmul.mubr.f32.gmra.mrb[0].mxu0 %v386
    %v1552 = vpop.f32.mrb[0].mxu0
    %v1553 = vadd.f32 %v1168, %v1552
    %v1554 = vpop.f32.mrb[0].mxu0
    %1555 = vmatprep.mubr.f32.mxu0 %v459
    %1556 = vmatmul.mubr.f32.gmra.mrb[0].mxu0 %v387
    %v1557 = vpop.f32.mrb[0].mxu0
    %v1558 = vadd.f32 %v1173, %v1557
    %v1559 = vpop.f32.mrb[0].mxu0
    %1560 = vmatprep.mubr.f32.mxu0 %v460
    %1561 = vmatmul.mubr.f32.gmra.mrb[0].mxu0 %v388
    %v1562 = vpop.f32.mrb[0].mxu0
    %v1563 = vadd.f32 %v1178, %v1562
    %v1564 = vpop.f32.mrb[0].mxu0
    %1565 = vmatprep.mubr.f32.mxu0 %v461
    %1566 = vmatmul.mubr.f32.gmra.mrb[0].mxu0 %v389
    %v1567 = vpop.f32.mrb[0].mxu0
    %v1568 = vadd.f32 %v1183, %v1567
    %v1569 = vpop.f32.mrb[0].mxu0
    %1570 = vmatprep.mubr.f32.mxu0 %v462
    %1571 = vmatmul.mubr.f32.gmra.mrb[0].mxu0 %v390
    %v1572 = vpop.f32.mrb[0].mxu0
    %v1573 = vadd.f32 %v1188, %v1572
    %v1574 = vpop.f32.mrb[0].mxu0
    %1575 = vmatprep.mubr.f32.mxu0 %v463
    %1576 = vmatmul.mubr.f32.gmra.mrb[0].mxu0 %v391
    %v1577 = vpop.f32.mrb[0].mxu0
    %v1578 = vadd.f32 %v1193, %v1577
    %v1579 = vpop.f32.mrb[0].mxu0
    %1580 = vmatprep.mubr.f32.mxu0 %v464
    %1581 = vmatmul.mubr.f32.gmra.mrb[0].mxu0 %v392
    %v1582 = vpop.f32.mrb[0].mxu0
    %v1583 = vadd.f32 %v1198, %v1582
    %v1584 = vpop.f32.mrb[0].mxu0
    %1585 = vmatprep.mubr.f32.mxu0 %v465
    %1586 = vmatmul.mubr.f32.gmra.mrb[0].mxu0 %v393
    %v1587 = vpop.f32.mrb[0].mxu0
    %v1588 = vadd.f32 %v1203, %v1587
    %v1589 = vpop.f32.mrb[0].mxu0
    %1590 = vmatprep.mubr.f32.mxu0 %v466
    %1591 = vmatmul.mubr.f32.gmra.mrb[0].mxu0 %v394
    %v1592 = vpop.f32.mrb[0].mxu0
    %v1593 = vadd.f32 %v1208, %v1592
    %v1594 = vpop.f32.mrb[0].mxu0
    %1595 = vmatprep.mubr.f32.mxu0 %v467
    %1596 = vmatmul.mubr.f32.gmra.mrb[0].mxu0 %v395
    %v1597 = vpop.f32.mrb[0].mxu0
    %v1598 = vadd.f32 %v1213, %v1597
    %v1599 = vpop.f32.mrb[0].mxu0
    %1600 = vmatprep.mubr.f32.mxu0 %v468
    %1601 = vmatmul.mubr.f32.gmra.mrb[0].mxu0 %v396
    %v1602 = vpop.f32.mrb[0].mxu0
    %v1603 = vadd.f32 %v1218, %v1602
    %v1604 = vpop.f32.mrb[0].mxu0
    %1605 = vmatprep.mubr.f32.mxu0 %v469
    %1606 = vmatmul.mubr.f32.gmra.mrb[0].mxu0 %v397
    %v1607 = vpop.f32.mrb[0].mxu0
    %v1608 = vadd.f32 %v1223, %v1607
    %v1609 = vpop.f32.mrb[0].mxu0
    %1610 = vmatprep.mubr.f32.mxu0 %v470
    %1611 = vmatmul.mubr.f32.gmra.mrb[0].mxu0 %v398
    %v1612 = vpop.f32.mrb[0].mxu0
    %v1613 = vadd.f32 %v1228, %v1612
    %v1614 = vpop.f32.mrb[0].mxu0
    %1615 = vmatprep.mubr.f32.mxu0 %v471
    %1616 = vmatmul.mubr.f32.gmra.mrb[0].mxu0 %v399
    %v1617 = vpop.f32.mrb[0].mxu0
    %v1618 = vadd.f32 %v1233, %v1617
    %v1619 = vpop.f32.mrb[0].mxu0
    %1620 = vmatprep.mubr.f32.mxu0 %v472
    %1621 = vmatmul.mubr.f32.gmra.mrb[0].mxu0 %v400
    %v1622 = vpop.f32.mrb[0].mxu0
    %v1623 = vadd.f32 %v1238, %v1622
    %v1624 = vpop.f32.mrb[0].mxu0
    %1625 = vmatprep.mubr.f32.mxu0 %v473
    %1626 = vmatmul.mubr.f32.gmra.mrb[0].mxu0 %v401
    %v1627 = vpop.f32.mrb[0].mxu0
    %v1628 = vadd.f32 %v1243, %v1627
    %v1629 = vpop.f32.mrb[0].mxu0
    %1630 = vmatprep.mubr.f32.mxu0 %v474
    %1631 = vmatmul.mubr.f32.gmra.mrb[0].mxu0 %v402
    %v1632 = vpop.f32.mrb[0].mxu0
    %v1633 = vadd.f32 %v1248, %v1632
    %v1634 = vpop.f32.mrb[0].mxu0
    %1635 = vmatprep.mubr.f32.mxu0 %v475
    %1636 = vmatmul.mubr.f32.gmra.mrb[0].mxu0 %v403
    %v1637 = vpop.f32.mrb[0].mxu0
    %v1638 = vadd.f32 %v1253, %v1637
    %v1639 = vpop.f32.mrb[0].mxu0
    %1640 = vmatprep.mubr.f32.mxu0 %v476
    %1641 = vmatmul.mubr.f32.gmra.mrb[0].mxu0 %v404
    %v1642 = vpop.f32.mrb[0].mxu0
    %v1643 = vadd.f32 %v1258, %v1642
    %v1644 = vpop.f32.mrb[0].mxu0
    %1645 = vmatprep.mubr.f32.mxu0 %v477
    %1646 = vmatmul.mubr.f32.gmra.mrb[0].mxu0 %v405
    %v1647 = vpop.f32.mrb[0].mxu0
    %v1648 = vadd.f32 %v1263, %v1647
    %v1649 = vpop.f32.mrb[0].mxu0
    %1650 = vmatprep.mubr.f32.mxu0 %v478
    %1651 = vmatmul.mubr.f32.gmra.mrb[0].mxu0 %v406
    %v1652 = vpop.f32.mrb[0].mxu0
    %v1653 = vadd.f32 %v1268, %v1652
    %v1654 = vpop.f32.mrb[0].mxu0
    %1655 = vmatprep.mubr.f32.mxu0 %v483
    %1656 = vmatmul.mubr.f32.gmra.mrb[0].mxu0 %v411
    %v1657 = vpop.f32.mrb[0].mxu0
    %v1658 = vadd.f32 %v1273, %v1657
    %v1659 = vpop.f32.mrb[0].mxu0
    %1660 = vmatprep.mubr.f32.mxu0 %v484
    %1661 = vmatmul.mubr.f32.gmra.mrb[0].mxu0 %v412
    %v1662 = vpop.f32.mrb[0].mxu0
    %v1663 = vadd.f32 %v1278, %v1662
    %v1664 = vpop.f32.mrb[0].mxu0
    %1665 = vmatprep.mubr.f32.mxu0 %v485
    %1666 = vmatmul.mubr.f32.gmra.mrb[0].mxu0 %v413
    %v1667 = vpop.f32.mrb[0].mxu0
    %v1668 = vadd.f32 %v1283, %v1667
    %v1669 = vpop.f32.mrb[0].mxu0
    %1670 = vmatprep.mubr.f32.mxu0 %v486
    %1671 = vmatmul.mubr.f32.gmra.mrb[0].mxu0 %v414
    %v1672 = vpop.f32.mrb[0].mxu0
    %v1673 = vadd.f32 %v1288, %v1672
    %v1674 = vpop.f32.mrb[0].mxu0
    %1675 = vmatprep.mubr.f32.mxu0 %v487
    %1676 = vmatmul.mubr.f32.gmra.mrb[0].mxu0 %v415
    %v1677 = vpop.f32.mrb[0].mxu0
    %v1678 = vadd.f32 %v1293, %v1677
    %v1679 = vpop.f32.mrb[0].mxu0
    %1680 = vmatprep.mubr.f32.mxu0 %v488
    %1681 = vmatmul.mubr.f32.gmra.mrb[0].mxu0 %v416
    %v1682 = vpop.f32.mrb[0].mxu0
    %v1683 = vadd.f32 %v1298, %v1682
    %v1684 = vpop.f32.mrb[0].mxu0
    %1685 = vmatprep.mubr.f32.mxu0 %v489
    %1686 = vmatmul.mubr.f32.gmra.mrb[0].mxu0 %v417
    %v1687 = vpop.f32.mrb[0].mxu0
    %v1688 = vadd.f32 %v1303, %v1687
    %v1689 = vpop.f32.mrb[0].mxu0
    %1690 = vmatprep.mubr.f32.mxu0 %v490
    %1691 = vmatmul.mubr.f32.gmra.mrb[0].mxu0 %v418
    %v1692 = vpop.f32.mrb[0].mxu0
    %v1693 = vadd.f32 %v1308, %v1692
    %v1694 = vpop.f32.mrb[0].mxu0
    %1695 = vmatprep.mubr.f32.mxu0 %v491
    %1696 = vmatmul.mubr.f32.gmra.mrb[0].mxu0 %v419
    %v1697 = vpop.f32.mrb[0].mxu0
    %v1698 = vadd.f32 %v1313, %v1697
    %v1699 = vpop.f32.mrb[0].mxu0
    %1700 = vmatprep.mubr.f32.mxu0 %v492
    %1701 = vmatmul.mubr.f32.gmra.mrb[0].mxu0 %v420
    %v1702 = vpop.f32.mrb[0].mxu0
    %v1703 = vadd.f32 %v1318, %v1702
    %v1704 = vpop.f32.mrb[0].mxu0
    %1705 = vmatprep.mubr.f32.mxu0 %v493
    %1706 = vmatmul.mubr.f32.gmra.mrb[0].mxu0 %v421
    %v1707 = vpop.f32.mrb[0].mxu0
    %v1708 = vadd.f32 %v1323, %v1707
    %v1709 = vpop.f32.mrb[0].mxu0
    %1710 = vmatprep.mubr.f32.mxu0 %v494
    %1711 = vmatmul.mubr.f32.gmra.mrb[0].mxu0 %v422
    %v1712 = vpop.f32.mrb[0].mxu0
    %v1713 = vadd.f32 %v1328, %v1712
    %v1714 = vpop.f32.mrb[0].mxu0
    %1715 = vmatprep.mubr.f32.mxu0 %v495
    %1716 = vmatmul.mubr.f32.gmra.mrb[0].mxu0 %v423
    %v1717 = vpop.f32.mrb[0].mxu0
    %v1718 = vadd.f32 %v1333, %v1717
    %v1719 = vpop.f32.mrb[0].mxu0
    %1720 = vmatprep.mubr.f32.mxu0 %v496
    %1721 = vmatmul.mubr.f32.gmra.mrb[0].mxu0 %v424
    %v1722 = vpop.f32.mrb[0].mxu0
    %v1723 = vadd.f32 %v1338, %v1722
    %v1724 = vpop.f32.mrb[0].mxu0
    %1725 = vmatprep.mubr.f32.mxu0 %v497
    %1726 = vmatmul.mubr.f32.gmra.mrb[0].mxu0 %v425
    %v1727 = vpop.f32.mrb[0].mxu0
    %v1728 = vadd.f32 %v1343, %v1727
    %v1729 = vpop.f32.mrb[0].mxu0
    %1730 = vmatprep.mubr.f32.mxu0 %v498
    %1731 = vmatmul.mubr.f32.gmra.mrb[0].mxu0 %v426
    %v1732 = vpop.f32.mrb[0].mxu0
    %v1733 = vadd.f32 %v1348, %v1732
    %v1734 = vpop.f32.mrb[0].mxu0
    %1735 = vmatprep.mubr.f32.mxu0 %v499
    %1736 = vmatmul.mubr.f32.gmra.mrb[0].mxu0 %v427
    %v1737 = vpop.f32.mrb[0].mxu0
    %v1738 = vadd.f32 %v1353, %v1737
    %v1739 = vpop.f32.mrb[0].mxu0
    %1740 = vmatprep.mubr.f32.mxu0 %v500
    %1741 = vmatmul.mubr.f32.gmra.mrb[0].mxu0 %v428
    %v1742 = vpop.f32.mrb[0].mxu0
    %v1743 = vadd.f32 %v1358, %v1742
    %v1744 = vpop.f32.mrb[0].mxu0
    %1745 = vmatprep.mubr.f32.mxu0 %v501
    %1746 = vmatmul.mubr.f32.gmra.mrb[0].mxu0 %v429
    %v1747 = vpop.f32.mrb[0].mxu0
    %v1748 = vadd.f32 %v1363, %v1747
    %v1749 = vpop.f32.mrb[0].mxu0
    %1750 = vmatprep.mubr.f32.mxu0 %v502
    %1751 = vmatmul.mubr.f32.gmra.mrb[0].mxu0 %v430
    %v1752 = vpop.f32.mrb[0].mxu0
    %v1753 = vadd.f32 %v1368, %v1752
    %v1754 = vpop.f32.mrb[0].mxu0
    %1755 = vmatprep.mubr.f32.mxu0 %v503
    %1756 = vmatmul.mubr.f32.gmra.mrb[0].mxu0 %v431
    %v1757 = vpop.f32.mrb[0].mxu0
    %v1758 = vadd.f32 %v1373, %v1757
    %v1759 = vpop.f32.mrb[0].mxu0
    %1760 = vmatprep.mubr.f32.mxu0 %v504
    %1761 = vmatmul.mubr.f32.gmra.mrb[0].mxu0 %v432
    %v1762 = vpop.f32.mrb[0].mxu0
    %v1763 = vadd.f32 %v1378, %v1762
    %v1764 = vpop.f32.mrb[0].mxu0
    %1765 = vmatprep.mubr.f32.mxu0 %v505
    %1766 = vmatmul.mubr.f32.gmra.mrb[0].mxu0 %v433
    %v1767 = vpop.f32.mrb[0].mxu0
    %v1768 = vadd.f32 %v1383, %v1767
    %v1769 = vpop.f32.mrb[0].mxu0
    %1770 = vmatprep.mubr.f32.mxu0 %v506
    %1771 = vmatmul.mubr.f32.gmra.mrb[0].mxu0 %v434
    %v1772 = vpop.f32.mrb[0].mxu0
    %v1773 = vadd.f32 %v1388, %v1772
    %v1774 = vpop.f32.mrb[0].mxu0
    %1775 = vmatprep.mubr.f32.mxu0 %v507
    %1776 = vmatmul.mubr.f32.gmra.mrb[0].mxu0 %v435
    %v1777 = vpop.f32.mrb[0].mxu0
    %v1778 = vadd.f32 %v1393, %v1777
    %v1779 = vpop.f32.mrb[0].mxu0
    %1780 = vmatprep.mubr.f32.mxu0 %v508
    %1781 = vmatmul.mubr.f32.gmra.mrb[0].mxu0 %v436
    %v1782 = vpop.f32.mrb[0].mxu0
    %v1783 = vadd.f32 %v1398, %v1782
    %v1784 = vpop.f32.mrb[0].mxu0
    %1785 = vmatprep.mubr.f32.mxu0 %v509
    %1786 = vmatmul.mubr.f32.gmra.mrb[0].mxu0 %v437
    %v1787 = vpop.f32.mrb[0].mxu0
    %v1788 = vadd.f32 %v1403, %v1787
    %v1789 = vpop.f32.mrb[0].mxu0
    %1790 = vmatprep.mubr.f32.mxu0 %v510
    %1791 = vmatmul.mubr.f32.gmra.mrb[0].mxu0 %v438
    %v1792 = vpop.f32.mrb[0].mxu0
    %v1793 = vadd.f32 %v1408, %v1792
    %v1794 = vpop.f32.mrb[0].mxu0
    %1795 = vmatprep.mubr.f32.mxu0 %v511
    %1796 = vmatmul.mubr.f32.gmra.mrb[0].mxu0 %v439
    %v1797 = vpop.f32.mrb[0].mxu0
    %v1798 = vadd.f32 %v1413, %v1797
    %v1799 = vpop.f32.mrb[0].mxu0
    %1800 = vmatprep.mubr.f32.mxu0 %v512
    %1801 = vmatmul.mubr.f32.gmra.mrb[0].mxu0 %v440
    %v1802 = vpop.f32.mrb[0].mxu0
    %v1803 = vadd.f32 %v1418, %v1802
    %v1804 = vpop.f32.mrb[0].mxu0
    %1805 = vmatprep.mubr.f32.mxu0 %v513
    %1806 = vmatmul.mubr.f32.gmra.mrb[0].mxu0 %v441
    %v1807 = vpop.f32.mrb[0].mxu0
    %v1808 = vadd.f32 %v1423, %v1807
    %v1809 = vpop.f32.mrb[0].mxu0
    %1810 = vmatprep.mubr.f32.mxu0 %v514
    %1811 = vmatmul.mubr.f32.gmra.mrb[0].mxu0 %v442
    %v1812 = vpop.f32.mrb[0].mxu0
    %v1813 = vadd.f32 %v1428, %v1812
    %v1814 = vpop.f32.mrb[0].mxu0
    %1815 = vdwg.mxu0
    %1816 = vmatprep.subr.mxu0 0.0
    %1817 = vmatpush1.msra.mxu0 %v613
    %1818 = vmatprep.subr.mxu0 0.0
    %1819 = vmatpush1.msra.mxu0 %v614
    %1820 = vmatprep.subr.mxu0 0.0
    %1821 = vmatpush1.msra.mxu0 %v615
    %1822 = vmatprep.subr.mxu0 0.0
    %1823 = vmatpush1.msra.mxu0 %v616
    %1824 = vmatprep.subr.mxu0 0.0
    %1825 = vmatpush1.msra.mxu0 %v617
    %1826 = vmatprep.subr.mxu0 0.0
    %1827 = vmatpush1.msra.mxu0 %v618
    %1828 = vmatprep.subr.mxu0 0.0
    %1829 = vmatpush1.msra.mxu0 %v619
    %1830 = vmatprep.subr.mxu0 0.0
    %1831 = vmatpush1.msra.mxu0 %v620
    %1832 = vmatprep.subr.mxu0 0.0
    %1833 = vmatpush1.msra.mxu0 %v621
    %1834 = vmatprep.subr.mxu0 0.0
    %1835 = vmatpush1.msra.mxu0 %v622
    %1836 = vmatprep.subr.mxu0 0.0
    %1837 = vmatpush1.msra.mxu0 %v623
    %1838 = vmatprep.subr.mxu0 0.0
    %1839 = vmatpush1.msra.mxu0 %v624
    %1840 = vmatprep.subr.mxu0 0.0
    %1841 = vmatpush1.msra.mxu0 %v625
    %1842 = vmatprep.subr.mxu0 0.0
    %1843 = vmatpush1.msra.mxu0 %v626
    %1844 = vmatprep.subr.mxu0 0.0
    %1845 = vmatpush1.msra.mxu0 %v627
    %1846 = vmatprep.subr.mxu0 0.0
    %1847 = vmatpush1.msra.mxu0 %v628
    %1848 = vmatprep.subr.mxu0 0.0
    %1849 = vmatpush1.msra.mxu0 %v629
    %1850 = vmatprep.subr.mxu0 0.0
    %1851 = vmatpush1.msra.mxu0 %v630
    %1852 = vmatprep.subr.mxu0 0.0
    %1853 = vmatpush1.msra.mxu0 %v631
    %1854 = vmatprep.subr.mxu0 0.0
    %1855 = vmatpush1.msra.mxu0 %v632
    %1856 = vmatprep.subr.mxu0 0.0
    %1857 = vmatpush1.msra.mxu0 %v633
    %1858 = vmatprep.subr.mxu0 0.0
    %1859 = vmatpush1.msra.mxu0 %v634
    %1860 = vmatprep.subr.mxu0 0.0
    %1861 = vmatpush1.msra.mxu0 %v635
    %1862 = vmatprep.subr.mxu0 0.0
    %1863 = vmatpush1.msra.mxu0 %v636
    %1864 = vmatprep.subr.mxu0 0.0
    %1865 = vmatpush1.msra.mxu0 %v637
    %1866 = vmatprep.subr.mxu0 0.0
    %1867 = vmatpush1.msra.mxu0 %v638
    %1868 = vmatprep.subr.mxu0 0.0
    %1869 = vmatpush1.msra.mxu0 %v639
    %1870 = vmatprep.subr.mxu0 0.0
    %1871 = vmatpush1.msra.mxu0 %v640
    %1872 = vmatprep.subr.mxu0 0.0
    %1873 = vmatpush1.msra.mxu0 %v641
    %1874 = vmatprep.subr.mxu0 0.0
    %1875 = vmatpush1.msra.mxu0 %v642
    %1876 = vmatprep.subr.mxu0 0.0
    %1877 = vmatpush1.msra.mxu0 %v643
    %1878 = vmatprep.subr.mxu0 0.0
    %1879 = vmatpush1.msra.mxu0 %v644
    %1880 = vmatprep.mubr.f32.mxu0 %v377
    %1881 = vmatmul.mubr.f32.gmra.mrb[0].mxu0 %v305
    %v1882 = vpop.f32.mrb[0].mxu0
    %v1883 = vadd.f32 %v1498, %v1882
    %v1884 = vpop.f32.mrb[0].mxu0
    %1885 = vmatprep.mubr.f32.mxu0 %v378
    %1886 = vmatmul.mubr.f32.gmra.mrb[0].mxu0 %v306
    %v1887 = vpop.f32.mrb[0].mxu0
    %v1888 = vadd.f32 %v1503, %v1887
    %v1889 = vpop.f32.mrb[0].mxu0
    %1890 = vmatprep.mubr.f32.mxu0 %v379
    %1891 = vmatmul.mubr.f32.gmra.mrb[0].mxu0 %v307
    %v1892 = vpop.f32.mrb[0].mxu0
    %v1893 = vadd.f32 %v1508, %v1892
    %v1894 = vpop.f32.mrb[0].mxu0
    %1895 = vmatprep.mubr.f32.mxu0 %v380
    %1896 = vmatmul.mubr.f32.gmra.mrb[0].mxu0 %v308
    %v1897 = vpop.f32.mrb[0].mxu0
    %v1898 = vadd.f32 %v1513, %v1897
    %v1899 = vpop.f32.mrb[0].mxu0
    %1900 = vmatprep.mubr.f32.mxu0 %v381
    %1901 = vmatmul.mubr.f32.gmra.mrb[0].mxu0 %v309
    %v1902 = vpop.f32.mrb[0].mxu0
    %v1903 = vadd.f32 %v1518, %v1902
    %v1904 = vpop.f32.mrb[0].mxu0
    %1905 = vmatprep.mubr.f32.mxu0 %v382
    %1906 = vmatmul.mubr.f32.gmra.mrb[0].mxu0 %v310
    %v1907 = vpop.f32.mrb[0].mxu0
    %v1908 = vadd.f32 %v1523, %v1907
    %v1909 = vpop.f32.mrb[0].mxu0
    %1910 = vmatprep.mubr.f32.mxu0 %v383
    %1911 = vmatmul.mubr.f32.gmra.mrb[0].mxu0 %v311
    %v1912 = vpop.f32.mrb[0].mxu0
    %v1913 = vadd.f32 %v1528, %v1912
    %v1914 = vpop.f32.mrb[0].mxu0
    %1915 = vmatprep.mubr.f32.mxu0 %v384
    %1916 = vmatmul.mubr.f32.gmra.mrb[0].mxu0 %v312
    %v1917 = vpop.f32.mrb[0].mxu0
    %v1918 = vadd.f32 %v1533, %v1917
    %v1919 = vpop.f32.mrb[0].mxu0
    %1920 = vmatprep.mubr.f32.mxu0 %v385
    %1921 = vmatmul.mubr.f32.gmra.mrb[0].mxu0 %v313
    %v1922 = vpop.f32.mrb[0].mxu0
    %v1923 = vadd.f32 %v1538, %v1922
    %v1924 = vpop.f32.mrb[0].mxu0
    %1925 = vmatprep.mubr.f32.mxu0 %v386
    %1926 = vmatmul.mubr.f32.gmra.mrb[0].mxu0 %v314
    %v1927 = vpop.f32.mrb[0].mxu0
    %v1928 = vadd.f32 %v1543, %v1927
    %v1929 = vpop.f32.mrb[0].mxu0
    %1930 = vmatprep.mubr.f32.mxu0 %v387
    %1931 = vmatmul.mubr.f32.gmra.mrb[0].mxu0 %v315
    %v1932 = vpop.f32.mrb[0].mxu0
    %v1933 = vadd.f32 %v1548, %v1932
    %v1934 = vpop.f32.mrb[0].mxu0
    %1935 = vmatprep.mubr.f32.mxu0 %v388
    %1936 = vmatmul.mubr.f32.gmra.mrb[0].mxu0 %v316
    %v1937 = vpop.f32.mrb[0].mxu0
    %v1938 = vadd.f32 %v1553, %v1937
    %v1939 = vpop.f32.mrb[0].mxu0
    %1940 = vmatprep.mubr.f32.mxu0 %v389
    %1941 = vmatmul.mubr.f32.gmra.mrb[0].mxu0 %v317
    %v1942 = vpop.f32.mrb[0].mxu0
    %v1943 = vadd.f32 %v1558, %v1942
    %v1944 = vpop.f32.mrb[0].mxu0
    %1945 = vmatprep.mubr.f32.mxu0 %v390
    %1946 = vmatmul.mubr.f32.gmra.mrb[0].mxu0 %v318
    %v1947 = vpop.f32.mrb[0].mxu0
    %v1948 = vadd.f32 %v1563, %v1947
    %v1949 = vpop.f32.mrb[0].mxu0
    %1950 = vmatprep.mubr.f32.mxu0 %v391
    %1951 = vmatmul.mubr.f32.gmra.mrb[0].mxu0 %v319
    %v1952 = vpop.f32.mrb[0].mxu0
    %v1953 = vadd.f32 %v1568, %v1952
    %v1954 = vpop.f32.mrb[0].mxu0
    %1955 = vmatprep.mubr.f32.mxu0 %v392
    %1956 = vmatmul.mubr.f32.gmra.mrb[0].mxu0 %v320
    %v1957 = vpop.f32.mrb[0].mxu0
    %v1958 = vadd.f32 %v1573, %v1957
    %v1959 = vpop.f32.mrb[0].mxu0
    %1960 = vmatprep.mubr.f32.mxu0 %v393
    %1961 = vmatmul.mubr.f32.gmra.mrb[0].mxu0 %v321
    %v1962 = vpop.f32.mrb[0].mxu0
    %v1963 = vadd.f32 %v1578, %v1962
    %v1964 = vpop.f32.mrb[0].mxu0
    %1965 = vmatprep.mubr.f32.mxu0 %v394
    %1966 = vmatmul.mubr.f32.gmra.mrb[0].mxu0 %v322
    %v1967 = vpop.f32.mrb[0].mxu0
    %v1968 = vadd.f32 %v1583, %v1967
    %v1969 = vpop.f32.mrb[0].mxu0
    %1970 = vmatprep.mubr.f32.mxu0 %v395
    %1971 = vmatmul.mubr.f32.gmra.mrb[0].mxu0 %v323
    %v1972 = vpop.f32.mrb[0].mxu0
    %v1973 = vadd.f32 %v1588, %v1972
    %v1974 = vpop.f32.mrb[0].mxu0
    %1975 = vmatprep.mubr.f32.mxu0 %v396
    %1976 = vmatmul.mubr.f32.gmra.mrb[0].mxu0 %v324
    %v1977 = vpop.f32.mrb[0].mxu0
    %v1978 = vadd.f32 %v1593, %v1977
    %v1979 = vpop.f32.mrb[0].mxu0
    %1980 = vmatprep.mubr.f32.mxu0 %v397
    %1981 = vmatmul.mubr.f32.gmra.mrb[0].mxu0 %v325
    %v1982 = vpop.f32.mrb[0].mxu0
    %v1983 = vadd.f32 %v1598, %v1982
    %v1984 = vpop.f32.mrb[0].mxu0
    %1985 = vmatprep.mubr.f32.mxu0 %v398
    %1986 = vmatmul.mubr.f32.gmra.mrb[0].mxu0 %v326
    %v1987 = vpop.f32.mrb[0].mxu0
    %v1988 = vadd.f32 %v1603, %v1987
    %v1989 = vpop.f32.mrb[0].mxu0
    %1990 = vmatprep.mubr.f32.mxu0 %v399
    %1991 = vmatmul.mubr.f32.gmra.mrb[0].mxu0 %v327
    %v1992 = vpop.f32.mrb[0].mxu0
    %v1993 = vadd.f32 %v1608, %v1992
    %v1994 = vpop.f32.mrb[0].mxu0
    %1995 = vmatprep.mubr.f32.mxu0 %v400
    %1996 = vmatmul.mubr.f32.gmra.mrb[0].mxu0 %v328
    %v1997 = vpop.f32.mrb[0].mxu0
    %v1998 = vadd.f32 %v1613, %v1997
    %v1999 = vpop.f32.mrb[0].mxu0
    %2000 = vmatprep.mubr.f32.mxu0 %v401
    %2001 = vmatmul.mubr.f32.gmra.mrb[0].mxu0 %v329
    %v2002 = vpop.f32.mrb[0].mxu0
    %v2003 = vadd.f32 %v1618, %v2002
    %v2004 = vpop.f32.mrb[0].mxu0
    %2005 = vmatprep.mubr.f32.mxu0 %v402
    %2006 = vmatmul.mubr.f32.gmra.mrb[0].mxu0 %v330
    %v2007 = vpop.f32.mrb[0].mxu0
    %v2008 = vadd.f32 %v1623, %v2007
    %v2009 = vpop.f32.mrb[0].mxu0
    %2010 = vmatprep.mubr.f32.mxu0 %v403
    %2011 = vmatmul.mubr.f32.gmra.mrb[0].mxu0 %v331
    %v2012 = vpop.f32.mrb[0].mxu0
    %v2013 = vadd.f32 %v1628, %v2012
    %v2014 = vpop.f32.mrb[0].mxu0
    %2015 = vmatprep.mubr.f32.mxu0 %v404
    %2016 = vmatmul.mubr.f32.gmra.mrb[0].mxu0 %v332
    %v2017 = vpop.f32.mrb[0].mxu0
    %v2018 = vadd.f32 %v1633, %v2017
    %v2019 = vpop.f32.mrb[0].mxu0
    %2020 = vmatprep.mubr.f32.mxu0 %v405
    %2021 = vmatmul.mubr.f32.gmra.mrb[0].mxu0 %v333
    %v2022 = vpop.f32.mrb[0].mxu0
    %v2023 = vadd.f32 %v1638, %v2022
    %v2024 = vpop.f32.mrb[0].mxu0
    %2025 = vmatprep.mubr.f32.mxu0 %v406
    %2026 = vmatmul.mubr.f32.gmra.mrb[0].mxu0 %v334
    %v2027 = vpop.f32.mrb[0].mxu0
    %v2028 = vadd.f32 %v1643, %v2027
    %v2029 = vpop.f32.mrb[0].mxu0
    %2030 = vmatprep.mubr.f32.mxu0 %v407
    %2031 = vmatmul.mubr.f32.gmra.mrb[0].mxu0 %v335
    %v2032 = vpop.f32.mrb[0].mxu0
    %v2033 = vadd.f32 %v1648, %v2032
    %v2034 = vpop.f32.mrb[0].mxu0
    %2035 = vmatprep.mubr.f32.mxu0 %v408
    %2036 = vmatmul.mubr.f32.gmra.mrb[0].mxu0 %v336
    %v2037 = vpop.f32.mrb[0].mxu0
    %v2038 = vadd.f32 %v1653, %v2037
    %v2039 = vpop.f32.mrb[0].mxu0
    %2040 = vmatprep.mubr.f32.mxu0 %v413
    %2041 = vmatmul.mubr.f32.gmra.mrb[0].mxu0 %v341
    %v2042 = vpop.f32.mrb[0].mxu0
    %v2043 = vadd.f32 %v1658, %v2042
    %v2044 = vpop.f32.mrb[0].mxu0
    %2045 = vmatprep.mubr.f32.mxu0 %v414
    %2046 = vmatmul.mubr.f32.gmra.mrb[0].mxu0 %v342
    %v2047 = vpop.f32.mrb[0].mxu0
    %v2048 = vadd.f32 %v1663, %v2047
    %v2049 = vpop.f32.mrb[0].mxu0
    %2050 = vmatprep.mubr.f32.mxu0 %v415
    %2051 = vmatmul.mubr.f32.gmra.mrb[0].mxu0 %v343
    %v2052 = vpop.f32.mrb[0].mxu0
    %v2053 = vadd.f32 %v1668, %v2052
    %v2054 = vpop.f32.mrb[0].mxu0
    %2055 = vmatprep.mubr.f32.mxu0 %v416
    %2056 = vmatmul.mubr.f32.gmra.mrb[0].mxu0 %v344
    %v2057 = vpop.f32.mrb[0].mxu0
    %v2058 = vadd.f32 %v1673, %v2057
    %v2059 = vpop.f32.mrb[0].mxu0
    %2060 = vmatprep.mubr.f32.mxu0 %v417
    %2061 = vmatmul.mubr.f32.gmra.mrb[0].mxu0 %v345
    %v2062 = vpop.f32.mrb[0].mxu0
    %v2063 = vadd.f32 %v1678, %v2062
    %v2064 = vpop.f32.mrb[0].mxu0
    %2065 = vmatprep.mubr.f32.mxu0 %v418
    %2066 = vmatmul.mubr.f32.gmra.mrb[0].mxu0 %v346
    %v2067 = vpop.f32.mrb[0].mxu0
    %v2068 = vadd.f32 %v1683, %v2067
    %v2069 = vpop.f32.mrb[0].mxu0
    %2070 = vmatprep.mubr.f32.mxu0 %v419
    %2071 = vmatmul.mubr.f32.gmra.mrb[0].mxu0 %v347
    %v2072 = vpop.f32.mrb[0].mxu0
    %v2073 = vadd.f32 %v1688, %v2072
    %v2074 = vpop.f32.mrb[0].mxu0
    %2075 = vmatprep.mubr.f32.mxu0 %v420
    %2076 = vmatmul.mubr.f32.gmra.mrb[0].mxu0 %v348
    %v2077 = vpop.f32.mrb[0].mxu0
    %v2078 = vadd.f32 %v1693, %v2077
    %v2079 = vpop.f32.mrb[0].mxu0
    %2080 = vmatprep.mubr.f32.mxu0 %v421
    %2081 = vmatmul.mubr.f32.gmra.mrb[0].mxu0 %v349
    %v2082 = vpop.f32.mrb[0].mxu0
    %v2083 = vadd.f32 %v1698, %v2082
    %v2084 = vpop.f32.mrb[0].mxu0
    %2085 = vmatprep.mubr.f32.mxu0 %v422
    %2086 = vmatmul.mubr.f32.gmra.mrb[0].mxu0 %v350
    %v2087 = vpop.f32.mrb[0].mxu0
    %v2088 = vadd.f32 %v1703, %v2087
    %v2089 = vpop.f32.mrb[0].mxu0
    %2090 = vmatprep.mubr.f32.mxu0 %v423
    %2091 = vmatmul.mubr.f32.gmra.mrb[0].mxu0 %v351
    %v2092 = vpop.f32.mrb[0].mxu0
    %v2093 = vadd.f32 %v1708, %v2092
    %v2094 = vpop.f32.mrb[0].mxu0
    %2095 = vmatprep.mubr.f32.mxu0 %v424
    %2096 = vmatmul.mubr.f32.gmra.mrb[0].mxu0 %v352
    %v2097 = vpop.f32.mrb[0].mxu0
    %v2098 = vadd.f32 %v1713, %v2097
    %v2099 = vpop.f32.mrb[0].mxu0
    %2100 = vmatprep.mubr.f32.mxu0 %v425
    %2101 = vmatmul.mubr.f32.gmra.mrb[0].mxu0 %v353
    %v2102 = vpop.f32.mrb[0].mxu0
    %v2103 = vadd.f32 %v1718, %v2102
    %v2104 = vpop.f32.mrb[0].mxu0
    %2105 = vmatprep.mubr.f32.mxu0 %v426
    %2106 = vmatmul.mubr.f32.gmra.mrb[0].mxu0 %v354
    %v2107 = vpop.f32.mrb[0].mxu0
    %v2108 = vadd.f32 %v1723, %v2107
    %v2109 = vpop.f32.mrb[0].mxu0
    %2110 = vmatprep.mubr.f32.mxu0 %v427
    %2111 = vmatmul.mubr.f32.gmra.mrb[0].mxu0 %v355
    %v2112 = vpop.f32.mrb[0].mxu0
    %v2113 = vadd.f32 %v1728, %v2112
    %v2114 = vpop.f32.mrb[0].mxu0
    %2115 = vmatprep.mubr.f32.mxu0 %v428
    %2116 = vmatmul.mubr.f32.gmra.mrb[0].mxu0 %v356
    %v2117 = vpop.f32.mrb[0].mxu0
    %v2118 = vadd.f32 %v1733, %v2117
    %v2119 = vpop.f32.mrb[0].mxu0
    %2120 = vmatprep.mubr.f32.mxu0 %v429
    %2121 = vmatmul.mubr.f32.gmra.mrb[0].mxu0 %v357
    %v2122 = vpop.f32.mrb[0].mxu0
    %v2123 = vadd.f32 %v1738, %v2122
    %v2124 = vpop.f32.mrb[0].mxu0
    %2125 = vmatprep.mubr.f32.mxu0 %v430
    %2126 = vmatmul.mubr.f32.gmra.mrb[0].mxu0 %v358
    %v2127 = vpop.f32.mrb[0].mxu0
    %v2128 = vadd.f32 %v1743, %v2127
    %v2129 = vpop.f32.mrb[0].mxu0
    %2130 = vmatprep.mubr.f32.mxu0 %v431
    %2131 = vmatmul.mubr.f32.gmra.mrb[0].mxu0 %v359
    %v2132 = vpop.f32.mrb[0].mxu0
    %v2133 = vadd.f32 %v1748, %v2132
    %v2134 = vpop.f32.mrb[0].mxu0
    %2135 = vmatprep.mubr.f32.mxu0 %v432
    %2136 = vmatmul.mubr.f32.gmra.mrb[0].mxu0 %v360
    %v2137 = vpop.f32.mrb[0].mxu0
    %v2138 = vadd.f32 %v1753, %v2137
    %v2139 = vpop.f32.mrb[0].mxu0
    %2140 = vmatprep.mubr.f32.mxu0 %v433
    %2141 = vmatmul.mubr.f32.gmra.mrb[0].mxu0 %v361
    %v2142 = vpop.f32.mrb[0].mxu0
    %v2143 = vadd.f32 %v1758, %v2142
    %v2144 = vpop.f32.mrb[0].mxu0
    %2145 = vmatprep.mubr.f32.mxu0 %v434
    %2146 = vmatmul.mubr.f32.gmra.mrb[0].mxu0 %v362
    %v2147 = vpop.f32.mrb[0].mxu0
    %v2148 = vadd.f32 %v1763, %v2147
    %v2149 = vpop.f32.mrb[0].mxu0
    %2150 = vmatprep.mubr.f32.mxu0 %v435
    %2151 = vmatmul.mubr.f32.gmra.mrb[0].mxu0 %v363
    %v2152 = vpop.f32.mrb[0].mxu0
    %v2153 = vadd.f32 %v1768, %v2152
    %v2154 = vpop.f32.mrb[0].mxu0
    %2155 = vmatprep.mubr.f32.mxu0 %v436
    %2156 = vmatmul.mubr.f32.gmra.mrb[0].mxu0 %v364
    %v2157 = vpop.f32.mrb[0].mxu0
    %v2158 = vadd.f32 %v1773, %v2157
    %v2159 = vpop.f32.mrb[0].mxu0
    %2160 = vmatprep.mubr.f32.mxu0 %v437
    %2161 = vmatmul.mubr.f32.gmra.mrb[0].mxu0 %v365
    %v2162 = vpop.f32.mrb[0].mxu0
    %v2163 = vadd.f32 %v1778, %v2162
    %v2164 = vpop.f32.mrb[0].mxu0
    %2165 = vmatprep.mubr.f32.mxu0 %v438
    %2166 = vmatmul.mubr.f32.gmra.mrb[0].mxu0 %v366
    %v2167 = vpop.f32.mrb[0].mxu0
    %v2168 = vadd.f32 %v1783, %v2167
    %v2169 = vpop.f32.mrb[0].mxu0
    %2170 = vmatprep.mubr.f32.mxu0 %v439
    %2171 = vmatmul.mubr.f32.gmra.mrb[0].mxu0 %v367
    %v2172 = vpop.f32.mrb[0].mxu0
    %v2173 = vadd.f32 %v1788, %v2172
    %v2174 = vpop.f32.mrb[0].mxu0
    %2175 = vmatprep.mubr.f32.mxu0 %v440
    %2176 = vmatmul.mubr.f32.gmra.mrb[0].mxu0 %v368
    %v2177 = vpop.f32.mrb[0].mxu0
    %v2178 = vadd.f32 %v1793, %v2177
    %v2179 = vpop.f32.mrb[0].mxu0
    %2180 = vmatprep.mubr.f32.mxu0 %v441
    %2181 = vmatmul.mubr.f32.gmra.mrb[0].mxu0 %v369
    %v2182 = vpop.f32.mrb[0].mxu0
    %v2183 = vadd.f32 %v1798, %v2182
    %v2184 = vpop.f32.mrb[0].mxu0
    %2185 = vmatprep.mubr.f32.mxu0 %v442
    %2186 = vmatmul.mubr.f32.gmra.mrb[0].mxu0 %v370
    %v2187 = vpop.f32.mrb[0].mxu0
    %v2188 = vadd.f32 %v1803, %v2187
    %v2189 = vpop.f32.mrb[0].mxu0
    %2190 = vmatprep.mubr.f32.mxu0 %v443
    %2191 = vmatmul.mubr.f32.gmra.mrb[0].mxu0 %v371
    %v2192 = vpop.f32.mrb[0].mxu0
    %v2193 = vadd.f32 %v1808, %v2192
    %v2194 = vpop.f32.mrb[0].mxu0
    %2195 = vmatprep.mubr.f32.mxu0 %v444
    %2196 = vmatmul.mubr.f32.gmra.mrb[0].mxu0 %v372
    %v2197 = vpop.f32.mrb[0].mxu0
    %v2198 = vadd.f32 %v1813, %v2197
    %v2199 = vpop.f32.mrb[0].mxu0
    %2200 = vdwg.mxu0
    %2201 = vmatprep.subr.mxu0 0.0
    %2202 = vmatpush1.msra.mxu0 %v645
    %2203 = vmatprep.subr.mxu0 0.0
    %2204 = vmatpush1.msra.mxu0 %v646
    %2205 = vmatprep.subr.mxu0 0.0
    %2206 = vmatpush1.msra.mxu0 %v647
    %2207 = vmatprep.subr.mxu0 0.0
    %2208 = vmatpush1.msra.mxu0 %v648
    %2209 = vmatprep.subr.mxu0 0.0
    %2210 = vmatpush1.msra.mxu0 %v649
    %2211 = vmatprep.subr.mxu0 0.0
    %2212 = vmatpush1.msra.mxu0 %v650
    %2213 = vmatprep.subr.mxu0 0.0
    %2214 = vmatpush1.msra.mxu0 %v651
    %2215 = vmatprep.subr.mxu0 0.0
    %2216 = vmatpush1.msra.mxu0 %v652
    %2217 = vmatprep.subr.mxu0 0.0
    %2218 = vmatpush1.msra.mxu0 %v653
    %2219 = vmatprep.subr.mxu0 0.0
    %2220 = vmatpush1.msra.mxu0 %v654
    %2221 = vmatprep.subr.mxu0 0.0
    %2222 = vmatpush1.msra.mxu0 %v655
    %2223 = vmatprep.subr.mxu0 0.0
    %2224 = vmatpush1.msra.mxu0 %v656
    %2225 = vmatprep.subr.mxu0 0.0
    %2226 = vmatpush1.msra.mxu0 %v657
    %2227 = vmatprep.subr.mxu0 0.0
    %2228 = vmatpush1.msra.mxu0 %v658
    %2229 = vmatprep.subr.mxu0 0.0
    %2230 = vmatpush1.msra.mxu0 %v659
    %2231 = vmatprep.subr.mxu0 0.0
    %2232 = vmatpush1.msra.mxu0 %v660
    %2233 = vmatprep.subr.mxu0 0.0
    %2234 = vmatpush1.msra.mxu0 0.0
    %2235 = vmatprep.subr.mxu0 0.0
    %2236 = vmatpush1.msra.mxu0 0.0
    %2237 = vmatprep.subr.mxu0 0.0
    %2238 = vmatpush1.msra.mxu0 0.0
    %2239 = vmatprep.subr.mxu0 0.0
    %2240 = vmatpush1.msra.mxu0 0.0
    %2241 = vmatprep.subr.mxu0 0.0
    %2242 = vmatpush1.msra.mxu0 0.0
    %2243 = vmatprep.subr.mxu0 0.0
    %2244 = vmatpush1.msra.mxu0 0.0
    %2245 = vmatprep.subr.mxu0 0.0
    %2246 = vmatpush1.msra.mxu0 0.0
    %2247 = vmatprep.subr.mxu0 0.0
    %2248 = vmatpush1.msra.mxu0 0.0
    %2249 = vmatprep.subr.mxu0 0.0
    %2250 = vmatpush1.msra.mxu0 0.0
    %2251 = vmatprep.subr.mxu0 0.0
    %2252 = vmatpush1.msra.mxu0 0.0
    %2253 = vmatprep.subr.mxu0 0.0
    %2254 = vmatpush1.msra.mxu0 0.0
    %2255 = vmatprep.subr.mxu0 0.0
    %2256 = vmatpush1.msra.mxu0 0.0
    %2257 = vmatprep.subr.mxu0 0.0
    %2258 = vmatpush1.msra.mxu0 0.0
    %2259 = vmatprep.subr.mxu0 0.0
    %2260 = vmatpush1.msra.mxu0 0.0
    %2261 = vmatprep.subr.mxu0 0.0
    %2262 = vmatpush1.msra.mxu0 0.0
    %2263 = vmatprep.subr.mxu0 0.0
    %2264 = vmatpush1.msra.mxu0 0.0
    %2265 = vmatprep.mubr.f32.mxu0 0.0
    %2266 = vmatmul.mubr.f32.gmra.mrb[0].mxu0 %v449
    %v2267 = vpop.f32.mrb[0].mxu0
    %v2268 = vadd.f32 %v1883, %v2267
    %v2269 = vpop.f32.mrb[0].mxu0
    %2270 = vmatprep.mubr.f32.mxu0 0.0
    %2271 = vmatmul.mubr.f32.gmra.mrb[0].mxu0 %v450
    %v2272 = vpop.f32.mrb[0].mxu0
    %v2273 = vadd.f32 %v1888, %v2272
    %v2274 = vpop.f32.mrb[0].mxu0
    %2275 = vmatprep.mubr.f32.mxu0 0.0
    %2276 = vmatmul.mubr.f32.gmra.mrb[0].mxu0 %v451
    %v2277 = vpop.f32.mrb[0].mxu0
    %v2278 = vadd.f32 %v1893, %v2277
    %v2279 = vpop.f32.mrb[0].mxu0
    %2280 = vmatprep.mubr.f32.mxu0 0.0
    %2281 = vmatmul.mubr.f32.gmra.mrb[0].mxu0 %v452
    %v2282 = vpop.f32.mrb[0].mxu0
    %v2283 = vadd.f32 %v1898, %v2282
    %v2284 = vpop.f32.mrb[0].mxu0
    %2285 = vmatprep.mubr.f32.mxu0 0.0
    %2286 = vmatmul.mubr.f32.gmra.mrb[0].mxu0 %v453
    %v2287 = vpop.f32.mrb[0].mxu0
    %v2288 = vadd.f32 %v1903, %v2287
    %v2289 = vpop.f32.mrb[0].mxu0
    %2290 = vmatprep.mubr.f32.mxu0 0.0
    %2291 = vmatmul.mubr.f32.gmra.mrb[0].mxu0 %v454
    %v2292 = vpop.f32.mrb[0].mxu0
    %v2293 = vadd.f32 %v1908, %v2292
    %v2294 = vpop.f32.mrb[0].mxu0
    %2295 = vmatprep.mubr.f32.mxu0 0.0
    %2296 = vmatmul.mubr.f32.gmra.mrb[0].mxu0 %v455
    %v2297 = vpop.f32.mrb[0].mxu0
    %v2298 = vadd.f32 %v1913, %v2297
    %v2299 = vpop.f32.mrb[0].mxu0
    %2300 = vmatprep.mubr.f32.mxu0 0.0
    %2301 = vmatmul.mubr.f32.gmra.mrb[0].mxu0 %v456
    %v2302 = vpop.f32.mrb[0].mxu0
    %v2303 = vadd.f32 %v1918, %v2302
    %v2304 = vpop.f32.mrb[0].mxu0
    %2305 = vmatprep.mubr.f32.mxu0 0.0
    %2306 = vmatmul.mubr.f32.gmra.mrb[0].mxu0 %v457
    %v2307 = vpop.f32.mrb[0].mxu0
    %v2308 = vadd.f32 %v1923, %v2307
    %v2309 = vpop.f32.mrb[0].mxu0
    %2310 = vmatprep.mubr.f32.mxu0 0.0
    %2311 = vmatmul.mubr.f32.gmra.mrb[0].mxu0 %v458
    %v2312 = vpop.f32.mrb[0].mxu0
    %v2313 = vadd.f32 %v1928, %v2312
    %v2314 = vpop.f32.mrb[0].mxu0
    %2315 = vmatprep.mubr.f32.mxu0 0.0
    %2316 = vmatmul.mubr.f32.gmra.mrb[0].mxu0 %v459
    %v2317 = vpop.f32.mrb[0].mxu0
    %v2318 = vadd.f32 %v1933, %v2317
    %v2319 = vpop.f32.mrb[0].mxu0
    %2320 = vmatprep.mubr.f32.mxu0 0.0
    %2321 = vmatmul.mubr.f32.gmra.mrb[0].mxu0 %v460
    %v2322 = vpop.f32.mrb[0].mxu0
    %v2323 = vadd.f32 %v1938, %v2322
    %v2324 = vpop.f32.mrb[0].mxu0
    %2325 = vmatprep.mubr.f32.mxu0 0.0
    %2326 = vmatmul.mubr.f32.gmra.mrb[0].mxu0 %v461
    %v2327 = vpop.f32.mrb[0].mxu0
    %v2328 = vadd.f32 %v1943, %v2327
    %v2329 = vpop.f32.mrb[0].mxu0
    %2330 = vmatprep.mubr.f32.mxu0 0.0
    %2331 = vmatmul.mubr.f32.gmra.mrb[0].mxu0 %v462
    %v2332 = vpop.f32.mrb[0].mxu0
    %v2333 = vadd.f32 %v1948, %v2332
    %v2334 = vpop.f32.mrb[0].mxu0
    %2335 = vmatprep.mubr.f32.mxu0 0.0
    %2336 = vmatmul.mubr.f32.gmra.mrb[0].mxu0 %v463
    %v2337 = vpop.f32.mrb[0].mxu0
    %v2338 = vadd.f32 %v1953, %v2337
    %v2339 = vpop.f32.mrb[0].mxu0
    %2340 = vmatprep.mubr.f32.mxu0 0.0
    %2341 = vmatmul.mubr.f32.gmra.mrb[0].mxu0 %v464
    %v2342 = vpop.f32.mrb[0].mxu0
    %v2343 = vadd.f32 %v1958, %v2342
    %v2344 = vpop.f32.mrb[0].mxu0
    %2345 = vmatprep.mubr.f32.mxu0 0.0
    %2346 = vmatmul.mubr.f32.gmra.mrb[0].mxu0 %v465
    %v2347 = vpop.f32.mrb[0].mxu0
    %v2348 = vadd.f32 %v1963, %v2347
    %v2349 = vpop.f32.mrb[0].mxu0
    %2350 = vmatprep.mubr.f32.mxu0 0.0
    %2351 = vmatmul.mubr.f32.gmra.mrb[0].mxu0 %v466
    %v2352 = vpop.f32.mrb[0].mxu0
    %v2353 = vadd.f32 %v1968, %v2352
    %v2354 = vpop.f32.mrb[0].mxu0
    %2355 = vmatprep.mubr.f32.mxu0 0.0
    %2356 = vmatmul.mubr.f32.gmra.mrb[0].mxu0 %v467
    %v2357 = vpop.f32.mrb[0].mxu0
    %v2358 = vadd.f32 %v1973, %v2357
    %v2359 = vpop.f32.mrb[0].mxu0
    %2360 = vmatprep.mubr.f32.mxu0 0.0
    %2361 = vmatmul.mubr.f32.gmra.mrb[0].mxu0 %v468
    %v2362 = vpop.f32.mrb[0].mxu0
    %v2363 = vadd.f32 %v1978, %v2362
    %v2364 = vpop.f32.mrb[0].mxu0
    %2365 = vmatprep.mubr.f32.mxu0 0.0
    %2366 = vmatmul.mubr.f32.gmra.mrb[0].mxu0 %v469
    %v2367 = vpop.f32.mrb[0].mxu0
    %v2368 = vadd.f32 %v1983, %v2367
    %v2369 = vpop.f32.mrb[0].mxu0
    %2370 = vmatprep.mubr.f32.mxu0 0.0
    %2371 = vmatmul.mubr.f32.gmra.mrb[0].mxu0 %v470
    %v2372 = vpop.f32.mrb[0].mxu0
    %v2373 = vadd.f32 %v1988, %v2372
    %v2374 = vpop.f32.mrb[0].mxu0
    %2375 = vmatprep.mubr.f32.mxu0 0.0
    %2376 = vmatmul.mubr.f32.gmra.mrb[0].mxu0 %v471
    %v2377 = vpop.f32.mrb[0].mxu0
    %v2378 = vadd.f32 %v1993, %v2377
    %v2379 = vpop.f32.mrb[0].mxu0
    %2380 = vmatprep.mubr.f32.mxu0 0.0
    %2381 = vmatmul.mubr.f32.gmra.mrb[0].mxu0 %v472
    %v2382 = vpop.f32.mrb[0].mxu0
    %v2383 = vadd.f32 %v1998, %v2382
    %v2384 = vpop.f32.mrb[0].mxu0
    %2385 = vmatprep.mubr.f32.mxu0 0.0
    %2386 = vmatmul.mubr.f32.gmra.mrb[0].mxu0 %v473
    %v2387 = vpop.f32.mrb[0].mxu0
    %v2388 = vadd.f32 %v2003, %v2387
    %v2389 = vpop.f32.mrb[0].mxu0
    %2390 = vmatprep.mubr.f32.mxu0 0.0
    %2391 = vmatmul.mubr.f32.gmra.mrb[0].mxu0 %v474
    %v2392 = vpop.f32.mrb[0].mxu0
    %v2393 = vadd.f32 %v2008, %v2392
    %v2394 = vpop.f32.mrb[0].mxu0
    %2395 = vmatprep.mubr.f32.mxu0 0.0
    %2396 = vmatmul.mubr.f32.gmra.mrb[0].mxu0 %v475
    %v2397 = vpop.f32.mrb[0].mxu0
    %v2398 = vadd.f32 %v2013, %v2397
    %v2399 = vpop.f32.mrb[0].mxu0
    %2400 = vmatprep.mubr.f32.mxu0 0.0
    %2401 = vmatmul.mubr.f32.gmra.mrb[0].mxu0 %v476
    %v2402 = vpop.f32.mrb[0].mxu0
    %v2403 = vadd.f32 %v2018, %v2402
    %v2404 = vpop.f32.mrb[0].mxu0
    %2405 = vmatprep.mubr.f32.mxu0 0.0
    %2406 = vmatmul.mubr.f32.gmra.mrb[0].mxu0 %v477
    %v2407 = vpop.f32.mrb[0].mxu0
    %v2408 = vadd.f32 %v2023, %v2407
    %v2409 = vpop.f32.mrb[0].mxu0
    %2410 = vmatprep.mubr.f32.mxu0 0.0
    %2411 = vmatmul.mubr.f32.gmra.mrb[0].mxu0 %v478
    %v2412 = vpop.f32.mrb[0].mxu0
    %v2413 = vadd.f32 %v2028, %v2412
    %v2414 = vpop.f32.mrb[0].mxu0
    %2415 = vmatprep.mubr.f32.mxu0 0.0
    %2416 = vmatmul.mubr.f32.gmra.mrb[0].mxu0 %v479
    %v2417 = vpop.f32.mrb[0].mxu0
    %v2418 = vadd.f32 %v2033, %v2417
    %v2419 = vpop.f32.mrb[0].mxu0
    %2420 = vmatprep.mubr.f32.mxu0 0.0
    %2421 = vmatmul.mubr.f32.gmra.mrb[0].mxu0 %v480
    %v2422 = vpop.f32.mrb[0].mxu0
    %v2423 = vadd.f32 %v2038, %v2422
    %v2424 = vpop.f32.mrb[0].mxu0
    %2425 = vmatprep.mubr.f32.mxu0 0.0
    %2426 = vmatmul.mubr.f32.gmra.mrb[0].mxu0 %v485
    %v2427 = vpop.f32.mrb[0].mxu0
    %v2428 = vadd.f32 %v2043, %v2427
    %v2429 = vpop.f32.mrb[0].mxu0
    %2430 = vmatprep.mubr.f32.mxu0 0.0
    %2431 = vmatmul.mubr.f32.gmra.mrb[0].mxu0 %v486
    %v2432 = vpop.f32.mrb[0].mxu0
    %v2433 = vadd.f32 %v2048, %v2432
    %v2434 = vpop.f32.mrb[0].mxu0
    %2435 = vmatprep.mubr.f32.mxu0 0.0
    %2436 = vmatmul.mubr.f32.gmra.mrb[0].mxu0 %v487
    %v2437 = vpop.f32.mrb[0].mxu0
    %v2438 = vadd.f32 %v2053, %v2437
    %v2439 = vpop.f32.mrb[0].mxu0
    %2440 = vmatprep.mubr.f32.mxu0 0.0
    %2441 = vmatmul.mubr.f32.gmra.mrb[0].mxu0 %v488
    %v2442 = vpop.f32.mrb[0].mxu0
    %v2443 = vadd.f32 %v2058, %v2442
    %v2444 = vpop.f32.mrb[0].mxu0
    %2445 = vmatprep.mubr.f32.mxu0 0.0
    %2446 = vmatmul.mubr.f32.gmra.mrb[0].mxu0 %v489
    %v2447 = vpop.f32.mrb[0].mxu0
    %v2448 = vadd.f32 %v2063, %v2447
    %v2449 = vpop.f32.mrb[0].mxu0
    %2450 = vmatprep.mubr.f32.mxu0 0.0
    %2451 = vmatmul.mubr.f32.gmra.mrb[0].mxu0 %v490
    %v2452 = vpop.f32.mrb[0].mxu0
    %v2453 = vadd.f32 %v2068, %v2452
    %v2454 = vpop.f32.mrb[0].mxu0
    %2455 = vmatprep.mubr.f32.mxu0 0.0
    %2456 = vmatmul.mubr.f32.gmra.mrb[0].mxu0 %v491
    %v2457 = vpop.f32.mrb[0].mxu0
    %v2458 = vadd.f32 %v2073, %v2457
    %v2459 = vpop.f32.mrb[0].mxu0
    %2460 = vmatprep.mubr.f32.mxu0 0.0
    %2461 = vmatmul.mubr.f32.gmra.mrb[0].mxu0 %v492
    %v2462 = vpop.f32.mrb[0].mxu0
    %v2463 = vadd.f32 %v2078, %v2462
    %v2464 = vpop.f32.mrb[0].mxu0
    %2465 = vmatprep.mubr.f32.mxu0 0.0
    %2466 = vmatmul.mubr.f32.gmra.mrb[0].mxu0 %v493
    %v2467 = vpop.f32.mrb[0].mxu0
    %v2468 = vadd.f32 %v2083, %v2467
    %v2469 = vpop.f32.mrb[0].mxu0
    %2470 = vmatprep.mubr.f32.mxu0 0.0
    %2471 = vmatmul.mubr.f32.gmra.mrb[0].mxu0 %v494
    %v2472 = vpop.f32.mrb[0].mxu0
    %v2473 = vadd.f32 %v2088, %v2472
    %v2474 = vpop.f32.mrb[0].mxu0
    %2475 = vmatprep.mubr.f32.mxu0 0.0
    %2476 = vmatmul.mubr.f32.gmra.mrb[0].mxu0 %v495
    %v2477 = vpop.f32.mrb[0].mxu0
    %v2478 = vadd.f32 %v2093, %v2477
    %v2479 = vpop.f32.mrb[0].mxu0
    %2480 = vmatprep.mubr.f32.mxu0 0.0
    %2481 = vmatmul.mubr.f32.gmra.mrb[0].mxu0 %v496
    %v2482 = vpop.f32.mrb[0].mxu0
    %v2483 = vadd.f32 %v2098, %v2482
    %v2484 = vpop.f32.mrb[0].mxu0
    %2485 = vmatprep.mubr.f32.mxu0 0.0
    %2486 = vmatmul.mubr.f32.gmra.mrb[0].mxu0 %v497
    %v2487 = vpop.f32.mrb[0].mxu0
    %v2488 = vadd.f32 %v2103, %v2487
    %v2489 = vpop.f32.mrb[0].mxu0
    %2490 = vmatprep.mubr.f32.mxu0 0.0
    %2491 = vmatmul.mubr.f32.gmra.mrb[0].mxu0 %v498
    %v2492 = vpop.f32.mrb[0].mxu0
    %v2493 = vadd.f32 %v2108, %v2492
    %v2494 = vpop.f32.mrb[0].mxu0
    %2495 = vmatprep.mubr.f32.mxu0 0.0
    %2496 = vmatmul.mubr.f32.gmra.mrb[0].mxu0 %v499
    %v2497 = vpop.f32.mrb[0].mxu0
    %v2498 = vadd.f32 %v2113, %v2497
    %v2499 = vpop.f32.mrb[0].mxu0
    %2500 = vmatprep.mubr.f32.mxu0 0.0
    %2501 = vmatmul.mubr.f32.gmra.mrb[0].mxu0 %v500
    %v2502 = vpop.f32.mrb[0].mxu0
    %v2503 = vadd.f32 %v2118, %v2502
    %v2504 = vpop.f32.mrb[0].mxu0
    %2505 = vmatprep.mubr.f32.mxu0 0.0
    %2506 = vmatmul.mubr.f32.gmra.mrb[0].mxu0 %v501
    %v2507 = vpop.f32.mrb[0].mxu0
    %v2508 = vadd.f32 %v2123, %v2507
    %v2509 = vpop.f32.mrb[0].mxu0
    %2510 = vmatprep.mubr.f32.mxu0 0.0
    %2511 = vmatmul.mubr.f32.gmra.mrb[0].mxu0 %v502
    %v2512 = vpop.f32.mrb[0].mxu0
    %v2513 = vadd.f32 %v2128, %v2512
    %v2514 = vpop.f32.mrb[0].mxu0
    %2515 = vmatprep.mubr.f32.mxu0 0.0
    %2516 = vmatmul.mubr.f32.gmra.mrb[0].mxu0 %v503
    %v2517 = vpop.f32.mrb[0].mxu0
    %v2518 = vadd.f32 %v2133, %v2517
    %v2519 = vpop.f32.mrb[0].mxu0
    %2520 = vmatprep.mubr.f32.mxu0 0.0
    %2521 = vmatmul.mubr.f32.gmra.mrb[0].mxu0 %v504
    %v2522 = vpop.f32.mrb[0].mxu0
    %v2523 = vadd.f32 %v2138, %v2522
    %v2524 = vpop.f32.mrb[0].mxu0
    %2525 = vmatprep.mubr.f32.mxu0 0.0
    %2526 = vmatmul.mubr.f32.gmra.mrb[0].mxu0 %v505
    %v2527 = vpop.f32.mrb[0].mxu0
    %v2528 = vadd.f32 %v2143, %v2527
    %v2529 = vpop.f32.mrb[0].mxu0
    %2530 = vmatprep.mubr.f32.mxu0 0.0
    %2531 = vmatmul.mubr.f32.gmra.mrb[0].mxu0 %v506
    %v2532 = vpop.f32.mrb[0].mxu0
    %v2533 = vadd.f32 %v2148, %v2532
    %v2534 = vpop.f32.mrb[0].mxu0
    %2535 = vmatprep.mubr.f32.mxu0 0.0
    %2536 = vmatmul.mubr.f32.gmra.mrb[0].mxu0 %v507
    %v2537 = vpop.f32.mrb[0].mxu0
    %v2538 = vadd.f32 %v2153, %v2537
    %v2539 = vpop.f32.mrb[0].mxu0
    %2540 = vmatprep.mubr.f32.mxu0 0.0
    %2541 = vmatmul.mubr.f32.gmra.mrb[0].mxu0 %v508
    %v2542 = vpop.f32.mrb[0].mxu0
    %v2543 = vadd.f32 %v2158, %v2542
    %v2544 = vpop.f32.mrb[0].mxu0
    %2545 = vmatprep.mubr.f32.mxu0 0.0
    %2546 = vmatmul.mubr.f32.gmra.mrb[0].mxu0 %v509
    %v2547 = vpop.f32.mrb[0].mxu0
    %v2548 = vadd.f32 %v2163, %v2547
    %v2549 = vpop.f32.mrb[0].mxu0
    %2550 = vmatprep.mubr.f32.mxu0 0.0
    %2551 = vmatmul.mubr.f32.gmra.mrb[0].mxu0 %v510
    %v2552 = vpop.f32.mrb[0].mxu0
    %v2553 = vadd.f32 %v2168, %v2552
    %v2554 = vpop.f32.mrb[0].mxu0
    %2555 = vmatprep.mubr.f32.mxu0 0.0
    %2556 = vmatmul.mubr.f32.gmra.mrb[0].mxu0 %v511
    %v2557 = vpop.f32.mrb[0].mxu0
    %v2558 = vadd.f32 %v2173, %v2557
    %v2559 = vpop.f32.mrb[0].mxu0
    %2560 = vmatprep.mubr.f32.mxu0 0.0
    %2561 = vmatmul.mubr.f32.gmra.mrb[0].mxu0 %v512
    %v2562 = vpop.f32.mrb[0].mxu0
    %v2563 = vadd.f32 %v2178, %v2562
    %v2564 = vpop.f32.mrb[0].mxu0
    %2565 = vmatprep.mubr.f32.mxu0 0.0
    %2566 = vmatmul.mubr.f32.gmra.mrb[0].mxu0 %v513
    %v2567 = vpop.f32.mrb[0].mxu0
    %v2568 = vadd.f32 %v2183, %v2567
    %v2569 = vpop.f32.mrb[0].mxu0
    %2570 = vmatprep.mubr.f32.mxu0 0.0
    %2571 = vmatmul.mubr.f32.gmra.mrb[0].mxu0 %v514
    %v2572 = vpop.f32.mrb[0].mxu0
    %v2573 = vadd.f32 %v2188, %v2572
    %v2574 = vpop.f32.mrb[0].mxu0
    %2575 = vmatprep.mubr.f32.mxu0 0.0
    %2576 = vmatmul.mubr.f32.gmra.mrb[0].mxu0 %v515
    %v2577 = vpop.f32.mrb[0].mxu0
    %v2578 = vadd.f32 %v2193, %v2577
    %v2579 = vpop.f32.mrb[0].mxu0
    %2580 = vmatprep.mubr.f32.mxu0 0.0
    %2581 = vmatmul.mubr.f32.gmra.mrb[0].mxu0 %v516
    %v2582 = vpop.f32.mrb[0].mxu0
    %v2583 = vadd.f32 %v2198, %v2582
    %v2584 = vpop.f32.mrb[0].mxu0
    %2585 = vdwg.mxu0
    %v2586 = vadd.f32 %v2268, %v2273
    %v2587 = vadd.f32 %v2586, %v2278
    %v2588 = vadd.f32 %v2587, %v2283
    %v2589 = vadd.f32 %v2588, %v2288
    %v2590 = vadd.f32 %v2589, %v2293
    %v2591 = vadd.f32 %v2590, %v2298
    %v2592 = vadd.f32 %v2591, %v2303
    %v2593 = vadd.f32 %v2592, %v2308
    %v2594 = vadd.f32 %v2593, %v2313
    %v2595 = vadd.f32 %v2594, %v2318
    %v2596 = vadd.f32 %v2595, %v2323
    %v2597 = vadd.f32 %v2596, %v2328
    %v2598 = vadd.f32 %v2597, %v2333
    %v2599 = vadd.f32 %v2598, %v2338
    %v2600 = vadd.f32 %v2599, %v2343
    %v2601 = vadd.f32 %v2600, %v2348
    %v2602 = vadd.f32 %v2601, %v2353
    %v2603 = vadd.f32 %v2602, %v2358
    %v2604 = vadd.f32 %v2603, %v2363
    %v2605 = vadd.f32 %v2604, %v2368
    %v2606 = vadd.f32 %v2605, %v2373
    %v2607 = vadd.f32 %v2606, %v2378
    %v2608 = vadd.f32 %v2607, %v2383
    %v2609 = vadd.f32 %v2608, %v2388
    %v2610 = vadd.f32 %v2609, %v2393
    %v2611 = vadd.f32 %v2610, %v2398
    %v2612 = vadd.f32 %v2611, %v2403
    %v2613 = vadd.f32 %v2612, %v2408
    %v2614 = vadd.f32 %v2613, %v2413
    %v2615 = vadd.f32 %v2614, %v2418
    %v2616 = vadd.f32 %v2615, %v2423
    %v2617 = vadd.f32 %v2616, %v2428
    %v2618 = vadd.f32 %v2617, %v2433
    %v2619 = vadd.f32 %v2618, %v2438
    %v2620 = vadd.f32 %v2619, %v2443
    %v2621 = vadd.f32 %v2620, %v2448
    %v2622 = vadd.f32 %v2621, %v2453
    %v2623 = vadd.f32 %v2622, %v2458
    %v2624 = vadd.f32 %v2623, %v2463
    %v2625 = vadd.f32 %v2624, %v2468
    %v2626 = vadd.f32 %v2625, %v2473
    %v2627 = vadd.f32 %v2626, %v2478
    %v2628 = vadd.f32 %v2627, %v2483
    %v2629 = vadd.f32 %v2628, %v2488
    %v2630 = vadd.f32 %v2629, %v2493
    %v2631 = vadd.f32 %v2630, %v2498
    %v2632 = vadd.f32 %v2631, %v2503
    %v2633 = vadd.f32 %v2632, %v2508
    %v2634 = vadd.f32 %v2633, %v2513
    %v2635 = vadd.f32 %v2634, %v2518
    %v2636 = vadd.f32 %v2635, %v2523
    %v2637 = vadd.f32 %v2636, %v2528
    %v2638 = vadd.f32 %v2637, %v2533
    %v2639 = vadd.f32 %v2638, %v2538
    %v2640 = vadd.f32 %v2639, %v2543
    %v2641 = vadd.f32 %v2640, %v2548
    %v2642 = vadd.f32 %v2641, %v2553
    %v2643 = vadd.f32 %v2642, %v2558
    %v2644 = vadd.f32 %v2643, %v2563
    %v2645 = vadd.f32 %v2644, %v2568
    %v2646 = vadd.f32 %v2645, %v2573
    %v2647 = vadd.f32 %v2646, %v2578
    %v2648 = vadd.f32 %v2647, %v2583
    %v2649 = vrot.slane %v2648, 4
    %v2650 = vadd.f32 %v2648, %v2649
    %v2651 = vrot.slane %v2650, 2
    %v2652 = vadd.f32 %v2650, %v2651
    %v2653 = vrot.slane %v2652, 1
    %v2654 = vadd.f32 %v2652, %v2653
    %v2655 = vmul.f32 %v2654, 0.001953125
    %v2656 = vsub.f32 %v2268, %v2655
    %v2657 = vsub.f32 %v2273, %v2655
    %v2658 = vsub.f32 %v2278, %v2655
    %v2659 = vsub.f32 %v2283, %v2655
    %v2660 = vsub.f32 %v2288, %v2655
    %v2661 = vsub.f32 %v2293, %v2655
    %v2662 = vsub.f32 %v2298, %v2655
    %v2663 = vsub.f32 %v2303, %v2655
    %v2664 = vsub.f32 %v2308, %v2655
    %v2665 = vsub.f32 %v2313, %v2655
    %v2666 = vsub.f32 %v2318, %v2655
    %v2667 = vsub.f32 %v2323, %v2655
    %v2668 = vsub.f32 %v2328, %v2655
    %v2669 = vsub.f32 %v2333, %v2655
    %v2670 = vsub.f32 %v2338, %v2655
    %v2671 = vsub.f32 %v2343, %v2655
    %v2672 = vsub.f32 %v2348, %v2655
    %v2673 = vsub.f32 %v2353, %v2655
    %v2674 = vsub.f32 %v2358, %v2655
    %v2675 = vsub.f32 %v2363, %v2655
    %v2676 = vsub.f32 %v2368, %v2655
    %v2677 = vsub.f32 %v2373, %v2655
    %v2678 = vsub.f32 %v2378, %v2655
    %v2679 = vsub.f32 %v2383, %v2655
    %v2680 = vsub.f32 %v2388, %v2655
    %v2681 = vsub.f32 %v2393, %v2655
    %v2682 = vsub.f32 %v2398, %v2655
    %v2683 = vsub.f32 %v2403, %v2655
    %v2684 = vsub.f32 %v2408, %v2655
    %v2685 = vsub.f32 %v2413, %v2655
    %v2686 = vsub.f32 %v2418, %v2655
    %v2687 = vsub.f32 %v2423, %v2655
    %v2688 = vsub.f32 %v2428, %v2655
    %v2689 = vsub.f32 %v2433, %v2655
    %v2690 = vsub.f32 %v2438, %v2655
    %v2691 = vsub.f32 %v2443, %v2655
    %v2692 = vsub.f32 %v2448, %v2655
    %v2693 = vsub.f32 %v2453, %v2655
    %v2694 = vsub.f32 %v2458, %v2655
    %v2695 = vsub.f32 %v2463, %v2655
    %v2696 = vsub.f32 %v2468, %v2655
    %v2697 = vsub.f32 %v2473, %v2655
    %v2698 = vsub.f32 %v2478, %v2655
    %v2699 = vsub.f32 %v2483, %v2655
    %v2700 = vsub.f32 %v2488, %v2655
    %v2701 = vsub.f32 %v2493, %v2655
    %v2702 = vsub.f32 %v2498, %v2655
    %v2703 = vsub.f32 %v2503, %v2655
    %v2704 = vsub.f32 %v2508, %v2655
    %v2705 = vsub.f32 %v2513, %v2655
    %v2706 = vsub.f32 %v2518, %v2655
    %v2707 = vsub.f32 %v2523, %v2655
    %v2708 = vsub.f32 %v2528, %v2655
    %v2709 = vsub.f32 %v2533, %v2655
    %v2710 = vsub.f32 %v2538, %v2655
    %v2711 = vsub.f32 %v2543, %v2655
    %v2712 = vsub.f32 %v2548, %v2655
    %v2713 = vsub.f32 %v2553, %v2655
    %v2714 = vsub.f32 %v2558, %v2655
    %v2715 = vsub.f32 %v2563, %v2655
    %v2716 = vsub.f32 %v2568, %v2655
    %v2717 = vsub.f32 %v2573, %v2655
    %v2718 = vsub.f32 %v2578, %v2655
    %v2719 = vsub.f32 %v2583, %v2655
    %v2720 = vmul.f32 %v2656, %v2656
    %v2721 = vmul.f32 %v2657, %v2657
    %v2722 = vmul.f32 %v2658, %v2658
    %v2723 = vmul.f32 %v2659, %v2659
    %v2724 = vmul.f32 %v2660, %v2660
    %v2725 = vmul.f32 %v2661, %v2661
    %v2726 = vmul.f32 %v2662, %v2662
    %v2727 = vmul.f32 %v2663, %v2663
    %v2728 = vmul.f32 %v2664, %v2664
    %v2729 = vmul.f32 %v2665, %v2665
    %v2730 = vmul.f32 %v2666, %v2666
    %v2731 = vmul.f32 %v2667, %v2667
    %v2732 = vmul.f32 %v2668, %v2668
    %v2733 = vmul.f32 %v2669, %v2669
    %v2734 = vmul.f32 %v2670, %v2670
    %v2735 = vmul.f32 %v2671, %v2671
    %v2736 = vmul.f32 %v2672, %v2672
    %v2737 = vmul.f32 %v2673, %v2673
    %v2738 = vmul.f32 %v2674, %v2674
    %v2739 = vmul.f32 %v2675, %v2675
    %v2740 = vmul.f32 %v2676, %v2676
    %v2741 = vmul.f32 %v2677, %v2677
    %v2742 = vmul.f32 %v2678, %v2678
    %v2743 = vmul.f32 %v2679, %v2679
    %v2744 = vmul.f32 %v2680, %v2680
    %v2745 = vmul.f32 %v2681, %v2681
    %v2746 = vmul.f32 %v2682, %v2682
    %v2747 = vmul.f32 %v2683, %v2683
    %v2748 = vmul.f32 %v2684, %v2684
    %v2749 = vmul.f32 %v2685, %v2685
    %v2750 = vmul.f32 %v2686, %v2686
    %v2751 = vmul.f32 %v2687, %v2687
    %v2752 = vmul.f32 %v2688, %v2688
    %v2753 = vmul.f32 %v2689, %v2689
    %v2754 = vmul.f32 %v2690, %v2690
    %v2755 = vmul.f32 %v2691, %v2691
    %v2756 = vmul.f32 %v2692, %v2692
    %v2757 = vmul.f32 %v2693, %v2693
    %v2758 = vmul.f32 %v2694, %v2694
    %v2759 = vmul.f32 %v2695, %v2695
    %v2760 = vmul.f32 %v2696, %v2696
    %v2761 = vmul.f32 %v2697, %v2697
    %v2762 = vmul.f32 %v2698, %v2698
    %v2763 = vmul.f32 %v2699, %v2699
    %v2764 = vmul.f32 %v2700, %v2700
    %v2765 = vmul.f32 %v2701, %v2701
    %v2766 = vmul.f32 %v2702, %v2702
    %v2767 = vmul.f32 %v2703, %v2703
    %v2768 = vmul.f32 %v2704, %v2704
    %v2769 = vmul.f32 %v2705, %v2705
    %v2770 = vmul.f32 %v2706, %v2706
    %v2771 = vmul.f32 %v2707, %v2707
    %v2772 = vmul.f32 %v2708, %v2708
    %v2773 = vmul.f32 %v2709, %v2709
    %v2774 = vmul.f32 %v2710, %v2710
    %v2775 = vmul.f32 %v2711, %v2711
    %v2776 = vmul.f32 %v2712, %v2712
    %v2777 = vmul.f32 %v2713, %v2713
    %v2778 = vmul.f32 %v2714, %v2714
    %v2779 = vmul.f32 %v2715, %v2715
    %v2780 = vmul.f32 %v2716, %v2716
    %v2781 = vmul.f32 %v2717, %v2717
    %v2782 = vmul.f32 %v2718, %v2718
    %v2783 = vmul.f32 %v2719, %v2719
    %v2784 = vadd.f32 %v2720, %v2721
    %v2785 = vadd.f32 %v2784, %v2722
    %v2786 = vadd.f32 %v2785, %v2723
    %v2787 = vadd.f32 %v2786, %v2724
    %v2788 = vadd.f32 %v2787, %v2725
    %v2789 = vadd.f32 %v2788, %v2726
    %v2790 = vadd.f32 %v2789, %v2727
    %v2791 = vadd.f32 %v2790, %v2728
    %v2792 = vadd.f32 %v2791, %v2729
    %v2793 = vadd.f32 %v2792, %v2730
    %v2794 = vadd.f32 %v2793, %v2731
    %v2795 = vadd.f32 %v2794, %v2732
    %v2796 = vadd.f32 %v2795, %v2733
    %v2797 = vadd.f32 %v2796, %v2734
    %v2798 = vadd.f32 %v2797, %v2735
    %v2799 = vadd.f32 %v2798, %v2736
    %v2800 = vadd.f32 %v2799, %v2737
    %v2801 = vadd.f32 %v2800, %v2738
    %v2802 = vadd.f32 %v2801, %v2739
    %v2803 = vadd.f32 %v2802, %v2740
    %v2804 = vadd.f32 %v2803, %v2741
    %v2805 = vadd.f32 %v2804, %v2742
    %v2806 = vadd.f32 %v2805, %v2743
    %v2807 = vadd.f32 %v2806, %v2744
    %v2808 = vadd.f32 %v2807, %v2745
    %v2809 = vadd.f32 %v2808, %v2746
    %v2810 = vadd.f32 %v2809, %v2747
    %v2811 = vadd.f32 %v2810, %v2748
    %v2812 = vadd.f32 %v2811, %v2749
    %v2813 = vadd.f32 %v2812, %v2750
    %v2814 = vadd.f32 %v2813, %v2751
    %v2815 = vadd.f32 %v2814, %v2752
    %v2816 = vadd.f32 %v2815, %v2753
    %v2817 = vadd.f32 %v2816, %v2754
    %v2818 = vadd.f32 %v2817, %v2755
    %v2819 = vadd.f32 %v2818, %v2756
    %v2820 = vadd.f32 %v2819, %v2757
    %v2821 = vadd.f32 %v2820, %v2758
    %v2822 = vadd.f32 %v2821, %v2759
    %v2823 = vadd.f32 %v2822, %v2760
    %v2824 = vadd.f32 %v2823, %v2761
    %v2825 = vadd.f32 %v2824, %v2762
    %v2826 = vadd.f32 %v2825, %v2763
    %v2827 = vadd.f32 %v2826, %v2764
    %v2828 = vadd.f32 %v2827, %v2765
    %v2829 = vadd.f32 %v2828, %v2766
    %v2830 = vadd.f32 %v2829, %v2767
    %v2831 = vadd.f32 %v2830, %v2768
    %v2832 = vadd.f32 %v2831, %v2769
    %v2833 = vadd.f32 %v2832, %v2770
    %v2834 = vadd.f32 %v2833, %v2771
    %v2835 = vadd.f32 %v2834, %v2772
    %v2836 = vadd.f32 %v2835, %v2773
    %v2837 = vadd.f32 %v2836, %v2774
    %v2838 = vadd.f32 %v2837, %v2775
    %v2839 = vadd.f32 %v2838, %v2776
    %v2840 = vadd.f32 %v2839, %v2777
    %v2841 = vadd.f32 %v2840, %v2778
    %v2842 = vadd.f32 %v2841, %v2779
    %v2843 = vadd.f32 %v2842, %v2780
    %v2844 = vadd.f32 %v2843, %v2781
    %v2845 = vadd.f32 %v2844, %v2782
    %v2846 = vadd.f32 %v2845, %v2783
    %v2847 = vrot.slane %v2846, 4
    %v2848 = vadd.f32 %v2846, %v2847
    %v2849 = vrot.slane %v2848, 2
    %v2850 = vadd.f32 %v2848, %v2849
    %v2851 = vrot.slane %v2850, 1
    %v2852 = vadd.f32 %v2850, %v2851
    %v2853 = vmul.f32 %v2852, 0.001953125
    %v2854 = vld [vmem:[%s2] sm:$0x1]
    %v2855 = vadd.f32 %v2853, 1e-05
    %v2856 = vrsqrt.pop %v2855
    %v2857 = vmul.f32 %v2854, %v2856
    %v2859 = vlaneseq
    %v2860 = vshrl.u32 %v2859, 7
    %v2861 = vsub.s32 0, %v2860
    %v2862 = vrot.slane %v2857, %v2861
    %v2864 = vmul.f32 %v2656, %v2862
    %v2865 = vmul.f32 %v2657, %v2862
    %v2866 = vmul.f32 %v2658, %v2862
    %v2867 = vmul.f32 %v2659, %v2862
    %v2868 = vmul.f32 %v2660, %v2862
    %v2869 = vmul.f32 %v2661, %v2862
    %v2870 = vmul.f32 %v2662, %v2862
    %v2871 = vmul.f32 %v2663, %v2862
    %v2872 = vmul.f32 %v2664, %v2862
    %v2873 = vmul.f32 %v2665, %v2862
    %v2874 = vmul.f32 %v2666, %v2862
    %v2875 = vmul.f32 %v2667, %v2862
    %v2876 = vmul.f32 %v2668, %v2862
    %v2877 = vmul.f32 %v2669, %v2862
    %v2878 = vmul.f32 %v2670, %v2862
    %v2879 = vmul.f32 %v2671, %v2862
    %v2880 = vmul.f32 %v2672, %v2862
    %v2881 = vmul.f32 %v2673, %v2862
    %v2882 = vmul.f32 %v2674, %v2862
    %v2883 = vmul.f32 %v2675, %v2862
    %v2884 = vmul.f32 %v2676, %v2862
    %v2885 = vmul.f32 %v2677, %v2862
    %v2886 = vmul.f32 %v2678, %v2862
    %v2887 = vmul.f32 %v2679, %v2862
    %v2888 = vmul.f32 %v2680, %v2862
    %v2889 = vmul.f32 %v2681, %v2862
    %v2890 = vmul.f32 %v2682, %v2862
    %v2891 = vmul.f32 %v2683, %v2862
    %v2892 = vmul.f32 %v2684, %v2862
    %v2893 = vmul.f32 %v2685, %v2862
    %v2894 = vmul.f32 %v2686, %v2862
    %v2895 = vmul.f32 %v2687, %v2862
    %v2896 = vmul.f32 %v2688, %v2862
    %v2897 = vmul.f32 %v2689, %v2862
    %v2898 = vmul.f32 %v2690, %v2862
    %v2899 = vmul.f32 %v2691, %v2862
    %v2900 = vmul.f32 %v2692, %v2862
    %v2901 = vmul.f32 %v2693, %v2862
    %v2902 = vmul.f32 %v2694, %v2862
    %v2903 = vmul.f32 %v2695, %v2862
    %v2904 = vmul.f32 %v2696, %v2862
    %v2905 = vmul.f32 %v2697, %v2862
    %v2906 = vmul.f32 %v2698, %v2862
    %v2907 = vmul.f32 %v2699, %v2862
    %v2908 = vmul.f32 %v2700, %v2862
    %v2909 = vmul.f32 %v2701, %v2862
    %v2910 = vmul.f32 %v2702, %v2862
    %v2911 = vmul.f32 %v2703, %v2862
    %v2912 = vmul.f32 %v2704, %v2862
    %v2913 = vmul.f32 %v2705, %v2862
    %v2914 = vmul.f32 %v2706, %v2862
    %v2915 = vmul.f32 %v2707, %v2862
    %v2916 = vmul.f32 %v2708, %v2862
    %v2917 = vmul.f32 %v2709, %v2862
    %v2918 = vmul.f32 %v2710, %v2862
    %v2919 = vmul.f32 %v2711, %v2862
    %v2920 = vmul.f32 %v2712, %v2862
    %v2921 = vmul.f32 %v2713, %v2862
    %v2922 = vmul.f32 %v2714, %v2862
    %v2923 = vmul.f32 %v2715, %v2862
    %v2924 = vmul.f32 %v2716, %v2862
    %v2925 = vmul.f32 %v2717, %v2862
    %v2926 = vmul.f32 %v2718, %v2862
    %v2927 = vmul.f32 %v2719, %v2862
    %v2928 = vld [vmem:[%s3] sm:$0x1]
    %v2930 = vlaneseq
    %v2931 = vshrl.u32 %v2930, 7
    %v2932 = vsub.s32 0, %v2931
    %v2933 = vrot.slane %v2928, %v2932
    %v2935 = vadd.f32 %v2864, %v2933
    %v2936 = vadd.f32 %v2865, %v2933
    %v2937 = vadd.f32 %v2866, %v2933
    %v2938 = vadd.f32 %v2867, %v2933
    %v2939 = vadd.f32 %v2868, %v2933
    %v2940 = vadd.f32 %v2869, %v2933
    %v2941 = vadd.f32 %v2870, %v2933
    %v2942 = vadd.f32 %v2871, %v2933
    %v2943 = vadd.f32 %v2872, %v2933
    %v2944 = vadd.f32 %v2873, %v2933
    %v2945 = vadd.f32 %v2874, %v2933
    %v2946 = vadd.f32 %v2875, %v2933
    %v2947 = vadd.f32 %v2876, %v2933
    %v2948 = vadd.f32 %v2877, %v2933
    %v2949 = vadd.f32 %v2878, %v2933
    %v2950 = vadd.f32 %v2879, %v2933
    %v2951 = vadd.f32 %v2880, %v2933
    %v2952 = vadd.f32 %v2881, %v2933
    %v2953 = vadd.f32 %v2882, %v2933
    %v2954 = vadd.f32 %v2883, %v2933
    %v2955 = vadd.f32 %v2884, %v2933
    %v2956 = vadd.f32 %v2885, %v2933
    %v2957 = vadd.f32 %v2886, %v2933
    %v2958 = vadd.f32 %v2887, %v2933
    %v2959 = vadd.f32 %v2888, %v2933
    %v2960 = vadd.f32 %v2889, %v2933
    %v2961 = vadd.f32 %v2890, %v2933
    %v2962 = vadd.f32 %v2891, %v2933
    %v2963 = vadd.f32 %v2892, %v2933
    %v2964 = vadd.f32 %v2893, %v2933
    %v2965 = vadd.f32 %v2894, %v2933
    %v2966 = vadd.f32 %v2895, %v2933
    %v2967 = vadd.f32 %v2896, %v2933
    %v2968 = vadd.f32 %v2897, %v2933
    %v2969 = vadd.f32 %v2898, %v2933
    %v2970 = vadd.f32 %v2899, %v2933
    %v2971 = vadd.f32 %v2900, %v2933
    %v2972 = vadd.f32 %v2901, %v2933
    %v2973 = vadd.f32 %v2902, %v2933
    %v2974 = vadd.f32 %v2903, %v2933
    %v2975 = vadd.f32 %v2904, %v2933
    %v2976 = vadd.f32 %v2905, %v2933
    %v2977 = vadd.f32 %v2906, %v2933
    %v2978 = vadd.f32 %v2907, %v2933
    %v2979 = vadd.f32 %v2908, %v2933
    %v2980 = vadd.f32 %v2909, %v2933
    %v2981 = vadd.f32 %v2910, %v2933
    %v2982 = vadd.f32 %v2911, %v2933
    %v2983 = vadd.f32 %v2912, %v2933
    %v2984 = vadd.f32 %v2913, %v2933
    %v2985 = vadd.f32 %v2914, %v2933
    %v2986 = vadd.f32 %v2915, %v2933
    %v2987 = vadd.f32 %v2916, %v2933
    %v2988 = vadd.f32 %v2917, %v2933
    %v2989 = vadd.f32 %v2918, %v2933
    %v2990 = vadd.f32 %v2919, %v2933
    %v2991 = vadd.f32 %v2920, %v2933
    %v2992 = vadd.f32 %v2921, %v2933
    %v2993 = vadd.f32 %v2922, %v2933
    %v2994 = vadd.f32 %v2923, %v2933
    %v2995 = vadd.f32 %v2924, %v2933
    %v2996 = vadd.f32 %v2925, %v2933
    %v2997 = vadd.f32 %v2926, %v2933
    %v2998 = vadd.f32 %v2927, %v2933
    %v2999 = vmax.f32 %v2935, 0.0
    %v3000 = vmax.f32 %v2936, 0.0
    %v3001 = vmax.f32 %v2937, 0.0
    %v3002 = vmax.f32 %v2938, 0.0
    %v3003 = vmax.f32 %v2939, 0.0
    %v3004 = vmax.f32 %v2940, 0.0
    %v3005 = vmax.f32 %v2941, 0.0
    %v3006 = vmax.f32 %v2942, 0.0
    %v3007 = vmax.f32 %v2943, 0.0
    %v3008 = vmax.f32 %v2944, 0.0
    %v3009 = vmax.f32 %v2945, 0.0
    %v3010 = vmax.f32 %v2946, 0.0
    %v3011 = vmax.f32 %v2947, 0.0
    %v3012 = vmax.f32 %v2948, 0.0
    %v3013 = vmax.f32 %v2949, 0.0
    %v3014 = vmax.f32 %v2950, 0.0
    %v3015 = vmax.f32 %v2951, 0.0
    %v3016 = vmax.f32 %v2952, 0.0
    %v3017 = vmax.f32 %v2953, 0.0
    %v3018 = vmax.f32 %v2954, 0.0
    %v3019 = vmax.f32 %v2955, 0.0
    %v3020 = vmax.f32 %v2956, 0.0
    %v3021 = vmax.f32 %v2957, 0.0
    %v3022 = vmax.f32 %v2958, 0.0
    %v3023 = vmax.f32 %v2959, 0.0
    %v3024 = vmax.f32 %v2960, 0.0
    %v3025 = vmax.f32 %v2961, 0.0
    %v3026 = vmax.f32 %v2962, 0.0
    %v3027 = vmax.f32 %v2963, 0.0
    %v3028 = vmax.f32 %v2964, 0.0
    %v3029 = vmax.f32 %v2965, 0.0
    %v3030 = vmax.f32 %v2966, 0.0
    %v3031 = vmax.f32 %v2967, 0.0
    %v3032 = vmax.f32 %v2968, 0.0
    %v3033 = vmax.f32 %v2969, 0.0
    %v3034 = vmax.f32 %v2970, 0.0
    %v3035 = vmax.f32 %v2971, 0.0
    %v3036 = vmax.f32 %v2972, 0.0
    %v3037 = vmax.f32 %v2973, 0.0
    %v3038 = vmax.f32 %v2974, 0.0
    %v3039 = vmax.f32 %v2975, 0.0
    %v3040 = vmax.f32 %v2976, 0.0
    %v3041 = vmax.f32 %v2977, 0.0
    %v3042 = vmax.f32 %v2978, 0.0
    %v3043 = vmax.f32 %v2979, 0.0
    %v3044 = vmax.f32 %v2980, 0.0
    %v3045 = vmax.f32 %v2981, 0.0
    %v3046 = vmax.f32 %v2982, 0.0
    %v3047 = vmax.f32 %v2983, 0.0
    %v3048 = vmax.f32 %v2984, 0.0
    %v3049 = vmax.f32 %v2985, 0.0
    %v3050 = vmax.f32 %v2986, 0.0
    %v3051 = vmax.f32 %v2987, 0.0
    %v3052 = vmax.f32 %v2988, 0.0
    %v3053 = vmax.f32 %v2989, 0.0
    %v3054 = vmax.f32 %v2990, 0.0
    %v3055 = vmax.f32 %v2991, 0.0
    %v3056 = vmax.f32 %v2992, 0.0
    %v3057 = vmax.f32 %v2993, 0.0
    %v3058 = vmax.f32 %v2994, 0.0
    %v3059 = vmax.f32 %v2995, 0.0
    %v3060 = vmax.f32 %v2996, 0.0
    %v3061 = vmax.f32 %v2997, 0.0
    %v3062 = vmax.f32 %v2998, 0.0
    %3063 = vst [vmem:[%s236 + $0x8] sm:$0xff] %v2999
    %3064 = vst [vmem:[%s236 + $0x10] sm:$0xff] %v3000
    %3065 = vst [vmem:[%s236 + $0x28] sm:$0xff] %v3001
    %3066 = vst [vmem:[%s236 + $0x30] sm:$0xff] %v3002
    %3067 = vst [vmem:[%s236 + $0x48] sm:$0xff] %v3003
    %3068 = vst [vmem:[%s236 + $0x50] sm:$0xff] %v3004
    %3069 = vst [vmem:[%s236 + $0x68] sm:$0xff] %v3005
    %3070 = vst [vmem:[%s236 + $0x70] sm:$0xff] %v3006
    %3071 = vst [vmem:[%s236 + $0x88] sm:$0xff] %v3007
    %3072 = vst [vmem:[%s236 + $0x90] sm:$0xff] %v3008
    %3073 = vst [vmem:[%s236 + $0xa8] sm:$0xff] %v3009
    %3074 = vst [vmem:[%s236 + $0xb0] sm:$0xff] %v3010
    %3075 = vst [vmem:[%s236 + $0xc8] sm:$0xff] %v3011
    %3076 = vst [vmem:[%s236 + $0xd0] sm:$0xff] %v3012
    %3077 = vst [vmem:[%s236 + $0xe8] sm:$0xff] %v3013
    %3078 = vst [vmem:[%s236 + $0xf0] sm:$0xff] %v3014
    %3079 = vst [vmem:[%s236 + $0x108] sm:$0xff] %v3015
    %3080 = vst [vmem:[%s236 + $0x110] sm:$0xff] %v3016
    %3081 = vst [vmem:[%s236 + $0x128] sm:$0xff] %v3017
    %3082 = vst [vmem:[%s236 + $0x130] sm:$0xff] %v3018
    %3083 = vst [vmem:[%s236 + $0x148] sm:$0xff] %v3019
    %3084 = vst [vmem:[%s236 + $0x150] sm:$0xff] %v3020
    %3085 = vst [vmem:[%s236 + $0x168] sm:$0xff] %v3021
    %3086 = vst [vmem:[%s236 + $0x170] sm:$0xff] %v3022
    %3087 = vst [vmem:[%s236 + $0x188] sm:$0xff] %v3023
    %3088 = vst [vmem:[%s236 + $0x190] sm:$0xff] %v3024
    %3089 = vst [vmem:[%s236 + $0x1a8] sm:$0xff] %v3025
    %3090 = vst [vmem:[%s236 + $0x1b0] sm:$0xff] %v3026
    %3091 = vst [vmem:[%s236 + $0x1c8] sm:$0xff] %v3027
    %3092 = vst [vmem:[%s236 + $0x1d0] sm:$0xff] %v3028
    %3093 = vst [vmem:[%s236 + $0x1e8] sm:$0xff] %v3029
    %3094 = vst [vmem:[%s236 + $0x1f0] sm:$0xff] %v3030
    %3095 = vst [vmem:[%s236 + $0x248] sm:$0xff] %v3031
    %3096 = vst [vmem:[%s236 + $0x250] sm:$0xff] %v3032
    %3097 = vst [vmem:[%s236 + $0x268] sm:$0xff] %v3033
    %3098 = vst [vmem:[%s236 + $0x270] sm:$0xff] %v3034
    %3099 = vst [vmem:[%s236 + $0x288] sm:$0xff] %v3035
    %3100 = vst [vmem:[%s236 + $0x290] sm:$0xff] %v3036
    %3101 = vst [vmem:[%s236 + $0x2a8] sm:$0xff] %v3037
    %3102 = vst [vmem:[%s236 + $0x2b0] sm:$0xff] %v3038
    %3103 = vst [vmem:[%s236 + $0x2c8] sm:$0xff] %v3039
    %3104 = vst [vmem:[%s236 + $0x2d0] sm:$0xff] %v3040
    %3105 = vst [vmem:[%s236 + $0x2e8] sm:$0xff] %v3041
    %3106 = vst [vmem:[%s236 + $0x2f0] sm:$0xff] %v3042
    %3107 = vst [vmem:[%s236 + $0x308] sm:$0xff] %v3043
    %3108 = vst [vmem:[%s236 + $0x310] sm:$0xff] %v3044
    %3109 = vst [vmem:[%s236 + $0x328] sm:$0xff] %v3045
    %3110 = vst [vmem:[%s236 + $0x330] sm:$0xff] %v3046
    %3111 = vst [vmem:[%s236 + $0x348] sm:$0xff] %v3047
    %3112 = vst [vmem:[%s236 + $0x350] sm:$0xff] %v3048
    %3113 = vst [vmem:[%s236 + $0x368] sm:$0xff] %v3049
    %3114 = vst [vmem:[%s236 + $0x370] sm:$0xff] %v3050
    %3115 = vst [vmem:[%s236 + $0x388] sm:$0xff] %v3051
    %3116 = vst [vmem:[%s236 + $0x390] sm:$0xff] %v3052
    %3117 = vst [vmem:[%s236 + $0x3a8] sm:$0xff] %v3053
    %3118 = vst [vmem:[%s236 + $0x3b0] sm:$0xff] %v3054
    %3119 = vst [vmem:[%s236 + $0x3c8] sm:$0xff] %v3055
    %3120 = vst [vmem:[%s236 + $0x3d0] sm:$0xff] %v3056
    %3121 = vst [vmem:[%s236 + $0x3e8] sm:$0xff] %v3057
    %3122 = vst [vmem:[%s236 + $0x3f0] sm:$0xff] %v3058
    %3123 = vst [vmem:[%s236 + $0x408] sm:$0xff] %v3059
    %3124 = vst [vmem:[%s236 + $0x410] sm:$0xff] %v3060
    %3125 = vst [vmem:[%s236 + $0x428] sm:$0xff] %v3061
    %3126 = vst [vmem:[%s236 + $0x430] sm:$0xff] %v3062
    %v3127 = vld [vmem:[#allocation2 + $0x7] sm:$0xff]
    %v3128 = vld [vmem:[#allocation2 + $0xf] sm:$0xff]
    %v3129 = vld [vmem:[#allocation2 + $0x27] sm:$0xff]
    %v3130 = vld [vmem:[#allocation2 + $0x2f] sm:$0xff]
    %v3131 = vld [vmem:[#allocation2 + $0x47] sm:$0xff]
    %v3132 = vld [vmem:[#allocation2 + $0x4f] sm:$0xff]
    %v3133 = vld [vmem:[#allocation2 + $0x67] sm:$0xff]
    %v3134 = vld [vmem:[#allocation2 + $0x6f] sm:$0xff]
    %v3135 = vld [vmem:[#allocation2 + $0x87] sm:$0xff]
    %v3136 = vld [vmem:[#allocation2 + $0x8f] sm:$0xff]
    %v3137 = vld [vmem:[#allocation2 + $0xa7] sm:$0xff]
    %v3138 = vld [vmem:[#allocation2 + $0xaf] sm:$0xff]
    %v3139 = vld [vmem:[#allocation2 + $0xc7] sm:$0xff]
    %v3140 = vld [vmem:[#allocation2 + $0xcf] sm:$0xff]
    %v3141 = vld [vmem:[#allocation2 + $0xe7] sm:$0xff]
    %v3142 = vld [vmem:[#allocation2 + $0xef] sm:$0xff]
    %v3143 = vld [vmem:[#allocation2 + $0x107] sm:$0xff]
    %v3144 = vld [vmem:[#allocation2 + $0x10f] sm:$0xff]
    %v3145 = vld [vmem:[#allocation2 + $0x127] sm:$0xff]
    %v3146 = vld [vmem:[#allocation2 + $0x12f] sm:$0xff]
    %v3147 = vld [vmem:[#allocation2 + $0x147] sm:$0xff]
    %v3148 = vld [vmem:[#allocation2 + $0x14f] sm:$0xff]
    %v3149 = vld [vmem:[#allocation2 + $0x167] sm:$0xff]
    %v3150 = vld [vmem:[#allocation2 + $0x16f] sm:$0xff]
    %v3151 = vld [vmem:[#allocation2 + $0x187] sm:$0xff]
    %v3152 = vld [vmem:[#allocation2 + $0x18f] sm:$0xff]
    %v3153 = vld [vmem:[#allocation2 + $0x1a7] sm:$0xff]
    %v3154 = vld [vmem:[#allocation2 + $0x1af] sm:$0xff]
    %v3155 = vld [vmem:[#allocation2 + $0x1c7] sm:$0xff]
    %v3156 = vld [vmem:[#allocation2 + $0x1cf] sm:$0xff]
    %v3157 = vld [vmem:[#allocation2 + $0x1e7] sm:$0xff]
    %v3158 = vld [vmem:[#allocation2 + $0x1ef] sm:$0xff]
    %v3159 = vld [vmem:[#allocation2 + $0x207] sm:$0xff]
    %v3160 = vld [vmem:[#allocation2 + $0x20f] sm:$0xff]
    %v3161 = vld [vmem:[#allocation2 + $0x227] sm:$0xff]
    %v3162 = vld [vmem:[#allocation2 + $0x22f] sm:$0xff]
    %v3163 = vld [vmem:[#allocation2 + $0x247] sm:$0xff]
    %v3164 = vld [vmem:[#allocation2 + $0x24f] sm:$0xff]
    %v3165 = vld [vmem:[#allocation2 + $0x267] sm:$0xff]
    %v3166 = vld [vmem:[#allocation2 + $0x26f] sm:$0xff]
    %v3167 = vld [vmem:[#allocation2 + $0x287] sm:$0xff]
    %v3168 = vld [vmem:[#allocation2 + $0x28f] sm:$0xff]
    %v3169 = vld [vmem:[#allocation2 + $0x2a7] sm:$0xff]
    %v3170 = vld [vmem:[#allocation2 + $0x2af] sm:$0xff]
    %v3171 = vld [vmem:[#allocation2 + $0x2c7] sm:$0xff]
    %v3172 = vld [vmem:[#allocation2 + $0x2cf] sm:$0xff]
    %v3173 = vld [vmem:[#allocation2 + $0x2e7] sm:$0xff]
    %v3174 = vld [vmem:[#allocation2 + $0x2ef] sm:$0xff]
    %v3175 = vld [vmem:[#allocation2 + $0x307] sm:$0xff]
    %v3176 = vld [vmem:[#allocation2 + $0x30f] sm:$0xff]
    %v3177 = vld [vmem:[#allocation2 + $0x327] sm:$0xff]
    %v3178 = vld [vmem:[#allocation2 + $0x32f] sm:$0xff]
    %v3179 = vld [vmem:[#allocation2 + $0x347] sm:$0xff]
    %v3180 = vld [vmem:[#allocation2 + $0x34f] sm:$0xff]
    %v3181 = vld [vmem:[#allocation2 + $0x367] sm:$0xff]
    %v3182 = vld [vmem:[#allocation2 + $0x36f] sm:$0xff]
    %v3183 = vld [vmem:[#allocation2 + $0x387] sm:$0xff]
    %v3184 = vld [vmem:[#allocation2 + $0x38f] sm:$0xff]
    %v3185 = vld [vmem:[#allocation2 + $0x3a7] sm:$0xff]
    %v3186 = vld [vmem:[#allocation2 + $0x3af] sm:$0xff]
    %v3187 = vld [vmem:[#allocation2 + $0x3c7] sm:$0xff]
    %v3188 = vld [vmem:[#allocation2 + $0x3cf] sm:$0xff]
    %v3189 = vld [vmem:[#allocation2 + $0x3e7] sm:$0xff]
    %v3190 = vld [vmem:[#allocation2 + $0x3ef] sm:$0xff]
    %v3191 = vld [vmem:[#allocation2 + $0x407] sm:$0xff]
    %v3192 = vld [vmem:[#allocation2 + $0x40f] sm:$0xff]
    %v3193 = vld [vmem:[#allocation2 + $0x427] sm:$0xff]
    %v3194 = vld [vmem:[#allocation2 + $0x42f] sm:$0xff]
    %v3195 = vld [vmem:[#allocation2 + $0x447] sm:$0xff]
    %v3196 = vld [vmem:[#allocation2 + $0x44f] sm:$0xff]
    %v3197 = vld [vmem:[#allocation2 + $0x467] sm:$0xff]
    %v3198 = vld [vmem:[#allocation2 + $0x46f] sm:$0xff]
    %v3199 = vld [vmem:[#allocation2 + $0x8] sm:$0xff]
    %v3200 = vld [vmem:[#allocation2 + $0x10] sm:$0xff]
    %v3201 = vld [vmem:[#allocation2 + $0x28] sm:$0xff]
    %v3202 = vld [vmem:[#allocation2 + $0x30] sm:$0xff]
    %v3203 = vld [vmem:[#allocation2 + $0x48] sm:$0xff]
    %v3204 = vld [vmem:[#allocation2 + $0x50] sm:$0xff]
    %v3205 = vld [vmem:[#allocation2 + $0x68] sm:$0xff]
    %v3206 = vld [vmem:[#allocation2 + $0x70] sm:$0xff]
    %v3207 = vld [vmem:[#allocation2 + $0x88] sm:$0xff]
    %v3208 = vld [vmem:[#allocation2 + $0x90] sm:$0xff]
    %v3209 = vld [vmem:[#allocation2 + $0xa8] sm:$0xff]
    %v3210 = vld [vmem:[#allocation2 + $0xb0] sm:$0xff]
    %v3211 = vld [vmem:[#allocation2 + $0xc8] sm:$0xff]
    %v3212 = vld [vmem:[#allocation2 + $0xd0] sm:$0xff]
    %v3213 = vld [vmem:[#allocation2 + $0xe8] sm:$0xff]
    %v3214 = vld [vmem:[#allocation2 + $0xf0] sm:$0xff]
    %v3215 = vld [vmem:[#allocation2 + $0x108] sm:$0xff]
    %v3216 = vld [vmem:[#allocation2 + $0x110] sm:$0xff]
    %v3217 = vld [vmem:[#allocation2 + $0x128] sm:$0xff]
    %v3218 = vld [vmem:[#allocation2 + $0x130] sm:$0xff]
    %v3219 = vld [vmem:[#allocation2 + $0x148] sm:$0xff]
    %v3220 = vld [vmem:[#allocation2 + $0x150] sm:$0xff]
    %v3221 = vld [vmem:[#allocation2 + $0x168] sm:$0xff]
    %v3222 = vld [vmem:[#allocation2 + $0x170] sm:$0xff]
    %v3223 = vld [vmem:[#allocation2 + $0x188] sm:$0xff]
    %v3224 = vld [vmem:[#allocation2 + $0x190] sm:$0xff]
    %v3225 = vld [vmem:[#allocation2 + $0x1a8] sm:$0xff]
    %v3226 = vld [vmem:[#allocation2 + $0x1b0] sm:$0xff]
    %v3227 = vld [vmem:[#allocation2 + $0x1c8] sm:$0xff]
    %v3228 = vld [vmem:[#allocation2 + $0x1d0] sm:$0xff]
    %v3229 = vld [vmem:[#allocation2 + $0x1e8] sm:$0xff]
    %v3230 = vld [vmem:[#allocation2 + $0x1f0] sm:$0xff]
    %v3231 = vld [vmem:[#allocation2 + $0x208] sm:$0xff]
    %v3232 = vld [vmem:[#allocation2 + $0x210] sm:$0xff]
    %v3233 = vld [vmem:[#allocation2 + $0x228] sm:$0xff]
    %v3234 = vld [vmem:[#allocation2 + $0x230] sm:$0xff]
    %v3235 = vld [vmem:[#allocation2 + $0x248] sm:$0xff]
    %v3236 = vld [vmem:[#allocation2 + $0x250] sm:$0xff]
    %v3237 = vld [vmem:[#allocation2 + $0x268] sm:$0xff]
    %v3238 = vld [vmem:[#allocation2 + $0x270] sm:$0xff]
    %v3239 = vld [vmem:[#allocation2 + $0x288] sm:$0xff]
    %v3240 = vld [vmem:[#allocation2 + $0x290] sm:$0xff]
    %v3241 = vld [vmem:[#allocation2 + $0x2a8] sm:$0xff]
    %v3242 = vld [vmem:[#allocation2 + $0x2b0] sm:$0xff]
    %v3243 = vld [vmem:[#allocation2 + $0x2c8] sm:$0xff]
    %v3244 = vld [vmem:[#allocation2 + $0x2d0] sm:$0xff]
    %v3245 = vld [vmem:[#allocation2 + $0x2e8] sm:$0xff]
    %v3246 = vld [vmem:[#allocation2 + $0x2f0] sm:$0xff]
    %v3247 = vld [vmem:[#allocation2 + $0x308] sm:$0xff]
    %v3248 = vld [vmem:[#allocation2 + $0x310] sm:$0xff]
    %v3249 = vld [vmem:[#allocation2 + $0x328] sm:$0xff]
    %v3250 = vld [vmem:[#allocation2 + $0x330] sm:$0xff]
    %v3251 = vld [vmem:[#allocation2 + $0x348] sm:$0xff]
    %v3252 = vld [vmem:[#allocation2 + $0x350] sm:$0xff]
    %v3253 = vld [vmem:[#allocation2 + $0x368] sm:$0xff]
    %v3254 = vld [vmem:[#allocation2 + $0x370] sm:$0xff]
    %v3255 = vld [vmem:[#allocation2 + $0x388] sm:$0xff]
    %v3256 = vld [vmem:[#allocation2 + $0x390] sm:$0xff]
    %v3257 = vld [vmem:[#allocation2 + $0x3a8] sm:$0xff]
    %v3258 = vld [vmem:[#allocation2 + $0x3b0] sm:$0xff]
    %v3259 = vld [vmem:[#allocation2 + $0x3c8] sm:$0xff]
    %v3260 = vld [vmem:[#allocation2 + $0x3d0] sm:$0xff]
    %v3261 = vld [vmem:[#allocation2 + $0x3e8] sm:$0xff]
    %v3262 = vld [vmem:[#allocation2 + $0x3f0] sm:$0xff]
    %v3263 = vld [vmem:[#allocation2 + $0x408] sm:$0xff]
    %v3264 = vld [vmem:[#allocation2 + $0x410] sm:$0xff]
    %v3265 = vld [vmem:[#allocation2 + $0x428] sm:$0xff]
    %v3266 = vld [vmem:[#allocation2 + $0x430] sm:$0xff]
    %v3267 = vld [vmem:[#allocation2 + $0x448] sm:$0xff]
    %v3268 = vld [vmem:[#allocation2 + $0x450] sm:$0xff]
    %v3269 = vld [vmem:[#allocation2 + $0x468] sm:$0xff]
    %v3270 = vld [vmem:[#allocation2 + $0x470] sm:$0xff]
    %v3271 = vld [vmem:[#allocation2 + $0x9] sm:$0xff]
    %v3272 = vld [vmem:[#allocation2 + $0x11] sm:$0xff]
    %v3273 = vld [vmem:[#allocation2 + $0x29] sm:$0xff]
    %v3274 = vld [vmem:[#allocation2 + $0x31] sm:$0xff]
    %v3275 = vld [vmem:[#allocation2 + $0x49] sm:$0xff]
    %v3276 = vld [vmem:[#allocation2 + $0x51] sm:$0xff]
    %v3277 = vld [vmem:[#allocation2 + $0x69] sm:$0xff]
    %v3278 = vld [vmem:[#allocation2 + $0x71] sm:$0xff]
    %v3279 = vld [vmem:[#allocation2 + $0x89] sm:$0xff]
    %v3280 = vld [vmem:[#allocation2 + $0x91] sm:$0xff]
    %v3281 = vld [vmem:[#allocation2 + $0xa9] sm:$0xff]
    %v3282 = vld [vmem:[#allocation2 + $0xb1] sm:$0xff]
    %v3283 = vld [vmem:[#allocation2 + $0xc9] sm:$0xff]
    %v3284 = vld [vmem:[#allocation2 + $0xd1] sm:$0xff]
    %v3285 = vld [vmem:[#allocation2 + $0xe9] sm:$0xff]
    %v3286 = vld [vmem:[#allocation2 + $0xf1] sm:$0xff]
    %v3287 = vld [vmem:[#allocation2 + $0x109] sm:$0xff]
    %v3288 = vld [vmem:[#allocation2 + $0x111] sm:$0xff]
    %v3289 = vld [vmem:[#allocation2 + $0x129] sm:$0xff]
    %v3290 = vld [vmem:[#allocation2 + $0x131] sm:$0xff]
    %v3291 = vld [vmem:[#allocation2 + $0x149] sm:$0xff]
    %v3292 = vld [vmem:[#allocation2 + $0x151] sm:$0xff]
    %v3293 = vld [vmem:[#allocation2 + $0x169] sm:$0xff]
    %v3294 = vld [vmem:[#allocation2 + $0x171] sm:$0xff]
    %v3295 = vld [vmem:[#allocation2 + $0x189] sm:$0xff]
    %v3296 = vld [vmem:[#allocation2 + $0x191] sm:$0xff]
    %v3297 = vld [vmem:[#allocation2 + $0x1a9] sm:$0xff]
    %v3298 = vld [vmem:[#allocation2 + $0x1b1] sm:$0xff]
    %v3299 = vld [vmem:[#allocation2 + $0x1c9] sm:$0xff]
    %v3300 = vld [vmem:[#allocation2 + $0x1d1] sm:$0xff]
    %v3301 = vld [vmem:[#allocation2 + $0x1e9] sm:$0xff]
    %v3302 = vld [vmem:[#allocation2 + $0x1f1] sm:$0xff]
    %v3303 = vld [vmem:[#allocation2 + $0x209] sm:$0xff]
    %v3304 = vld [vmem:[#allocation2 + $0x211] sm:$0xff]
    %v3305 = vld [vmem:[#allocation2 + $0x229] sm:$0xff]
    %v3306 = vld [vmem:[#allocation2 + $0x231] sm:$0xff]
    %v3307 = vld [vmem:[#allocation2 + $0x249] sm:$0xff]
    %v3308 = vld [vmem:[#allocation2 + $0x251] sm:$0xff]
    %v3309 = vld [vmem:[#allocation2 + $0x269] sm:$0xff]
    %v3310 = vld [vmem:[#allocation2 + $0x271] sm:$0xff]
    %v3311 = vld [vmem:[#allocation2 + $0x289] sm:$0xff]
    %v3312 = vld [vmem:[#allocation2 + $0x291] sm:$0xff]
    %v3313 = vld [vmem:[#allocation2 + $0x2a9] sm:$0xff]
    %v3314 = vld [vmem:[#allocation2 + $0x2b1] sm:$0xff]
    %v3315 = vld [vmem:[#allocation2 + $0x2c9] sm:$0xff]
    %v3316 = vld [vmem:[#allocation2 + $0x2d1] sm:$0xff]
    %v3317 = vld [vmem:[#allocation2 + $0x2e9] sm:$0xff]
    %v3318 = vld [vmem:[#allocation2 + $0x2f1] sm:$0xff]
    %v3319 = vld [vmem:[#allocation2 + $0x309] sm:$0xff]
    %v3320 = vld [vmem:[#allocation2 + $0x311] sm:$0xff]
    %v3321 = vld [vmem:[#allocation2 + $0x329] sm:$0xff]
    %v3322 = vld [vmem:[#allocation2 + $0x331] sm:$0xff]
    %v3323 = vld [vmem:[#allocation2 + $0x349] sm:$0xff]
    %v3324 = vld [vmem:[#allocation2 + $0x351] sm:$0xff]
    %v3325 = vld [vmem:[#allocation2 + $0x369] sm:$0xff]
    %v3326 = vld [vmem:[#allocation2 + $0x371] sm:$0xff]
    %v3327 = vld [vmem:[#allocation2 + $0x389] sm:$0xff]
    %v3328 = vld [vmem:[#allocation2 + $0x391] sm:$0xff]
    %v3329 = vld [vmem:[#allocation2 + $0x3a9] sm:$0xff]
    %v3330 = vld [vmem:[#allocation2 + $0x3b1] sm:$0xff]
    %v3331 = vld [vmem:[#allocation2 + $0x3c9] sm:$0xff]
    %v3332 = vld [vmem:[#allocation2 + $0x3d1] sm:$0xff]
    %v3333 = vld [vmem:[#allocation2 + $0x3e9] sm:$0xff]
    %v3334 = vld [vmem:[#allocation2 + $0x3f1] sm:$0xff]
    %v3335 = vld [vmem:[#allocation2 + $0x409] sm:$0xff]
    %v3336 = vld [vmem:[#allocation2 + $0x411] sm:$0xff]
    %v3337 = vld [vmem:[#allocation2 + $0x429] sm:$0xff]
    %v3338 = vld [vmem:[#allocation2 + $0x431] sm:$0xff]
    %v3339 = vld [vmem:[#allocation2 + $0x449] sm:$0xff]
    %v3340 = vld [vmem:[#allocation2 + $0x451] sm:$0xff]
    %v3341 = vld [vmem:[#allocation2 + $0x469] sm:$0xff]
    %v3342 = vld [vmem:[#allocation2 + $0x471] sm:$0xff]
    %v3343 = vld [vmem:[#allocation8] sm:$0xff]
    %v3344 = vld [vmem:[#allocation8 + $0x8] sm:$0xff]
    %v3345 = vld [vmem:[#allocation8 + $0x10] sm:$0xff]
    %v3346 = vld [vmem:[#allocation8 + $0x18] sm:$0xff]
    %v3347 = vld [vmem:[#allocation8 + $0x20] sm:$0xff]
    %v3348 = vld [vmem:[#allocation8 + $0x28] sm:$0xff]
    %v3349 = vld [vmem:[#allocation8 + $0x30] sm:$0xff]
    %v3350 = vld [vmem:[#allocation8 + $0x38] sm:$0xff]
    %v3351 = vld [vmem:[#allocation8 + $0x40] sm:$0xff]
    %v3352 = vld [vmem:[#allocation8 + $0x48] sm:$0xff]
    %v3353 = vld [vmem:[#allocation8 + $0x50] sm:$0xff]
    %v3354 = vld [vmem:[#allocation8 + $0x58] sm:$0xff]
    %v3355 = vld [vmem:[#allocation8 + $0x60] sm:$0xff]
    %v3356 = vld [vmem:[#allocation8 + $0x68] sm:$0xff]
    %v3357 = vld [vmem:[#allocation8 + $0x70] sm:$0xff]
    %v3358 = vld [vmem:[#allocation8 + $0x78] sm:$0xff]
    %v3359 = vld [vmem:[#allocation8 + $0x80] sm:$0xff]
    %v3360 = vld [vmem:[#allocation8 + $0x88] sm:$0xff]
    %v3361 = vld [vmem:[#allocation8 + $0x90] sm:$0xff]
    %v3362 = vld [vmem:[#allocation8 + $0x98] sm:$0xff]
    %v3363 = vld [vmem:[#allocation8 + $0xa0] sm:$0xff]
    %v3364 = vld [vmem:[#allocation8 + $0xa8] sm:$0xff]
    %v3365 = vld [vmem:[#allocation8 + $0xb0] sm:$0xff]
    %v3366 = vld [vmem:[#allocation8 + $0xb8] sm:$0xff]
    %v3367 = vld [vmem:[#allocation8 + $0xc0] sm:$0xff]
    %v3368 = vld [vmem:[#allocation8 + $0xc8] sm:$0xff]
    %v3369 = vld [vmem:[#allocation8 + $0xd0] sm:$0xff]
    %v3370 = vld [vmem:[#allocation8 + $0xd8] sm:$0xff]
    %v3371 = vld [vmem:[#allocation8 + $0xe0] sm:$0xff]
    %v3372 = vld [vmem:[#allocation8 + $0xe8] sm:$0xff]
    %v3373 = vld [vmem:[#allocation8 + $0xf0] sm:$0xff]
    %v3374 = vld [vmem:[#allocation8 + $0xf8] sm:$0xff]
    %v3375 = vld [vmem:[#allocation8 + $0x100] sm:$0xff]
    %v3376 = vld [vmem:[#allocation8 + $0x108] sm:$0xff]
    %v3377 = vld [vmem:[#allocation8 + $0x110] sm:$0xff]
    %v3378 = vld [vmem:[#allocation8 + $0x118] sm:$0xff]
    %v3379 = vld [vmem:[#allocation8 + $0x120] sm:$0xff]
    %v3380 = vld [vmem:[#allocation8 + $0x128] sm:$0xff]
    %v3381 = vld [vmem:[#allocation8 + $0x130] sm:$0xff]
    %v3382 = vld [vmem:[#allocation8 + $0x138] sm:$0xff]
    %v3383 = vld [vmem:[#allocation8 + $0x140] sm:$0xff]
    %v3384 = vld [vmem:[#allocation8 + $0x148] sm:$0xff]
    %v3385 = vld [vmem:[#allocation8 + $0x150] sm:$0xff]
    %v3386 = vld [vmem:[#allocation8 + $0x158] sm:$0xff]
    %v3387 = vld [vmem:[#allocation8 + $0x160] sm:$0xff]
    %v3388 = vld [vmem:[#allocation8 + $0x168] sm:$0xff]
    %v3389 = vld [vmem:[#allocation8 + $0x170] sm:$0xff]
    %v3390 = vld [vmem:[#allocation8 + $0x178] sm:$0xff]
    %v3391 = vld [vmem:[#allocation8 + $0x180] sm:$0xff]
    %v3392 = vld [vmem:[#allocation8 + $0x188] sm:$0xff]
    %v3393 = vld [vmem:[#allocation8 + $0x190] sm:$0xff]
    %v3394 = vld [vmem:[#allocation8 + $0x198] sm:$0xff]
    %v3395 = vld [vmem:[#allocation8 + $0x1a0] sm:$0xff]
    %v3396 = vld [vmem:[#allocation8 + $0x1a8] sm:$0xff]
    %v3397 = vld [vmem:[#allocation8 + $0x1b0] sm:$0xff]
    %v3398 = vld [vmem:[#allocation8 + $0x1b8] sm:$0xff]
    %v3399 = vld [vmem:[#allocation8 + $0x1c0] sm:$0xff]
    %v3400 = vld [vmem:[#allocation8 + $0x1c8] sm:$0xff]
    %v3401 = vld [vmem:[#allocation8 + $0x1d0] sm:$0xff]
    %v3402 = vld [vmem:[#allocation8 + $0x1d8] sm:$0xff]
    %v3403 = vld [vmem:[#allocation8 + $0x1e0] sm:$0xff]
    %v3404 = vld [vmem:[#allocation8 + $0x1e8] sm:$0xff]
    %v3405 = vld [vmem:[#allocation8 + $0x1f0] sm:$0xff]
    %v3406 = vld [vmem:[#allocation8 + $0x1f8] sm:$0xff]
    %v3407 = vld [vmem:[#allocation8 + $0x200] sm:$0xff]
    %v3408 = vld [vmem:[#allocation8 + $0x208] sm:$0xff]
    %v3409 = vld [vmem:[#allocation8 + $0x210] sm:$0xff]
    %v3410 = vld [vmem:[#allocation8 + $0x218] sm:$0xff]
    %v3411 = vld [vmem:[#allocation8 + $0x220] sm:$0xff]
    %v3412 = vld [vmem:[#allocation8 + $0x228] sm:$0xff]
    %v3413 = vld [vmem:[#allocation8 + $0x230] sm:$0xff]
    %v3414 = vld [vmem:[#allocation8 + $0x238] sm:$0xff]
    %v3415 = vld [vmem:[#allocation8 + $0x240] sm:$0xff]
    %v3416 = vld [vmem:[#allocation8 + $0x248] sm:$0xff]
    %v3417 = vld [vmem:[#allocation8 + $0x250] sm:$0xff]
    %v3418 = vld [vmem:[#allocation8 + $0x258] sm:$0xff]
    %v3419 = vld [vmem:[#allocation8 + $0x260] sm:$0xff]
    %v3420 = vld [vmem:[#allocation8 + $0x268] sm:$0xff]
    %v3421 = vld [vmem:[#allocation8 + $0x270] sm:$0xff]
    %v3422 = vld [vmem:[#allocation8 + $0x278] sm:$0xff]
    %v3423 = vld [vmem:[#allocation8 + $0x280] sm:$0xff]
    %v3424 = vld [vmem:[#allocation8 + $0x288] sm:$0xff]
    %v3425 = vld [vmem:[#allocation8 + $0x290] sm:$0xff]
    %v3426 = vld [vmem:[#allocation8 + $0x298] sm:$0xff]
    %v3427 = vld [vmem:[#allocation8 + $0x2a0] sm:$0xff]
    %v3428 = vld [vmem:[#allocation8 + $0x2a8] sm:$0xff]
    %v3429 = vld [vmem:[#allocation8 + $0x2b0] sm:$0xff]
    %v3430 = vld [vmem:[#allocation8 + $0x2b8] sm:$0xff]
    %v3431 = vld [vmem:[#allocation8 + $0x2c0] sm:$0xff]
    %v3432 = vld [vmem:[#allocation8 + $0x2c8] sm:$0xff]
    %v3433 = vld [vmem:[#allocation8 + $0x2d0] sm:$0xff]
    %v3434 = vld [vmem:[#allocation8 + $0x2d8] sm:$0xff]
    %v3435 = vld [vmem:[#allocation8 + $0x2e0] sm:$0xff]
    %v3436 = vld [vmem:[#allocation8 + $0x2e8] sm:$0xff]
    %v3437 = vld [vmem:[#allocation8 + $0x2f0] sm:$0xff]
    %v3438 = vld [vmem:[#allocation8 + $0x2f8] sm:$0xff]
    %v3439 = vld [vmem:[#allocation8 + $0x300] sm:$0xff]
    %v3440 = vld [vmem:[#allocation8 + $0x308] sm:$0xff]
    %v3441 = vld [vmem:[#allocation8 + $0x310] sm:$0xff]
    %v3442 = vld [vmem:[#allocation8 + $0x318] sm:$0xff]
    %v3443 = vld [vmem:[#allocation8 + $0x320] sm:$0xff]
    %v3444 = vld [vmem:[#allocation8 + $0x328] sm:$0xff]
    %v3445 = vld [vmem:[#allocation8 + $0x330] sm:$0xff]
    %v3446 = vld [vmem:[#allocation8 + $0x338] sm:$0xff]
    %v3447 = vld [vmem:[#allocation8 + $0x340] sm:$0xff]
    %v3448 = vld [vmem:[#allocation8 + $0x348] sm:$0xff]
    %v3449 = vld [vmem:[#allocation8 + $0x350] sm:$0xff]
    %v3450 = vld [vmem:[#allocation8 + $0x358] sm:$0xff]
    %v3451 = vld [vmem:[#allocation8 + $0x360] sm:$0xff]
    %v3452 = vld [vmem:[#allocation8 + $0x368] sm:$0xff]
    %v3453 = vld [vmem:[#allocation8 + $0x370] sm:$0xff]
    %v3454 = vld [vmem:[#allocation8 + $0x378] sm:$0xff]
    %v3455 = vld [vmem:[#allocation8 + $0x380] sm:$0xff]
    %v3456 = vld [vmem:[#allocation8 + $0x388] sm:$0xff]
    %v3457 = vld [vmem:[#allocation8 + $0x390] sm:$0xff]
    %v3458 = vld [vmem:[#allocation8 + $0x398] sm:$0xff]
    %v3459 = vld [vmem:[#allocation8 + $0x3a0] sm:$0xff]
    %v3460 = vld [vmem:[#allocation8 + $0x3a8] sm:$0xff]
    %v3461 = vld [vmem:[#allocation8 + $0x3b0] sm:$0xff]
    %v3462 = vld [vmem:[#allocation8 + $0x3b8] sm:$0xff]
    %v3463 = vld [vmem:[#allocation8 + $0x3c0] sm:$0xff]
    %v3464 = vld [vmem:[#allocation8 + $0x3c8] sm:$0xff]
    %v3465 = vld [vmem:[#allocation8 + $0x3d0] sm:$0xff]
    %v3466 = vld [vmem:[#allocation8 + $0x3d8] sm:$0xff]
    %v3467 = vld [vmem:[#allocation8 + $0x3e0] sm:$0xff]
    %v3468 = vld [vmem:[#allocation8 + $0x3e8] sm:$0xff]
    %v3469 = vld [vmem:[#allocation8 + $0x3f0] sm:$0xff]
    %v3470 = vld [vmem:[#allocation8 + $0x3f8] sm:$0xff]
    %v3471 = vld [vmem:[#allocation8 + $0x400] sm:$0xff]
    %v3472 = vld [vmem:[#allocation8 + $0x408] sm:$0xff]
    %v3473 = vld [vmem:[#allocation8 + $0x410] sm:$0xff]
    %v3474 = vld [vmem:[#allocation8 + $0x418] sm:$0xff]
    %v3475 = vld [vmem:[#allocation8 + $0x420] sm:$0xff]
    %v3476 = vld [vmem:[#allocation8 + $0x428] sm:$0xff]
    %v3477 = vld [vmem:[#allocation8 + $0x430] sm:$0xff]
    %v3478 = vld [vmem:[#allocation8 + $0x438] sm:$0xff]
    %v3479 = vld [vmem:[#allocation8 + $0x440] sm:$0xff]
    %v3480 = vld [vmem:[#allocation8 + $0x448] sm:$0xff]
    %v3481 = vld [vmem:[#allocation8 + $0x450] sm:$0xff]
    %v3482 = vld [vmem:[#allocation8 + $0x458] sm:$0xff]
    %v3483 = vld [vmem:[#allocation8 + $0x460] sm:$0xff]
    %v3484 = vld [vmem:[#allocation8 + $0x468] sm:$0xff]
    %v3485 = vld [vmem:[#allocation8 + $0x470] sm:$0xff]
    %v3486 = vld [vmem:[#allocation8 + $0x478] sm:$0xff]
    %3487 = vmatprep.subr.mxu0 0.0
    %3488 = vmatpush1.msra.mxu0 %v3343
    %3489 = vmatprep.subr.mxu0 0.0
    %3490 = vmatpush1.msra.mxu0 %v3344
    %3491 = vmatprep.subr.mxu0 0.0
    %3492 = vmatpush1.msra.mxu0 %v3345
    %3493 = vmatprep.subr.mxu0 0.0
    %3494 = vmatpush1.msra.mxu0 %v3346
    %3495 = vmatprep.subr.mxu0 0.0
    %3496 = vmatpush1.msra.mxu0 %v3347
    %3497 = vmatprep.subr.mxu0 0.0
    %3498 = vmatpush1.msra.mxu0 %v3348
    %3499 = vmatprep.subr.mxu0 0.0
    %3500 = vmatpush1.msra.mxu0 %v3349
    %3501 = vmatprep.subr.mxu0 0.0
    %3502 = vmatpush1.msra.mxu0 %v3350
    %3503 = vmatprep.subr.mxu0 0.0
    %3504 = vmatpush1.msra.mxu0 %v3351
    %3505 = vmatprep.subr.mxu0 0.0
    %3506 = vmatpush1.msra.mxu0 %v3352
    %3507 = vmatprep.subr.mxu0 0.0
    %3508 = vmatpush1.msra.mxu0 %v3353
    %3509 = vmatprep.subr.mxu0 0.0
    %3510 = vmatpush1.msra.mxu0 %v3354
    %3511 = vmatprep.subr.mxu0 0.0
    %3512 = vmatpush1.msra.mxu0 %v3355
    %3513 = vmatprep.subr.mxu0 0.0
    %3514 = vmatpush1.msra.mxu0 %v3356
    %3515 = vmatprep.subr.mxu0 0.0
    %3516 = vmatpush1.msra.mxu0 %v3357
    %3517 = vmatprep.subr.mxu0 0.0
    %3518 = vmatpush1.msra.mxu0 %v3358
    %3519 = vmatprep.subr.mxu0 0.0
    %3520 = vmatpush1.msra.mxu0 %v3359
    %3521 = vmatprep.subr.mxu0 0.0
    %3522 = vmatpush1.msra.mxu0 %v3360
    %3523 = vmatprep.subr.mxu0 0.0
    %3524 = vmatpush1.msra.mxu0 %v3361
    %3525 = vmatprep.subr.mxu0 0.0
    %3526 = vmatpush1.msra.mxu0 %v3362
    %3527 = vmatprep.subr.mxu0 0.0
    %3528 = vmatpush1.msra.mxu0 %v3363
    %3529 = vmatprep.subr.mxu0 0.0
    %3530 = vmatpush1.msra.mxu0 %v3364
    %3531 = vmatprep.subr.mxu0 0.0
    %3532 = vmatpush1.msra.mxu0 %v3365
    %3533 = vmatprep.subr.mxu0 0.0
    %3534 = vmatpush1.msra.mxu0 %v3366
    %3535 = vmatprep.subr.mxu0 0.0
    %3536 = vmatpush1.msra.mxu0 %v3367
    %3537 = vmatprep.subr.mxu0 0.0
    %3538 = vmatpush1.msra.mxu0 %v3368
    %3539 = vmatprep.subr.mxu0 0.0
    %3540 = vmatpush1.msra.mxu0 %v3369
    %3541 = vmatprep.subr.mxu0 0.0
    %3542 = vmatpush1.msra.mxu0 %v3370
    %3543 = vmatprep.subr.mxu0 0.0
    %3544 = vmatpush1.msra.mxu0 %v3371
    %3545 = vmatprep.subr.mxu0 0.0
    %3546 = vmatpush1.msra.mxu0 %v3372
    %3547 = vmatprep.subr.mxu0 0.0
    %3548 = vmatpush1.msra.mxu0 %v3373
    %3549 = vmatprep.subr.mxu0 0.0
    %3550 = vmatpush1.msra.mxu0 %v3374
    %3551 = vmatprep.mubr.f32.mxu0 %v3199
    %3552 = vmatmul.mubr.f32.gmra.mrb[0].mxu0 %v3127
    %v3553 = vpop.f32.mrb[0].mxu0
    %v3554 = vadd.f32 0.0, %v3553
    %v3555 = vpop.f32.mrb[0].mxu0
    %3556 = vmatprep.mubr.f32.mxu0 %v3200
    %3557 = vmatmul.mubr.f32.gmra.mrb[0].mxu0 %v3128
    %v3558 = vpop.f32.mrb[0].mxu0
    %v3559 = vadd.f32 0.0, %v3558
    %v3560 = vpop.f32.mrb[0].mxu0
    %3561 = vmatprep.mubr.f32.mxu0 %v3201
    %3562 = vmatmul.mubr.f32.gmra.mrb[0].mxu0 %v3129
    %v3563 = vpop.f32.mrb[0].mxu0
    %v3564 = vadd.f32 0.0, %v3563
    %v3565 = vpop.f32.mrb[0].mxu0
    %3566 = vmatprep.mubr.f32.mxu0 %v3202
    %3567 = vmatmul.mubr.f32.gmra.mrb[0].mxu0 %v3130
    %v3568 = vpop.f32.mrb[0].mxu0
    %v3569 = vadd.f32 0.0, %v3568
    %v3570 = vpop.f32.mrb[0].mxu0
    %3571 = vmatprep.mubr.f32.mxu0 %v3203
    %3572 = vmatmul.mubr.f32.gmra.mrb[0].mxu0 %v3131
    %v3573 = vpop.f32.mrb[0].mxu0
    %v3574 = vadd.f32 0.0, %v3573
    %v3575 = vpop.f32.mrb[0].mxu0
    %3576 = vmatprep.mubr.f32.mxu0 %v3204
    %3577 = vmatmul.mubr.f32.gmra.mrb[0].mxu0 %v3132
    %v3578 = vpop.f32.mrb[0].mxu0
    %v3579 = vadd.f32 0.0, %v3578
    %v3580 = vpop.f32.mrb[0].mxu0
    %3581 = vmatprep.mubr.f32.mxu0 %v3205
    %3582 = vmatmul.mubr.f32.gmra.mrb[0].mxu0 %v3133
    %v3583 = vpop.f32.mrb[0].mxu0
    %v3584 = vadd.f32 0.0, %v3583
    %v3585 = vpop.f32.mrb[0].mxu0
    %3586 = vmatprep.mubr.f32.mxu0 %v3206
    %3587 = vmatmul.mubr.f32.gmra.mrb[0].mxu0 %v3134
    %v3588 = vpop.f32.mrb[0].mxu0
    %v3589 = vadd.f32 0.0, %v3588
    %v3590 = vpop.f32.mrb[0].mxu0
    %3591 = vmatprep.mubr.f32.mxu0 %v3207
    %3592 = vmatmul.mubr.f32.gmra.mrb[0].mxu0 %v3135
    %v3593 = vpop.f32.mrb[0].mxu0
    %v3594 = vadd.f32 0.0, %v3593
    %v3595 = vpop.f32.mrb[0].mxu0
    %3596 = vmatprep.mubr.f32.mxu0 %v3208
    %3597 = vmatmul.mubr.f32.gmra.mrb[0].mxu0 %v3136
    %v3598 = vpop.f32.mrb[0].mxu0
    %v3599 = vadd.f32 0.0, %v3598
    %v3600 = vpop.f32.mrb[0].mxu0
    %3601 = vmatprep.mubr.f32.mxu0 %v3209
    %3602 = vmatmul.mubr.f32.gmra.mrb[0].mxu0 %v3137
    %v3603 = vpop.f32.mrb[0].mxu0
    %v3604 = vadd.f32 0.0, %v3603
    %v3605 = vpop.f32.mrb[0].mxu0
    %3606 = vmatprep.mubr.f32.mxu0 %v3210
    %3607 = vmatmul.mubr.f32.gmra.mrb[0].mxu0 %v3138
    %v3608 = vpop.f32.mrb[0].mxu0
    %v3609 = vadd.f32 0.0, %v3608
    %v3610 = vpop.f32.mrb[0].mxu0
    %3611 = vmatprep.mubr.f32.mxu0 %v3211
    %3612 = vmatmul.mubr.f32.gmra.mrb[0].mxu0 %v3139
    %v3613 = vpop.f32.mrb[0].mxu0
    %v3614 = vadd.f32 0.0, %v3613
    %v3615 = vpop.f32.mrb[0].mxu0
    %3616 = vmatprep.mubr.f32.mxu0 %v3212
    %3617 = vmatmul.mubr.f32.gmra.mrb[0].mxu0 %v3140
    %v3618 = vpop.f32.mrb[0].mxu0
    %v3619 = vadd.f32 0.0, %v3618
    %v3620 = vpop.f32.mrb[0].mxu0
    %3621 = vmatprep.mubr.f32.mxu0 %v3213
    %3622 = vmatmul.mubr.f32.gmra.mrb[0].mxu0 %v3141
    %v3623 = vpop.f32.mrb[0].mxu0
    %v3624 = vadd.f32 0.0, %v3623
    %v3625 = vpop.f32.mrb[0].mxu0
    %3626 = vmatprep.mubr.f32.mxu0 %v3214
    %3627 = vmatmul.mubr.f32.gmra.mrb[0].mxu0 %v3142
    %v3628 = vpop.f32.mrb[0].mxu0
    %v3629 = vadd.f32 0.0, %v3628
    %v3630 = vpop.f32.mrb[0].mxu0
    %3631 = vmatprep.mubr.f32.mxu0 %v3215
    %3632 = vmatmul.mubr.f32.gmra.mrb[0].mxu0 %v3143
    %v3633 = vpop.f32.mrb[0].mxu0
    %v3634 = vadd.f32 0.0, %v3633
    %v3635 = vpop.f32.mrb[0].mxu0
    %3636 = vmatprep.mubr.f32.mxu0 %v3216
    %3637 = vmatmul.mubr.f32.gmra.mrb[0].mxu0 %v3144
    %v3638 = vpop.f32.mrb[0].mxu0
    %v3639 = vadd.f32 0.0, %v3638
    %v3640 = vpop.f32.mrb[0].mxu0
    %3641 = vmatprep.mubr.f32.mxu0 %v3217
    %3642 = vmatmul.mubr.f32.gmra.mrb[0].mxu0 %v3145
    %v3643 = vpop.f32.mrb[0].mxu0
    %v3644 = vadd.f32 0.0, %v3643
    %v3645 = vpop.f32.mrb[0].mxu0
    %3646 = vmatprep.mubr.f32.mxu0 %v3218
    %3647 = vmatmul.mubr.f32.gmra.mrb[0].mxu0 %v3146
    %v3648 = vpop.f32.mrb[0].mxu0
    %v3649 = vadd.f32 0.0, %v3648
    %v3650 = vpop.f32.mrb[0].mxu0
    %3651 = vmatprep.mubr.f32.mxu0 %v3219
    %3652 = vmatmul.mubr.f32.gmra.mrb[0].mxu0 %v3147
    %v3653 = vpop.f32.mrb[0].mxu0
    %v3654 = vadd.f32 0.0, %v3653
    %v3655 = vpop.f32.mrb[0].mxu0
    %3656 = vmatprep.mubr.f32.mxu0 %v3220
    %3657 = vmatmul.mubr.f32.gmra.mrb[0].mxu0 %v3148
    %v3658 = vpop.f32.mrb[0].mxu0
    %v3659 = vadd.f32 0.0, %v3658
    %v3660 = vpop.f32.mrb[0].mxu0
    %3661 = vmatprep.mubr.f32.mxu0 %v3221
    %3662 = vmatmul.mubr.f32.gmra.mrb[0].mxu0 %v3149
    %v3663 = vpop.f32.mrb[0].mxu0
    %v3664 = vadd.f32 0.0, %v3663
    %v3665 = vpop.f32.mrb[0].mxu0
    %3666 = vmatprep.mubr.f32.mxu0 %v3222
    %3667 = vmatmul.mubr.f32.gmra.mrb[0].mxu0 %v3150
    %v3668 = vpop.f32.mrb[0].mxu0
    %v3669 = vadd.f32 0.0, %v3668
    %v3670 = vpop.f32.mrb[0].mxu0
    %3671 = vmatprep.mubr.f32.mxu0 %v3223
    %3672 = vmatmul.mubr.f32.gmra.mrb[0].mxu0 %v3151
    %v3673 = vpop.f32.mrb[0].mxu0
    %v3674 = vadd.f32 0.0, %v3673
    %v3675 = vpop.f32.mrb[0].mxu0
    %3676 = vmatprep.mubr.f32.mxu0 %v3224
    %3677 = vmatmul.mubr.f32.gmra.mrb[0].mxu0 %v3152
    %v3678 = vpop.f32.mrb[0].mxu0
    %v3679 = vadd.f32 0.0, %v3678
    %v3680 = vpop.f32.mrb[0].mxu0
    %3681 = vmatprep.mubr.f32.mxu0 %v3225
    %3682 = vmatmul.mubr.f32.gmra.mrb[0].mxu0 %v3153
    %v3683 = vpop.f32.mrb[0].mxu0
    %v3684 = vadd.f32 0.0, %v3683
    %v3685 = vpop.f32.mrb[0].mxu0
    %3686 = vmatprep.mubr.f32.mxu0 %v3226
    %3687 = vmatmul.mubr.f32.gmra.mrb[0].mxu0 %v3154
    %v3688 = vpop.f32.mrb[0].mxu0
    %v3689 = vadd.f32 0.0, %v3688
    %v3690 = vpop.f32.mrb[0].mxu0
    %3691 = vmatprep.mubr.f32.mxu0 %v3227
    %3692 = vmatmul.mubr.f32.gmra.mrb[0].mxu0 %v3155
    %v3693 = vpop.f32.mrb[0].mxu0
    %v3694 = vadd.f32 0.0, %v3693
    %v3695 = vpop.f32.mrb[0].mxu0
    %3696 = vmatprep.mubr.f32.mxu0 %v3228
    %3697 = vmatmul.mubr.f32.gmra.mrb[0].mxu0 %v3156
    %v3698 = vpop.f32.mrb[0].mxu0
    %v3699 = vadd.f32 0.0, %v3698
    %v3700 = vpop.f32.mrb[0].mxu0
    %3701 = vmatprep.mubr.f32.mxu0 %v3229
    %3702 = vmatmul.mubr.f32.gmra.mrb[0].mxu0 %v3157
    %v3703 = vpop.f32.mrb[0].mxu0
    %v3704 = vadd.f32 0.0, %v3703
    %v3705 = vpop.f32.mrb[0].mxu0
    %3706 = vmatprep.mubr.f32.mxu0 %v3230
    %3707 = vmatmul.mubr.f32.gmra.mrb[0].mxu0 %v3158
    %v3708 = vpop.f32.mrb[0].mxu0
    %v3709 = vadd.f32 0.0, %v3708
    %v3710 = vpop.f32.mrb[0].mxu0
    %3711 = vmatprep.mubr.f32.mxu0 %v3235
    %3712 = vmatmul.mubr.f32.gmra.mrb[0].mxu0 %v3163
    %v3713 = vpop.f32.mrb[0].mxu0
    %v3714 = vadd.f32 0.0, %v3713
    %v3715 = vpop.f32.mrb[0].mxu0
    %3716 = vmatprep.mubr.f32.mxu0 %v3236
    %3717 = vmatmul.mubr.f32.gmra.mrb[0].mxu0 %v3164
    %v3718 = vpop.f32.mrb[0].mxu0
    %v3719 = vadd.f32 0.0, %v3718
    %v3720 = vpop.f32.mrb[0].mxu0
    %3721 = vmatprep.mubr.f32.mxu0 %v3237
    %3722 = vmatmul.mubr.f32.gmra.mrb[0].mxu0 %v3165
    %v3723 = vpop.f32.mrb[0].mxu0
    %v3724 = vadd.f32 0.0, %v3723
    %v3725 = vpop.f32.mrb[0].mxu0
    %3726 = vmatprep.mubr.f32.mxu0 %v3238
    %3727 = vmatmul.mubr.f32.gmra.mrb[0].mxu0 %v3166
    %v3728 = vpop.f32.mrb[0].mxu0
    %v3729 = vadd.f32 0.0, %v3728
    %v3730 = vpop.f32.mrb[0].mxu0
    %3731 = vmatprep.mubr.f32.mxu0 %v3239
    %3732 = vmatmul.mubr.f32.gmra.mrb[0].mxu0 %v3167
    %v3733 = vpop.f32.mrb[0].mxu0
    %v3734 = vadd.f32 0.0, %v3733
    %v3735 = vpop.f32.mrb[0].mxu0
    %3736 = vmatprep.mubr.f32.mxu0 %v3240
    %3737 = vmatmul.mubr.f32.gmra.mrb[0].mxu0 %v3168
    %v3738 = vpop.f32.mrb[0].mxu0
    %v3739 = vadd.f32 0.0, %v3738
    %v3740 = vpop.f32.mrb[0].mxu0
    %3741 = vmatprep.mubr.f32.mxu0 %v3241
    %3742 = vmatmul.mubr.f32.gmra.mrb[0].mxu0 %v3169
    %v3743 = vpop.f32.mrb[0].mxu0
    %v3744 = vadd.f32 0.0, %v3743
    %v3745 = vpop.f32.mrb[0].mxu0
    %3746 = vmatprep.mubr.f32.mxu0 %v3242
    %3747 = vmatmul.mubr.f32.gmra.mrb[0].mxu0 %v3170
    %v3748 = vpop.f32.mrb[0].mxu0
    %v3749 = vadd.f32 0.0, %v3748
    %v3750 = vpop.f32.mrb[0].mxu0
    %3751 = vmatprep.mubr.f32.mxu0 %v3243
    %3752 = vmatmul.mubr.f32.gmra.mrb[0].mxu0 %v3171
    %v3753 = vpop.f32.mrb[0].mxu0
    %v3754 = vadd.f32 0.0, %v3753
    %v3755 = vpop.f32.mrb[0].mxu0
    %3756 = vmatprep.mubr.f32.mxu0 %v3244
    %3757 = vmatmul.mubr.f32.gmra.mrb[0].mxu0 %v3172
    %v3758 = vpop.f32.mrb[0].mxu0
    %v3759 = vadd.f32 0.0, %v3758
    %v3760 = vpop.f32.mrb[0].mxu0
    %3761 = vmatprep.mubr.f32.mxu0 %v3245
    %3762 = vmatmul.mubr.f32.gmra.mrb[0].mxu0 %v3173
    %v3763 = vpop.f32.mrb[0].mxu0
    %v3764 = vadd.f32 0.0, %v3763
    %v3765 = vpop.f32.mrb[0].mxu0
    %3766 = vmatprep.mubr.f32.mxu0 %v3246
    %3767 = vmatmul.mubr.f32.gmra.mrb[0].mxu0 %v3174
    %v3768 = vpop.f32.mrb[0].mxu0
    %v3769 = vadd.f32 0.0, %v3768
    %v3770 = vpop.f32.mrb[0].mxu0
    %3771 = vmatprep.mubr.f32.mxu0 %v3247
    %3772 = vmatmul.mubr.f32.gmra.mrb[0].mxu0 %v3175
    %v3773 = vpop.f32.mrb[0].mxu0
    %v3774 = vadd.f32 0.0, %v3773
    %v3775 = vpop.f32.mrb[0].mxu0
    %3776 = vmatprep.mubr.f32.mxu0 %v3248
    %3777 = vmatmul.mubr.f32.gmra.mrb[0].mxu0 %v3176
    %v3778 = vpop.f32.mrb[0].mxu0
    %v3779 = vadd.f32 0.0, %v3778
    %v3780 = vpop.f32.mrb[0].mxu0
    %3781 = vmatprep.mubr.f32.mxu0 %v3249
    %3782 = vmatmul.mubr.f32.gmra.mrb[0].mxu0 %v3177
    %v3783 = vpop.f32.mrb[0].mxu0
    %v3784 = vadd.f32 0.0, %v3783
    %v3785 = vpop.f32.mrb[0].mxu0
    %3786 = vmatprep.mubr.f32.mxu0 %v3250
    %3787 = vmatmul.mubr.f32.gmra.mrb[0].mxu0 %v3178
    %v3788 = vpop.f32.mrb[0].mxu0
    %v3789 = vadd.f32 0.0, %v3788
    %v3790 = vpop.f32.mrb[0].mxu0
    %3791 = vmatprep.mubr.f32.mxu0 %v3251
    %3792 = vmatmul.mubr.f32.gmra.mrb[0].mxu0 %v3179
    %v3793 = vpop.f32.mrb[0].mxu0
    %v3794 = vadd.f32 0.0, %v3793
    %v3795 = vpop.f32.mrb[0].mxu0
    %3796 = vmatprep.mubr.f32.mxu0 %v3252
    %3797 = vmatmul.mubr.f32.gmra.mrb[0].mxu0 %v3180
    %v3798 = vpop.f32.mrb[0].mxu0
    %v3799 = vadd.f32 0.0, %v3798
    %v3800 = vpop.f32.mrb[0].mxu0
    %3801 = vmatprep.mubr.f32.mxu0 %v3253
    %3802 = vmatmul.mubr.f32.gmra.mrb[0].mxu0 %v3181
    %v3803 = vpop.f32.mrb[0].mxu0
    %v3804 = vadd.f32 0.0, %v3803
    %v3805 = vpop.f32.mrb[0].mxu0
    %3806 = vmatprep.mubr.f32.mxu0 %v3254
    %3807 = vmatmul.mubr.f32.gmra.mrb[0].mxu0 %v3182
    %v3808 = vpop.f32.mrb[0].mxu0
    %v3809 = vadd.f32 0.0, %v3808
    %v3810 = vpop.f32.mrb[0].mxu0
    %3811 = vmatprep.mubr.f32.mxu0 %v3255
    %3812 = vmatmul.mubr.f32.gmra.mrb[0].mxu0 %v3183
    %v3813 = vpop.f32.mrb[0].mxu0
    %v3814 = vadd.f32 0.0, %v3813
    %v3815 = vpop.f32.mrb[0].mxu0
    %3816 = vmatprep.mubr.f32.mxu0 %v3256
    %3817 = vmatmul.mubr.f32.gmra.mrb[0].mxu0 %v3184
    %v3818 = vpop.f32.mrb[0].mxu0
    %v3819 = vadd.f32 0.0, %v3818
    %v3820 = vpop.f32.mrb[0].mxu0
    %3821 = vmatprep.mubr.f32.mxu0 %v3257
    %3822 = vmatmul.mubr.f32.gmra.mrb[0].mxu0 %v3185
    %v3823 = vpop.f32.mrb[0].mxu0
    %v3824 = vadd.f32 0.0, %v3823
    %v3825 = vpop.f32.mrb[0].mxu0
    %3826 = vmatprep.mubr.f32.mxu0 %v3258
    %3827 = vmatmul.mubr.f32.gmra.mrb[0].mxu0 %v3186
    %v3828 = vpop.f32.mrb[0].mxu0
    %v3829 = vadd.f32 0.0, %v3828
    %v3830 = vpop.f32.mrb[0].mxu0
    %3831 = vmatprep.mubr.f32.mxu0 %v3259
    %3832 = vmatmul.mubr.f32.gmra.mrb[0].mxu0 %v3187
    %v3833 = vpop.f32.mrb[0].mxu0
    %v3834 = vadd.f32 0.0, %v3833
    %v3835 = vpop.f32.mrb[0].mxu0
    %3836 = vmatprep.mubr.f32.mxu0 %v3260
    %3837 = vmatmul.mubr.f32.gmra.mrb[0].mxu0 %v3188
    %v3838 = vpop.f32.mrb[0].mxu0
    %v3839 = vadd.f32 0.0, %v3838
    %v3840 = vpop.f32.mrb[0].mxu0
    %3841 = vmatprep.mubr.f32.mxu0 %v3261
    %3842 = vmatmul.mubr.f32.gmra.mrb[0].mxu0 %v3189
    %v3843 = vpop.f32.mrb[0].mxu0
    %v3844 = vadd.f32 0.0, %v3843
    %v3845 = vpop.f32.mrb[0].mxu0
    %3846 = vmatprep.mubr.f32.mxu0 %v3262
    %3847 = vmatmul.mubr.f32.gmra.mrb[0].mxu0 %v3190
    %v3848 = vpop.f32.mrb[0].mxu0
    %v3849 = vadd.f32 0.0, %v3848
    %v3850 = vpop.f32.mrb[0].mxu0
    %3851 = vmatprep.mubr.f32.mxu0 %v3263
    %3852 = vmatmul.mubr.f32.gmra.mrb[0].mxu0 %v3191
    %v3853 = vpop.f32.mrb[0].mxu0
    %v3854 = vadd.f32 0.0, %v3853
    %v3855 = vpop.f32.mrb[0].mxu0
    %3856 = vmatprep.mubr.f32.mxu0 %v3264
    %3857 = vmatmul.mubr.f32.gmra.mrb[0].mxu0 %v3192
    %v3858 = vpop.f32.mrb[0].mxu0
    %v3859 = vadd.f32 0.0, %v3858
    %v3860 = vpop.f32.mrb[0].mxu0
    %3861 = vmatprep.mubr.f32.mxu0 %v3265
    %3862 = vmatmul.mubr.f32.gmra.mrb[0].mxu0 %v3193
    %v3863 = vpop.f32.mrb[0].mxu0
    %v3864 = vadd.f32 0.0, %v3863
    %v3865 = vpop.f32.mrb[0].mxu0
    %3866 = vmatprep.mubr.f32.mxu0 %v3266
    %3867 = vmatmul.mubr.f32.gmra.mrb[0].mxu0 %v3194
    %v3868 = vpop.f32.mrb[0].mxu0
    %v3869 = vadd.f32 0.0, %v3868
    %v3870 = vpop.f32.mrb[0].mxu0
    %3871 = vdwg.mxu0
    %3872 = vmatprep.subr.mxu0 0.0
    %3873 = vmatpush1.msra.mxu0 %v3375
    %3874 = vmatprep.subr.mxu0 0.0
    %3875 = vmatpush1.msra.mxu0 %v3376
    %3876 = vmatprep.subr.mxu0 0.0
    %3877 = vmatpush1.msra.mxu0 %v3377
    %3878 = vmatprep.subr.mxu0 0.0
    %3879 = vmatpush1.msra.mxu0 %v3378
    %3880 = vmatprep.subr.mxu0 0.0
    %3881 = vmatpush1.msra.mxu0 %v3379
    %3882 = vmatprep.subr.mxu0 0.0
    %3883 = vmatpush1.msra.mxu0 %v3380
    %3884 = vmatprep.subr.mxu0 0.0
    %3885 = vmatpush1.msra.mxu0 %v3381
    %3886 = vmatprep.subr.mxu0 0.0
    %3887 = vmatpush1.msra.mxu0 %v3382
    %3888 = vmatprep.subr.mxu0 0.0
    %3889 = vmatpush1.msra.mxu0 %v3383
    %3890 = vmatprep.subr.mxu0 0.0
    %3891 = vmatpush1.msra.mxu0 %v3384
    %3892 = vmatprep.subr.mxu0 0.0
    %3893 = vmatpush1.msra.mxu0 %v3385
    %3894 = vmatprep.subr.mxu0 0.0
    %3895 = vmatpush1.msra.mxu0 %v3386
    %3896 = vmatprep.subr.mxu0 0.0
    %3897 = vmatpush1.msra.mxu0 %v3387
    %3898 = vmatprep.subr.mxu0 0.0
    %3899 = vmatpush1.msra.mxu0 %v3388
    %3900 = vmatprep.subr.mxu0 0.0
    %3901 = vmatpush1.msra.mxu0 %v3389
    %3902 = vmatprep.subr.mxu0 0.0
    %3903 = vmatpush1.msra.mxu0 %v3390
    %3904 = vmatprep.subr.mxu0 0.0
    %3905 = vmatpush1.msra.mxu0 %v3391
    %3906 = vmatprep.subr.mxu0 0.0
    %3907 = vmatpush1.msra.mxu0 %v3392
    %3908 = vmatprep.subr.mxu0 0.0
    %3909 = vmatpush1.msra.mxu0 %v3393
    %3910 = vmatprep.subr.mxu0 0.0
    %3911 = vmatpush1.msra.mxu0 %v3394
    %3912 = vmatprep.subr.mxu0 0.0
    %3913 = vmatpush1.msra.mxu0 %v3395
    %3914 = vmatprep.subr.mxu0 0.0
    %3915 = vmatpush1.msra.mxu0 %v3396
    %3916 = vmatprep.subr.mxu0 0.0
    %3917 = vmatpush1.msra.mxu0 %v3397
    %3918 = vmatprep.subr.mxu0 0.0
    %3919 = vmatpush1.msra.mxu0 %v3398
    %3920 = vmatprep.subr.mxu0 0.0
    %3921 = vmatpush1.msra.mxu0 %v3399
    %3922 = vmatprep.subr.mxu0 0.0
    %3923 = vmatpush1.msra.mxu0 %v3400
    %3924 = vmatprep.subr.mxu0 0.0
    %3925 = vmatpush1.msra.mxu0 %v3401
    %3926 = vmatprep.subr.mxu0 0.0
    %3927 = vmatpush1.msra.mxu0 %v3402
    %3928 = vmatprep.subr.mxu0 0.0
    %3929 = vmatpush1.msra.mxu0 %v3403
    %3930 = vmatprep.subr.mxu0 0.0
    %3931 = vmatpush1.msra.mxu0 %v3404
    %3932 = vmatprep.subr.mxu0 0.0
    %3933 = vmatpush1.msra.mxu0 %v3405
    %3934 = vmatprep.subr.mxu0 0.0
    %3935 = vmatpush1.msra.mxu0 %v3406
    %3936 = vmatprep.mubr.f32.mxu0 %v3129
    %3937 = vmatmul.mubr.f32.gmra.mrb[0].mxu0 %v3271
    %v3938 = vpop.f32.mrb[0].mxu0
    %v3939 = vadd.f32 %v3554, %v3938
    %v3940 = vpop.f32.mrb[0].mxu0
    %3941 = vmatprep.mubr.f32.mxu0 %v3130
    %3942 = vmatmul.mubr.f32.gmra.mrb[0].mxu0 %v3272
    %v3943 = vpop.f32.mrb[0].mxu0
    %v3944 = vadd.f32 %v3559, %v3943
    %v3945 = vpop.f32.mrb[0].mxu0
    %3946 = vmatprep.mubr.f32.mxu0 %v3131
    %3947 = vmatmul.mubr.f32.gmra.mrb[0].mxu0 %v3273
    %v3948 = vpop.f32.mrb[0].mxu0
    %v3949 = vadd.f32 %v3564, %v3948
    %v3950 = vpop.f32.mrb[0].mxu0
    %3951 = vmatprep.mubr.f32.mxu0 %v3132
    %3952 = vmatmul.mubr.f32.gmra.mrb[0].mxu0 %v3274
    %v3953 = vpop.f32.mrb[0].mxu0
    %v3954 = vadd.f32 %v3569, %v3953
    %v3955 = vpop.f32.mrb[0].mxu0
    %3956 = vmatprep.mubr.f32.mxu0 %v3133
    %3957 = vmatmul.mubr.f32.gmra.mrb[0].mxu0 %v3275
    %v3958 = vpop.f32.mrb[0].mxu0
    %v3959 = vadd.f32 %v3574, %v3958
    %v3960 = vpop.f32.mrb[0].mxu0
    %3961 = vmatprep.mubr.f32.mxu0 %v3134
    %3962 = vmatmul.mubr.f32.gmra.mrb[0].mxu0 %v3276
    %v3963 = vpop.f32.mrb[0].mxu0
    %v3964 = vadd.f32 %v3579, %v3963
    %v3965 = vpop.f32.mrb[0].mxu0
    %3966 = vmatprep.mubr.f32.mxu0 %v3135
    %3967 = vmatmul.mubr.f32.gmra.mrb[0].mxu0 %v3277
    %v3968 = vpop.f32.mrb[0].mxu0
    %v3969 = vadd.f32 %v3584, %v3968
    %v3970 = vpop.f32.mrb[0].mxu0
    %3971 = vmatprep.mubr.f32.mxu0 %v3136
    %3972 = vmatmul.mubr.f32.gmra.mrb[0].mxu0 %v3278
    %v3973 = vpop.f32.mrb[0].mxu0
    %v3974 = vadd.f32 %v3589, %v3973
    %v3975 = vpop.f32.mrb[0].mxu0
    %3976 = vmatprep.mubr.f32.mxu0 %v3137
    %3977 = vmatmul.mubr.f32.gmra.mrb[0].mxu0 %v3279
    %v3978 = vpop.f32.mrb[0].mxu0
    %v3979 = vadd.f32 %v3594, %v3978
    %v3980 = vpop.f32.mrb[0].mxu0
    %3981 = vmatprep.mubr.f32.mxu0 %v3138
    %3982 = vmatmul.mubr.f32.gmra.mrb[0].mxu0 %v3280
    %v3983 = vpop.f32.mrb[0].mxu0
    %v3984 = vadd.f32 %v3599, %v3983
    %v3985 = vpop.f32.mrb[0].mxu0
    %3986 = vmatprep.mubr.f32.mxu0 %v3139
    %3987 = vmatmul.mubr.f32.gmra.mrb[0].mxu0 %v3281
    %v3988 = vpop.f32.mrb[0].mxu0
    %v3989 = vadd.f32 %v3604, %v3988
    %v3990 = vpop.f32.mrb[0].mxu0
    %3991 = vmatprep.mubr.f32.mxu0 %v3140
    %3992 = vmatmul.mubr.f32.gmra.mrb[0].mxu0 %v3282
    %v3993 = vpop.f32.mrb[0].mxu0
    %v3994 = vadd.f32 %v3609, %v3993
    %v3995 = vpop.f32.mrb[0].mxu0
    %3996 = vmatprep.mubr.f32.mxu0 %v3141
    %3997 = vmatmul.mubr.f32.gmra.mrb[0].mxu0 %v3283
    %v3998 = vpop.f32.mrb[0].mxu0
    %v3999 = vadd.f32 %v3614, %v3998
    %v4000 = vpop.f32.mrb[0].mxu0
    %4001 = vmatprep.mubr.f32.mxu0 %v3142
    %4002 = vmatmul.mubr.f32.gmra.mrb[0].mxu0 %v3284
    %v4003 = vpop.f32.mrb[0].mxu0
    %v4004 = vadd.f32 %v3619, %v4003
    %v4005 = vpop.f32.mrb[0].mxu0
    %4006 = vmatprep.mubr.f32.mxu0 %v3143
    %4007 = vmatmul.mubr.f32.gmra.mrb[0].mxu0 %v3285
    %v4008 = vpop.f32.mrb[0].mxu0
    %v4009 = vadd.f32 %v3624, %v4008
    %v4010 = vpop.f32.mrb[0].mxu0
    %4011 = vmatprep.mubr.f32.mxu0 %v3144
    %4012 = vmatmul.mubr.f32.gmra.mrb[0].mxu0 %v3286
    %v4013 = vpop.f32.mrb[0].mxu0
    %v4014 = vadd.f32 %v3629, %v4013
    %v4015 = vpop.f32.mrb[0].mxu0
    %4016 = vmatprep.mubr.f32.mxu0 %v3145
    %4017 = vmatmul.mubr.f32.gmra.mrb[0].mxu0 %v3287
    %v4018 = vpop.f32.mrb[0].mxu0
    %v4019 = vadd.f32 %v3634, %v4018
    %v4020 = vpop.f32.mrb[0].mxu0
    %4021 = vmatprep.mubr.f32.mxu0 %v3146
    %4022 = vmatmul.mubr.f32.gmra.mrb[0].mxu0 %v3288
    %v4023 = vpop.f32.mrb[0].mxu0
    %v4024 = vadd.f32 %v3639, %v4023
    %v4025 = vpop.f32.mrb[0].mxu0
    %4026 = vmatprep.mubr.f32.mxu0 %v3147
    %4027 = vmatmul.mubr.f32.gmra.mrb[0].mxu0 %v3289
    %v4028 = vpop.f32.mrb[0].mxu0
    %v4029 = vadd.f32 %v3644, %v4028
    %v4030 = vpop.f32.mrb[0].mxu0
    %4031 = vmatprep.mubr.f32.mxu0 %v3148
    %4032 = vmatmul.mubr.f32.gmra.mrb[0].mxu0 %v3290
    %v4033 = vpop.f32.mrb[0].mxu0
    %v4034 = vadd.f32 %v3649, %v4033
    %v4035 = vpop.f32.mrb[0].mxu0
    %4036 = vmatprep.mubr.f32.mxu0 %v3149
    %4037 = vmatmul.mubr.f32.gmra.mrb[0].mxu0 %v3291
    %v4038 = vpop.f32.mrb[0].mxu0
    %v4039 = vadd.f32 %v3654, %v4038
    %v4040 = vpop.f32.mrb[0].mxu0
    %4041 = vmatprep.mubr.f32.mxu0 %v3150
    %4042 = vmatmul.mubr.f32.gmra.mrb[0].mxu0 %v3292
    %v4043 = vpop.f32.mrb[0].mxu0
    %v4044 = vadd.f32 %v3659, %v4043
    %v4045 = vpop.f32.mrb[0].mxu0
    %4046 = vmatprep.mubr.f32.mxu0 %v3151
    %4047 = vmatmul.mubr.f32.gmra.mrb[0].mxu0 %v3293
    %v4048 = vpop.f32.mrb[0].mxu0
    %v4049 = vadd.f32 %v3664, %v4048
    %v4050 = vpop.f32.mrb[0].mxu0
    %4051 = vmatprep.mubr.f32.mxu0 %v3152
    %4052 = vmatmul.mubr.f32.gmra.mrb[0].mxu0 %v3294
    %v4053 = vpop.f32.mrb[0].mxu0
    %v4054 = vadd.f32 %v3669, %v4053
    %v4055 = vpop.f32.mrb[0].mxu0
    %4056 = vmatprep.mubr.f32.mxu0 %v3153
    %4057 = vmatmul.mubr.f32.gmra.mrb[0].mxu0 %v3295
    %v4058 = vpop.f32.mrb[0].mxu0
    %v4059 = vadd.f32 %v3674, %v4058
    %v4060 = vpop.f32.mrb[0].mxu0
    %4061 = vmatprep.mubr.f32.mxu0 %v3154
    %4062 = vmatmul.mubr.f32.gmra.mrb[0].mxu0 %v3296
    %v4063 = vpop.f32.mrb[0].mxu0
    %v4064 = vadd.f32 %v3679, %v4063
    %v4065 = vpop.f32.mrb[0].mxu0
    %4066 = vmatprep.mubr.f32.mxu0 %v3155
    %4067 = vmatmul.mubr.f32.gmra.mrb[0].mxu0 %v3297
    %v4068 = vpop.f32.mrb[0].mxu0
    %v4069 = vadd.f32 %v3684, %v4068
    %v4070 = vpop.f32.mrb[0].mxu0
    %4071 = vmatprep.mubr.f32.mxu0 %v3156
    %4072 = vmatmul.mubr.f32.gmra.mrb[0].mxu0 %v3298
    %v4073 = vpop.f32.mrb[0].mxu0
    %v4074 = vadd.f32 %v3689, %v4073
    %v4075 = vpop.f32.mrb[0].mxu0
    %4076 = vmatprep.mubr.f32.mxu0 %v3157
    %4077 = vmatmul.mubr.f32.gmra.mrb[0].mxu0 %v3299
    %v4078 = vpop.f32.mrb[0].mxu0
    %v4079 = vadd.f32 %v3694, %v4078
    %v4080 = vpop.f32.mrb[0].mxu0
    %4081 = vmatprep.mubr.f32.mxu0 %v3158
    %4082 = vmatmul.mubr.f32.gmra.mrb[0].mxu0 %v3300
    %v4083 = vpop.f32.mrb[0].mxu0
    %v4084 = vadd.f32 %v3699, %v4083
    %v4085 = vpop.f32.mrb[0].mxu0
    %4086 = vmatprep.mubr.f32.mxu0 %v3159
    %4087 = vmatmul.mubr.f32.gmra.mrb[0].mxu0 %v3301
    %v4088 = vpop.f32.mrb[0].mxu0
    %v4089 = vadd.f32 %v3704, %v4088
    %v4090 = vpop.f32.mrb[0].mxu0
    %4091 = vmatprep.mubr.f32.mxu0 %v3160
    %4092 = vmatmul.mubr.f32.gmra.mrb[0].mxu0 %v3302
    %v4093 = vpop.f32.mrb[0].mxu0
    %v4094 = vadd.f32 %v3709, %v4093
    %v4095 = vpop.f32.mrb[0].mxu0
    %4096 = vmatprep.mubr.f32.mxu0 %v3165
    %4097 = vmatmul.mubr.f32.gmra.mrb[0].mxu0 %v3307
    %v4098 = vpop.f32.mrb[0].mxu0
    %v4099 = vadd.f32 %v3714, %v4098
    %v4100 = vpop.f32.mrb[0].mxu0
    %4101 = vmatprep.mubr.f32.mxu0 %v3166
    %4102 = vmatmul.mubr.f32.gmra.mrb[0].mxu0 %v3308
    %v4103 = vpop.f32.mrb[0].mxu0
    %v4104 = vadd.f32 %v3719, %v4103
    %v4105 = vpop.f32.mrb[0].mxu0
    %4106 = vmatprep.mubr.f32.mxu0 %v3167
    %4107 = vmatmul.mubr.f32.gmra.mrb[0].mxu0 %v3309
    %v4108 = vpop.f32.mrb[0].mxu0
    %v4109 = vadd.f32 %v3724, %v4108
    %v4110 = vpop.f32.mrb[0].mxu0
    %4111 = vmatprep.mubr.f32.mxu0 %v3168
    %4112 = vmatmul.mubr.f32.gmra.mrb[0].mxu0 %v3310
    %v4113 = vpop.f32.mrb[0].mxu0
    %v4114 = vadd.f32 %v3729, %v4113
    %v4115 = vpop.f32.mrb[0].mxu0
    %4116 = vmatprep.mubr.f32.mxu0 %v3169
    %4117 = vmatmul.mubr.f32.gmra.mrb[0].mxu0 %v3311
    %v4118 = vpop.f32.mrb[0].mxu0
    %v4119 = vadd.f32 %v3734, %v4118
    %v4120 = vpop.f32.mrb[0].mxu0
    %4121 = vmatprep.mubr.f32.mxu0 %v3170
    %4122 = vmatmul.mubr.f32.gmra.mrb[0].mxu0 %v3312
    %v4123 = vpop.f32.mrb[0].mxu0
    %v4124 = vadd.f32 %v3739, %v4123
    %v4125 = vpop.f32.mrb[0].mxu0
    %4126 = vmatprep.mubr.f32.mxu0 %v3171
    %4127 = vmatmul.mubr.f32.gmra.mrb[0].mxu0 %v3313
    %v4128 = vpop.f32.mrb[0].mxu0
    %v4129 = vadd.f32 %v3744, %v4128
    %v4130 = vpop.f32.mrb[0].mxu0
    %4131 = vmatprep.mubr.f32.mxu0 %v3172
    %4132 = vmatmul.mubr.f32.gmra.mrb[0].mxu0 %v3314
    %v4133 = vpop.f32.mrb[0].mxu0
    %v4134 = vadd.f32 %v3749, %v4133
    %v4135 = vpop.f32.mrb[0].mxu0
    %4136 = vmatprep.mubr.f32.mxu0 %v3173
    %4137 = vmatmul.mubr.f32.gmra.mrb[0].mxu0 %v3315
    %v4138 = vpop.f32.mrb[0].mxu0
    %v4139 = vadd.f32 %v3754, %v4138
    %v4140 = vpop.f32.mrb[0].mxu0
    %4141 = vmatprep.mubr.f32.mxu0 %v3174
    %4142 = vmatmul.mubr.f32.gmra.mrb[0].mxu0 %v3316
    %v4143 = vpop.f32.mrb[0].mxu0
    %v4144 = vadd.f32 %v3759, %v4143
    %v4145 = vpop.f32.mrb[0].mxu0
    %4146 = vmatprep.mubr.f32.mxu0 %v3175
    %4147 = vmatmul.mubr.f32.gmra.mrb[0].mxu0 %v3317
    %v4148 = vpop.f32.mrb[0].mxu0
    %v4149 = vadd.f32 %v3764, %v4148
    %v4150 = vpop.f32.mrb[0].mxu0
    %4151 = vmatprep.mubr.f32.mxu0 %v3176
    %4152 = vmatmul.mubr.f32.gmra.mrb[0].mxu0 %v3318
    %v4153 = vpop.f32.mrb[0].mxu0
    %v4154 = vadd.f32 %v3769, %v4153
    %v4155 = vpop.f32.mrb[0].mxu0
    %4156 = vmatprep.mubr.f32.mxu0 %v3177
    %4157 = vmatmul.mubr.f32.gmra.mrb[0].mxu0 %v3319
    %v4158 = vpop.f32.mrb[0].mxu0
    %v4159 = vadd.f32 %v3774, %v4158
    %v4160 = vpop.f32.mrb[0].mxu0
    %4161 = vmatprep.mubr.f32.mxu0 %v3178
    %4162 = vmatmul.mubr.f32.gmra.mrb[0].mxu0 %v3320
    %v4163 = vpop.f32.mrb[0].mxu0
    %v4164 = vadd.f32 %v3779, %v4163
    %v4165 = vpop.f32.mrb[0].mxu0
    %4166 = vmatprep.mubr.f32.mxu0 %v3179
    %4167 = vmatmul.mubr.f32.gmra.mrb[0].mxu0 %v3321
    %v4168 = vpop.f32.mrb[0].mxu0
    %v4169 = vadd.f32 %v3784, %v4168
    %v4170 = vpop.f32.mrb[0].mxu0
    %4171 = vmatprep.mubr.f32.mxu0 %v3180
    %4172 = vmatmul.mubr.f32.gmra.mrb[0].mxu0 %v3322
    %v4173 = vpop.f32.mrb[0].mxu0
    %v4174 = vadd.f32 %v3789, %v4173
    %v4175 = vpop.f32.mrb[0].mxu0
    %4176 = vmatprep.mubr.f32.mxu0 %v3181
    %4177 = vmatmul.mubr.f32.gmra.mrb[0].mxu0 %v3323
    %v4178 = vpop.f32.mrb[0].mxu0
    %v4179 = vadd.f32 %v3794, %v4178
    %v4180 = vpop.f32.mrb[0].mxu0
    %4181 = vmatprep.mubr.f32.mxu0 %v3182
    %4182 = vmatmul.mubr.f32.gmra.mrb[0].mxu0 %v3324
    %v4183 = vpop.f32.mrb[0].mxu0
    %v4184 = vadd.f32 %v3799, %v4183
    %v4185 = vpop.f32.mrb[0].mxu0
    %4186 = vmatprep.mubr.f32.mxu0 %v3183
    %4187 = vmatmul.mubr.f32.gmra.mrb[0].mxu0 %v3325
    %v4188 = vpop.f32.mrb[0].mxu0
    %v4189 = vadd.f32 %v3804, %v4188
    %v4190 = vpop.f32.mrb[0].mxu0
    %4191 = vmatprep.mubr.f32.mxu0 %v3184
    %4192 = vmatmul.mubr.f32.gmra.mrb[0].mxu0 %v3326
    %v4193 = vpop.f32.mrb[0].mxu0
    %v4194 = vadd.f32 %v3809, %v4193
    %v4195 = vpop.f32.mrb[0].mxu0
    %4196 = vmatprep.mubr.f32.mxu0 %v3185
    %4197 = vmatmul.mubr.f32.gmra.mrb[0].mxu0 %v3327
    %v4198 = vpop.f32.mrb[0].mxu0
    %v4199 = vadd.f32 %v3814, %v4198
    %v4200 = vpop.f32.mrb[0].mxu0
    %4201 = vmatprep.mubr.f32.mxu0 %v3186
    %4202 = vmatmul.mubr.f32.gmra.mrb[0].mxu0 %v3328
    %v4203 = vpop.f32.mrb[0].mxu0
    %v4204 = vadd.f32 %v3819, %v4203
    %v4205 = vpop.f32.mrb[0].mxu0
    %4206 = vmatprep.mubr.f32.mxu0 %v3187
    %4207 = vmatmul.mubr.f32.gmra.mrb[0].mxu0 %v3329
    %v4208 = vpop.f32.mrb[0].mxu0
    %v4209 = vadd.f32 %v3824, %v4208
    %v4210 = vpop.f32.mrb[0].mxu0
    %4211 = vmatprep.mubr.f32.mxu0 %v3188
    %4212 = vmatmul.mubr.f32.gmra.mrb[0].mxu0 %v3330
    %v4213 = vpop.f32.mrb[0].mxu0
    %v4214 = vadd.f32 %v3829, %v4213
    %v4215 = vpop.f32.mrb[0].mxu0
    %4216 = vmatprep.mubr.f32.mxu0 %v3189
    %4217 = vmatmul.mubr.f32.gmra.mrb[0].mxu0 %v3331
    %v4218 = vpop.f32.mrb[0].mxu0
    %v4219 = vadd.f32 %v3834, %v4218
    %v4220 = vpop.f32.mrb[0].mxu0
    %4221 = vmatprep.mubr.f32.mxu0 %v3190
    %4222 = vmatmul.mubr.f32.gmra.mrb[0].mxu0 %v3332
    %v4223 = vpop.f32.mrb[0].mxu0
    %v4224 = vadd.f32 %v3839, %v4223
    %v4225 = vpop.f32.mrb[0].mxu0
    %4226 = vmatprep.mubr.f32.mxu0 %v3191
    %4227 = vmatmul.mubr.f32.gmra.mrb[0].mxu0 %v3333
    %v4228 = vpop.f32.mrb[0].mxu0
    %v4229 = vadd.f32 %v3844, %v4228
    %v4230 = vpop.f32.mrb[0].mxu0
    %4231 = vmatprep.mubr.f32.mxu0 %v3192
    %4232 = vmatmul.mubr.f32.gmra.mrb[0].mxu0 %v3334
    %v4233 = vpop.f32.mrb[0].mxu0
    %v4234 = vadd.f32 %v3849, %v4233
    %v4235 = vpop.f32.mrb[0].mxu0
    %4236 = vmatprep.mubr.f32.mxu0 %v3193
    %4237 = vmatmul.mubr.f32.gmra.mrb[0].mxu0 %v3335
    %v4238 = vpop.f32.mrb[0].mxu0
    %v4239 = vadd.f32 %v3854, %v4238
    %v4240 = vpop.f32.mrb[0].mxu0
    %4241 = vmatprep.mubr.f32.mxu0 %v3194
    %4242 = vmatmul.mubr.f32.gmra.mrb[0].mxu0 %v3336
    %v4243 = vpop.f32.mrb[0].mxu0
    %v4244 = vadd.f32 %v3859, %v4243
    %v4245 = vpop.f32.mrb[0].mxu0
    %4246 = vmatprep.mubr.f32.mxu0 %v3195
    %4247 = vmatmul.mubr.f32.gmra.mrb[0].mxu0 %v3337
    %v4248 = vpop.f32.mrb[0].mxu0
    %v4249 = vadd.f32 %v3864, %v4248
    %v4250 = vpop.f32.mrb[0].mxu0
    %4251 = vmatprep.mubr.f32.mxu0 %v3196
    %4252 = vmatmul.mubr.f32.gmra.mrb[0].mxu0 %v3338
    %v4253 = vpop.f32.mrb[0].mxu0
    %v4254 = vadd.f32 %v3869, %v4253
    %v4255 = vpop.f32.mrb[0].mxu0
    %4256 = vdwg.mxu0
    %4257 = vmatprep.subr.mxu0 0.0
    %4258 = vmatpush1.msra.mxu0 %v3407
    %4259 = vmatprep.subr.mxu0 0.0
    %4260 = vmatpush1.msra.mxu0 %v3408
    %4261 = vmatprep.subr.mxu0 0.0
    %4262 = vmatpush1.msra.mxu0 %v3409
    %4263 = vmatprep.subr.mxu0 0.0
    %4264 = vmatpush1.msra.mxu0 %v3410
    %4265 = vmatprep.subr.mxu0 0.0
    %4266 = vmatpush1.msra.mxu0 %v3411
    %4267 = vmatprep.subr.mxu0 0.0
    %4268 = vmatpush1.msra.mxu0 %v3412
    %4269 = vmatprep.subr.mxu0 0.0
    %4270 = vmatpush1.msra.mxu0 %v3413
    %4271 = vmatprep.subr.mxu0 0.0
    %4272 = vmatpush1.msra.mxu0 %v3414
    %4273 = vmatprep.subr.mxu0 0.0
    %4274 = vmatpush1.msra.mxu0 %v3415
    %4275 = vmatprep.subr.mxu0 0.0
    %4276 = vmatpush1.msra.mxu0 %v3416
    %4277 = vmatprep.subr.mxu0 0.0
    %4278 = vmatpush1.msra.mxu0 %v3417
    %4279 = vmatprep.subr.mxu0 0.0
    %4280 = vmatpush1.msra.mxu0 %v3418
    %4281 = vmatprep.subr.mxu0 0.0
    %4282 = vmatpush1.msra.mxu0 %v3419
    %4283 = vmatprep.subr.mxu0 0.0
    %4284 = vmatpush1.msra.mxu0 %v3420
    %4285 = vmatprep.subr.mxu0 0.0
    %4286 = vmatpush1.msra.mxu0 %v3421
    %4287 = vmatprep.subr.mxu0 0.0
    %4288 = vmatpush1.msra.mxu0 %v3422
    %4289 = vmatprep.subr.mxu0 0.0
    %4290 = vmatpush1.msra.mxu0 %v3423
    %4291 = vmatprep.subr.mxu0 0.0
    %4292 = vmatpush1.msra.mxu0 %v3424
    %4293 = vmatprep.subr.mxu0 0.0
    %4294 = vmatpush1.msra.mxu0 %v3425
    %4295 = vmatprep.subr.mxu0 0.0
    %4296 = vmatpush1.msra.mxu0 %v3426
    %4297 = vmatprep.subr.mxu0 0.0
    %4298 = vmatpush1.msra.mxu0 %v3427
    %4299 = vmatprep.subr.mxu0 0.0
    %4300 = vmatpush1.msra.mxu0 %v3428
    %4301 = vmatprep.subr.mxu0 0.0
    %4302 = vmatpush1.msra.mxu0 %v3429
    %4303 = vmatprep.subr.mxu0 0.0
    %4304 = vmatpush1.msra.mxu0 %v3430
    %4305 = vmatprep.subr.mxu0 0.0
    %4306 = vmatpush1.msra.mxu0 %v3431
    %4307 = vmatprep.subr.mxu0 0.0
    %4308 = vmatpush1.msra.mxu0 %v3432
    %4309 = vmatprep.subr.mxu0 0.0
    %4310 = vmatpush1.msra.mxu0 %v3433
    %4311 = vmatprep.subr.mxu0 0.0
    %4312 = vmatpush1.msra.mxu0 %v3434
    %4313 = vmatprep.subr.mxu0 0.0
    %4314 = vmatpush1.msra.mxu0 %v3435
    %4315 = vmatprep.subr.mxu0 0.0
    %4316 = vmatpush1.msra.mxu0 %v3436
    %4317 = vmatprep.subr.mxu0 0.0
    %4318 = vmatpush1.msra.mxu0 %v3437
    %4319 = vmatprep.subr.mxu0 0.0
    %4320 = vmatpush1.msra.mxu0 %v3438
    %4321 = vmatprep.mubr.f32.mxu0 %v3273
    %4322 = vmatmul.mubr.f32.gmra.mrb[0].mxu0 %v3201
    %v4323 = vpop.f32.mrb[0].mxu0
    %v4324 = vadd.f32 %v3939, %v4323
    %v4325 = vpop.f32.mrb[0].mxu0
    %4326 = vmatprep.mubr.f32.mxu0 %v3274
    %4327 = vmatmul.mubr.f32.gmra.mrb[0].mxu0 %v3202
    %v4328 = vpop.f32.mrb[0].mxu0
    %v4329 = vadd.f32 %v3944, %v4328
    %v4330 = vpop.f32.mrb[0].mxu0
    %4331 = vmatprep.mubr.f32.mxu0 %v3275
    %4332 = vmatmul.mubr.f32.gmra.mrb[0].mxu0 %v3203
    %v4333 = vpop.f32.mrb[0].mxu0
    %v4334 = vadd.f32 %v3949, %v4333
    %v4335 = vpop.f32.mrb[0].mxu0
    %4336 = vmatprep.mubr.f32.mxu0 %v3276
    %4337 = vmatmul.mubr.f32.gmra.mrb[0].mxu0 %v3204
    %v4338 = vpop.f32.mrb[0].mxu0
    %v4339 = vadd.f32 %v3954, %v4338
    %v4340 = vpop.f32.mrb[0].mxu0
    %4341 = vmatprep.mubr.f32.mxu0 %v3277
    %4342 = vmatmul.mubr.f32.gmra.mrb[0].mxu0 %v3205
    %v4343 = vpop.f32.mrb[0].mxu0
    %v4344 = vadd.f32 %v3959, %v4343
    %v4345 = vpop.f32.mrb[0].mxu0
    %4346 = vmatprep.mubr.f32.mxu0 %v3278
    %4347 = vmatmul.mubr.f32.gmra.mrb[0].mxu0 %v3206
    %v4348 = vpop.f32.mrb[0].mxu0
    %v4349 = vadd.f32 %v3964, %v4348
    %v4350 = vpop.f32.mrb[0].mxu0
    %4351 = vmatprep.mubr.f32.mxu0 %v3279
    %4352 = vmatmul.mubr.f32.gmra.mrb[0].mxu0 %v3207
    %v4353 = vpop.f32.mrb[0].mxu0
    %v4354 = vadd.f32 %v3969, %v4353
    %v4355 = vpop.f32.mrb[0].mxu0
    %4356 = vmatprep.mubr.f32.mxu0 %v3280
    %4357 = vmatmul.mubr.f32.gmra.mrb[0].mxu0 %v3208
    %v4358 = vpop.f32.mrb[0].mxu0
    %v4359 = vadd.f32 %v3974, %v4358
    %v4360 = vpop.f32.mrb[0].mxu0
    %4361 = vmatprep.mubr.f32.mxu0 %v3281
    %4362 = vmatmul.mubr.f32.gmra.mrb[0].mxu0 %v3209
    %v4363 = vpop.f32.mrb[0].mxu0
    %v4364 = vadd.f32 %v3979, %v4363
    %v4365 = vpop.f32.mrb[0].mxu0
    %4366 = vmatprep.mubr.f32.mxu0 %v3282
    %4367 = vmatmul.mubr.f32.gmra.mrb[0].mxu0 %v3210
    %v4368 = vpop.f32.mrb[0].mxu0
    %v4369 = vadd.f32 %v3984, %v4368
    %v4370 = vpop.f32.mrb[0].mxu0
    %4371 = vmatprep.mubr.f32.mxu0 %v3283
    %4372 = vmatmul.mubr.f32.gmra.mrb[0].mxu0 %v3211
    %v4373 = vpop.f32.mrb[0].mxu0
    %v4374 = vadd.f32 %v3989, %v4373
    %v4375 = vpop.f32.mrb[0].mxu0
    %4376 = vmatprep.mubr.f32.mxu0 %v3284
    %4377 = vmatmul.mubr.f32.gmra.mrb[0].mxu0 %v3212
    %v4378 = vpop.f32.mrb[0].mxu0
    %v4379 = vadd.f32 %v3994, %v4378
    %v4380 = vpop.f32.mrb[0].mxu0
    %4381 = vmatprep.mubr.f32.mxu0 %v3285
    %4382 = vmatmul.mubr.f32.gmra.mrb[0].mxu0 %v3213
    %v4383 = vpop.f32.mrb[0].mxu0
    %v4384 = vadd.f32 %v3999, %v4383
    %v4385 = vpop.f32.mrb[0].mxu0
    %4386 = vmatprep.mubr.f32.mxu0 %v3286
    %4387 = vmatmul.mubr.f32.gmra.mrb[0].mxu0 %v3214
    %v4388 = vpop.f32.mrb[0].mxu0
    %v4389 = vadd.f32 %v4004, %v4388
    %v4390 = vpop.f32.mrb[0].mxu0
    %4391 = vmatprep.mubr.f32.mxu0 %v3287
    %4392 = vmatmul.mubr.f32.gmra.mrb[0].mxu0 %v3215
    %v4393 = vpop.f32.mrb[0].mxu0
    %v4394 = vadd.f32 %v4009, %v4393
    %v4395 = vpop.f32.mrb[0].mxu0
    %4396 = vmatprep.mubr.f32.mxu0 %v3288
    %4397 = vmatmul.mubr.f32.gmra.mrb[0].mxu0 %v3216
    %v4398 = vpop.f32.mrb[0].mxu0
    %v4399 = vadd.f32 %v4014, %v4398
    %v4400 = vpop.f32.mrb[0].mxu0
    %4401 = vmatprep.mubr.f32.mxu0 %v3289
    %4402 = vmatmul.mubr.f32.gmra.mrb[0].mxu0 %v3217
    %v4403 = vpop.f32.mrb[0].mxu0
    %v4404 = vadd.f32 %v4019, %v4403
    %v4405 = vpop.f32.mrb[0].mxu0
    %4406 = vmatprep.mubr.f32.mxu0 %v3290
    %4407 = vmatmul.mubr.f32.gmra.mrb[0].mxu0 %v3218
    %v4408 = vpop.f32.mrb[0].mxu0
    %v4409 = vadd.f32 %v4024, %v4408
    %v4410 = vpop.f32.mrb[0].mxu0
    %4411 = vmatprep.mubr.f32.mxu0 %v3291
    %4412 = vmatmul.mubr.f32.gmra.mrb[0].mxu0 %v3219
    %v4413 = vpop.f32.mrb[0].mxu0
    %v4414 = vadd.f32 %v4029, %v4413
    %v4415 = vpop.f32.mrb[0].mxu0
    %4416 = vmatprep.mubr.f32.mxu0 %v3292
    %4417 = vmatmul.mubr.f32.gmra.mrb[0].mxu0 %v3220
    %v4418 = vpop.f32.mrb[0].mxu0
    %v4419 = vadd.f32 %v4034, %v4418
    %v4420 = vpop.f32.mrb[0].mxu0
    %4421 = vmatprep.mubr.f32.mxu0 %v3293
    %4422 = vmatmul.mubr.f32.gmra.mrb[0].mxu0 %v3221
    %v4423 = vpop.f32.mrb[0].mxu0
    %v4424 = vadd.f32 %v4039, %v4423
    %v4425 = vpop.f32.mrb[0].mxu0
    %4426 = vmatprep.mubr.f32.mxu0 %v3294
    %4427 = vmatmul.mubr.f32.gmra.mrb[0].mxu0 %v3222
    %v4428 = vpop.f32.mrb[0].mxu0
    %v4429 = vadd.f32 %v4044, %v4428
    %v4430 = vpop.f32.mrb[0].mxu0
    %4431 = vmatprep.mubr.f32.mxu0 %v3295
    %4432 = vmatmul.mubr.f32.gmra.mrb[0].mxu0 %v3223
    %v4433 = vpop.f32.mrb[0].mxu0
    %v4434 = vadd.f32 %v4049, %v4433
    %v4435 = vpop.f32.mrb[0].mxu0
    %4436 = vmatprep.mubr.f32.mxu0 %v3296
    %4437 = vmatmul.mubr.f32.gmra.mrb[0].mxu0 %v3224
    %v4438 = vpop.f32.mrb[0].mxu0
    %v4439 = vadd.f32 %v4054, %v4438
    %v4440 = vpop.f32.mrb[0].mxu0
    %4441 = vmatprep.mubr.f32.mxu0 %v3297
    %4442 = vmatmul.mubr.f32.gmra.mrb[0].mxu0 %v3225
    %v4443 = vpop.f32.mrb[0].mxu0
    %v4444 = vadd.f32 %v4059, %v4443
    %v4445 = vpop.f32.mrb[0].mxu0
    %4446 = vmatprep.mubr.f32.mxu0 %v3298
    %4447 = vmatmul.mubr.f32.gmra.mrb[0].mxu0 %v3226
    %v4448 = vpop.f32.mrb[0].mxu0
    %v4449 = vadd.f32 %v4064, %v4448
    %v4450 = vpop.f32.mrb[0].mxu0
    %4451 = vmatprep.mubr.f32.mxu0 %v3299
    %4452 = vmatmul.mubr.f32.gmra.mrb[0].mxu0 %v3227
    %v4453 = vpop.f32.mrb[0].mxu0
    %v4454 = vadd.f32 %v4069, %v4453
    %v4455 = vpop.f32.mrb[0].mxu0
    %4456 = vmatprep.mubr.f32.mxu0 %v3300
    %4457 = vmatmul.mubr.f32.gmra.mrb[0].mxu0 %v3228
    %v4458 = vpop.f32.mrb[0].mxu0
    %v4459 = vadd.f32 %v4074, %v4458
    %v4460 = vpop.f32.mrb[0].mxu0
    %4461 = vmatprep.mubr.f32.mxu0 %v3301
    %4462 = vmatmul.mubr.f32.gmra.mrb[0].mxu0 %v3229
    %v4463 = vpop.f32.mrb[0].mxu0
    %v4464 = vadd.f32 %v4079, %v4463
    %v4465 = vpop.f32.mrb[0].mxu0
    %4466 = vmatprep.mubr.f32.mxu0 %v3302
    %4467 = vmatmul.mubr.f32.gmra.mrb[0].mxu0 %v3230
    %v4468 = vpop.f32.mrb[0].mxu0
    %v4469 = vadd.f32 %v4084, %v4468
    %v4470 = vpop.f32.mrb[0].mxu0
    %4471 = vmatprep.mubr.f32.mxu0 %v3303
    %4472 = vmatmul.mubr.f32.gmra.mrb[0].mxu0 %v3231
    %v4473 = vpop.f32.mrb[0].mxu0
    %v4474 = vadd.f32 %v4089, %v4473
    %v4475 = vpop.f32.mrb[0].mxu0
    %4476 = vmatprep.mubr.f32.mxu0 %v3304
    %4477 = vmatmul.mubr.f32.gmra.mrb[0].mxu0 %v3232
    %v4478 = vpop.f32.mrb[0].mxu0
    %v4479 = vadd.f32 %v4094, %v4478
    %v4480 = vpop.f32.mrb[0].mxu0
    %4481 = vmatprep.mubr.f32.mxu0 %v3309
    %4482 = vmatmul.mubr.f32.gmra.mrb[0].mxu0 %v3237
    %v4483 = vpop.f32.mrb[0].mxu0
    %v4484 = vadd.f32 %v4099, %v4483
    %v4485 = vpop.f32.mrb[0].mxu0
    %4486 = vmatprep.mubr.f32.mxu0 %v3310
    %4487 = vmatmul.mubr.f32.gmra.mrb[0].mxu0 %v3238
    %v4488 = vpop.f32.mrb[0].mxu0
    %v4489 = vadd.f32 %v4104, %v4488
    %v4490 = vpop.f32.mrb[0].mxu0
    %4491 = vmatprep.mubr.f32.mxu0 %v3311
    %4492 = vmatmul.mubr.f32.gmra.mrb[0].mxu0 %v3239
    %v4493 = vpop.f32.mrb[0].mxu0
    %v4494 = vadd.f32 %v4109, %v4493
    %v4495 = vpop.f32.mrb[0].mxu0
    %4496 = vmatprep.mubr.f32.mxu0 %v3312
    %4497 = vmatmul.mubr.f32.gmra.mrb[0].mxu0 %v3240
    %v4498 = vpop.f32.mrb[0].mxu0
    %v4499 = vadd.f32 %v4114, %v4498
    %v4500 = vpop.f32.mrb[0].mxu0
    %4501 = vmatprep.mubr.f32.mxu0 %v3313
    %4502 = vmatmul.mubr.f32.gmra.mrb[0].mxu0 %v3241
    %v4503 = vpop.f32.mrb[0].mxu0
    %v4504 = vadd.f32 %v4119, %v4503
    %v4505 = vpop.f32.mrb[0].mxu0
    %4506 = vmatprep.mubr.f32.mxu0 %v3314
    %4507 = vmatmul.mubr.f32.gmra.mrb[0].mxu0 %v3242
    %v4508 = vpop.f32.mrb[0].mxu0
    %v4509 = vadd.f32 %v4124, %v4508
    %v4510 = vpop.f32.mrb[0].mxu0
    %4511 = vmatprep.mubr.f32.mxu0 %v3315
    %4512 = vmatmul.mubr.f32.gmra.mrb[0].mxu0 %v3243
    %v4513 = vpop.f32.mrb[0].mxu0
    %v4514 = vadd.f32 %v4129, %v4513
    %v4515 = vpop.f32.mrb[0].mxu0
    %4516 = vmatprep.mubr.f32.mxu0 %v3316
    %4517 = vmatmul.mubr.f32.gmra.mrb[0].mxu0 %v3244
    %v4518 = vpop.f32.mrb[0].mxu0
    %v4519 = vadd.f32 %v4134, %v4518
    %v4520 = vpop.f32.mrb[0].mxu0
    %4521 = vmatprep.mubr.f32.mxu0 %v3317
    %4522 = vmatmul.mubr.f32.gmra.mrb[0].mxu0 %v3245
    %v4523 = vpop.f32.mrb[0].mxu0
    %v4524 = vadd.f32 %v4139, %v4523
    %v4525 = vpop.f32.mrb[0].mxu0
    %4526 = vmatprep.mubr.f32.mxu0 %v3318
    %4527 = vmatmul.mubr.f32.gmra.mrb[0].mxu0 %v3246
    %v4528 = vpop.f32.mrb[0].mxu0
    %v4529 = vadd.f32 %v4144, %v4528
    %v4530 = vpop.f32.mrb[0].mxu0
    %4531 = vmatprep.mubr.f32.mxu0 %v3319
    %4532 = vmatmul.mubr.f32.gmra.mrb[0].mxu0 %v3247
    %v4533 = vpop.f32.mrb[0].mxu0
    %v4534 = vadd.f32 %v4149, %v4533
    %v4535 = vpop.f32.mrb[0].mxu0
    %4536 = vmatprep.mubr.f32.mxu0 %v3320
    %4537 = vmatmul.mubr.f32.gmra.mrb[0].mxu0 %v3248
    %v4538 = vpop.f32.mrb[0].mxu0
    %v4539 = vadd.f32 %v4154, %v4538
    %v4540 = vpop.f32.mrb[0].mxu0
    %4541 = vmatprep.mubr.f32.mxu0 %v3321
    %4542 = vmatmul.mubr.f32.gmra.mrb[0].mxu0 %v3249
    %v4543 = vpop.f32.mrb[0].mxu0
    %v4544 = vadd.f32 %v4159, %v4543
    %v4545 = vpop.f32.mrb[0].mxu0
    %4546 = vmatprep.mubr.f32.mxu0 %v3322
    %4547 = vmatmul.mubr.f32.gmra.mrb[0].mxu0 %v3250
    %v4548 = vpop.f32.mrb[0].mxu0
    %v4549 = vadd.f32 %v4164, %v4548
    %v4550 = vpop.f32.mrb[0].mxu0
    %4551 = vmatprep.mubr.f32.mxu0 %v3323
    %4552 = vmatmul.mubr.f32.gmra.mrb[0].mxu0 %v3251
    %v4553 = vpop.f32.mrb[0].mxu0
    %v4554 = vadd.f32 %v4169, %v4553
    %v4555 = vpop.f32.mrb[0].mxu0
    %4556 = vmatprep.mubr.f32.mxu0 %v3324
    %4557 = vmatmul.mubr.f32.gmra.mrb[0].mxu0 %v3252
    %v4558 = vpop.f32.mrb[0].mxu0
    %v4559 = vadd.f32 %v4174, %v4558
    %v4560 = vpop.f32.mrb[0].mxu0
    %4561 = vmatprep.mubr.f32.mxu0 %v3325
    %4562 = vmatmul.mubr.f32.gmra.mrb[0].mxu0 %v3253
    %v4563 = vpop.f32.mrb[0].mxu0
    %v4564 = vadd.f32 %v4179, %v4563
    %v4565 = vpop.f32.mrb[0].mxu0
    %4566 = vmatprep.mubr.f32.mxu0 %v3326
    %4567 = vmatmul.mubr.f32.gmra.mrb[0].mxu0 %v3254
    %v4568 = vpop.f32.mrb[0].mxu0
    %v4569 = vadd.f32 %v4184, %v4568
    %v4570 = vpop.f32.mrb[0].mxu0
    %4571 = vmatprep.mubr.f32.mxu0 %v3327
    %4572 = vmatmul.mubr.f32.gmra.mrb[0].mxu0 %v3255
    %v4573 = vpop.f32.mrb[0].mxu0
    %v4574 = vadd.f32 %v4189, %v4573
    %v4575 = vpop.f32.mrb[0].mxu0
    %4576 = vmatprep.mubr.f32.mxu0 %v3328
    %4577 = vmatmul.mubr.f32.gmra.mrb[0].mxu0 %v3256
    %v4578 = vpop.f32.mrb[0].mxu0
    %v4579 = vadd.f32 %v4194, %v4578
    %v4580 = vpop.f32.mrb[0].mxu0
    %4581 = vmatprep.mubr.f32.mxu0 %v3329
    %4582 = vmatmul.mubr.f32.gmra.mrb[0].mxu0 %v3257
    %v4583 = vpop.f32.mrb[0].mxu0
    %v4584 = vadd.f32 %v4199, %v4583
    %v4585 = vpop.f32.mrb[0].mxu0
    %4586 = vmatprep.mubr.f32.mxu0 %v3330
    %4587 = vmatmul.mubr.f32.gmra.mrb[0].mxu0 %v3258
    %v4588 = vpop.f32.mrb[0].mxu0
    %v4589 = vadd.f32 %v4204, %v4588
    %v4590 = vpop.f32.mrb[0].mxu0
    %4591 = vmatprep.mubr.f32.mxu0 %v3331
    %4592 = vmatmul.mubr.f32.gmra.mrb[0].mxu0 %v3259
    %v4593 = vpop.f32.mrb[0].mxu0
    %v4594 = vadd.f32 %v4209, %v4593
    %v4595 = vpop.f32.mrb[0].mxu0
    %4596 = vmatprep.mubr.f32.mxu0 %v3332
    %4597 = vmatmul.mubr.f32.gmra.mrb[0].mxu0 %v3260
    %v4598 = vpop.f32.mrb[0].mxu0
    %v4599 = vadd.f32 %v4214, %v4598
    %v4600 = vpop.f32.mrb[0].mxu0
    %4601 = vmatprep.mubr.f32.mxu0 %v3333
    %4602 = vmatmul.mubr.f32.gmra.mrb[0].mxu0 %v3261
    %v4603 = vpop.f32.mrb[0].mxu0
    %v4604 = vadd.f32 %v4219, %v4603
    %v4605 = vpop.f32.mrb[0].mxu0
    %4606 = vmatprep.mubr.f32.mxu0 %v3334
    %4607 = vmatmul.mubr.f32.gmra.mrb[0].mxu0 %v3262
    %v4608 = vpop.f32.mrb[0].mxu0
    %v4609 = vadd.f32 %v4224, %v4608
    %v4610 = vpop.f32.mrb[0].mxu0
    %4611 = vmatprep.mubr.f32.mxu0 %v3335
    %4612 = vmatmul.mubr.f32.gmra.mrb[0].mxu0 %v3263
    %v4613 = vpop.f32.mrb[0].mxu0
    %v4614 = vadd.f32 %v4229, %v4613
    %v4615 = vpop.f32.mrb[0].mxu0
    %4616 = vmatprep.mubr.f32.mxu0 %v3336
    %4617 = vmatmul.mubr.f32.gmra.mrb[0].mxu0 %v3264
    %v4618 = vpop.f32.mrb[0].mxu0
    %v4619 = vadd.f32 %v4234, %v4618
    %v4620 = vpop.f32.mrb[0].mxu0
    %4621 = vmatprep.mubr.f32.mxu0 %v3337
    %4622 = vmatmul.mubr.f32.gmra.mrb[0].mxu0 %v3265
    %v4623 = vpop.f32.mrb[0].mxu0
    %v4624 = vadd.f32 %v4239, %v4623
    %v4625 = vpop.f32.mrb[0].mxu0
    %4626 = vmatprep.mubr.f32.mxu0 %v3338
    %4627 = vmatmul.mubr.f32.gmra.mrb[0].mxu0 %v3266
    %v4628 = vpop.f32.mrb[0].mxu0
    %v4629 = vadd.f32 %v4244, %v4628
    %v4630 = vpop.f32.mrb[0].mxu0
    %4631 = vmatprep.mubr.f32.mxu0 %v3339
    %4632 = vmatmul.mubr.f32.gmra.mrb[0].mxu0 %v3267
    %v4633 = vpop.f32.mrb[0].mxu0
    %v4634 = vadd.f32 %v4249, %v4633
    %v4635 = vpop.f32.mrb[0].mxu0
    %4636 = vmatprep.mubr.f32.mxu0 %v3340
    %4637 = vmatmul.mubr.f32.gmra.mrb[0].mxu0 %v3268
    %v4638 = vpop.f32.mrb[0].mxu0
    %v4639 = vadd.f32 %v4254, %v4638
    %v4640 = vpop.f32.mrb[0].mxu0
    %4641 = vdwg.mxu0
    %4642 = vmatprep.subr.mxu0 0.0
    %4643 = vmatpush1.msra.mxu0 %v3439
    %4644 = vmatprep.subr.mxu0 0.0
    %4645 = vmatpush1.msra.mxu0 %v3440
    %4646 = vmatprep.subr.mxu0 0.0
    %4647 = vmatpush1.msra.mxu0 %v3441
    %4648 = vmatprep.subr.mxu0 0.0
    %4649 = vmatpush1.msra.mxu0 %v3442
    %4650 = vmatprep.subr.mxu0 0.0
    %4651 = vmatpush1.msra.mxu0 %v3443
    %4652 = vmatprep.subr.mxu0 0.0
    %4653 = vmatpush1.msra.mxu0 %v3444
    %4654 = vmatprep.subr.mxu0 0.0
    %4655 = vmatpush1.msra.mxu0 %v3445
    %4656 = vmatprep.subr.mxu0 0.0
    %4657 = vmatpush1.msra.mxu0 %v3446
    %4658 = vmatprep.subr.mxu0 0.0
    %4659 = vmatpush1.msra.mxu0 %v3447
    %4660 = vmatprep.subr.mxu0 0.0
    %4661 = vmatpush1.msra.mxu0 %v3448
    %4662 = vmatprep.subr.mxu0 0.0
    %4663 = vmatpush1.msra.mxu0 %v3449
    %4664 = vmatprep.subr.mxu0 0.0
    %4665 = vmatpush1.msra.mxu0 %v3450
    %4666 = vmatprep.subr.mxu0 0.0
    %4667 = vmatpush1.msra.mxu0 %v3451
    %4668 = vmatprep.subr.mxu0 0.0
    %4669 = vmatpush1.msra.mxu0 %v3452
    %4670 = vmatprep.subr.mxu0 0.0
    %4671 = vmatpush1.msra.mxu0 %v3453
    %4672 = vmatprep.subr.mxu0 0.0
    %4673 = vmatpush1.msra.mxu0 %v3454
    %4674 = vmatprep.subr.mxu0 0.0
    %4675 = vmatpush1.msra.mxu0 %v3455
    %4676 = vmatprep.subr.mxu0 0.0
    %4677 = vmatpush1.msra.mxu0 %v3456
    %4678 = vmatprep.subr.mxu0 0.0
    %4679 = vmatpush1.msra.mxu0 %v3457
    %4680 = vmatprep.subr.mxu0 0.0
    %4681 = vmatpush1.msra.mxu0 %v3458
    %4682 = vmatprep.subr.mxu0 0.0
    %4683 = vmatpush1.msra.mxu0 %v3459
    %4684 = vmatprep.subr.mxu0 0.0
    %4685 = vmatpush1.msra.mxu0 %v3460
    %4686 = vmatprep.subr.mxu0 0.0
    %4687 = vmatpush1.msra.mxu0 %v3461
    %4688 = vmatprep.subr.mxu0 0.0
    %4689 = vmatpush1.msra.mxu0 %v3462
    %4690 = vmatprep.subr.mxu0 0.0
    %4691 = vmatpush1.msra.mxu0 %v3463
    %4692 = vmatprep.subr.mxu0 0.0
    %4693 = vmatpush1.msra.mxu0 %v3464
    %4694 = vmatprep.subr.mxu0 0.0
    %4695 = vmatpush1.msra.mxu0 %v3465
    %4696 = vmatprep.subr.mxu0 0.0
    %4697 = vmatpush1.msra.mxu0 %v3466
    %4698 = vmatprep.subr.mxu0 0.0
    %4699 = vmatpush1.msra.mxu0 %v3467
    %4700 = vmatprep.subr.mxu0 0.0
    %4701 = vmatpush1.msra.mxu0 %v3468
    %4702 = vmatprep.subr.mxu0 0.0
    %4703 = vmatpush1.msra.mxu0 %v3469
    %4704 = vmatprep.subr.mxu0 0.0
    %4705 = vmatpush1.msra.mxu0 %v3470
    %4706 = vmatprep.mubr.f32.mxu0 %v3203
    %4707 = vmatmul.mubr.f32.gmra.mrb[0].mxu0 %v3131
    %v4708 = vpop.f32.mrb[0].mxu0
    %v4709 = vadd.f32 %v4324, %v4708
    %v4710 = vpop.f32.mrb[0].mxu0
    %4711 = vmatprep.mubr.f32.mxu0 %v3204
    %4712 = vmatmul.mubr.f32.gmra.mrb[0].mxu0 %v3132
    %v4713 = vpop.f32.mrb[0].mxu0
    %v4714 = vadd.f32 %v4329, %v4713
    %v4715 = vpop.f32.mrb[0].mxu0
    %4716 = vmatprep.mubr.f32.mxu0 %v3205
    %4717 = vmatmul.mubr.f32.gmra.mrb[0].mxu0 %v3133
    %v4718 = vpop.f32.mrb[0].mxu0
    %v4719 = vadd.f32 %v4334, %v4718
    %v4720 = vpop.f32.mrb[0].mxu0
    %4721 = vmatprep.mubr.f32.mxu0 %v3206
    %4722 = vmatmul.mubr.f32.gmra.mrb[0].mxu0 %v3134
    %v4723 = vpop.f32.mrb[0].mxu0
    %v4724 = vadd.f32 %v4339, %v4723
    %v4725 = vpop.f32.mrb[0].mxu0
    %4726 = vmatprep.mubr.f32.mxu0 %v3207
    %4727 = vmatmul.mubr.f32.gmra.mrb[0].mxu0 %v3135
    %v4728 = vpop.f32.mrb[0].mxu0
    %v4729 = vadd.f32 %v4344, %v4728
    %v4730 = vpop.f32.mrb[0].mxu0
    %4731 = vmatprep.mubr.f32.mxu0 %v3208
    %4732 = vmatmul.mubr.f32.gmra.mrb[0].mxu0 %v3136
    %v4733 = vpop.f32.mrb[0].mxu0
    %v4734 = vadd.f32 %v4349, %v4733
    %v4735 = vpop.f32.mrb[0].mxu0
    %4736 = vmatprep.mubr.f32.mxu0 %v3209
    %4737 = vmatmul.mubr.f32.gmra.mrb[0].mxu0 %v3137
    %v4738 = vpop.f32.mrb[0].mxu0
    %v4739 = vadd.f32 %v4354, %v4738
    %v4740 = vpop.f32.mrb[0].mxu0
    %4741 = vmatprep.mubr.f32.mxu0 %v3210
    %4742 = vmatmul.mubr.f32.gmra.mrb[0].mxu0 %v3138
    %v4743 = vpop.f32.mrb[0].mxu0
    %v4744 = vadd.f32 %v4359, %v4743
    %v4745 = vpop.f32.mrb[0].mxu0
    %4746 = vmatprep.mubr.f32.mxu0 %v3211
    %4747 = vmatmul.mubr.f32.gmra.mrb[0].mxu0 %v3139
    %v4748 = vpop.f32.mrb[0].mxu0
    %v4749 = vadd.f32 %v4364, %v4748
    %v4750 = vpop.f32.mrb[0].mxu0
    %4751 = vmatprep.mubr.f32.mxu0 %v3212
    %4752 = vmatmul.mubr.f32.gmra.mrb[0].mxu0 %v3140
    %v4753 = vpop.f32.mrb[0].mxu0
    %v4754 = vadd.f32 %v4369, %v4753
    %v4755 = vpop.f32.mrb[0].mxu0
    %4756 = vmatprep.mubr.f32.mxu0 %v3213
    %4757 = vmatmul.mubr.f32.gmra.mrb[0].mxu0 %v3141
    %v4758 = vpop.f32.mrb[0].mxu0
    %v4759 = vadd.f32 %v4374, %v4758
    %v4760 = vpop.f32.mrb[0].mxu0
    %4761 = vmatprep.mubr.f32.mxu0 %v3214
    %4762 = vmatmul.mubr.f32.gmra.mrb[0].mxu0 %v3142
    %v4763 = vpop.f32.mrb[0].mxu0
    %v4764 = vadd.f32 %v4379, %v4763
    %v4765 = vpop.f32.mrb[0].mxu0
    %4766 = vmatprep.mubr.f32.mxu0 %v3215
    %4767 = vmatmul.mubr.f32.gmra.mrb[0].mxu0 %v3143
    %v4768 = vpop.f32.mrb[0].mxu0
    %v4769 = vadd.f32 %v4384, %v4768
    %v4770 = vpop.f32.mrb[0].mxu0
    %4771 = vmatprep.mubr.f32.mxu0 %v3216
    %4772 = vmatmul.mubr.f32.gmra.mrb[0].mxu0 %v3144
    %v4773 = vpop.f32.mrb[0].mxu0
    %v4774 = vadd.f32 %v4389, %v4773
    %v4775 = vpop.f32.mrb[0].mxu0
    %4776 = vmatprep.mubr.f32.mxu0 %v3217
    %4777 = vmatmul.mubr.f32.gmra.mrb[0].mxu0 %v3145
    %v4778 = vpop.f32.mrb[0].mxu0
    %v4779 = vadd.f32 %v4394, %v4778
    %v4780 = vpop.f32.mrb[0].mxu0
    %4781 = vmatprep.mubr.f32.mxu0 %v3218
    %4782 = vmatmul.mubr.f32.gmra.mrb[0].mxu0 %v3146
    %v4783 = vpop.f32.mrb[0].mxu0
    %v4784 = vadd.f32 %v4399, %v4783
    %v4785 = vpop.f32.mrb[0].mxu0
    %4786 = vmatprep.mubr.f32.mxu0 %v3219
    %4787 = vmatmul.mubr.f32.gmra.mrb[0].mxu0 %v3147
    %v4788 = vpop.f32.mrb[0].mxu0
    %v4789 = vadd.f32 %v4404, %v4788
    %v4790 = vpop.f32.mrb[0].mxu0
    %4791 = vmatprep.mubr.f32.mxu0 %v3220
    %4792 = vmatmul.mubr.f32.gmra.mrb[0].mxu0 %v3148
    %v4793 = vpop.f32.mrb[0].mxu0
    %v4794 = vadd.f32 %v4409, %v4793
    %v4795 = vpop.f32.mrb[0].mxu0
    %4796 = vmatprep.mubr.f32.mxu0 %v3221
    %4797 = vmatmul.mubr.f32.gmra.mrb[0].mxu0 %v3149
    %v4798 = vpop.f32.mrb[0].mxu0
    %v4799 = vadd.f32 %v4414, %v4798
    %v4800 = vpop.f32.mrb[0].mxu0
    %4801 = vmatprep.mubr.f32.mxu0 %v3222
    %4802 = vmatmul.mubr.f32.gmra.mrb[0].mxu0 %v3150
    %v4803 = vpop.f32.mrb[0].mxu0
    %v4804 = vadd.f32 %v4419, %v4803
    %v4805 = vpop.f32.mrb[0].mxu0
    %4806 = vmatprep.mubr.f32.mxu0 %v3223
    %4807 = vmatmul.mubr.f32.gmra.mrb[0].mxu0 %v3151
    %v4808 = vpop.f32.mrb[0].mxu0
    %v4809 = vadd.f32 %v4424, %v4808
    %v4810 = vpop.f32.mrb[0].mxu0
    %4811 = vmatprep.mubr.f32.mxu0 %v3224
    %4812 = vmatmul.mubr.f32.gmra.mrb[0].mxu0 %v3152
    %v4813 = vpop.f32.mrb[0].mxu0
    %v4814 = vadd.f32 %v4429, %v4813
    %v4815 = vpop.f32.mrb[0].mxu0
    %4816 = vmatprep.mubr.f32.mxu0 %v3225
    %4817 = vmatmul.mubr.f32.gmra.mrb[0].mxu0 %v3153
    %v4818 = vpop.f32.mrb[0].mxu0
    %v4819 = vadd.f32 %v4434, %v4818
    %v4820 = vpop.f32.mrb[0].mxu0
    %4821 = vmatprep.mubr.f32.mxu0 %v3226
    %4822 = vmatmul.mubr.f32.gmra.mrb[0].mxu0 %v3154
    %v4823 = vpop.f32.mrb[0].mxu0
    %v4824 = vadd.f32 %v4439, %v4823
    %v4825 = vpop.f32.mrb[0].mxu0
    %4826 = vmatprep.mubr.f32.mxu0 %v3227
    %4827 = vmatmul.mubr.f32.gmra.mrb[0].mxu0 %v3155
    %v4828 = vpop.f32.mrb[0].mxu0
    %v4829 = vadd.f32 %v4444, %v4828
    %v4830 = vpop.f32.mrb[0].mxu0
    %4831 = vmatprep.mubr.f32.mxu0 %v3228
    %4832 = vmatmul.mubr.f32.gmra.mrb[0].mxu0 %v3156
    %v4833 = vpop.f32.mrb[0].mxu0
    %v4834 = vadd.f32 %v4449, %v4833
    %v4835 = vpop.f32.mrb[0].mxu0
    %4836 = vmatprep.mubr.f32.mxu0 %v3229
    %4837 = vmatmul.mubr.f32.gmra.mrb[0].mxu0 %v3157
    %v4838 = vpop.f32.mrb[0].mxu0
    %v4839 = vadd.f32 %v4454, %v4838
    %v4840 = vpop.f32.mrb[0].mxu0
    %4841 = vmatprep.mubr.f32.mxu0 %v3230
    %4842 = vmatmul.mubr.f32.gmra.mrb[0].mxu0 %v3158
    %v4843 = vpop.f32.mrb[0].mxu0
    %v4844 = vadd.f32 %v4459, %v4843
    %v4845 = vpop.f32.mrb[0].mxu0
    %4846 = vmatprep.mubr.f32.mxu0 %v3231
    %4847 = vmatmul.mubr.f32.gmra.mrb[0].mxu0 %v3159
    %v4848 = vpop.f32.mrb[0].mxu0
    %v4849 = vadd.f32 %v4464, %v4848
    %v4850 = vpop.f32.mrb[0].mxu0
    %4851 = vmatprep.mubr.f32.mxu0 %v3232
    %4852 = vmatmul.mubr.f32.gmra.mrb[0].mxu0 %v3160
    %v4853 = vpop.f32.mrb[0].mxu0
    %v4854 = vadd.f32 %v4469, %v4853
    %v4855 = vpop.f32.mrb[0].mxu0
    %4856 = vmatprep.mubr.f32.mxu0 %v3233
    %4857 = vmatmul.mubr.f32.gmra.mrb[0].mxu0 %v3161
    %v4858 = vpop.f32.mrb[0].mxu0
    %v4859 = vadd.f32 %v4474, %v4858
    %v4860 = vpop.f32.mrb[0].mxu0
    %4861 = vmatprep.mubr.f32.mxu0 %v3234
    %4862 = vmatmul.mubr.f32.gmra.mrb[0].mxu0 %v3162
    %v4863 = vpop.f32.mrb[0].mxu0
    %v4864 = vadd.f32 %v4479, %v4863
    %v4865 = vpop.f32.mrb[0].mxu0
    %4866 = vmatprep.mubr.f32.mxu0 %v3239
    %4867 = vmatmul.mubr.f32.gmra.mrb[0].mxu0 %v3167
    %v4868 = vpop.f32.mrb[0].mxu0
    %v4869 = vadd.f32 %v4484, %v4868
    %v4870 = vpop.f32.mrb[0].mxu0
    %4871 = vmatprep.mubr.f32.mxu0 %v3240
    %4872 = vmatmul.mubr.f32.gmra.mrb[0].mxu0 %v3168
    %v4873 = vpop.f32.mrb[0].mxu0
    %v4874 = vadd.f32 %v4489, %v4873
    %v4875 = vpop.f32.mrb[0].mxu0
    %4876 = vmatprep.mubr.f32.mxu0 %v3241
    %4877 = vmatmul.mubr.f32.gmra.mrb[0].mxu0 %v3169
    %v4878 = vpop.f32.mrb[0].mxu0
    %v4879 = vadd.f32 %v4494, %v4878
    %v4880 = vpop.f32.mrb[0].mxu0
    %4881 = vmatprep.mubr.f32.mxu0 %v3242
    %4882 = vmatmul.mubr.f32.gmra.mrb[0].mxu0 %v3170
    %v4883 = vpop.f32.mrb[0].mxu0
    %v4884 = vadd.f32 %v4499, %v4883
    %v4885 = vpop.f32.mrb[0].mxu0
    %4886 = vmatprep.mubr.f32.mxu0 %v3243
    %4887 = vmatmul.mubr.f32.gmra.mrb[0].mxu0 %v3171
    %v4888 = vpop.f32.mrb[0].mxu0
    %v4889 = vadd.f32 %v4504, %v4888
    %v4890 = vpop.f32.mrb[0].mxu0
    %4891 = vmatprep.mubr.f32.mxu0 %v3244
    %4892 = vmatmul.mubr.f32.gmra.mrb[0].mxu0 %v3172
    %v4893 = vpop.f32.mrb[0].mxu0
    %v4894 = vadd.f32 %v4509, %v4893
    %v4895 = vpop.f32.mrb[0].mxu0
    %4896 = vmatprep.mubr.f32.mxu0 %v3245
    %4897 = vmatmul.mubr.f32.gmra.mrb[0].mxu0 %v3173
    %v4898 = vpop.f32.mrb[0].mxu0
    %v4899 = vadd.f32 %v4514, %v4898
    %v4900 = vpop.f32.mrb[0].mxu0
    %4901 = vmatprep.mubr.f32.mxu0 %v3246
    %4902 = vmatmul.mubr.f32.gmra.mrb[0].mxu0 %v3174
    %v4903 = vpop.f32.mrb[0].mxu0
    %v4904 = vadd.f32 %v4519, %v4903
    %v4905 = vpop.f32.mrb[0].mxu0
    %4906 = vmatprep.mubr.f32.mxu0 %v3247
    %4907 = vmatmul.mubr.f32.gmra.mrb[0].mxu0 %v3175
    %v4908 = vpop.f32.mrb[0].mxu0
    %v4909 = vadd.f32 %v4524, %v4908
    %v4910 = vpop.f32.mrb[0].mxu0
    %4911 = vmatprep.mubr.f32.mxu0 %v3248
    %4912 = vmatmul.mubr.f32.gmra.mrb[0].mxu0 %v3176
    %v4913 = vpop.f32.mrb[0].mxu0
    %v4914 = vadd.f32 %v4529, %v4913
    %v4915 = vpop.f32.mrb[0].mxu0
    %4916 = vmatprep.mubr.f32.mxu0 %v3249
    %4917 = vmatmul.mubr.f32.gmra.mrb[0].mxu0 %v3177
    %v4918 = vpop.f32.mrb[0].mxu0
    %v4919 = vadd.f32 %v4534, %v4918
    %v4920 = vpop.f32.mrb[0].mxu0
    %4921 = vmatprep.mubr.f32.mxu0 %v3250
    %4922 = vmatmul.mubr.f32.gmra.mrb[0].mxu0 %v3178
    %v4923 = vpop.f32.mrb[0].mxu0
    %v4924 = vadd.f32 %v4539, %v4923
    %v4925 = vpop.f32.mrb[0].mxu0
    %4926 = vmatprep.mubr.f32.mxu0 %v3251
    %4927 = vmatmul.mubr.f32.gmra.mrb[0].mxu0 %v3179
    %v4928 = vpop.f32.mrb[0].mxu0
    %v4929 = vadd.f32 %v4544, %v4928
    %v4930 = vpop.f32.mrb[0].mxu0
    %4931 = vmatprep.mubr.f32.mxu0 %v3252
    %4932 = vmatmul.mubr.f32.gmra.mrb[0].mxu0 %v3180
    %v4933 = vpop.f32.mrb[0].mxu0
    %v4934 = vadd.f32 %v4549, %v4933
    %v4935 = vpop.f32.mrb[0].mxu0
    %4936 = vmatprep.mubr.f32.mxu0 %v3253
    %4937 = vmatmul.mubr.f32.gmra.mrb[0].mxu0 %v3181
    %v4938 = vpop.f32.mrb[0].mxu0
    %v4939 = vadd.f32 %v4554, %v4938
    %v4940 = vpop.f32.mrb[0].mxu0
    %4941 = vmatprep.mubr.f32.mxu0 %v3254
    %4942 = vmatmul.mubr.f32.gmra.mrb[0].mxu0 %v3182
    %v4943 = vpop.f32.mrb[0].mxu0
    %v4944 = vadd.f32 %v4559, %v4943
    %v4945 = vpop.f32.mrb[0].mxu0
    %4946 = vmatprep.mubr.f32.mxu0 %v3255
    %4947 = vmatmul.mubr.f32.gmra.mrb[0].mxu0 %v3183
    %v4948 = vpop.f32.mrb[0].mxu0
    %v4949 = vadd.f32 %v4564, %v4948
    %v4950 = vpop.f32.mrb[0].mxu0
    %4951 = vmatprep.mubr.f32.mxu0 %v3256
    %4952 = vmatmul.mubr.f32.gmra.mrb[0].mxu0 %v3184
    %v4953 = vpop.f32.mrb[0].mxu0
    %v4954 = vadd.f32 %v4569, %v4953
    %v4955 = vpop.f32.mrb[0].mxu0
    %4956 = vmatprep.mubr.f32.mxu0 %v3257
    %4957 = vmatmul.mubr.f32.gmra.mrb[0].mxu0 %v3185
    %v4958 = vpop.f32.mrb[0].mxu0
    %v4959 = vadd.f32 %v4574, %v4958
    %v4960 = vpop.f32.mrb[0].mxu0
    %4961 = vmatprep.mubr.f32.mxu0 %v3258
    %4962 = vmatmul.mubr.f32.gmra.mrb[0].mxu0 %v3186
    %v4963 = vpop.f32.mrb[0].mxu0
    %v4964 = vadd.f32 %v4579, %v4963
    %v4965 = vpop.f32.mrb[0].mxu0
    %4966 = vmatprep.mubr.f32.mxu0 %v3259
    %4967 = vmatmul.mubr.f32.gmra.mrb[0].mxu0 %v3187
    %v4968 = vpop.f32.mrb[0].mxu0
    %v4969 = vadd.f32 %v4584, %v4968
    %v4970 = vpop.f32.mrb[0].mxu0
    %4971 = vmatprep.mubr.f32.mxu0 %v3260
    %4972 = vmatmul.mubr.f32.gmra.mrb[0].mxu0 %v3188
    %v4973 = vpop.f32.mrb[0].mxu0
    %v4974 = vadd.f32 %v4589, %v4973
    %v4975 = vpop.f32.mrb[0].mxu0
    %4976 = vmatprep.mubr.f32.mxu0 %v3261
    %4977 = vmatmul.mubr.f32.gmra.mrb[0].mxu0 %v3189
    %v4978 = vpop.f32.mrb[0].mxu0
    %v4979 = vadd.f32 %v4594, %v4978
    %v4980 = vpop.f32.mrb[0].mxu0
    %4981 = vmatprep.mubr.f32.mxu0 %v3262
    %4982 = vmatmul.mubr.f32.gmra.mrb[0].mxu0 %v3190
    %v4983 = vpop.f32.mrb[0].mxu0
    %v4984 = vadd.f32 %v4599, %v4983
    %v4985 = vpop.f32.mrb[0].mxu0
    %4986 = vmatprep.mubr.f32.mxu0 %v3263
    %4987 = vmatmul.mubr.f32.gmra.mrb[0].mxu0 %v3191
    %v4988 = vpop.f32.mrb[0].mxu0
    %v4989 = vadd.f32 %v4604, %v4988
    %v4990 = vpop.f32.mrb[0].mxu0
    %4991 = vmatprep.mubr.f32.mxu0 %v3264
    %4992 = vmatmul.mubr.f32.gmra.mrb[0].mxu0 %v3192
    %v4993 = vpop.f32.mrb[0].mxu0
    %v4994 = vadd.f32 %v4609, %v4993
    %v4995 = vpop.f32.mrb[0].mxu0
    %4996 = vmatprep.mubr.f32.mxu0 %v3265
    %4997 = vmatmul.mubr.f32.gmra.mrb[0].mxu0 %v3193
    %v4998 = vpop.f32.mrb[0].mxu0
    %v4999 = vadd.f32 %v4614, %v4998
    %v5000 = vpop.f32.mrb[0].mxu0
    %5001 = vmatprep.mubr.f32.mxu0 %v3266
    %5002 = vmatmul.mubr.f32.gmra.mrb[0].mxu0 %v3194
    %v5003 = vpop.f32.mrb[0].mxu0
    %v5004 = vadd.f32 %v4619, %v5003
    %v5005 = vpop.f32.mrb[0].mxu0
    %5006 = vmatprep.mubr.f32.mxu0 %v3267
    %5007 = vmatmul.mubr.f32.gmra.mrb[0].mxu0 %v3195
    %v5008 = vpop.f32.mrb[0].mxu0
    %v5009 = vadd.f32 %v4624, %v5008
    %v5010 = vpop.f32.mrb[0].mxu0
    %5011 = vmatprep.mubr.f32.mxu0 %v3268
    %5012 = vmatmul.mubr.f32.gmra.mrb[0].mxu0 %v3196
    %v5013 = vpop.f32.mrb[0].mxu0
    %v5014 = vadd.f32 %v4629, %v5013
    %v5015 = vpop.f32.mrb[0].mxu0
    %5016 = vmatprep.mubr.f32.mxu0 %v3269
    %5017 = vmatmul.mubr.f32.gmra.mrb[0].mxu0 %v3197
    %v5018 = vpop.f32.mrb[0].mxu0
    %v5019 = vadd.f32 %v4634, %v5018
    %v5020 = vpop.f32.mrb[0].mxu0
    %5021 = vmatprep.mubr.f32.mxu0 %v3270
    %5022 = vmatmul.mubr.f32.gmra.mrb[0].mxu0 %v3198
    %v5023 = vpop.f32.mrb[0].mxu0
    %v5024 = vadd.f32 %v4639, %v5023
    %v5025 = vpop.f32.mrb[0].mxu0
    %5026 = vdwg.mxu0
    %5027 = vmatprep.subr.mxu0 0.0
    %5028 = vmatpush1.msra.mxu0 %v3471
    %5029 = vmatprep.subr.mxu0 0.0
    %5030 = vmatpush1.msra.mxu0 %v3472
    %5031 = vmatprep.subr.mxu0 0.0
    %5032 = vmatpush1.msra.mxu0 %v3473
    %5033 = vmatprep.subr.mxu0 0.0
    %5034 = vmatpush1.msra.mxu0 %v3474
    %5035 = vmatprep.subr.mxu0 0.0
    %5036 = vmatpush1.msra.mxu0 %v3475
    %5037 = vmatprep.subr.mxu0 0.0
    %5038 = vmatpush1.msra.mxu0 %v3476
    %5039 = vmatprep.subr.mxu0 0.0
    %5040 = vmatpush1.msra.mxu0 %v3477
    %5041 = vmatprep.subr.mxu0 0.0
    %5042 = vmatpush1.msra.mxu0 %v3478
    %5043 = vmatprep.subr.mxu0 0.0
    %5044 = vmatpush1.msra.mxu0 %v3479
    %5045 = vmatprep.subr.mxu0 0.0
    %5046 = vmatpush1.msra.mxu0 %v3480
    %5047 = vmatprep.subr.mxu0 0.0
    %5048 = vmatpush1.msra.mxu0 %v3481
    %5049 = vmatprep.subr.mxu0 0.0
    %5050 = vmatpush1.msra.mxu0 %v3482
    %5051 = vmatprep.subr.mxu0 0.0
    %5052 = vmatpush1.msra.mxu0 %v3483
    %5053 = vmatprep.subr.mxu0 0.0
    %5054 = vmatpush1.msra.mxu0 %v3484
    %5055 = vmatprep.subr.mxu0 0.0
    %5056 = vmatpush1.msra.mxu0 %v3485
    %5057 = vmatprep.subr.mxu0 0.0
    %5058 = vmatpush1.msra.mxu0 %v3486
    %5059 = vmatprep.subr.mxu0 0.0
    %5060 = vmatpush1.msra.mxu0 0.0
    %5061 = vmatprep.subr.mxu0 0.0
    %5062 = vmatpush1.msra.mxu0 0.0
    %5063 = vmatprep.subr.mxu0 0.0
    %5064 = vmatpush1.msra.mxu0 0.0
    %5065 = vmatprep.subr.mxu0 0.0
    %5066 = vmatpush1.msra.mxu0 0.0
    %5067 = vmatprep.subr.mxu0 0.0
    %5068 = vmatpush1.msra.mxu0 0.0
    %5069 = vmatprep.subr.mxu0 0.0
    %5070 = vmatpush1.msra.mxu0 0.0
    %5071 = vmatprep.subr.mxu0 0.0
    %5072 = vmatpush1.msra.mxu0 0.0
    %5073 = vmatprep.subr.mxu0 0.0
    %5074 = vmatpush1.msra.mxu0 0.0
    %5075 = vmatprep.subr.mxu0 0.0
    %5076 = vmatpush1.msra.mxu0 0.0
    %5077 = vmatprep.subr.mxu0 0.0
    %5078 = vmatpush1.msra.mxu0 0.0
    %5079 = vmatprep.subr.mxu0 0.0
    %5080 = vmatpush1.msra.mxu0 0.0
    %5081 = vmatprep.subr.mxu0 0.0
    %5082 = vmatpush1.msra.mxu0 0.0
    %5083 = vmatprep.subr.mxu0 0.0
    %5084 = vmatpush1.msra.mxu0 0.0
    %5085 = vmatprep.subr.mxu0 0.0
    %5086 = vmatpush1.msra.mxu0 0.0
    %5087 = vmatprep.subr.mxu0 0.0
    %5088 = vmatpush1.msra.mxu0 0.0
    %5089 = vmatprep.subr.mxu0 0.0
    %5090 = vmatpush1.msra.mxu0 0.0
    %5091 = vmatprep.mubr.f32.mxu0 0.0
    %5092 = vmatmul.mubr.f32.gmra.mrb[0].mxu0 %v3275
    %v5093 = vpop.f32.mrb[0].mxu0
    %v5094 = vadd.f32 %v4709, %v5093
    %v5095 = vpop.f32.mrb[0].mxu0
    %5096 = vmatprep.mubr.f32.mxu0 0.0
    %5097 = vmatmul.mubr.f32.gmra.mrb[0].mxu0 %v3276
    %v5098 = vpop.f32.mrb[0].mxu0
    %v5099 = vadd.f32 %v4714, %v5098
    %v5100 = vpop.f32.mrb[0].mxu0
    %5101 = vmatprep.mubr.f32.mxu0 0.0
    %5102 = vmatmul.mubr.f32.gmra.mrb[0].mxu0 %v3277
    %v5103 = vpop.f32.mrb[0].mxu0
    %v5104 = vadd.f32 %v4719, %v5103
    %v5105 = vpop.f32.mrb[0].mxu0
    %5106 = vmatprep.mubr.f32.mxu0 0.0
    %5107 = vmatmul.mubr.f32.gmra.mrb[0].mxu0 %v3278
    %v5108 = vpop.f32.mrb[0].mxu0
    %v5109 = vadd.f32 %v4724, %v5108
    %v5110 = vpop.f32.mrb[0].mxu0
    %5111 = vmatprep.mubr.f32.mxu0 0.0
    %5112 = vmatmul.mubr.f32.gmra.mrb[0].mxu0 %v3279
    %v5113 = vpop.f32.mrb[0].mxu0
    %v5114 = vadd.f32 %v4729, %v5113
    %v5115 = vpop.f32.mrb[0].mxu0
    %5116 = vmatprep.mubr.f32.mxu0 0.0
    %5117 = vmatmul.mubr.f32.gmra.mrb[0].mxu0 %v3280
    %v5118 = vpop.f32.mrb[0].mxu0
    %v5119 = vadd.f32 %v4734, %v5118
    %v5120 = vpop.f32.mrb[0].mxu0
    %5121 = vmatprep.mubr.f32.mxu0 0.0
    %5122 = vmatmul.mubr.f32.gmra.mrb[0].mxu0 %v3281
    %v5123 = vpop.f32.mrb[0].mxu0
    %v5124 = vadd.f32 %v4739, %v5123
    %v5125 = vpop.f32.mrb[0].mxu0
    %5126 = vmatprep.mubr.f32.mxu0 0.0
    %5127 = vmatmul.mubr.f32.gmra.mrb[0].mxu0 %v3282
    %v5128 = vpop.f32.mrb[0].mxu0
    %v5129 = vadd.f32 %v4744, %v5128
    %v5130 = vpop.f32.mrb[0].mxu0
    %5131 = vmatprep.mubr.f32.mxu0 0.0
    %5132 = vmatmul.mubr.f32.gmra.mrb[0].mxu0 %v3283
    %v5133 = vpop.f32.mrb[0].mxu0
    %v5134 = vadd.f32 %v4749, %v5133
    %v5135 = vpop.f32.mrb[0].mxu0
    %5136 = vmatprep.mubr.f32.mxu0 0.0
    %5137 = vmatmul.mubr.f32.gmra.mrb[0].mxu0 %v3284
    %v5138 = vpop.f32.mrb[0].mxu0
    %v5139 = vadd.f32 %v4754, %v5138
    %v5140 = vpop.f32.mrb[0].mxu0
    %5141 = vmatprep.mubr.f32.mxu0 0.0
    %5142 = vmatmul.mubr.f32.gmra.mrb[0].mxu0 %v3285
    %v5143 = vpop.f32.mrb[0].mxu0
    %v5144 = vadd.f32 %v4759, %v5143
    %v5145 = vpop.f32.mrb[0].mxu0
    %5146 = vmatprep.mubr.f32.mxu0 0.0
    %5147 = vmatmul.mubr.f32.gmra.mrb[0].mxu0 %v3286
    %v5148 = vpop.f32.mrb[0].mxu0
    %v5149 = vadd.f32 %v4764, %v5148
    %v5150 = vpop.f32.mrb[0].mxu0
    %5151 = vmatprep.mubr.f32.mxu0 0.0
    %5152 = vmatmul.mubr.f32.gmra.mrb[0].mxu0 %v3287
    %v5153 = vpop.f32.mrb[0].mxu0
    %v5154 = vadd.f32 %v4769, %v5153
    %v5155 = vpop.f32.mrb[0].mxu0
    %5156 = vmatprep.mubr.f32.mxu0 0.0
    %5157 = vmatmul.mubr.f32.gmra.mrb[0].mxu0 %v3288
    %v5158 = vpop.f32.mrb[0].mxu0
    %v5159 = vadd.f32 %v4774, %v5158
    %v5160 = vpop.f32.mrb[0].mxu0
    %5161 = vmatprep.mubr.f32.mxu0 0.0
    %5162 = vmatmul.mubr.f32.gmra.mrb[0].mxu0 %v3289
    %v5163 = vpop.f32.mrb[0].mxu0
    %v5164 = vadd.f32 %v4779, %v5163
    %v5165 = vpop.f32.mrb[0].mxu0
    %5166 = vmatprep.mubr.f32.mxu0 0.0
    %5167 = vmatmul.mubr.f32.gmra.mrb[0].mxu0 %v3290
    %v5168 = vpop.f32.mrb[0].mxu0
    %v5169 = vadd.f32 %v4784, %v5168
    %v5170 = vpop.f32.mrb[0].mxu0
    %5171 = vmatprep.mubr.f32.mxu0 0.0
    %5172 = vmatmul.mubr.f32.gmra.mrb[0].mxu0 %v3291
    %v5173 = vpop.f32.mrb[0].mxu0
    %v5174 = vadd.f32 %v4789, %v5173
    %v5175 = vpop.f32.mrb[0].mxu0
    %5176 = vmatprep.mubr.f32.mxu0 0.0
    %5177 = vmatmul.mubr.f32.gmra.mrb[0].mxu0 %v3292
    %v5178 = vpop.f32.mrb[0].mxu0
    %v5179 = vadd.f32 %v4794, %v5178
    %v5180 = vpop.f32.mrb[0].mxu0
    %5181 = vmatprep.mubr.f32.mxu0 0.0
    %5182 = vmatmul.mubr.f32.gmra.mrb[0].mxu0 %v3293
    %v5183 = vpop.f32.mrb[0].mxu0
    %v5184 = vadd.f32 %v4799, %v5183
    %v5185 = vpop.f32.mrb[0].mxu0
    %5186 = vmatprep.mubr.f32.mxu0 0.0
    %5187 = vmatmul.mubr.f32.gmra.mrb[0].mxu0 %v3294
    %v5188 = vpop.f32.mrb[0].mxu0
    %v5189 = vadd.f32 %v4804, %v5188
    %v5190 = vpop.f32.mrb[0].mxu0
    %5191 = vmatprep.mubr.f32.mxu0 0.0
    %5192 = vmatmul.mubr.f32.gmra.mrb[0].mxu0 %v3295
    %v5193 = vpop.f32.mrb[0].mxu0
    %v5194 = vadd.f32 %v4809, %v5193
    %v5195 = vpop.f32.mrb[0].mxu0
    %5196 = vmatprep.mubr.f32.mxu0 0.0
    %5197 = vmatmul.mubr.f32.gmra.mrb[0].mxu0 %v3296
    %v5198 = vpop.f32.mrb[0].mxu0
    %v5199 = vadd.f32 %v4814, %v5198
    %v5200 = vpop.f32.mrb[0].mxu0
    %5201 = vmatprep.mubr.f32.mxu0 0.0
    %5202 = vmatmul.mubr.f32.gmra.mrb[0].mxu0 %v3297
    %v5203 = vpop.f32.mrb[0].mxu0
    %v5204 = vadd.f32 %v4819, %v5203
    %v5205 = vpop.f32.mrb[0].mxu0
    %5206 = vmatprep.mubr.f32.mxu0 0.0
    %5207 = vmatmul.mubr.f32.gmra.mrb[0].mxu0 %v3298
    %v5208 = vpop.f32.mrb[0].mxu0
    %v5209 = vadd.f32 %v4824, %v5208
    %v5210 = vpop.f32.mrb[0].mxu0
    %5211 = vmatprep.mubr.f32.mxu0 0.0
    %5212 = vmatmul.mubr.f32.gmra.mrb[0].mxu0 %v3299
    %v5213 = vpop.f32.mrb[0].mxu0
    %v5214 = vadd.f32 %v4829, %v5213
    %v5215 = vpop.f32.mrb[0].mxu0
    %5216 = vmatprep.mubr.f32.mxu0 0.0
    %5217 = vmatmul.mubr.f32.gmra.mrb[0].mxu0 %v3300
    %v5218 = vpop.f32.mrb[0].mxu0
    %v5219 = vadd.f32 %v4834, %v5218
    %v5220 = vpop.f32.mrb[0].mxu0
    %5221 = vmatprep.mubr.f32.mxu0 0.0
    %5222 = vmatmul.mubr.f32.gmra.mrb[0].mxu0 %v3301
    %v5223 = vpop.f32.mrb[0].mxu0
    %v5224 = vadd.f32 %v4839, %v5223
    %v5225 = vpop.f32.mrb[0].mxu0
    %5226 = vmatprep.mubr.f32.mxu0 0.0
    %5227 = vmatmul.mubr.f32.gmra.mrb[0].mxu0 %v3302
    %v5228 = vpop.f32.mrb[0].mxu0
    %v5229 = vadd.f32 %v4844, %v5228
    %v5230 = vpop.f32.mrb[0].mxu0
    %5231 = vmatprep.mubr.f32.mxu0 0.0
    %5232 = vmatmul.mubr.f32.gmra.mrb[0].mxu0 %v3303
    %v5233 = vpop.f32.mrb[0].mxu0
    %v5234 = vadd.f32 %v4849, %v5233
    %v5235 = vpop.f32.mrb[0].mxu0
    %5236 = vmatprep.mubr.f32.mxu0 0.0
    %5237 = vmatmul.mubr.f32.gmra.mrb[0].mxu0 %v3304
    %v5238 = vpop.f32.mrb[0].mxu0
    %v5239 = vadd.f32 %v4854, %v5238
    %v5240 = vpop.f32.mrb[0].mxu0
    %5241 = vmatprep.mubr.f32.mxu0 0.0
    %5242 = vmatmul.mubr.f32.gmra.mrb[0].mxu0 %v3305
    %v5243 = vpop.f32.mrb[0].mxu0
    %v5244 = vadd.f32 %v4859, %v5243
    %v5245 = vpop.f32.mrb[0].mxu0
    %5246 = vmatprep.mubr.f32.mxu0 0.0
    %5247 = vmatmul.mubr.f32.gmra.mrb[0].mxu0 %v3306
    %v5248 = vpop.f32.mrb[0].mxu0
    %v5249 = vadd.f32 %v4864, %v5248
    %v5250 = vpop.f32.mrb[0].mxu0
    %5251 = vmatprep.mubr.f32.mxu0 0.0
    %5252 = vmatmul.mubr.f32.gmra.mrb[0].mxu0 %v3311
    %v5253 = vpop.f32.mrb[0].mxu0
    %v5254 = vadd.f32 %v4869, %v5253
    %v5255 = vpop.f32.mrb[0].mxu0
    %5256 = vmatprep.mubr.f32.mxu0 0.0
    %5257 = vmatmul.mubr.f32.gmra.mrb[0].mxu0 %v3312
    %v5258 = vpop.f32.mrb[0].mxu0
    %v5259 = vadd.f32 %v4874, %v5258
    %v5260 = vpop.f32.mrb[0].mxu0
    %5261 = vmatprep.mubr.f32.mxu0 0.0
    %5262 = vmatmul.mubr.f32.gmra.mrb[0].mxu0 %v3313
    %v5263 = vpop.f32.mrb[0].mxu0
    %v5264 = vadd.f32 %v4879, %v5263
    %v5265 = vpop.f32.mrb[0].mxu0
    %5266 = vmatprep.mubr.f32.mxu0 0.0
    %5267 = vmatmul.mubr.f32.gmra.mrb[0].mxu0 %v3314
    %v5268 = vpop.f32.mrb[0].mxu0
    %v5269 = vadd.f32 %v4884, %v5268
    %v5270 = vpop.f32.mrb[0].mxu0
    %5271 = vmatprep.mubr.f32.mxu0 0.0
    %5272 = vmatmul.mubr.f32.gmra.mrb[0].mxu0 %v3315
    %v5273 = vpop.f32.mrb[0].mxu0
    %v5274 = vadd.f32 %v4889, %v5273
    %v5275 = vpop.f32.mrb[0].mxu0
    %5276 = vmatprep.mubr.f32.mxu0 0.0
    %5277 = vmatmul.mubr.f32.gmra.mrb[0].mxu0 %v3316
    %v5278 = vpop.f32.mrb[0].mxu0
    %v5279 = vadd.f32 %v4894, %v5278
    %v5280 = vpop.f32.mrb[0].mxu0
    %5281 = vmatprep.mubr.f32.mxu0 0.0
    %5282 = vmatmul.mubr.f32.gmra.mrb[0].mxu0 %v3317
    %v5283 = vpop.f32.mrb[0].mxu0
    %v5284 = vadd.f32 %v4899, %v5283
    %v5285 = vpop.f32.mrb[0].mxu0
    %5286 = vmatprep.mubr.f32.mxu0 0.0
    %5287 = vmatmul.mubr.f32.gmra.mrb[0].mxu0 %v3318
    %v5288 = vpop.f32.mrb[0].mxu0
    %v5289 = vadd.f32 %v4904, %v5288
    %v5290 = vpop.f32.mrb[0].mxu0
    %5291 = vmatprep.mubr.f32.mxu0 0.0
    %5292 = vmatmul.mubr.f32.gmra.mrb[0].mxu0 %v3319
    %v5293 = vpop.f32.mrb[0].mxu0
    %v5294 = vadd.f32 %v4909, %v5293
    %v5295 = vpop.f32.mrb[0].mxu0
    %5296 = vmatprep.mubr.f32.mxu0 0.0
    %5297 = vmatmul.mubr.f32.gmra.mrb[0].mxu0 %v3320
    %v5298 = vpop.f32.mrb[0].mxu0
    %v5299 = vadd.f32 %v4914, %v5298
    %v5300 = vpop.f32.mrb[0].mxu0
    %5301 = vmatprep.mubr.f32.mxu0 0.0
    %5302 = vmatmul.mubr.f32.gmra.mrb[0].mxu0 %v3321
    %v5303 = vpop.f32.mrb[0].mxu0
    %v5304 = vadd.f32 %v4919, %v5303
    %v5305 = vpop.f32.mrb[0].mxu0
    %5306 = vmatprep.mubr.f32.mxu0 0.0
    %5307 = vmatmul.mubr.f32.gmra.mrb[0].mxu0 %v3322
    %v5308 = vpop.f32.mrb[0].mxu0
    %v5309 = vadd.f32 %v4924, %v5308
    %v5310 = vpop.f32.mrb[0].mxu0
    %5311 = vmatprep.mubr.f32.mxu0 0.0
    %5312 = vmatmul.mubr.f32.gmra.mrb[0].mxu0 %v3323
    %v5313 = vpop.f32.mrb[0].mxu0
    %v5314 = vadd.f32 %v4929, %v5313
    %v5315 = vpop.f32.mrb[0].mxu0
    %5316 = vmatprep.mubr.f32.mxu0 0.0
    %5317 = vmatmul.mubr.f32.gmra.mrb[0].mxu0 %v3324
    %v5318 = vpop.f32.mrb[0].mxu0
    %v5319 = vadd.f32 %v4934, %v5318
    %v5320 = vpop.f32.mrb[0].mxu0
    %5321 = vmatprep.mubr.f32.mxu0 0.0
    %5322 = vmatmul.mubr.f32.gmra.mrb[0].mxu0 %v3325
    %v5323 = vpop.f32.mrb[0].mxu0
    %v5324 = vadd.f32 %v4939, %v5323
    %v5325 = vpop.f32.mrb[0].mxu0
    %5326 = vmatprep.mubr.f32.mxu0 0.0
    %5327 = vmatmul.mubr.f32.gmra.mrb[0].mxu0 %v3326
    %v5328 = vpop.f32.mrb[0].mxu0
    %v5329 = vadd.f32 %v4944, %v5328
    %v5330 = vpop.f32.mrb[0].mxu0
    %5331 = vmatprep.mubr.f32.mxu0 0.0
    %5332 = vmatmul.mubr.f32.gmra.mrb[0].mxu0 %v3327
    %v5333 = vpop.f32.mrb[0].mxu0
    %v5334 = vadd.f32 %v4949, %v5333
    %v5335 = vpop.f32.mrb[0].mxu0
    %5336 = vmatprep.mubr.f32.mxu0 0.0
    %5337 = vmatmul.mubr.f32.gmra.mrb[0].mxu0 %v3328
    %v5338 = vpop.f32.mrb[0].mxu0
    %v5339 = vadd.f32 %v4954, %v5338
    %v5340 = vpop.f32.mrb[0].mxu0
    %5341 = vmatprep.mubr.f32.mxu0 0.0
    %5342 = vmatmul.mubr.f32.gmra.mrb[0].mxu0 %v3329
    %v5343 = vpop.f32.mrb[0].mxu0
    %v5344 = vadd.f32 %v4959, %v5343
    %v5345 = vpop.f32.mrb[0].mxu0
    %5346 = vmatprep.mubr.f32.mxu0 0.0
    %5347 = vmatmul.mubr.f32.gmra.mrb[0].mxu0 %v3330
    %v5348 = vpop.f32.mrb[0].mxu0
    %v5349 = vadd.f32 %v4964, %v5348
    %v5350 = vpop.f32.mrb[0].mxu0
    %5351 = vmatprep.mubr.f32.mxu0 0.0
    %5352 = vmatmul.mubr.f32.gmra.mrb[0].mxu0 %v3331
    %v5353 = vpop.f32.mrb[0].mxu0
    %v5354 = vadd.f32 %v4969, %v5353
    %v5355 = vpop.f32.mrb[0].mxu0
    %5356 = vmatprep.mubr.f32.mxu0 0.0
    %5357 = vmatmul.mubr.f32.gmra.mrb[0].mxu0 %v3332
    %v5358 = vpop.f32.mrb[0].mxu0
    %v5359 = vadd.f32 %v4974, %v5358
    %v5360 = vpop.f32.mrb[0].mxu0
    %5361 = vmatprep.mubr.f32.mxu0 0.0
    %5362 = vmatmul.mubr.f32.gmra.mrb[0].mxu0 %v3333
    %v5363 = vpop.f32.mrb[0].mxu0
    %v5364 = vadd.f32 %v4979, %v5363
    %v5365 = vpop.f32.mrb[0].mxu0
    %5366 = vmatprep.mubr.f32.mxu0 0.0
    %5367 = vmatmul.mubr.f32.gmra.mrb[0].mxu0 %v3334
    %v5368 = vpop.f32.mrb[0].mxu0
    %v5369 = vadd.f32 %v4984, %v5368
    %v5370 = vpop.f32.mrb[0].mxu0
    %5371 = vmatprep.mubr.f32.mxu0 0.0
    %5372 = vmatmul.mubr.f32.gmra.mrb[0].mxu0 %v3335
    %v5373 = vpop.f32.mrb[0].mxu0
    %v5374 = vadd.f32 %v4989, %v5373
    %v5375 = vpop.f32.mrb[0].mxu0
    %5376 = vmatprep.mubr.f32.mxu0 0.0
    %5377 = vmatmul.mubr.f32.gmra.mrb[0].mxu0 %v3336
    %v5378 = vpop.f32.mrb[0].mxu0
    %v5379 = vadd.f32 %v4994, %v5378
    %v5380 = vpop.f32.mrb[0].mxu0
    %5381 = vmatprep.mubr.f32.mxu0 0.0
    %5382 = vmatmul.mubr.f32.gmra.mrb[0].mxu0 %v3337
    %v5383 = vpop.f32.mrb[0].mxu0
    %v5384 = vadd.f32 %v4999, %v5383
    %v5385 = vpop.f32.mrb[0].mxu0
    %5386 = vmatprep.mubr.f32.mxu0 0.0
    %5387 = vmatmul.mubr.f32.gmra.mrb[0].mxu0 %v3338
    %v5388 = vpop.f32.mrb[0].mxu0
    %v5389 = vadd.f32 %v5004, %v5388
    %v5390 = vpop.f32.mrb[0].mxu0
    %5391 = vmatprep.mubr.f32.mxu0 0.0
    %5392 = vmatmul.mubr.f32.gmra.mrb[0].mxu0 %v3339
    %v5393 = vpop.f32.mrb[0].mxu0
    %v5394 = vadd.f32 %v5009, %v5393
    %v5395 = vpop.f32.mrb[0].mxu0
    %5396 = vmatprep.mubr.f32.mxu0 0.0
    %5397 = vmatmul.mubr.f32.gmra.mrb[0].mxu0 %v3340
    %v5398 = vpop.f32.mrb[0].mxu0
    %v5399 = vadd.f32 %v5014, %v5398
    %v5400 = vpop.f32.mrb[0].mxu0
    %5401 = vmatprep.mubr.f32.mxu0 0.0
    %5402 = vmatmul.mubr.f32.gmra.mrb[0].mxu0 %v3341
    %v5403 = vpop.f32.mrb[0].mxu0
    %v5404 = vadd.f32 %v5019, %v5403
    %v5405 = vpop.f32.mrb[0].mxu0
    %5406 = vmatprep.mubr.f32.mxu0 0.0
    %5407 = vmatmul.mubr.f32.gmra.mrb[0].mxu0 %v3342
    %v5408 = vpop.f32.mrb[0].mxu0
    %v5409 = vadd.f32 %v5024, %v5408
    %v5410 = vpop.f32.mrb[0].mxu0
    %5411 = vdwg.mxu0
    %v5412 = vadd.f32 %v5094, %v5099
    %v5413 = vadd.f32 %v5412, %v5104
    %v5414 = vadd.f32 %v5413, %v5109
    %v5415 = vadd.f32 %v5414, %v5114
    %v5416 = vadd.f32 %v5415, %v5119
    %v5417 = vadd.f32 %v5416, %v5124
    %v5418 = vadd.f32 %v5417, %v5129
    %v5419 = vadd.f32 %v5418, %v5134
    %v5420 = vadd.f32 %v5419, %v5139
    %v5421 = vadd.f32 %v5420, %v5144
    %v5422 = vadd.f32 %v5421, %v5149
    %v5423 = vadd.f32 %v5422, %v5154
    %v5424 = vadd.f32 %v5423, %v5159
    %v5425 = vadd.f32 %v5424, %v5164
    %v5426 = vadd.f32 %v5425, %v5169
    %v5427 = vadd.f32 %v5426, %v5174
    %v5428 = vadd.f32 %v5427, %v5179
    %v5429 = vadd.f32 %v5428, %v5184
    %v5430 = vadd.f32 %v5429, %v5189
    %v5431 = vadd.f32 %v5430, %v5194
    %v5432 = vadd.f32 %v5431, %v5199
    %v5433 = vadd.f32 %v5432, %v5204
    %v5434 = vadd.f32 %v5433, %v5209
    %v5435 = vadd.f32 %v5434, %v5214
    %v5436 = vadd.f32 %v5435, %v5219
    %v5437 = vadd.f32 %v5436, %v5224
    %v5438 = vadd.f32 %v5437, %v5229
    %v5439 = vadd.f32 %v5438, %v5234
    %v5440 = vadd.f32 %v5439, %v5239
    %v5441 = vadd.f32 %v5440, %v5244
    %v5442 = vadd.f32 %v5441, %v5249
    %v5443 = vadd.f32 %v5442, %v5254
    %v5444 = vadd.f32 %v5443, %v5259
    %v5445 = vadd.f32 %v5444, %v5264
    %v5446 = vadd.f32 %v5445, %v5269
    %v5447 = vadd.f32 %v5446, %v5274
    %v5448 = vadd.f32 %v5447, %v5279
    %v5449 = vadd.f32 %v5448, %v5284
    %v5450 = vadd.f32 %v5449, %v5289
    %v5451 = vadd.f32 %v5450, %v5294
    %v5452 = vadd.f32 %v5451, %v5299
    %v5453 = vadd.f32 %v5452, %v5304
    %v5454 = vadd.f32 %v5453, %v5309
    %v5455 = vadd.f32 %v5454, %v5314
    %v5456 = vadd.f32 %v5455, %v5319
    %v5457 = vadd.f32 %v5456, %v5324
    %v5458 = vadd.f32 %v5457, %v5329
    %v5459 = vadd.f32 %v5458, %v5334
    %v5460 = vadd.f32 %v5459, %v5339
    %v5461 = vadd.f32 %v5460, %v5344
    %v5462 = vadd.f32 %v5461, %v5349
    %v5463 = vadd.f32 %v5462, %v5354
    %v5464 = vadd.f32 %v5463, %v5359
    %v5465 = vadd.f32 %v5464, %v5364
    %v5466 = vadd.f32 %v5465, %v5369
    %v5467 = vadd.f32 %v5466, %v5374
    %v5468 = vadd.f32 %v5467, %v5379
    %v5469 = vadd.f32 %v5468, %v5384
    %v5470 = vadd.f32 %v5469, %v5389
    %v5471 = vadd.f32 %v5470, %v5394
    %v5472 = vadd.f32 %v5471, %v5399
    %v5473 = vadd.f32 %v5472, %v5404
    %v5474 = vadd.f32 %v5473, %v5409
    %v5475 = vrot.slane %v5474, 4
    %v5476 = vadd.f32 %v5474, %v5475
    %v5477 = vrot.slane %v5476, 2
    %v5478 = vadd.f32 %v5476, %v5477
    %v5479 = vrot.slane %v5478, 1
    %v5480 = vadd.f32 %v5478, %v5479
    %v5481 = vmul.f32 %v5480, 0.001953125
    %v5482 = vsub.f32 %v5094, %v5481
    %v5483 = vsub.f32 %v5099, %v5481
    %v5484 = vsub.f32 %v5104, %v5481
    %v5485 = vsub.f32 %v5109, %v5481
    %v5486 = vsub.f32 %v5114, %v5481
    %v5487 = vsub.f32 %v5119, %v5481
    %v5488 = vsub.f32 %v5124, %v5481
    %v5489 = vsub.f32 %v5129, %v5481
    %v5490 = vsub.f32 %v5134, %v5481
    %v5491 = vsub.f32 %v5139, %v5481
    %v5492 = vsub.f32 %v5144, %v5481
    %v5493 = vsub.f32 %v5149, %v5481
    %v5494 = vsub.f32 %v5154, %v5481
    %v5495 = vsub.f32 %v5159, %v5481
    %v5496 = vsub.f32 %v5164, %v5481
    %v5497 = vsub.f32 %v5169, %v5481
    %v5498 = vsub.f32 %v5174, %v5481
    %v5499 = vsub.f32 %v5179, %v5481
    %v5500 = vsub.f32 %v5184, %v5481
    %v5501 = vsub.f32 %v5189, %v5481
    %v5502 = vsub.f32 %v5194, %v5481
    %v5503 = vsub.f32 %v5199, %v5481
    %v5504 = vsub.f32 %v5204, %v5481
    %v5505 = vsub.f32 %v5209, %v5481
    %v5506 = vsub.f32 %v5214, %v5481
    %v5507 = vsub.f32 %v5219, %v5481
    %v5508 = vsub.f32 %v5224, %v5481
    %v5509 = vsub.f32 %v5229, %v5481
    %v5510 = vsub.f32 %v5234, %v5481
    %v5511 = vsub.f32 %v5239, %v5481
    %v5512 = vsub.f32 %v5244, %v5481
    %v5513 = vsub.f32 %v5249, %v5481
    %v5514 = vsub.f32 %v5254, %v5481
    %v5515 = vsub.f32 %v5259, %v5481
    %v5516 = vsub.f32 %v5264, %v5481
    %v5517 = vsub.f32 %v5269, %v5481
    %v5518 = vsub.f32 %v5274, %v5481
    %v5519 = vsub.f32 %v5279, %v5481
    %v5520 = vsub.f32 %v5284, %v5481
    %v5521 = vsub.f32 %v5289, %v5481
    %v5522 = vsub.f32 %v5294, %v5481
    %v5523 = vsub.f32 %v5299, %v5481
    %v5524 = vsub.f32 %v5304, %v5481
    %v5525 = vsub.f32 %v5309, %v5481
    %v5526 = vsub.f32 %v5314, %v5481
    %v5527 = vsub.f32 %v5319, %v5481
    %v5528 = vsub.f32 %v5324, %v5481
    %v5529 = vsub.f32 %v5329, %v5481
    %v5530 = vsub.f32 %v5334, %v5481
    %v5531 = vsub.f32 %v5339, %v5481
    %v5532 = vsub.f32 %v5344, %v5481
    %v5533 = vsub.f32 %v5349, %v5481
    %v5534 = vsub.f32 %v5354, %v5481
    %v5535 = vsub.f32 %v5359, %v5481
    %v5536 = vsub.f32 %v5364, %v5481
    %v5537 = vsub.f32 %v5369, %v5481
    %v5538 = vsub.f32 %v5374, %v5481
    %v5539 = vsub.f32 %v5379, %v5481
    %v5540 = vsub.f32 %v5384, %v5481
    %v5541 = vsub.f32 %v5389, %v5481
    %v5542 = vsub.f32 %v5394, %v5481
    %v5543 = vsub.f32 %v5399, %v5481
    %v5544 = vsub.f32 %v5404, %v5481
    %v5545 = vsub.f32 %v5409, %v5481
    %v5546 = vmul.f32 %v5482, %v5482
    %v5547 = vmul.f32 %v5483, %v5483
    %v5548 = vmul.f32 %v5484, %v5484
    %v5549 = vmul.f32 %v5485, %v5485
    %v5550 = vmul.f32 %v5486, %v5486
    %v5551 = vmul.f32 %v5487, %v5487
    %v5552 = vmul.f32 %v5488, %v5488
    %v5553 = vmul.f32 %v5489, %v5489
    %v5554 = vmul.f32 %v5490, %v5490
    %v5555 = vmul.f32 %v5491, %v5491
    %v5556 = vmul.f32 %v5492, %v5492
    %v5557 = vmul.f32 %v5493, %v5493
    %v5558 = vmul.f32 %v5494, %v5494
    %v5559 = vmul.f32 %v5495, %v5495
    %v5560 = vmul.f32 %v5496, %v5496
    %v5561 = vmul.f32 %v5497, %v5497
    %v5562 = vmul.f32 %v5498, %v5498
    %v5563 = vmul.f32 %v5499, %v5499
    %v5564 = vmul.f32 %v5500, %v5500
    %v5565 = vmul.f32 %v5501, %v5501
    %v5566 = vmul.f32 %v5502, %v5502
    %v5567 = vmul.f32 %v5503, %v5503
    %v5568 = vmul.f32 %v5504, %v5504
    %v5569 = vmul.f32 %v5505, %v5505
    %v5570 = vmul.f32 %v5506, %v5506
    %v5571 = vmul.f32 %v5507, %v5507
    %v5572 = vmul.f32 %v5508, %v5508
    %v5573 = vmul.f32 %v5509, %v5509
    %v5574 = vmul.f32 %v5510, %v5510
    %v5575 = vmul.f32 %v5511, %v5511
    %v5576 = vmul.f32 %v5512, %v5512
    %v5577 = vmul.f32 %v5513, %v5513
    %v5578 = vmul.f32 %v5514, %v5514
    %v5579 = vmul.f32 %v5515, %v5515
    %v5580 = vmul.f32 %v5516, %v5516
    %v5581 = vmul.f32 %v5517, %v5517
    %v5582 = vmul.f32 %v5518, %v5518
    %v5583 = vmul.f32 %v5519, %v5519
    %v5584 = vmul.f32 %v5520, %v5520
    %v5585 = vmul.f32 %v5521, %v5521
    %v5586 = vmul.f32 %v5522, %v5522
    %v5587 = vmul.f32 %v5523, %v5523
    %v5588 = vmul.f32 %v5524, %v5524
    %v5589 = vmul.f32 %v5525, %v5525
    %v5590 = vmul.f32 %v5526, %v5526
    %v5591 = vmul.f32 %v5527, %v5527
    %v5592 = vmul.f32 %v5528, %v5528
    %v5593 = vmul.f32 %v5529, %v5529
    %v5594 = vmul.f32 %v5530, %v5530
    %v5595 = vmul.f32 %v5531, %v5531
    %v5596 = vmul.f32 %v5532, %v5532
    %v5597 = vmul.f32 %v5533, %v5533
    %v5598 = vmul.f32 %v5534, %v5534
    %v5599 = vmul.f32 %v5535, %v5535
    %v5600 = vmul.f32 %v5536, %v5536
    %v5601 = vmul.f32 %v5537, %v5537
    %v5602 = vmul.f32 %v5538, %v5538
    %v5603 = vmul.f32 %v5539, %v5539
    %v5604 = vmul.f32 %v5540, %v5540
    %v5605 = vmul.f32 %v5541, %v5541
    %v5606 = vmul.f32 %v5542, %v5542
    %v5607 = vmul.f32 %v5543, %v5543
    %v5608 = vmul.f32 %v5544, %v5544
    %v5609 = vmul.f32 %v5545, %v5545
    %v5610 = vadd.f32 %v5546, %v5547
    %v5611 = vadd.f32 %v5610, %v5548
    %v5612 = vadd.f32 %v5611, %v5549
    %v5613 = vadd.f32 %v5612, %v5550
    %v5614 = vadd.f32 %v5613, %v5551
    %v5615 = vadd.f32 %v5614, %v5552
    %v5616 = vadd.f32 %v5615, %v5553
    %v5617 = vadd.f32 %v5616, %v5554
    %v5618 = vadd.f32 %v5617, %v5555
    %v5619 = vadd.f32 %v5618, %v5556
    %v5620 = vadd.f32 %v5619, %v5557
    %v5621 = vadd.f32 %v5620, %v5558
    %v5622 = vadd.f32 %v5621, %v5559
    %v5623 = vadd.f32 %v5622, %v5560
    %v5624 = vadd.f32 %v5623, %v5561
    %v5625 = vadd.f32 %v5624, %v5562
    %v5626 = vadd.f32 %v5625, %v5563
    %v5627 = vadd.f32 %v5626, %v5564
    %v5628 = vadd.f32 %v5627, %v5565
    %v5629 = vadd.f32 %v5628, %v5566
    %v5630 = vadd.f32 %v5629, %v5567
    %v5631 = vadd.f32 %v5630, %v5568
    %v5632 = vadd.f32 %v5631, %v5569
    %v5633 = vadd.f32 %v5632, %v5570
    %v5634 = vadd.f32 %v5633, %v5571
    %v5635 = vadd.f32 %v5634, %v5572
    %v5636 = vadd.f32 %v5635, %v5573
    %v5637 = vadd.f32 %v5636, %v5574
    %v5638 = vadd.f32 %v5637, %v5575
    %v5639 = vadd.f32 %v5638, %v5576
    %v5640 = vadd.f32 %v5639, %v5577
    %v5641 = vadd.f32 %v5640, %v5578
    %v5642 = vadd.f32 %v5641, %v5579
    %v5643 = vadd.f32 %v5642, %v5580
    %v5644 = vadd.f32 %v5643, %v5581
    %v5645 = vadd.f32 %v5644, %v5582
    %v5646 = vadd.f32 %v5645, %v5583
    %v5647 = vadd.f32 %v5646, %v5584
    %v5648 = vadd.f32 %v5647, %v5585
    %v5649 = vadd.f32 %v5648, %v5586
    %v5650 = vadd.f32 %v5649, %v5587
    %v5651 = vadd.f32 %v5650, %v5588
    %v5652 = vadd.f32 %v5651, %v5589
    %v5653 = vadd.f32 %v5652, %v5590
    %v5654 = vadd.f32 %v5653, %v5591
    %v5655 = vadd.f32 %v5654, %v5592
    %v5656 = vadd.f32 %v5655, %v5593
    %v5657 = vadd.f32 %v5656, %v5594
    %v5658 = vadd.f32 %v5657, %v5595
    %v5659 = vadd.f32 %v5658, %v5596
    %v5660 = vadd.f32 %v5659, %v5597
    %v5661 = vadd.f32 %v5660, %v5598
    %v5662 = vadd.f32 %v5661, %v5599
    %v5663 = vadd.f32 %v5662, %v5600
    %v5664 = vadd.f32 %v5663, %v5601
    %v5665 = vadd.f32 %v5664, %v5602
    %v5666 = vadd.f32 %v5665, %v5603
    %v5667 = vadd.f32 %v5666, %v5604
    %v5668 = vadd.f32 %v5667, %v5605
    %v5669 = vadd.f32 %v5668, %v5606
    %v5670 = vadd.f32 %v5669, %v5607
    %v5671 = vadd.f32 %v5670, %v5608
    %v5672 = vadd.f32 %v5671, %v5609
    %v5673 = vrot.slane %v5672, 4
    %v5674 = vadd.f32 %v5672, %v5673
    %v5675 = vrot.slane %v5674, 2
    %v5676 = vadd.f32 %v5674, %v5675
    %v5677 = vrot.slane %v5676, 1
    %v5678 = vadd.f32 %v5676, %v5677
    %v5679 = vmul.f32 %v5678, 0.001953125
    %v5680 = vld [vmem:[%s5] sm:$0x1]
    %v5681 = vadd.f32 %v5679, 1e-05
    %v5682 = vrsqrt.pop %v5681
    %v5683 = vmul.f32 %v5680, %v5682
    %v5685 = vlaneseq
    %v5686 = vshrl.u32 %v5685, 7
    %v5687 = vsub.s32 0, %v5686
    %v5688 = vrot.slane %v5683, %v5687
    %v5690 = vmul.f32 %v5482, %v5688
    %v5691 = vmul.f32 %v5483, %v5688
    %v5692 = vmul.f32 %v5484, %v5688
    %v5693 = vmul.f32 %v5485, %v5688
    %v5694 = vmul.f32 %v5486, %v5688
    %v5695 = vmul.f32 %v5487, %v5688
    %v5696 = vmul.f32 %v5488, %v5688
    %v5697 = vmul.f32 %v5489, %v5688
    %v5698 = vmul.f32 %v5490, %v5688
    %v5699 = vmul.f32 %v5491, %v5688
    %v5700 = vmul.f32 %v5492, %v5688
    %v5701 = vmul.f32 %v5493, %v5688
    %v5702 = vmul.f32 %v5494, %v5688
    %v5703 = vmul.f32 %v5495, %v5688
    %v5704 = vmul.f32 %v5496, %v5688
    %v5705 = vmul.f32 %v5497, %v5688
    %v5706 = vmul.f32 %v5498, %v5688
    %v5707 = vmul.f32 %v5499, %v5688
    %v5708 = vmul.f32 %v5500, %v5688
    %v5709 = vmul.f32 %v5501, %v5688
    %v5710 = vmul.f32 %v5502, %v5688
    %v5711 = vmul.f32 %v5503, %v5688
    %v5712 = vmul.f32 %v5504, %v5688
    %v5713 = vmul.f32 %v5505, %v5688
    %v5714 = vmul.f32 %v5506, %v5688
    %v5715 = vmul.f32 %v5507, %v5688
    %v5716 = vmul.f32 %v5508, %v5688
    %v5717 = vmul.f32 %v5509, %v5688
    %v5718 = vmul.f32 %v5510, %v5688
    %v5719 = vmul.f32 %v5511, %v5688
    %v5720 = vmul.f32 %v5512, %v5688
    %v5721 = vmul.f32 %v5513, %v5688
    %v5722 = vmul.f32 %v5514, %v5688
    %v5723 = vmul.f32 %v5515, %v5688
    %v5724 = vmul.f32 %v5516, %v5688
    %v5725 = vmul.f32 %v5517, %v5688
    %v5726 = vmul.f32 %v5518, %v5688
    %v5727 = vmul.f32 %v5519, %v5688
    %v5728 = vmul.f32 %v5520, %v5688
    %v5729 = vmul.f32 %v5521, %v5688
    %v5730 = vmul.f32 %v5522, %v5688
    %v5731 = vmul.f32 %v5523, %v5688
    %v5732 = vmul.f32 %v5524, %v5688
    %v5733 = vmul.f32 %v5525, %v5688
    %v5734 = vmul.f32 %v5526, %v5688
    %v5735 = vmul.f32 %v5527, %v5688
    %v5736 = vmul.f32 %v5528, %v5688
    %v5737 = vmul.f32 %v5529, %v5688
    %v5738 = vmul.f32 %v5530, %v5688
    %v5739 = vmul.f32 %v5531, %v5688
    %v5740 = vmul.f32 %v5532, %v5688
    %v5741 = vmul.f32 %v5533, %v5688
    %v5742 = vmul.f32 %v5534, %v5688
    %v5743 = vmul.f32 %v5535, %v5688
    %v5744 = vmul.f32 %v5536, %v5688
    %v5745 = vmul.f32 %v5537, %v5688
    %v5746 = vmul.f32 %v5538, %v5688
    %v5747 = vmul.f32 %v5539, %v5688
    %v5748 = vmul.f32 %v5540, %v5688
    %v5749 = vmul.f32 %v5541, %v5688
    %v5750 = vmul.f32 %v5542, %v5688
    %v5751 = vmul.f32 %v5543, %v5688
    %v5752 = vmul.f32 %v5544, %v5688
    %v5753 = vmul.f32 %v5545, %v5688
    %v5754 = vld [vmem:[%s6] sm:$0x1]
    %v5756 = vlaneseq
    %v5757 = vshrl.u32 %v5756, 7
    %v5758 = vsub.s32 0, %v5757
    %v5759 = vrot.slane %v5754, %v5758
    %v5761 = vadd.f32 %v5690, %v5759
    %v5762 = vadd.f32 %v5691, %v5759
    %v5763 = vadd.f32 %v5692, %v5759
    %v5764 = vadd.f32 %v5693, %v5759
    %v5765 = vadd.f32 %v5694, %v5759
    %v5766 = vadd.f32 %v5695, %v5759
    %v5767 = vadd.f32 %v5696, %v5759
    %v5768 = vadd.f32 %v5697, %v5759
    %v5769 = vadd.f32 %v5698, %v5759
    %v5770 = vadd.f32 %v5699, %v5759
    %v5771 = vadd.f32 %v5700, %v5759
    %v5772 = vadd.f32 %v5701, %v5759
    %v5773 = vadd.f32 %v5702, %v5759
    %v5774 = vadd.f32 %v5703, %v5759
    %v5775 = vadd.f32 %v5704, %v5759
    %v5776 = vadd.f32 %v5705, %v5759
    %v5777 = vadd.f32 %v5706, %v5759
    %v5778 = vadd.f32 %v5707, %v5759
    %v5779 = vadd.f32 %v5708, %v5759
    %v5780 = vadd.f32 %v5709, %v5759
    %v5781 = vadd.f32 %v5710, %v5759
    %v5782 = vadd.f32 %v5711, %v5759
    %v5783 = vadd.f32 %v5712, %v5759
    %v5784 = vadd.f32 %v5713, %v5759
    %v5785 = vadd.f32 %v5714, %v5759
    %v5786 = vadd.f32 %v5715, %v5759
    %v5787 = vadd.f32 %v5716, %v5759
    %v5788 = vadd.f32 %v5717, %v5759
    %v5789 = vadd.f32 %v5718, %v5759
    %v5790 = vadd.f32 %v5719, %v5759
    %v5791 = vadd.f32 %v5720, %v5759
    %v5792 = vadd.f32 %v5721, %v5759
    %v5793 = vadd.f32 %v5722, %v5759
    %v5794 = vadd.f32 %v5723, %v5759
    %v5795 = vadd.f32 %v5724, %v5759
    %v5796 = vadd.f32 %v5725, %v5759
    %v5797 = vadd.f32 %v5726, %v5759
    %v5798 = vadd.f32 %v5727, %v5759
    %v5799 = vadd.f32 %v5728, %v5759
    %v5800 = vadd.f32 %v5729, %v5759
    %v5801 = vadd.f32 %v5730, %v5759
    %v5802 = vadd.f32 %v5731, %v5759
    %v5803 = vadd.f32 %v5732, %v5759
    %v5804 = vadd.f32 %v5733, %v5759
    %v5805 = vadd.f32 %v5734, %v5759
    %v5806 = vadd.f32 %v5735, %v5759
    %v5807 = vadd.f32 %v5736, %v5759
    %v5808 = vadd.f32 %v5737, %v5759
    %v5809 = vadd.f32 %v5738, %v5759
    %v5810 = vadd.f32 %v5739, %v5759
    %v5811 = vadd.f32 %v5740, %v5759
    %v5812 = vadd.f32 %v5741, %v5759
    %v5813 = vadd.f32 %v5742, %v5759
    %v5814 = vadd.f32 %v5743, %v5759
    %v5815 = vadd.f32 %v5744, %v5759
    %v5816 = vadd.f32 %v5745, %v5759
    %v5817 = vadd.f32 %v5746, %v5759
    %v5818 = vadd.f32 %v5747, %v5759
    %v5819 = vadd.f32 %v5748, %v5759
    %v5820 = vadd.f32 %v5749, %v5759
    %v5821 = vadd.f32 %v5750, %v5759
    %v5822 = vadd.f32 %v5751, %v5759
    %v5823 = vadd.f32 %v5752, %v5759
    %v5824 = vadd.f32 %v5753, %v5759
    %v5825 = vmax.f32 %v5761, 0.0
    %v5826 = vmax.f32 %v5762, 0.0
    %v5827 = vmax.f32 %v5763, 0.0
    %v5828 = vmax.f32 %v5764, 0.0
    %v5829 = vmax.f32 %v5765, 0.0
    %v5830 = vmax.f32 %v5766, 0.0
    %v5831 = vmax.f32 %v5767, 0.0
    %v5832 = vmax.f32 %v5768, 0.0
    %v5833 = vmax.f32 %v5769, 0.0
    %v5834 = vmax.f32 %v5770, 0.0
    %v5835 = vmax.f32 %v5771, 0.0
    %v5836 = vmax.f32 %v5772, 0.0
    %v5837 = vmax.f32 %v5773, 0.0
    %v5838 = vmax.f32 %v5774, 0.0
    %v5839 = vmax.f32 %v5775, 0.0
    %v5840 = vmax.f32 %v5776, 0.0
    %v5841 = vmax.f32 %v5777, 0.0
    %v5842 = vmax.f32 %v5778, 0.0
    %v5843 = vmax.f32 %v5779, 0.0
    %v5844 = vmax.f32 %v5780, 0.0
    %v5845 = vmax.f32 %v5781, 0.0
    %v5846 = vmax.f32 %v5782, 0.0
    %v5847 = vmax.f32 %v5783, 0.0
    %v5848 = vmax.f32 %v5784, 0.0
    %v5849 = vmax.f32 %v5785, 0.0
    %v5850 = vmax.f32 %v5786, 0.0
    %v5851 = vmax.f32 %v5787, 0.0
    %v5852 = vmax.f32 %v5788, 0.0
    %v5853 = vmax.f32 %v5789, 0.0
    %v5854 = vmax.f32 %v5790, 0.0
    %v5855 = vmax.f32 %v5791, 0.0
    %v5856 = vmax.f32 %v5792, 0.0
    %v5857 = vmax.f32 %v5793, 0.0
    %v5858 = vmax.f32 %v5794, 0.0
    %v5859 = vmax.f32 %v5795, 0.0
    %v5860 = vmax.f32 %v5796, 0.0
    %v5861 = vmax.f32 %v5797, 0.0
    %v5862 = vmax.f32 %v5798, 0.0
    %v5863 = vmax.f32 %v5799, 0.0
    %v5864 = vmax.f32 %v5800, 0.0
    %v5865 = vmax.f32 %v5801, 0.0
    %v5866 = vmax.f32 %v5802, 0.0
    %v5867 = vmax.f32 %v5803, 0.0
    %v5868 = vmax.f32 %v5804, 0.0
    %v5869 = vmax.f32 %v5805, 0.0
    %v5870 = vmax.f32 %v5806, 0.0
    %v5871 = vmax.f32 %v5807, 0.0
    %v5872 = vmax.f32 %v5808, 0.0
    %v5873 = vmax.f32 %v5809, 0.0
    %v5874 = vmax.f32 %v5810, 0.0
    %v5875 = vmax.f32 %v5811, 0.0
    %v5876 = vmax.f32 %v5812, 0.0
    %v5877 = vmax.f32 %v5813, 0.0
    %v5878 = vmax.f32 %v5814, 0.0
    %v5879 = vmax.f32 %v5815, 0.0
    %v5880 = vmax.f32 %v5816, 0.0
    %v5881 = vmax.f32 %v5817, 0.0
    %v5882 = vmax.f32 %v5818, 0.0
    %v5883 = vmax.f32 %v5819, 0.0
    %v5884 = vmax.f32 %v5820, 0.0
    %v5885 = vmax.f32 %v5821, 0.0
    %v5886 = vmax.f32 %v5822, 0.0
    %v5887 = vmax.f32 %v5823, 0.0
    %v5888 = vmax.f32 %v5824, 0.0
    %5889 = vst [vmem:[%s236 + $0x8] sm:$0xff] %v5825
    %5890 = vst [vmem:[%s236 + $0x10] sm:$0xff] %v5826
    %5891 = vst [vmem:[%s236 + $0x28] sm:$0xff] %v5827
    %5892 = vst [vmem:[%s236 + $0x30] sm:$0xff] %v5828
    %5893 = vst [vmem:[%s236 + $0x48] sm:$0xff] %v5829
    %5894 = vst [vmem:[%s236 + $0x50] sm:$0xff] %v5830
    %5895 = vst [vmem:[%s236 + $0x68] sm:$0xff] %v5831
    %5896 = vst [vmem:[%s236 + $0x70] sm:$0xff] %v5832
    %5897 = vst [vmem:[%s236 + $0x88] sm:$0xff] %v5833
    %5898 = vst [vmem:[%s236 + $0x90] sm:$0xff] %v5834
    %5899 = vst [vmem:[%s236 + $0xa8] sm:$0xff] %v5835
    %5900 = vst [vmem:[%s236 + $0xb0] sm:$0xff] %v5836
    %5901 = vst [vmem:[%s236 + $0xc8] sm:$0xff] %v5837
    %5902 = vst [vmem:[%s236 + $0xd0] sm:$0xff] %v5838
    %5903 = vst [vmem:[%s236 + $0xe8] sm:$0xff] %v5839
    %5904 = vst [vmem:[%s236 + $0xf0] sm:$0xff] %v5840
    %5905 = vst [vmem:[%s236 + $0x108] sm:$0xff] %v5841
    %5906 = vst [vmem:[%s236 + $0x110] sm:$0xff] %v5842
    %5907 = vst [vmem:[%s236 + $0x128] sm:$0xff] %v5843
    %5908 = vst [vmem:[%s236 + $0x130] sm:$0xff] %v5844
    %5909 = vst [vmem:[%s236 + $0x148] sm:$0xff] %v5845
    %5910 = vst [vmem:[%s236 + $0x150] sm:$0xff] %v5846
    %5911 = vst [vmem:[%s236 + $0x168] sm:$0xff] %v5847
    %5912 = vst [vmem:[%s236 + $0x170] sm:$0xff] %v5848
    %5913 = vst [vmem:[%s236 + $0x188] sm:$0xff] %v5849
    %5914 = vst [vmem:[%s236 + $0x190] sm:$0xff] %v5850
    %5915 = vst [vmem:[%s236 + $0x1a8] sm:$0xff] %v5851
    %5916 = vst [vmem:[%s236 + $0x1b0] sm:$0xff] %v5852
    %5917 = vst [vmem:[%s236 + $0x1c8] sm:$0xff] %v5853
    %5918 = vst [vmem:[%s236 + $0x1d0] sm:$0xff] %v5854
    %5919 = vst [vmem:[%s236 + $0x1e8] sm:$0xff] %v5855
    %5920 = vst [vmem:[%s236 + $0x1f0] sm:$0xff] %v5856
    %5921 = vst [vmem:[%s236 + $0x248] sm:$0xff] %v5857
    %5922 = vst [vmem:[%s236 + $0x250] sm:$0xff] %v5858
    %5923 = vst [vmem:[%s236 + $0x268] sm:$0xff] %v5859
    %5924 = vst [vmem:[%s236 + $0x270] sm:$0xff] %v5860
    %5925 = vst [vmem:[%s236 + $0x288] sm:$0xff] %v5861
    %5926 = vst [vmem:[%s236 + $0x290] sm:$0xff] %v5862
    %5927 = vst [vmem:[%s236 + $0x2a8] sm:$0xff] %v5863
    %5928 = vst [vmem:[%s236 + $0x2b0] sm:$0xff] %v5864
    %5929 = vst [vmem:[%s236 + $0x2c8] sm:$0xff] %v5865
    %5930 = vst [vmem:[%s236 + $0x2d0] sm:$0xff] %v5866
    %5931 = vst [vmem:[%s236 + $0x2e8] sm:$0xff] %v5867
    %5932 = vst [vmem:[%s236 + $0x2f0] sm:$0xff] %v5868
    %5933 = vst [vmem:[%s236 + $0x308] sm:$0xff] %v5869
    %5934 = vst [vmem:[%s236 + $0x310] sm:$0xff] %v5870
    %5935 = vst [vmem:[%s236 + $0x328] sm:$0xff] %v5871
    %5936 = vst [vmem:[%s236 + $0x330] sm:$0xff] %v5872
    %5937 = vst [vmem:[%s236 + $0x348] sm:$0xff] %v5873
    %5938 = vst [vmem:[%s236 + $0x350] sm:$0xff] %v5874
    %5939 = vst [vmem:[%s236 + $0x368] sm:$0xff] %v5875
    %5940 = vst [vmem:[%s236 + $0x370] sm:$0xff] %v5876
    %5941 = vst [vmem:[%s236 + $0x388] sm:$0xff] %v5877
    %5942 = vst [vmem:[%s236 + $0x390] sm:$0xff] %v5878
    %5943 = vst [vmem:[%s236 + $0x3a8] sm:$0xff] %v5879
    %5944 = vst [vmem:[%s236 + $0x3b0] sm:$0xff] %v5880
    %5945 = vst [vmem:[%s236 + $0x3c8] sm:$0xff] %v5881
    %5946 = vst [vmem:[%s236 + $0x3d0] sm:$0xff] %v5882
    %5947 = vst [vmem:[%s236 + $0x3e8] sm:$0xff] %v5883
    %5948 = vst [vmem:[%s236 + $0x3f0] sm:$0xff] %v5884
    %5949 = vst [vmem:[%s236 + $0x408] sm:$0xff] %v5885
    %5950 = vst [vmem:[%s236 + $0x410] sm:$0xff] %v5886
    %5951 = vst [vmem:[%s236 + $0x428] sm:$0xff] %v5887
    %5952 = vst [vmem:[%s236 + $0x430] sm:$0xff] %v5888
    %v5953 = vld [vmem:[#allocation2 + $0x7] sm:$0xff]
    %v5954 = vld [vmem:[#allocation2 + $0xf] sm:$0xff]
    %v5955 = vld [vmem:[#allocation2 + $0x27] sm:$0xff]
    %v5956 = vld [vmem:[#allocation2 + $0x2f] sm:$0xff]
    %v5957 = vld [vmem:[#allocation2 + $0x47] sm:$0xff]
    %v5958 = vld [vmem:[#allocation2 + $0x4f] sm:$0xff]
    %v5959 = vld [vmem:[#allocation2 + $0x67] sm:$0xff]
    %v5960 = vld [vmem:[#allocation2 + $0x6f] sm:$0xff]
    %v5961 = vld [vmem:[#allocation2 + $0x87] sm:$0xff]
    %v5962 = vld [vmem:[#allocation2 + $0x8f] sm:$0xff]
    %v5963 = vld [vmem:[#allocation2 + $0xa7] sm:$0xff]
    %v5964 = vld [vmem:[#allocation2 + $0xaf] sm:$0xff]
    %v5965 = vld [vmem:[#allocation2 + $0xc7] sm:$0xff]
    %v5966 = vld [vmem:[#allocation2 + $0xcf] sm:$0xff]
    %v5967 = vld [vmem:[#allocation2 + $0xe7] sm:$0xff]
    %v5968 = vld [vmem:[#allocation2 + $0xef] sm:$0xff]
    %v5969 = vld [vmem:[#allocation2 + $0x107] sm:$0xff]
    %v5970 = vld [vmem:[#allocation2 + $0x10f] sm:$0xff]
    %v5971 = vld [vmem:[#allocation2 + $0x127] sm:$0xff]
    %v5972 = vld [vmem:[#allocation2 + $0x12f] sm:$0xff]
    %v5973 = vld [vmem:[#allocation2 + $0x147] sm:$0xff]
    %v5974 = vld [vmem:[#allocation2 + $0x14f] sm:$0xff]
    %v5975 = vld [vmem:[#allocation2 + $0x167] sm:$0xff]
    %v5976 = vld [vmem:[#allocation2 + $0x16f] sm:$0xff]
    %v5977 = vld [vmem:[#allocation2 + $0x187] sm:$0xff]
    %v5978 = vld [vmem:[#allocation2 + $0x18f] sm:$0xff]
    %v5979 = vld [vmem:[#allocation2 + $0x1a7] sm:$0xff]
    %v5980 = vld [vmem:[#allocation2 + $0x1af] sm:$0xff]
    %v5981 = vld [vmem:[#allocation2 + $0x1c7] sm:$0xff]
    %v5982 = vld [vmem:[#allocation2 + $0x1cf] sm:$0xff]
    %v5983 = vld [vmem:[#allocation2 + $0x1e7] sm:$0xff]
    %v5984 = vld [vmem:[#allocation2 + $0x1ef] sm:$0xff]
    %v5985 = vld [vmem:[#allocation2 + $0x207] sm:$0xff]
    %v5986 = vld [vmem:[#allocation2 + $0x20f] sm:$0xff]
    %v5987 = vld [vmem:[#allocation2 + $0x227] sm:$0xff]
    %v5988 = vld [vmem:[#allocation2 + $0x22f] sm:$0xff]
    %v5989 = vld [vmem:[#allocation2 + $0x247] sm:$0xff]
    %v5990 = vld [vmem:[#allocation2 + $0x24f] sm:$0xff]
    %v5991 = vld [vmem:[#allocation2 + $0x267] sm:$0xff]
    %v5992 = vld [vmem:[#allocation2 + $0x26f] sm:$0xff]
    %v5993 = vld [vmem:[#allocation2 + $0x287] sm:$0xff]
    %v5994 = vld [vmem:[#allocation2 + $0x28f] sm:$0xff]
    %v5995 = vld [vmem:[#allocation2 + $0x2a7] sm:$0xff]
    %v5996 = vld [vmem:[#allocation2 + $0x2af] sm:$0xff]
    %v5997 = vld [vmem:[#allocation2 + $0x2c7] sm:$0xff]
    %v5998 = vld [vmem:[#allocation2 + $0x2cf] sm:$0xff]
    %v5999 = vld [vmem:[#allocation2 + $0x2e7] sm:$0xff]
    %v6000 = vld [vmem:[#allocation2 + $0x2ef] sm:$0xff]
    %v6001 = vld [vmem:[#allocation2 + $0x307] sm:$0xff]
    %v6002 = vld [vmem:[#allocation2 + $0x30f] sm:$0xff]
    %v6003 = vld [vmem:[#allocation2 + $0x327] sm:$0xff]
    %v6004 = vld [vmem:[#allocation2 + $0x32f] sm:$0xff]
    %v6005 = vld [vmem:[#allocation2 + $0x347] sm:$0xff]
    %v6006 = vld [vmem:[#allocation2 + $0x34f] sm:$0xff]
    %v6007 = vld [vmem:[#allocation2 + $0x367] sm:$0xff]
    %v6008 = vld [vmem:[#allocation2 + $0x36f] sm:$0xff]
    %v6009 = vld [vmem:[#allocation2 + $0x387] sm:$0xff]
    %v6010 = vld [vmem:[#allocation2 + $0x38f] sm:$0xff]
    %v6011 = vld [vmem:[#allocation2 + $0x3a7] sm:$0xff]
    %v6012 = vld [vmem:[#allocation2 + $0x3af] sm:$0xff]
    %v6013 = vld [vmem:[#allocation2 + $0x3c7] sm:$0xff]
    %v6014 = vld [vmem:[#allocation2 + $0x3cf] sm:$0xff]
    %v6015 = vld [vmem:[#allocation2 + $0x3e7] sm:$0xff]
    %v6016 = vld [vmem:[#allocation2 + $0x3ef] sm:$0xff]
    %v6017 = vld [vmem:[#allocation2 + $0x407] sm:$0xff]
    %v6018 = vld [vmem:[#allocation2 + $0x40f] sm:$0xff]
    %v6019 = vld [vmem:[#allocation2 + $0x427] sm:$0xff]
    %v6020 = vld [vmem:[#allocation2 + $0x42f] sm:$0xff]
    %v6021 = vld [vmem:[#allocation2 + $0x447] sm:$0xff]
    %v6022 = vld [vmem:[#allocation2 + $0x44f] sm:$0xff]
    %v6023 = vld [vmem:[#allocation2 + $0x467] sm:$0xff]
    %v6024 = vld [vmem:[#allocation2 + $0x46f] sm:$0xff]
    %v6025 = vld [vmem:[#allocation2 + $0x8] sm:$0xff]
    %v6026 = vld [vmem:[#allocation2 + $0x10] sm:$0xff]
    %v6027 = vld [vmem:[#allocation2 + $0x28] sm:$0xff]
    %v6028 = vld [vmem:[#allocation2 + $0x30] sm:$0xff]
    %v6029 = vld [vmem:[#allocation2 + $0x48] sm:$0xff]
    %v6030 = vld [vmem:[#allocation2 + $0x50] sm:$0xff]
    %v6031 = vld [vmem:[#allocation2 + $0x68] sm:$0xff]
    %v6032 = vld [vmem:[#allocation2 + $0x70] sm:$0xff]
    %v6033 = vld [vmem:[#allocation2 + $0x88] sm:$0xff]
    %v6034 = vld [vmem:[#allocation2 + $0x90] sm:$0xff]
    %v6035 = vld [vmem:[#allocation2 + $0xa8] sm:$0xff]
    %v6036 = vld [vmem:[#allocation2 + $0xb0] sm:$0xff]
    %v6037 = vld [vmem:[#allocation2 + $0xc8] sm:$0xff]
    %v6038 = vld [vmem:[#allocation2 + $0xd0] sm:$0xff]
    %v6039 = vld [vmem:[#allocation2 + $0xe8] sm:$0xff]
    %v6040 = vld [vmem:[#allocation2 + $0xf0] sm:$0xff]
    %v6041 = vld [vmem:[#allocation2 + $0x108] sm:$0xff]
    %v6042 = vld [vmem:[#allocation2 + $0x110] sm:$0xff]
    %v6043 = vld [vmem:[#allocation2 + $0x128] sm:$0xff]
    %v6044 = vld [vmem:[#allocation2 + $0x130] sm:$0xff]
    %v6045 = vld [vmem:[#allocation2 + $0x148] sm:$0xff]
    %v6046 = vld [vmem:[#allocation2 + $0x150] sm:$0xff]
    %v6047 = vld [vmem:[#allocation2 + $0x168] sm:$0xff]
    %v6048 = vld [vmem:[#allocation2 + $0x170] sm:$0xff]
    %v6049 = vld [vmem:[#allocation2 + $0x188] sm:$0xff]
    %v6050 = vld [vmem:[#allocation2 + $0x190] sm:$0xff]
    %v6051 = vld [vmem:[#allocation2 + $0x1a8] sm:$0xff]
    %v6052 = vld [vmem:[#allocation2 + $0x1b0] sm:$0xff]
    %v6053 = vld [vmem:[#allocation2 + $0x1c8] sm:$0xff]
    %v6054 = vld [vmem:[#allocation2 + $0x1d0] sm:$0xff]
    %v6055 = vld [vmem:[#allocation2 + $0x1e8] sm:$0xff]
    %v6056 = vld [vmem:[#allocation2 + $0x1f0] sm:$0xff]
    %v6057 = vld [vmem:[#allocation2 + $0x208] sm:$0xff]
    %v6058 = vld [vmem:[#allocation2 + $0x210] sm:$0xff]
    %v6059 = vld [vmem:[#allocation2 + $0x228] sm:$0xff]
    %v6060 = vld [vmem:[#allocation2 + $0x230] sm:$0xff]
    %v6061 = vld [vmem:[#allocation2 + $0x248] sm:$0xff]
    %v6062 = vld [vmem:[#allocation2 + $0x250] sm:$0xff]
    %v6063 = vld [vmem:[#allocation2 + $0x268] sm:$0xff]
    %v6064 = vld [vmem:[#allocation2 + $0x270] sm:$0xff]
    %v6065 = vld [vmem:[#allocation2 + $0x288] sm:$0xff]
    %v6066 = vld [vmem:[#allocation2 + $0x290] sm:$0xff]
    %v6067 = vld [vmem:[#allocation2 + $0x2a8] sm:$0xff]
    %v6068 = vld [vmem:[#allocation2 + $0x2b0] sm:$0xff]
    %v6069 = vld [vmem:[#allocation2 + $0x2c8] sm:$0xff]
    %v6070 = vld [vmem:[#allocation2 + $0x2d0] sm:$0xff]
    %v6071 = vld [vmem:[#allocation2 + $0x2e8] sm:$0xff]
    %v6072 = vld [vmem:[#allocation2 + $0x2f0] sm:$0xff]
    %v6073 = vld [vmem:[#allocation2 + $0x308] sm:$0xff]
    %v6074 = vld [vmem:[#allocation2 + $0x310] sm:$0xff]
    %v6075 = vld [vmem:[#allocation2 + $0x328] sm:$0xff]
    %v6076 = vld [vmem:[#allocation2 + $0x330] sm:$0xff]
    %v6077 = vld [vmem:[#allocation2 + $0x348] sm:$0xff]
    %v6078 = vld [vmem:[#allocation2 + $0x350] sm:$0xff]
    %v6079 = vld [vmem:[#allocation2 + $0x368] sm:$0xff]
    %v6080 = vld [vmem:[#allocation2 + $0x370] sm:$0xff]
    %v6081 = vld [vmem:[#allocation2 + $0x388] sm:$0xff]
    %v6082 = vld [vmem:[#allocation2 + $0x390] sm:$0xff]
    %v6083 = vld [vmem:[#allocation2 + $0x3a8] sm:$0xff]
    %v6084 = vld [vmem:[#allocation2 + $0x3b0] sm:$0xff]
    %v6085 = vld [vmem:[#allocation2 + $0x3c8] sm:$0xff]
    %v6086 = vld [vmem:[#allocation2 + $0x3d0] sm:$0xff]
    %v6087 = vld [vmem:[#allocation2 + $0x3e8] sm:$0xff]
    %v6088 = vld [vmem:[#allocation2 + $0x3f0] sm:$0xff]
    %v6089 = vld [vmem:[#allocation2 + $0x408] sm:$0xff]
    %v6090 = vld [vmem:[#allocation2 + $0x410] sm:$0xff]
    %v6091 = vld [vmem:[#allocation2 + $0x428] sm:$0xff]
    %v6092 = vld [vmem:[#allocation2 + $0x430] sm:$0xff]
    %v6093 = vld [vmem:[#allocation2 + $0x448] sm:$0xff]
    %v6094 = vld [vmem:[#allocation2 + $0x450] sm:$0xff]
    %v6095 = vld [vmem:[#allocation2 + $0x468] sm:$0xff]
    %v6096 = vld [vmem:[#allocation2 + $0x470] sm:$0xff]
    %v6097 = vld [vmem:[#allocation2 + $0x9] sm:$0xff]
    %v6098 = vld [vmem:[#allocation2 + $0x11] sm:$0xff]
    %v6099 = vld [vmem:[#allocation2 + $0x29] sm:$0xff]
    %v6100 = vld [vmem:[#allocation2 + $0x31] sm:$0xff]
    %v6101 = vld [vmem:[#allocation2 + $0x49] sm:$0xff]
    %v6102 = vld [vmem:[#allocation2 + $0x51] sm:$0xff]
    %v6103 = vld [vmem:[#allocation2 + $0x69] sm:$0xff]
    %v6104 = vld [vmem:[#allocation2 + $0x71] sm:$0xff]
    %v6105 = vld [vmem:[#allocation2 + $0x89] sm:$0xff]
    %v6106 = vld [vmem:[#allocation2 + $0x91] sm:$0xff]
    %v6107 = vld [vmem:[#allocation2 + $0xa9] sm:$0xff]
    %v6108 = vld [vmem:[#allocation2 + $0xb1] sm:$0xff]
    %v6109 = vld [vmem:[#allocation2 + $0xc9] sm:$0xff]
    %v6110 = vld [vmem:[#allocation2 + $0xd1] sm:$0xff]
    %v6111 = vld [vmem:[#allocation2 + $0xe9] sm:$0xff]
    %v6112 = vld [vmem:[#allocation2 + $0xf1] sm:$0xff]
    %v6113 = vld [vmem:[#allocation2 + $0x109] sm:$0xff]
    %v6114 = vld [vmem:[#allocation2 + $0x111] sm:$0xff]
    %v6115 = vld [vmem:[#allocation2 + $0x129] sm:$0xff]
    %v6116 = vld [vmem:[#allocation2 + $0x131] sm:$0xff]
    %v6117 = vld [vmem:[#allocation2 + $0x149] sm:$0xff]
    %v6118 = vld [vmem:[#allocation2 + $0x151] sm:$0xff]
    %v6119 = vld [vmem:[#allocation2 + $0x169] sm:$0xff]
    %v6120 = vld [vmem:[#allocation2 + $0x171] sm:$0xff]
    %v6121 = vld [vmem:[#allocation2 + $0x189] sm:$0xff]
    %v6122 = vld [vmem:[#allocation2 + $0x191] sm:$0xff]
    %v6123 = vld [vmem:[#allocation2 + $0x1a9] sm:$0xff]
    %v6124 = vld [vmem:[#allocation2 + $0x1b1] sm:$0xff]
    %v6125 = vld [vmem:[#allocation2 + $0x1c9] sm:$0xff]
    %v6126 = vld [vmem:[#allocation2 + $0x1d1] sm:$0xff]
    %v6127 = vld [vmem:[#allocation2 + $0x1e9] sm:$0xff]
    %v6128 = vld [vmem:[#allocation2 + $0x1f1] sm:$0xff]
    %v6129 = vld [vmem:[#allocation2 + $0x209] sm:$0xff]
    %v6130 = vld [vmem:[#allocation2 + $0x211] sm:$0xff]
    %v6131 = vld [vmem:[#allocation2 + $0x229] sm:$0xff]
    %v6132 = vld [vmem:[#allocation2 + $0x231] sm:$0xff]
    %v6133 = vld [vmem:[#allocation2 + $0x249] sm:$0xff]
    %v6134 = vld [vmem:[#allocation2 + $0x251] sm:$0xff]
    %v6135 = vld [vmem:[#allocation2 + $0x269] sm:$0xff]
    %v6136 = vld [vmem:[#allocation2 + $0x271] sm:$0xff]
    %v6137 = vld [vmem:[#allocation2 + $0x289] sm:$0xff]
    %v6138 = vld [vmem:[#allocation2 + $0x291] sm:$0xff]
    %v6139 = vld [vmem:[#allocation2 + $0x2a9] sm:$0xff]
    %v6140 = vld [vmem:[#allocation2 + $0x2b1] sm:$0xff]
    %v6141 = vld [vmem:[#allocation2 + $0x2c9] sm:$0xff]
    %v6142 = vld [vmem:[#allocation2 + $0x2d1] sm:$0xff]
    %v6143 = vld [vmem:[#allocation2 + $0x2e9] sm:$0xff]
    %v6144 = vld [vmem:[#allocation2 + $0x2f1] sm:$0xff]
    %v6145 = vld [vmem:[#allocation2 + $0x309] sm:$0xff]
    %v6146 = vld [vmem:[#allocation2 + $0x311] sm:$0xff]
    %v6147 = vld [vmem:[#allocation2 + $0x329] sm:$0xff]
    %v6148 = vld [vmem:[#allocation2 + $0x331] sm:$0xff]
    %v6149 = vld [vmem:[#allocation2 + $0x349] sm:$0xff]
    %v6150 = vld [vmem:[#allocation2 + $0x351] sm:$0xff]
    %v6151 = vld [vmem:[#allocation2 + $0x369] sm:$0xff]
    %v6152 = vld [vmem:[#allocation2 + $0x371] sm:$0xff]
    %v6153 = vld [vmem:[#allocation2 + $0x389] sm:$0xff]
    %v6154 = vld [vmem:[#allocation2 + $0x391] sm:$0xff]
    %v6155 = vld [vmem:[#allocation2 + $0x3a9] sm:$0xff]
    %v6156 = vld [vmem:[#allocation2 + $0x3b1] sm:$0xff]
    %v6157 = vld [vmem:[#allocation2 + $0x3c9] sm:$0xff]
    %v6158 = vld [vmem:[#allocation2 + $0x3d1] sm:$0xff]
    %v6159 = vld [vmem:[#allocation2 + $0x3e9] sm:$0xff]
    %v6160 = vld [vmem:[#allocation2 + $0x3f1] sm:$0xff]
    %v6161 = vld [vmem:[#allocation2 + $0x409] sm:$0xff]
    %v6162 = vld [vmem:[#allocation2 + $0x411] sm:$0xff]
    %v6163 = vld [vmem:[#allocation2 + $0x429] sm:$0xff]
    %v6164 = vld [vmem:[#allocation2 + $0x431] sm:$0xff]
    %v6165 = vld [vmem:[#allocation2 + $0x449] sm:$0xff]
    %v6166 = vld [vmem:[#allocation2 + $0x451] sm:$0xff]
    %v6167 = vld [vmem:[#allocation2 + $0x469] sm:$0xff]
    %v6168 = vld [vmem:[#allocation2 + $0x471] sm:$0xff]
    %v6169 = vld [vmem:[#allocation9] sm:$0xff]
    %v6170 = vld [vmem:[#allocation9 + $0x8] sm:$0xff]
    %v6171 = vld [vmem:[#allocation9 + $0x10] sm:$0xff]
    %v6172 = vld [vmem:[#allocation9 + $0x18] sm:$0xff]
    %v6173 = vld [vmem:[#allocation9 + $0x20] sm:$0xff]
    %v6174 = vld [vmem:[#allocation9 + $0x28] sm:$0xff]
    %v6175 = vld [vmem:[#allocation9 + $0x30] sm:$0xff]
    %v6176 = vld [vmem:[#allocation9 + $0x38] sm:$0xff]
    %v6177 = vld [vmem:[#allocation9 + $0x40] sm:$0xff]
    %v6178 = vld [vmem:[#allocation9 + $0x48] sm:$0xff]
    %v6179 = vld [vmem:[#allocation9 + $0x50] sm:$0xff]
    %v6180 = vld [vmem:[#allocation9 + $0x58] sm:$0xff]
    %v6181 = vld [vmem:[#allocation9 + $0x60] sm:$0xff]
    %v6182 = vld [vmem:[#allocation9 + $0x68] sm:$0xff]
    %v6183 = vld [vmem:[#allocation9 + $0x70] sm:$0xff]
    %v6184 = vld [vmem:[#allocation9 + $0x78] sm:$0xff]
    %v6185 = vld [vmem:[#allocation9 + $0x80] sm:$0xff]
    %v6186 = vld [vmem:[#allocation9 + $0x88] sm:$0xff]
    %v6187 = vld [vmem:[#allocation9 + $0x90] sm:$0xff]
    %v6188 = vld [vmem:[#allocation9 + $0x98] sm:$0xff]
    %v6189 = vld [vmem:[#allocation9 + $0xa0] sm:$0xff]
    %v6190 = vld [vmem:[#allocation9 + $0xa8] sm:$0xff]
    %v6191 = vld [vmem:[#allocation9 + $0xb0] sm:$0xff]
    %v6192 = vld [vmem:[#allocation9 + $0xb8] sm:$0xff]
    %v6193 = vld [vmem:[#allocation9 + $0xc0] sm:$0xff]
    %v6194 = vld [vmem:[#allocation9 + $0xc8] sm:$0xff]
    %v6195 = vld [vmem:[#allocation9 + $0xd0] sm:$0xff]
    %v6196 = vld [vmem:[#allocation9 + $0xd8] sm:$0xff]
    %v6197 = vld [vmem:[#allocation9 + $0xe0] sm:$0xff]
    %v6198 = vld [vmem:[#allocation9 + $0xe8] sm:$0xff]
    %v6199 = vld [vmem:[#allocation9 + $0xf0] sm:$0xff]
    %v6200 = vld [vmem:[#allocation9 + $0xf8] sm:$0xff]
    %v6201 = vld [vmem:[#allocation9 + $0x100] sm:$0xff]
    %v6202 = vld [vmem:[#allocation9 + $0x108] sm:$0xff]
    %v6203 = vld [vmem:[#allocation9 + $0x110] sm:$0xff]
    %v6204 = vld [vmem:[#allocation9 + $0x118] sm:$0xff]
    %v6205 = vld [vmem:[#allocation9 + $0x120] sm:$0xff]
    %v6206 = vld [vmem:[#allocation9 + $0x128] sm:$0xff]
    %v6207 = vld [vmem:[#allocation9 + $0x130] sm:$0xff]
    %v6208 = vld [vmem:[#allocation9 + $0x138] sm:$0xff]
    %v6209 = vld [vmem:[#allocation9 + $0x140] sm:$0xff]
    %v6210 = vld [vmem:[#allocation9 + $0x148] sm:$0xff]
    %v6211 = vld [vmem:[#allocation9 + $0x150] sm:$0xff]
    %v6212 = vld [vmem:[#allocation9 + $0x158] sm:$0xff]
    %v6213 = vld [vmem:[#allocation9 + $0x160] sm:$0xff]
    %v6214 = vld [vmem:[#allocation9 + $0x168] sm:$0xff]
    %v6215 = vld [vmem:[#allocation9 + $0x170] sm:$0xff]
    %v6216 = vld [vmem:[#allocation9 + $0x178] sm:$0xff]
    %v6217 = vld [vmem:[#allocation9 + $0x180] sm:$0xff]
    %v6218 = vld [vmem:[#allocation9 + $0x188] sm:$0xff]
    %v6219 = vld [vmem:[#allocation9 + $0x190] sm:$0xff]
    %v6220 = vld [vmem:[#allocation9 + $0x198] sm:$0xff]
    %v6221 = vld [vmem:[#allocation9 + $0x1a0] sm:$0xff]
    %v6222 = vld [vmem:[#allocation9 + $0x1a8] sm:$0xff]
    %v6223 = vld [vmem:[#allocation9 + $0x1b0] sm:$0xff]
    %v6224 = vld [vmem:[#allocation9 + $0x1b8] sm:$0xff]
    %v6225 = vld [vmem:[#allocation9 + $0x1c0] sm:$0xff]
    %v6226 = vld [vmem:[#allocation9 + $0x1c8] sm:$0xff]
    %v6227 = vld [vmem:[#allocation9 + $0x1d0] sm:$0xff]
    %v6228 = vld [vmem:[#allocation9 + $0x1d8] sm:$0xff]
    %v6229 = vld [vmem:[#allocation9 + $0x1e0] sm:$0xff]
    %v6230 = vld [vmem:[#allocation9 + $0x1e8] sm:$0xff]
    %v6231 = vld [vmem:[#allocation9 + $0x1f0] sm:$0xff]
    %v6232 = vld [vmem:[#allocation9 + $0x1f8] sm:$0xff]
    %v6233 = vld [vmem:[#allocation9 + $0x200] sm:$0xff]
    %v6234 = vld [vmem:[#allocation9 + $0x208] sm:$0xff]
    %v6235 = vld [vmem:[#allocation9 + $0x210] sm:$0xff]
    %v6236 = vld [vmem:[#allocation9 + $0x218] sm:$0xff]
    %v6237 = vld [vmem:[#allocation9 + $0x220] sm:$0xff]
    %v6238 = vld [vmem:[#allocation9 + $0x228] sm:$0xff]
    %v6239 = vld [vmem:[#allocation9 + $0x230] sm:$0xff]
    %v6240 = vld [vmem:[#allocation9 + $0x238] sm:$0xff]
    %v6241 = vld [vmem:[#allocation9 + $0x240] sm:$0xff]
    %v6242 = vld [vmem:[#allocation9 + $0x248] sm:$0xff]
    %v6243 = vld [vmem:[#allocation9 + $0x250] sm:$0xff]
    %v6244 = vld [vmem:[#allocation9 + $0x258] sm:$0xff]
    %v6245 = vld [vmem:[#allocation9 + $0x260] sm:$0xff]
    %v6246 = vld [vmem:[#allocation9 + $0x268] sm:$0xff]
    %v6247 = vld [vmem:[#allocation9 + $0x270] sm:$0xff]
    %v6248 = vld [vmem:[#allocation9 + $0x278] sm:$0xff]
    %v6249 = vld [vmem:[#allocation9 + $0x280] sm:$0xff]
    %v6250 = vld [vmem:[#allocation9 + $0x288] sm:$0xff]
    %v6251 = vld [vmem:[#allocation9 + $0x290] sm:$0xff]
    %v6252 = vld [vmem:[#allocation9 + $0x298] sm:$0xff]
    %v6253 = vld [vmem:[#allocation9 + $0x2a0] sm:$0xff]
    %v6254 = vld [vmem:[#allocation9 + $0x2a8] sm:$0xff]
    %v6255 = vld [vmem:[#allocation9 + $0x2b0] sm:$0xff]
    %v6256 = vld [vmem:[#allocation9 + $0x2b8] sm:$0xff]
    %v6257 = vld [vmem:[#allocation9 + $0x2c0] sm:$0xff]
    %v6258 = vld [vmem:[#allocation9 + $0x2c8] sm:$0xff]
    %v6259 = vld [vmem:[#allocation9 + $0x2d0] sm:$0xff]
    %v6260 = vld [vmem:[#allocation9 + $0x2d8] sm:$0xff]
    %v6261 = vld [vmem:[#allocation9 + $0x2e0] sm:$0xff]
    %v6262 = vld [vmem:[#allocation9 + $0x2e8] sm:$0xff]
    %v6263 = vld [vmem:[#allocation9 + $0x2f0] sm:$0xff]
    %v6264 = vld [vmem:[#allocation9 + $0x2f8] sm:$0xff]
    %v6265 = vld [vmem:[#allocation9 + $0x300] sm:$0xff]
    %v6266 = vld [vmem:[#allocation9 + $0x308] sm:$0xff]
    %v6267 = vld [vmem:[#allocation9 + $0x310] sm:$0xff]
    %v6268 = vld [vmem:[#allocation9 + $0x318] sm:$0xff]
    %v6269 = vld [vmem:[#allocation9 + $0x320] sm:$0xff]
    %v6270 = vld [vmem:[#allocation9 + $0x328] sm:$0xff]
    %v6271 = vld [vmem:[#allocation9 + $0x330] sm:$0xff]
    %v6272 = vld [vmem:[#allocation9 + $0x338] sm:$0xff]
    %v6273 = vld [vmem:[#allocation9 + $0x340] sm:$0xff]
    %v6274 = vld [vmem:[#allocation9 + $0x348] sm:$0xff]
    %v6275 = vld [vmem:[#allocation9 + $0x350] sm:$0xff]
    %v6276 = vld [vmem:[#allocation9 + $0x358] sm:$0xff]
    %v6277 = vld [vmem:[#allocation9 + $0x360] sm:$0xff]
    %v6278 = vld [vmem:[#allocation9 + $0x368] sm:$0xff]
    %v6279 = vld [vmem:[#allocation9 + $0x370] sm:$0xff]
    %v6280 = vld [vmem:[#allocation9 + $0x378] sm:$0xff]
    %v6281 = vld [vmem:[#allocation9 + $0x380] sm:$0xff]
    %v6282 = vld [vmem:[#allocation9 + $0x388] sm:$0xff]
    %v6283 = vld [vmem:[#allocation9 + $0x390] sm:$0xff]
    %v6284 = vld [vmem:[#allocation9 + $0x398] sm:$0xff]
    %v6285 = vld [vmem:[#allocation9 + $0x3a0] sm:$0xff]
    %v6286 = vld [vmem:[#allocation9 + $0x3a8] sm:$0xff]
    %v6287 = vld [vmem:[#allocation9 + $0x3b0] sm:$0xff]
    %v6288 = vld [vmem:[#allocation9 + $0x3b8] sm:$0xff]
    %v6289 = vld [vmem:[#allocation9 + $0x3c0] sm:$0xff]
    %v6290 = vld [vmem:[#allocation9 + $0x3c8] sm:$0xff]
    %v6291 = vld [vmem:[#allocation9 + $0x3d0] sm:$0xff]
    %v6292 = vld [vmem:[#allocation9 + $0x3d8] sm:$0xff]
    %v6293 = vld [vmem:[#allocation9 + $0x3e0] sm:$0xff]
    %v6294 = vld [vmem:[#allocation9 + $0x3e8] sm:$0xff]
    %v6295 = vld [vmem:[#allocation9 + $0x3f0] sm:$0xff]
    %v6296 = vld [vmem:[#allocation9 + $0x3f8] sm:$0xff]
    %v6297 = vld [vmem:[#allocation9 + $0x400] sm:$0xff]
    %v6298 = vld [vmem:[#allocation9 + $0x408] sm:$0xff]
    %v6299 = vld [vmem:[#allocation9 + $0x410] sm:$0xff]
    %v6300 = vld [vmem:[#allocation9 + $0x418] sm:$0xff]
    %v6301 = vld [vmem:[#allocation9 + $0x420] sm:$0xff]
    %v6302 = vld [vmem:[#allocation9 + $0x428] sm:$0xff]
    %v6303 = vld [vmem:[#allocation9 + $0x430] sm:$0xff]
    %v6304 = vld [vmem:[#allocation9 + $0x438] sm:$0xff]
    %v6305 = vld [vmem:[#allocation9 + $0x440] sm:$0xff]
    %v6306 = vld [vmem:[#allocation9 + $0x448] sm:$0xff]
    %v6307 = vld [vmem:[#allocation9 + $0x450] sm:$0xff]
    %v6308 = vld [vmem:[#allocation9 + $0x458] sm:$0xff]
    %v6309 = vld [vmem:[#allocation9 + $0x460] sm:$0xff]
    %v6310 = vld [vmem:[#allocation9 + $0x468] sm:$0xff]
    %v6311 = vld [vmem:[#allocation9 + $0x470] sm:$0xff]
    %v6312 = vld [vmem:[#allocation9 + $0x478] sm:$0xff]
    %6313 = vmatprep.subr.mxu0 0.0
    %6314 = vmatpush1.msra.mxu0 %v6169
    %6315 = vmatprep.subr.mxu0 0.0
    %6316 = vmatpush1.msra.mxu0 %v6170
    %6317 = vmatprep.subr.mxu0 0.0
    %6318 = vmatpush1.msra.mxu0 %v6171
    %6319 = vmatprep.subr.mxu0 0.0
    %6320 = vmatpush1.msra.mxu0 %v6172
    %6321 = vmatprep.subr.mxu0 0.0
    %6322 = vmatpush1.msra.mxu0 %v6173
    %6323 = vmatprep.subr.mxu0 0.0
    %6324 = vmatpush1.msra.mxu0 %v6174
    %6325 = vmatprep.subr.mxu0 0.0
    %6326 = vmatpush1.msra.mxu0 %v6175
    %6327 = vmatprep.subr.mxu0 0.0
    %6328 = vmatpush1.msra.mxu0 %v6176
    %6329 = vmatprep.subr.mxu0 0.0
    %6330 = vmatpush1.msra.mxu0 %v6177
    %6331 = vmatprep.subr.mxu0 0.0
    %6332 = vmatpush1.msra.mxu0 %v6178
    %6333 = vmatprep.subr.mxu0 0.0
    %6334 = vmatpush1.msra.mxu0 %v6179
    %6335 = vmatprep.subr.mxu0 0.0
    %6336 = vmatpush1.msra.mxu0 %v6180
    %6337 = vmatprep.subr.mxu0 0.0
    %6338 = vmatpush1.msra.mxu0 %v6181
    %6339 = vmatprep.subr.mxu0 0.0
    %6340 = vmatpush1.msra.mxu0 %v6182
    %6341 = vmatprep.subr.mxu0 0.0
    %6342 = vmatpush1.msra.mxu0 %v6183
    %6343 = vmatprep.subr.mxu0 0.0
    %6344 = vmatpush1.msra.mxu0 %v6184
    %6345 = vmatprep.subr.mxu0 0.0
    %6346 = vmatpush1.msra.mxu0 %v6185
    %6347 = vmatprep.subr.mxu0 0.0
    %6348 = vmatpush1.msra.mxu0 %v6186
    %6349 = vmatprep.subr.mxu0 0.0
    %6350 = vmatpush1.msra.mxu0 %v6187
    %6351 = vmatprep.subr.mxu0 0.0
    %6352 = vmatpush1.msra.mxu0 %v6188
    %6353 = vmatprep.subr.mxu0 0.0
    %6354 = vmatpush1.msra.mxu0 %v6189
    %6355 = vmatprep.subr.mxu0 0.0
    %6356 = vmatpush1.msra.mxu0 %v6190
    %6357 = vmatprep.subr.mxu0 0.0
    %6358 = vmatpush1.msra.mxu0 %v6191
    %6359 = vmatprep.subr.mxu0 0.0
    %6360 = vmatpush1.msra.mxu0 %v6192
    %6361 = vmatprep.subr.mxu0 0.0
    %6362 = vmatpush1.msra.mxu0 %v6193
    %6363 = vmatprep.subr.mxu0 0.0
    %6364 = vmatpush1.msra.mxu0 %v6194
    %6365 = vmatprep.subr.mxu0 0.0
    %6366 = vmatpush1.msra.mxu0 %v6195
    %6367 = vmatprep.subr.mxu0 0.0
    %6368 = vmatpush1.msra.mxu0 %v6196
    %6369 = vmatprep.subr.mxu0 0.0
    %6370 = vmatpush1.msra.mxu0 %v6197
    %6371 = vmatprep.subr.mxu0 0.0
    %6372 = vmatpush1.msra.mxu0 %v6198
    %6373 = vmatprep.subr.mxu0 0.0
    %6374 = vmatpush1.msra.mxu0 %v6199
    %6375 = vmatprep.subr.mxu0 0.0
    %6376 = vmatpush1.msra.mxu0 %v6200
    %6377 = vmatprep.mubr.f32.mxu0 %v6025
    %6378 = vmatmul.mubr.f32.gmra.mrb[0].mxu0 %v5953
    %v6379 = vpop.f32.mrb[0].mxu0
    %v6380 = vadd.f32 0.0, %v6379
    %v6381 = vpop.f32.mrb[0].mxu0
    %6382 = vmatprep.mubr.f32.mxu0 %v6026
    %6383 = vmatmul.mubr.f32.gmra.mrb[0].mxu0 %v5954
    %v6384 = vpop.f32.mrb[0].mxu0
    %v6385 = vadd.f32 0.0, %v6384
    %v6386 = vpop.f32.mrb[0].mxu0
    %6387 = vmatprep.mubr.f32.mxu0 %v6027
    %6388 = vmatmul.mubr.f32.gmra.mrb[0].mxu0 %v5955
    %v6389 = vpop.f32.mrb[0].mxu0
    %v6390 = vadd.f32 0.0, %v6389
    %v6391 = vpop.f32.mrb[0].mxu0
    %6392 = vmatprep.mubr.f32.mxu0 %v6028
    %6393 = vmatmul.mubr.f32.gmra.mrb[0].mxu0 %v5956
    %v6394 = vpop.f32.mrb[0].mxu0
    %v6395 = vadd.f32 0.0, %v6394
    %v6396 = vpop.f32.mrb[0].mxu0
    %6397 = vmatprep.mubr.f32.mxu0 %v6029
    %6398 = vmatmul.mubr.f32.gmra.mrb[0].mxu0 %v5957
    %v6399 = vpop.f32.mrb[0].mxu0
    %v6400 = vadd.f32 0.0, %v6399
    %v6401 = vpop.f32.mrb[0].mxu0
    %6402 = vmatprep.mubr.f32.mxu0 %v6030
    %6403 = vmatmul.mubr.f32.gmra.mrb[0].mxu0 %v5958
    %v6404 = vpop.f32.mrb[0].mxu0
    %v6405 = vadd.f32 0.0, %v6404
    %v6406 = vpop.f32.mrb[0].mxu0
    %6407 = vmatprep.mubr.f32.mxu0 %v6031
    %6408 = vmatmul.mubr.f32.gmra.mrb[0].mxu0 %v5959
    %v6409 = vpop.f32.mrb[0].mxu0
    %v6410 = vadd.f32 0.0, %v6409
    %v6411 = vpop.f32.mrb[0].mxu0
    %6412 = vmatprep.mubr.f32.mxu0 %v6032
    %6413 = vmatmul.mubr.f32.gmra.mrb[0].mxu0 %v5960
    %v6414 = vpop.f32.mrb[0].mxu0
    %v6415 = vadd.f32 0.0, %v6414
    %v6416 = vpop.f32.mrb[0].mxu0
    %6417 = vmatprep.mubr.f32.mxu0 %v6033
    %6418 = vmatmul.mubr.f32.gmra.mrb[0].mxu0 %v5961
    %v6419 = vpop.f32.mrb[0].mxu0
    %v6420 = vadd.f32 0.0, %v6419
    %v6421 = vpop.f32.mrb[0].mxu0
    %6422 = vmatprep.mubr.f32.mxu0 %v6034
    %6423 = vmatmul.mubr.f32.gmra.mrb[0].mxu0 %v5962
    %v6424 = vpop.f32.mrb[0].mxu0
    %v6425 = vadd.f32 0.0, %v6424
    %v6426 = vpop.f32.mrb[0].mxu0
    %6427 = vmatprep.mubr.f32.mxu0 %v6035
    %6428 = vmatmul.mubr.f32.gmra.mrb[0].mxu0 %v5963
    %v6429 = vpop.f32.mrb[0].mxu0
    %v6430 = vadd.f32 0.0, %v6429
    %v6431 = vpop.f32.mrb[0].mxu0
    %6432 = vmatprep.mubr.f32.mxu0 %v6036
    %6433 = vmatmul.mubr.f32.gmra.mrb[0].mxu0 %v5964
    %v6434 = vpop.f32.mrb[0].mxu0
    %v6435 = vadd.f32 0.0, %v6434
    %v6436 = vpop.f32.mrb[0].mxu0
    %6437 = vmatprep.mubr.f32.mxu0 %v6037
    %6438 = vmatmul.mubr.f32.gmra.mrb[0].mxu0 %v5965
    %v6439 = vpop.f32.mrb[0].mxu0
    %v6440 = vadd.f32 0.0, %v6439
    %v6441 = vpop.f32.mrb[0].mxu0
    %6442 = vmatprep.mubr.f32.mxu0 %v6038
    %6443 = vmatmul.mubr.f32.gmra.mrb[0].mxu0 %v5966
    %v6444 = vpop.f32.mrb[0].mxu0
    %v6445 = vadd.f32 0.0, %v6444
    %v6446 = vpop.f32.mrb[0].mxu0
    %6447 = vmatprep.mubr.f32.mxu0 %v6039
    %6448 = vmatmul.mubr.f32.gmra.mrb[0].mxu0 %v5967
    %v6449 = vpop.f32.mrb[0].mxu0
    %v6450 = vadd.f32 0.0, %v6449
    %v6451 = vpop.f32.mrb[0].mxu0
    %6452 = vmatprep.mubr.f32.mxu0 %v6040
    %6453 = vmatmul.mubr.f32.gmra.mrb[0].mxu0 %v5968
    %v6454 = vpop.f32.mrb[0].mxu0
    %v6455 = vadd.f32 0.0, %v6454
    %v6456 = vpop.f32.mrb[0].mxu0
    %6457 = vmatprep.mubr.f32.mxu0 %v6041
    %6458 = vmatmul.mubr.f32.gmra.mrb[0].mxu0 %v5969
    %v6459 = vpop.f32.mrb[0].mxu0
    %v6460 = vadd.f32 0.0, %v6459
    %v6461 = vpop.f32.mrb[0].mxu0
    %6462 = vmatprep.mubr.f32.mxu0 %v6042
    %6463 = vmatmul.mubr.f32.gmra.mrb[0].mxu0 %v5970
    %v6464 = vpop.f32.mrb[0].mxu0
    %v6465 = vadd.f32 0.0, %v6464
    %v6466 = vpop.f32.mrb[0].mxu0
    %6467 = vmatprep.mubr.f32.mxu0 %v6043
    %6468 = vmatmul.mubr.f32.gmra.mrb[0].mxu0 %v5971
    %v6469 = vpop.f32.mrb[0].mxu0
    %v6470 = vadd.f32 0.0, %v6469
    %v6471 = vpop.f32.mrb[0].mxu0
    %6472 = vmatprep.mubr.f32.mxu0 %v6044
    %6473 = vmatmul.mubr.f32.gmra.mrb[0].mxu0 %v5972
    %v6474 = vpop.f32.mrb[0].mxu0
    %v6475 = vadd.f32 0.0, %v6474
    %v6476 = vpop.f32.mrb[0].mxu0
    %6477 = vmatprep.mubr.f32.mxu0 %v6045
    %6478 = vmatmul.mubr.f32.gmra.mrb[0].mxu0 %v5973
    %v6479 = vpop.f32.mrb[0].mxu0
    %v6480 = vadd.f32 0.0, %v6479
    %v6481 = vpop.f32.mrb[0].mxu0
    %6482 = vmatprep.mubr.f32.mxu0 %v6046
    %6483 = vmatmul.mubr.f32.gmra.mrb[0].mxu0 %v5974
    %v6484 = vpop.f32.mrb[0].mxu0
    %v6485 = vadd.f32 0.0, %v6484
    %v6486 = vpop.f32.mrb[0].mxu0
    %6487 = vmatprep.mubr.f32.mxu0 %v6047
    %6488 = vmatmul.mubr.f32.gmra.mrb[0].mxu0 %v5975
    %v6489 = vpop.f32.mrb[0].mxu0
    %v6490 = vadd.f32 0.0, %v6489
    %v6491 = vpop.f32.mrb[0].mxu0
    %6492 = vmatprep.mubr.f32.mxu0 %v6048
    %6493 = vmatmul.mubr.f32.gmra.mrb[0].mxu0 %v5976
    %v6494 = vpop.f32.mrb[0].mxu0
    %v6495 = vadd.f32 0.0, %v6494
    %v6496 = vpop.f32.mrb[0].mxu0
    %6497 = vmatprep.mubr.f32.mxu0 %v6049
    %6498 = vmatmul.mubr.f32.gmra.mrb[0].mxu0 %v5977
    %v6499 = vpop.f32.mrb[0].mxu0
    %v6500 = vadd.f32 0.0, %v6499
    %v6501 = vpop.f32.mrb[0].mxu0
    %6502 = vmatprep.mubr.f32.mxu0 %v6050
    %6503 = vmatmul.mubr.f32.gmra.mrb[0].mxu0 %v5978
    %v6504 = vpop.f32.mrb[0].mxu0
    %v6505 = vadd.f32 0.0, %v6504
    %v6506 = vpop.f32.mrb[0].mxu0
    %6507 = vmatprep.mubr.f32.mxu0 %v6051
    %6508 = vmatmul.mubr.f32.gmra.mrb[0].mxu0 %v5979
    %v6509 = vpop.f32.mrb[0].mxu0
    %v6510 = vadd.f32 0.0, %v6509
    %v6511 = vpop.f32.mrb[0].mxu0
    %6512 = vmatprep.mubr.f32.mxu0 %v6052
    %6513 = vmatmul.mubr.f32.gmra.mrb[0].mxu0 %v5980
    %v6514 = vpop.f32.mrb[0].mxu0
    %v6515 = vadd.f32 0.0, %v6514
    %v6516 = vpop.f32.mrb[0].mxu0
    %6517 = vmatprep.mubr.f32.mxu0 %v6053
    %6518 = vmatmul.mubr.f32.gmra.mrb[0].mxu0 %v5981
    %v6519 = vpop.f32.mrb[0].mxu0
    %v6520 = vadd.f32 0.0, %v6519
    %v6521 = vpop.f32.mrb[0].mxu0
    %6522 = vmatprep.mubr.f32.mxu0 %v6054
    %6523 = vmatmul.mubr.f32.gmra.mrb[0].mxu0 %v5982
    %v6524 = vpop.f32.mrb[0].mxu0
    %v6525 = vadd.f32 0.0, %v6524
    %v6526 = vpop.f32.mrb[0].mxu0
    %6527 = vmatprep.mubr.f32.mxu0 %v6055
    %6528 = vmatmul.mubr.f32.gmra.mrb[0].mxu0 %v5983
    %v6529 = vpop.f32.mrb[0].mxu0
    %v6530 = vadd.f32 0.0, %v6529
    %v6531 = vpop.f32.mrb[0].mxu0
    %6532 = vmatprep.mubr.f32.mxu0 %v6056
    %6533 = vmatmul.mubr.f32.gmra.mrb[0].mxu0 %v5984
    %v6534 = vpop.f32.mrb[0].mxu0
    %v6535 = vadd.f32 0.0, %v6534
    %v6536 = vpop.f32.mrb[0].mxu0
    %6537 = vmatprep.mubr.f32.mxu0 %v6061
    %6538 = vmatmul.mubr.f32.gmra.mrb[0].mxu0 %v5989
    %v6539 = vpop.f32.mrb[0].mxu0
    %v6540 = vadd.f32 0.0, %v6539
    %v6541 = vpop.f32.mrb[0].mxu0
    %6542 = vmatprep.mubr.f32.mxu0 %v6062
    %6543 = vmatmul.mubr.f32.gmra.mrb[0].mxu0 %v5990
    %v6544 = vpop.f32.mrb[0].mxu0
    %v6545 = vadd.f32 0.0, %v6544
    %v6546 = vpop.f32.mrb[0].mxu0
    %6547 = vmatprep.mubr.f32.mxu0 %v6063
    %6548 = vmatmul.mubr.f32.gmra.mrb[0].mxu0 %v5991
    %v6549 = vpop.f32.mrb[0].mxu0
    %v6550 = vadd.f32 0.0, %v6549
    %v6551 = vpop.f32.mrb[0].mxu0
    %6552 = vmatprep.mubr.f32.mxu0 %v6064
    %6553 = vmatmul.mubr.f32.gmra.mrb[0].mxu0 %v5992
    %v6554 = vpop.f32.mrb[0].mxu0
    %v6555 = vadd.f32 0.0, %v6554
    %v6556 = vpop.f32.mrb[0].mxu0
    %6557 = vmatprep.mubr.f32.mxu0 %v6065
    %6558 = vmatmul.mubr.f32.gmra.mrb[0].mxu0 %v5993
    %v6559 = vpop.f32.mrb[0].mxu0
    %v6560 = vadd.f32 0.0, %v6559
    %v6561 = vpop.f32.mrb[0].mxu0
    %6562 = vmatprep.mubr.f32.mxu0 %v6066
    %6563 = vmatmul.mubr.f32.gmra.mrb[0].mxu0 %v5994
    %v6564 = vpop.f32.mrb[0].mxu0
    %v6565 = vadd.f32 0.0, %v6564
    %v6566 = vpop.f32.mrb[0].mxu0
    %6567 = vmatprep.mubr.f32.mxu0 %v6067
    %6568 = vmatmul.mubr.f32.gmra.mrb[0].mxu0 %v5995
    %v6569 = vpop.f32.mrb[0].mxu0
    %v6570 = vadd.f32 0.0, %v6569
    %v6571 = vpop.f32.mrb[0].mxu0
    %6572 = vmatprep.mubr.f32.mxu0 %v6068
    %6573 = vmatmul.mubr.f32.gmra.mrb[0].mxu0 %v5996
    %v6574 = vpop.f32.mrb[0].mxu0
    %v6575 = vadd.f32 0.0, %v6574
    %v6576 = vpop.f32.mrb[0].mxu0
    %6577 = vmatprep.mubr.f32.mxu0 %v6069
    %6578 = vmatmul.mubr.f32.gmra.mrb[0].mxu0 %v5997
    %v6579 = vpop.f32.mrb[0].mxu0
    %v6580 = vadd.f32 0.0, %v6579
    %v6581 = vpop.f32.mrb[0].mxu0
    %6582 = vmatprep.mubr.f32.mxu0 %v6070
    %6583 = vmatmul.mubr.f32.gmra.mrb[0].mxu0 %v5998
    %v6584 = vpop.f32.mrb[0].mxu0
    %v6585 = vadd.f32 0.0, %v6584
    %v6586 = vpop.f32.mrb[0].mxu0
    %6587 = vmatprep.mubr.f32.mxu0 %v6071
    %6588 = vmatmul.mubr.f32.gmra.mrb[0].mxu0 %v5999
    %v6589 = vpop.f32.mrb[0].mxu0
    %v6590 = vadd.f32 0.0, %v6589
    %v6591 = vpop.f32.mrb[0].mxu0
    %6592 = vmatprep.mubr.f32.mxu0 %v6072
    %6593 = vmatmul.mubr.f32.gmra.mrb[0].mxu0 %v6000
    %v6594 = vpop.f32.mrb[0].mxu0
    %v6595 = vadd.f32 0.0, %v6594
    %v6596 = vpop.f32.mrb[0].mxu0
    %6597 = vmatprep.mubr.f32.mxu0 %v6073
    %6598 = vmatmul.mubr.f32.gmra.mrb[0].mxu0 %v6001
    %v6599 = vpop.f32.mrb[0].mxu0
    %v6600 = vadd.f32 0.0, %v6599
    %v6601 = vpop.f32.mrb[0].mxu0
    %6602 = vmatprep.mubr.f32.mxu0 %v6074
    %6603 = vmatmul.mubr.f32.gmra.mrb[0].mxu0 %v6002
    %v6604 = vpop.f32.mrb[0].mxu0
    %v6605 = vadd.f32 0.0, %v6604
    %v6606 = vpop.f32.mrb[0].mxu0
    %6607 = vmatprep.mubr.f32.mxu0 %v6075
    %6608 = vmatmul.mubr.f32.gmra.mrb[0].mxu0 %v6003
    %v6609 = vpop.f32.mrb[0].mxu0
    %v6610 = vadd.f32 0.0, %v6609
    %v6611 = vpop.f32.mrb[0].mxu0
    %6612 = vmatprep.mubr.f32.mxu0 %v6076
    %6613 = vmatmul.mubr.f32.gmra.mrb[0].mxu0 %v6004
    %v6614 = vpop.f32.mrb[0].mxu0
    %v6615 = vadd.f32 0.0, %v6614
    %v6616 = vpop.f32.mrb[0].mxu0
    %6617 = vmatprep.mubr.f32.mxu0 %v6077
    %6618 = vmatmul.mubr.f32.gmra.mrb[0].mxu0 %v6005
    %v6619 = vpop.f32.mrb[0].mxu0
    %v6620 = vadd.f32 0.0, %v6619
    %v6621 = vpop.f32.mrb[0].mxu0
    %6622 = vmatprep.mubr.f32.mxu0 %v6078
    %6623 = vmatmul.mubr.f32.gmra.mrb[0].mxu0 %v6006
    %v6624 = vpop.f32.mrb[0].mxu0
    %v6625 = vadd.f32 0.0, %v6624
    %v6626 = vpop.f32.mrb[0].mxu0
    %6627 = vmatprep.mubr.f32.mxu0 %v6079
    %6628 = vmatmul.mubr.f32.gmra.mrb[0].mxu0 %v6007
    %v6629 = vpop.f32.mrb[0].mxu0
    %v6630 = vadd.f32 0.0, %v6629
    %v6631 = vpop.f32.mrb[0].mxu0
    %6632 = vmatprep.mubr.f32.mxu0 %v6080
    %6633 = vmatmul.mubr.f32.gmra.mrb[0].mxu0 %v6008
    %v6634 = vpop.f32.mrb[0].mxu0
    %v6635 = vadd.f32 0.0, %v6634
    %v6636 = vpop.f32.mrb[0].mxu0
    %6637 = vmatprep.mubr.f32.mxu0 %v6081
    %6638 = vmatmul.mubr.f32.gmra.mrb[0].mxu0 %v6009
    %v6639 = vpop.f32.mrb[0].mxu0
    %v6640 = vadd.f32 0.0, %v6639
    %v6641 = vpop.f32.mrb[0].mxu0
    %6642 = vmatprep.mubr.f32.mxu0 %v6082
    %6643 = vmatmul.mubr.f32.gmra.mrb[0].mxu0 %v6010
    %v6644 = vpop.f32.mrb[0].mxu0
    %v6645 = vadd.f32 0.0, %v6644
    %v6646 = vpop.f32.mrb[0].mxu0
    %6647 = vmatprep.mubr.f32.mxu0 %v6083
    %6648 = vmatmul.mubr.f32.gmra.mrb[0].mxu0 %v6011
    %v6649 = vpop.f32.mrb[0].mxu0
    %v6650 = vadd.f32 0.0, %v6649
    %v6651 = vpop.f32.mrb[0].mxu0
    %6652 = vmatprep.mubr.f32.mxu0 %v6084
    %6653 = vmatmul.mubr.f32.gmra.mrb[0].mxu0 %v6012
    %v6654 = vpop.f32.mrb[0].mxu0
    %v6655 = vadd.f32 0.0, %v6654
    %v6656 = vpop.f32.mrb[0].mxu0
    %6657 = vmatprep.mubr.f32.mxu0 %v6085
    %6658 = vmatmul.mubr.f32.gmra.mrb[0].mxu0 %v6013
    %v6659 = vpop.f32.mrb[0].mxu0
    %v6660 = vadd.f32 0.0, %v6659
    %v6661 = vpop.f32.mrb[0].mxu0
    %6662 = vmatprep.mubr.f32.mxu0 %v6086
    %6663 = vmatmul.mubr.f32.gmra.mrb[0].mxu0 %v6014
    %v6664 = vpop.f32.mrb[0].mxu0
    %v6665 = vadd.f32 0.0, %v6664
    %v6666 = vpop.f32.mrb[0].mxu0
    %6667 = vmatprep.mubr.f32.mxu0 %v6087
    %6668 = vmatmul.mubr.f32.gmra.mrb[0].mxu0 %v6015
    %v6669 = vpop.f32.mrb[0].mxu0
    %v6670 = vadd.f32 0.0, %v6669
    %v6671 = vpop.f32.mrb[0].mxu0
    %6672 = vmatprep.mubr.f32.mxu0 %v6088
    %6673 = vmatmul.mubr.f32.gmra.mrb[0].mxu0 %v6016
    %v6674 = vpop.f32.mrb[0].mxu0
    %v6675 = vadd.f32 0.0, %v6674
    %v6676 = vpop.f32.mrb[0].mxu0
    %6677 = vmatprep.mubr.f32.mxu0 %v6089
    %6678 = vmatmul.mubr.f32.gmra.mrb[0].mxu0 %v6017
    %v6679 = vpop.f32.mrb[0].mxu0
    %v6680 = vadd.f32 0.0, %v6679
    %v6681 = vpop.f32.mrb[0].mxu0
    %6682 = vmatprep.mubr.f32.mxu0 %v6090
    %6683 = vmatmul.mubr.f32.gmra.mrb[0].mxu0 %v6018
    %v6684 = vpop.f32.mrb[0].mxu0
    %v6685 = vadd.f32 0.0, %v6684
    %v6686 = vpop.f32.mrb[0].mxu0
    %6687 = vmatprep.mubr.f32.mxu0 %v6091
    %6688 = vmatmul.mubr.f32.gmra.mrb[0].mxu0 %v6019
    %v6689 = vpop.f32.mrb[0].mxu0
    %v6690 = vadd.f32 0.0, %v6689
    %v6691 = vpop.f32.mrb[0].mxu0
    %6692 = vmatprep.mubr.f32.mxu0 %v6092
    %6693 = vmatmul.mubr.f32.gmra.mrb[0].mxu0 %v6020
    %v6694 = vpop.f32.mrb[0].mxu0
    %v6695 = vadd.f32 0.0, %v6694
    %v6696 = vpop.f32.mrb[0].mxu0
    %6697 = vdwg.mxu0
    %6698 = vmatprep.subr.mxu0 0.0
    %6699 = vmatpush1.msra.mxu0 %v6201
    %6700 = vmatprep.subr.mxu0 0.0
    %6701 = vmatpush1.msra.mxu0 %v6202
    %6702 = vmatprep.subr.mxu0 0.0
    %6703 = vmatpush1.msra.mxu0 %v6203
    %6704 = vmatprep.subr.mxu0 0.0
    %6705 = vmatpush1.msra.mxu0 %v6204
    %6706 = vmatprep.subr.mxu0 0.0
    %6707 = vmatpush1.msra.mxu0 %v6205
    %6708 = vmatprep.subr.mxu0 0.0
    %6709 = vmatpush1.msra.mxu0 %v6206
    %6710 = vmatprep.subr.mxu0 0.0
    %6711 = vmatpush1.msra.mxu0 %v6207
    %6712 = vmatprep.subr.mxu0 0.0
    %6713 = vmatpush1.msra.mxu0 %v6208
    %6714 = vmatprep.subr.mxu0 0.0
    %6715 = vmatpush1.msra.mxu0 %v6209
    %6716 = vmatprep.subr.mxu0 0.0
    %6717 = vmatpush1.msra.mxu0 %v6210
    %6718 = vmatprep.subr.mxu0 0.0
    %6719 = vmatpush1.msra.mxu0 %v6211
    %6720 = vmatprep.subr.mxu0 0.0
    %6721 = vmatpush1.msra.mxu0 %v6212
    %6722 = vmatprep.subr.mxu0 0.0
    %6723 = vmatpush1.msra.mxu0 %v6213
    %6724 = vmatprep.subr.mxu0 0.0
    %6725 = vmatpush1.msra.mxu0 %v6214
    %6726 = vmatprep.subr.mxu0 0.0
    %6727 = vmatpush1.msra.mxu0 %v6215
    %6728 = vmatprep.subr.mxu0 0.0
    %6729 = vmatpush1.msra.mxu0 %v6216
    %6730 = vmatprep.subr.mxu0 0.0
    %6731 = vmatpush1.msra.mxu0 %v6217
    %6732 = vmatprep.subr.mxu0 0.0
    %6733 = vmatpush1.msra.mxu0 %v6218
    %6734 = vmatprep.subr.mxu0 0.0
    %6735 = vmatpush1.msra.mxu0 %v6219
    %6736 = vmatprep.subr.mxu0 0.0
    %6737 = vmatpush1.msra.mxu0 %v6220
    %6738 = vmatprep.subr.mxu0 0.0
    %6739 = vmatpush1.msra.mxu0 %v6221
    %6740 = vmatprep.subr.mxu0 0.0
    %6741 = vmatpush1.msra.mxu0 %v6222
    %6742 = vmatprep.subr.mxu0 0.0
    %6743 = vmatpush1.msra.mxu0 %v6223
    %6744 = vmatprep.subr.mxu0 0.0
    %6745 = vmatpush1.msra.mxu0 %v6224
    %6746 = vmatprep.subr.mxu0 0.0
    %6747 = vmatpush1.msra.mxu0 %v6225
    %6748 = vmatprep.subr.mxu0 0.0
    %6749 = vmatpush1.msra.mxu0 %v6226
    %6750 = vmatprep.subr.mxu0 0.0
    %6751 = vmatpush1.msra.mxu0 %v6227
    %6752 = vmatprep.subr.mxu0 0.0
    %6753 = vmatpush1.msra.mxu0 %v6228
    %6754 = vmatprep.subr.mxu0 0.0
    %6755 = vmatpush1.msra.mxu0 %v6229
    %6756 = vmatprep.subr.mxu0 0.0
    %6757 = vmatpush1.msra.mxu0 %v6230
    %6758 = vmatprep.subr.mxu0 0.0
    %6759 = vmatpush1.msra.mxu0 %v6231
    %6760 = vmatprep.subr.mxu0 0.0
    %6761 = vmatpush1.msra.mxu0 %v6232
    %6762 = vmatprep.mubr.f32.mxu0 %v5955
    %6763 = vmatmul.mubr.f32.gmra.mrb[0].mxu0 %v6097
    %v6764 = vpop.f32.mrb[0].mxu0
    %v6765 = vadd.f32 %v6380, %v6764
    %v6766 = vpop.f32.mrb[0].mxu0
    %6767 = vmatprep.mubr.f32.mxu0 %v5956
    %6768 = vmatmul.mubr.f32.gmra.mrb[0].mxu0 %v6098
    %v6769 = vpop.f32.mrb[0].mxu0
    %v6770 = vadd.f32 %v6385, %v6769
    %v6771 = vpop.f32.mrb[0].mxu0
    %6772 = vmatprep.mubr.f32.mxu0 %v5957
    %6773 = vmatmul.mubr.f32.gmra.mrb[0].mxu0 %v6099
    %v6774 = vpop.f32.mrb[0].mxu0
    %v6775 = vadd.f32 %v6390, %v6774
    %v6776 = vpop.f32.mrb[0].mxu0
    %6777 = vmatprep.mubr.f32.mxu0 %v5958
    %6778 = vmatmul.mubr.f32.gmra.mrb[0].mxu0 %v6100
    %v6779 = vpop.f32.mrb[0].mxu0
    %v6780 = vadd.f32 %v6395, %v6779
    %v6781 = vpop.f32.mrb[0].mxu0
    %6782 = vmatprep.mubr.f32.mxu0 %v5959
    %6783 = vmatmul.mubr.f32.gmra.mrb[0].mxu0 %v6101
    %v6784 = vpop.f32.mrb[0].mxu0
    %v6785 = vadd.f32 %v6400, %v6784
    %v6786 = vpop.f32.mrb[0].mxu0
    %6787 = vmatprep.mubr.f32.mxu0 %v5960
    %6788 = vmatmul.mubr.f32.gmra.mrb[0].mxu0 %v6102
    %v6789 = vpop.f32.mrb[0].mxu0
    %v6790 = vadd.f32 %v6405, %v6789
    %v6791 = vpop.f32.mrb[0].mxu0
    %6792 = vmatprep.mubr.f32.mxu0 %v5961
    %6793 = vmatmul.mubr.f32.gmra.mrb[0].mxu0 %v6103
    %v6794 = vpop.f32.mrb[0].mxu0
    %v6795 = vadd.f32 %v6410, %v6794
    %v6796 = vpop.f32.mrb[0].mxu0
    %6797 = vmatprep.mubr.f32.mxu0 %v5962
    %6798 = vmatmul.mubr.f32.gmra.mrb[0].mxu0 %v6104
    %v6799 = vpop.f32.mrb[0].mxu0
    %v6800 = vadd.f32 %v6415, %v6799
    %v6801 = vpop.f32.mrb[0].mxu0
    %6802 = vmatprep.mubr.f32.mxu0 %v5963
    %6803 = vmatmul.mubr.f32.gmra.mrb[0].mxu0 %v6105
    %v6804 = vpop.f32.mrb[0].mxu0
    %v6805 = vadd.f32 %v6420, %v6804
    %v6806 = vpop.f32.mrb[0].mxu0
    %6807 = vmatprep.mubr.f32.mxu0 %v5964
    %6808 = vmatmul.mubr.f32.gmra.mrb[0].mxu0 %v6106
    %v6809 = vpop.f32.mrb[0].mxu0
    %v6810 = vadd.f32 %v6425, %v6809
    %v6811 = vpop.f32.mrb[0].mxu0
    %6812 = vmatprep.mubr.f32.mxu0 %v5965
    %6813 = vmatmul.mubr.f32.gmra.mrb[0].mxu0 %v6107
    %v6814 = vpop.f32.mrb[0].mxu0
    %v6815 = vadd.f32 %v6430, %v6814
    %v6816 = vpop.f32.mrb[0].mxu0
    %6817 = vmatprep.mubr.f32.mxu0 %v5966
    %6818 = vmatmul.mubr.f32.gmra.mrb[0].mxu0 %v6108
    %v6819 = vpop.f32.mrb[0].mxu0
    %v6820 = vadd.f32 %v6435, %v6819
    %v6821 = vpop.f32.mrb[0].mxu0
    %6822 = vmatprep.mubr.f32.mxu0 %v5967
    %6823 = vmatmul.mubr.f32.gmra.mrb[0].mxu0 %v6109
    %v6824 = vpop.f32.mrb[0].mxu0
    %v6825 = vadd.f32 %v6440, %v6824
    %v6826 = vpop.f32.mrb[0].mxu0
    %6827 = vmatprep.mubr.f32.mxu0 %v5968
    %6828 = vmatmul.mubr.f32.gmra.mrb[0].mxu0 %v6110
    %v6829 = vpop.f32.mrb[0].mxu0
    %v6830 = vadd.f32 %v6445, %v6829
    %v6831 = vpop.f32.mrb[0].mxu0
    %6832 = vmatprep.mubr.f32.mxu0 %v5969
    %6833 = vmatmul.mubr.f32.gmra.mrb[0].mxu0 %v6111
    %v6834 = vpop.f32.mrb[0].mxu0
    %v6835 = vadd.f32 %v6450, %v6834
    %v6836 = vpop.f32.mrb[0].mxu0
    %6837 = vmatprep.mubr.f32.mxu0 %v5970
    %6838 = vmatmul.mubr.f32.gmra.mrb[0].mxu0 %v6112
    %v6839 = vpop.f32.mrb[0].mxu0
    %v6840 = vadd.f32 %v6455, %v6839
    %v6841 = vpop.f32.mrb[0].mxu0
    %6842 = vmatprep.mubr.f32.mxu0 %v5971
    %6843 = vmatmul.mubr.f32.gmra.mrb[0].mxu0 %v6113
    %v6844 = vpop.f32.mrb[0].mxu0
    %v6845 = vadd.f32 %v6460, %v6844
    %v6846 = vpop.f32.mrb[0].mxu0
    %6847 = vmatprep.mubr.f32.mxu0 %v5972
    %6848 = vmatmul.mubr.f32.gmra.mrb[0].mxu0 %v6114
    %v6849 = vpop.f32.mrb[0].mxu0
    %v6850 = vadd.f32 %v6465, %v6849
    %v6851 = vpop.f32.mrb[0].mxu0
    %6852 = vmatprep.mubr.f32.mxu0 %v5973
    %6853 = vmatmul.mubr.f32.gmra.mrb[0].mxu0 %v6115
    %v6854 = vpop.f32.mrb[0].mxu0
    %v6855 = vadd.f32 %v6470, %v6854
    %v6856 = vpop.f32.mrb[0].mxu0
    %6857 = vmatprep.mubr.f32.mxu0 %v5974
    %6858 = vmatmul.mubr.f32.gmra.mrb[0].mxu0 %v6116
    %v6859 = vpop.f32.mrb[0].mxu0
    %v6860 = vadd.f32 %v6475, %v6859
    %v6861 = vpop.f32.mrb[0].mxu0
    %6862 = vmatprep.mubr.f32.mxu0 %v5975
    %6863 = vmatmul.mubr.f32.gmra.mrb[0].mxu0 %v6117
    %v6864 = vpop.f32.mrb[0].mxu0
    %v6865 = vadd.f32 %v6480, %v6864
    %v6866 = vpop.f32.mrb[0].mxu0
    %6867 = vmatprep.mubr.f32.mxu0 %v5976
    %6868 = vmatmul.mubr.f32.gmra.mrb[0].mxu0 %v6118
    %v6869 = vpop.f32.mrb[0].mxu0
    %v6870 = vadd.f32 %v6485, %v6869
    %v6871 = vpop.f32.mrb[0].mxu0
    %6872 = vmatprep.mubr.f32.mxu0 %v5977
    %6873 = vmatmul.mubr.f32.gmra.mrb[0].mxu0 %v6119
    %v6874 = vpop.f32.mrb[0].mxu0
    %v6875 = vadd.f32 %v6490, %v6874
    %v6876 = vpop.f32.mrb[0].mxu0
    %6877 = vmatprep.mubr.f32.mxu0 %v5978
    %6878 = vmatmul.mubr.f32.gmra.mrb[0].mxu0 %v6120
    %v6879 = vpop.f32.mrb[0].mxu0
    %v6880 = vadd.f32 %v6495, %v6879
    %v6881 = vpop.f32.mrb[0].mxu0
    %6882 = vmatprep.mubr.f32.mxu0 %v5979
    %6883 = vmatmul.mubr.f32.gmra.mrb[0].mxu0 %v6121
    %v6884 = vpop.f32.mrb[0].mxu0
    %v6885 = vadd.f32 %v6500, %v6884
    %v6886 = vpop.f32.mrb[0].mxu0
    %6887 = vmatprep.mubr.f32.mxu0 %v5980
    %6888 = vmatmul.mubr.f32.gmra.mrb[0].mxu0 %v6122
    %v6889 = vpop.f32.mrb[0].mxu0
    %v6890 = vadd.f32 %v6505, %v6889
    %v6891 = vpop.f32.mrb[0].mxu0
    %6892 = vmatprep.mubr.f32.mxu0 %v5981
    %6893 = vmatmul.mubr.f32.gmra.mrb[0].mxu0 %v6123
    %v6894 = vpop.f32.mrb[0].mxu0
    %v6895 = vadd.f32 %v6510, %v6894
    %v6896 = vpop.f32.mrb[0].mxu0
    %6897 = vmatprep.mubr.f32.mxu0 %v5982
    %6898 = vmatmul.mubr.f32.gmra.mrb[0].mxu0 %v6124
    %v6899 = vpop.f32.mrb[0].mxu0
    %v6900 = vadd.f32 %v6515, %v6899
    %v6901 = vpop.f32.mrb[0].mxu0
    %6902 = vmatprep.mubr.f32.mxu0 %v5983
    %6903 = vmatmul.mubr.f32.gmra.mrb[0].mxu0 %v6125
    %v6904 = vpop.f32.mrb[0].mxu0
    %v6905 = vadd.f32 %v6520, %v6904
    %v6906 = vpop.f32.mrb[0].mxu0
    %6907 = vmatprep.mubr.f32.mxu0 %v5984
    %6908 = vmatmul.mubr.f32.gmra.mrb[0].mxu0 %v6126
    %v6909 = vpop.f32.mrb[0].mxu0
    %v6910 = vadd.f32 %v6525, %v6909
    %v6911 = vpop.f32.mrb[0].mxu0
    %6912 = vmatprep.mubr.f32.mxu0 %v5985
    %6913 = vmatmul.mubr.f32.gmra.mrb[0].mxu0 %v6127
    %v6914 = vpop.f32.mrb[0].mxu0
    %v6915 = vadd.f32 %v6530, %v6914
    %v6916 = vpop.f32.mrb[0].mxu0
    %6917 = vmatprep.mubr.f32.mxu0 %v5986
    %6918 = vmatmul.mubr.f32.gmra.mrb[0].mxu0 %v6128
    %v6919 = vpop.f32.mrb[0].mxu0
    %v6920 = vadd.f32 %v6535, %v6919
    %v6921 = vpop.f32.mrb[0].mxu0
    %6922 = vmatprep.mubr.f32.mxu0 %v5991
    %6923 = vmatmul.mubr.f32.gmra.mrb[0].mxu0 %v6133
    %v6924 = vpop.f32.mrb[0].mxu0
    %v6925 = vadd.f32 %v6540, %v6924
    %v6926 = vpop.f32.mrb[0].mxu0
    %6927 = vmatprep.mubr.f32.mxu0 %v5992
    %6928 = vmatmul.mubr.f32.gmra.mrb[0].mxu0 %v6134
    %v6929 = vpop.f32.mrb[0].mxu0
    %v6930 = vadd.f32 %v6545, %v6929
    %v6931 = vpop.f32.mrb[0].mxu0
    %6932 = vmatprep.mubr.f32.mxu0 %v5993
    %6933 = vmatmul.mubr.f32.gmra.mrb[0].mxu0 %v6135
    %v6934 = vpop.f32.mrb[0].mxu0
    %v6935 = vadd.f32 %v6550, %v6934
    %v6936 = vpop.f32.mrb[0].mxu0
    %6937 = vmatprep.mubr.f32.mxu0 %v5994
    %6938 = vmatmul.mubr.f32.gmra.mrb[0].mxu0 %v6136
    %v6939 = vpop.f32.mrb[0].mxu0
    %v6940 = vadd.f32 %v6555, %v6939
    %v6941 = vpop.f32.mrb[0].mxu0
    %6942 = vmatprep.mubr.f32.mxu0 %v5995
    %6943 = vmatmul.mubr.f32.gmra.mrb[0].mxu0 %v6137
    %v6944 = vpop.f32.mrb[0].mxu0
    %v6945 = vadd.f32 %v6560, %v6944
    %v6946 = vpop.f32.mrb[0].mxu0
    %6947 = vmatprep.mubr.f32.mxu0 %v5996
    %6948 = vmatmul.mubr.f32.gmra.mrb[0].mxu0 %v6138
    %v6949 = vpop.f32.mrb[0].mxu0
    %v6950 = vadd.f32 %v6565, %v6949
    %v6951 = vpop.f32.mrb[0].mxu0
    %6952 = vmatprep.mubr.f32.mxu0 %v5997
    %6953 = vmatmul.mubr.f32.gmra.mrb[0].mxu0 %v6139
    %v6954 = vpop.f32.mrb[0].mxu0
    %v6955 = vadd.f32 %v6570, %v6954
    %v6956 = vpop.f32.mrb[0].mxu0
    %6957 = vmatprep.mubr.f32.mxu0 %v5998
    %6958 = vmatmul.mubr.f32.gmra.mrb[0].mxu0 %v6140
    %v6959 = vpop.f32.mrb[0].mxu0
    %v6960 = vadd.f32 %v6575, %v6959
    %v6961 = vpop.f32.mrb[0].mxu0
    %6962 = vmatprep.mubr.f32.mxu0 %v5999
    %6963 = vmatmul.mubr.f32.gmra.mrb[0].mxu0 %v6141
    %v6964 = vpop.f32.mrb[0].mxu0
    %v6965 = vadd.f32 %v6580, %v6964
    %v6966 = vpop.f32.mrb[0].mxu0
    %6967 = vmatprep.mubr.f32.mxu0 %v6000
    %6968 = vmatmul.mubr.f32.gmra.mrb[0].mxu0 %v6142
    %v6969 = vpop.f32.mrb[0].mxu0
    %v6970 = vadd.f32 %v6585, %v6969
    %v6971 = vpop.f32.mrb[0].mxu0
    %6972 = vmatprep.mubr.f32.mxu0 %v6001
    %6973 = vmatmul.mubr.f32.gmra.mrb[0].mxu0 %v6143
    %v6974 = vpop.f32.mrb[0].mxu0
    %v6975 = vadd.f32 %v6590, %v6974
    %v6976 = vpop.f32.mrb[0].mxu0
    %6977 = vmatprep.mubr.f32.mxu0 %v6002
    %6978 = vmatmul.mubr.f32.gmra.mrb[0].mxu0 %v6144
    %v6979 = vpop.f32.mrb[0].mxu0
    %v6980 = vadd.f32 %v6595, %v6979
    %v6981 = vpop.f32.mrb[0].mxu0
    %6982 = vmatprep.mubr.f32.mxu0 %v6003
    %6983 = vmatmul.mubr.f32.gmra.mrb[0].mxu0 %v6145
    %v6984 = vpop.f32.mrb[0].mxu0
    %v6985 = vadd.f32 %v6600, %v6984
    %v6986 = vpop.f32.mrb[0].mxu0
    %6987 = vmatprep.mubr.f32.mxu0 %v6004
    %6988 = vmatmul.mubr.f32.gmra.mrb[0].mxu0 %v6146
    %v6989 = vpop.f32.mrb[0].mxu0
    %v6990 = vadd.f32 %v6605, %v6989
    %v6991 = vpop.f32.mrb[0].mxu0
    %6992 = vmatprep.mubr.f32.mxu0 %v6005
    %6993 = vmatmul.mubr.f32.gmra.mrb[0].mxu0 %v6147
    %v6994 = vpop.f32.mrb[0].mxu0
    %v6995 = vadd.f32 %v6610, %v6994
    %v6996 = vpop.f32.mrb[0].mxu0
    %6997 = vmatprep.mubr.f32.mxu0 %v6006
    %6998 = vmatmul.mubr.f32.gmra.mrb[0].mxu0 %v6148
    %v6999 = vpop.f32.mrb[0].mxu0
    %v7000 = vadd.f32 %v6615, %v6999
    %v7001 = vpop.f32.mrb[0].mxu0
    %7002 = vmatprep.mubr.f32.mxu0 %v6007
    %7003 = vmatmul.mubr.f32.gmra.mrb[0].mxu0 %v6149
    %v7004 = vpop.f32.mrb[0].mxu0
    %v7005 = vadd.f32 %v6620, %v7004
    %v7006 = vpop.f32.mrb[0].mxu0
    %7007 = vmatprep.mubr.f32.mxu0 %v6008
    %7008 = vmatmul.mubr.f32.gmra.mrb[0].mxu0 %v6150
    %v7009 = vpop.f32.mrb[0].mxu0
    %v7010 = vadd.f32 %v6625, %v7009
    %v7011 = vpop.f32.mrb[0].mxu0
    %7012 = vmatprep.mubr.f32.mxu0 %v6009
    %7013 = vmatmul.mubr.f32.gmra.mrb[0].mxu0 %v6151
    %v7014 = vpop.f32.mrb[0].mxu0
    %v7015 = vadd.f32 %v6630, %v7014
    %v7016 = vpop.f32.mrb[0].mxu0
    %7017 = vmatprep.mubr.f32.mxu0 %v6010
    %7018 = vmatmul.mubr.f32.gmra.mrb[0].mxu0 %v6152
    %v7019 = vpop.f32.mrb[0].mxu0
    %v7020 = vadd.f32 %v6635, %v7019
    %v7021 = vpop.f32.mrb[0].mxu0
    %7022 = vmatprep.mubr.f32.mxu0 %v6011
    %7023 = vmatmul.mubr.f32.gmra.mrb[0].mxu0 %v6153
    %v7024 = vpop.f32.mrb[0].mxu0
    %v7025 = vadd.f32 %v6640, %v7024
    %v7026 = vpop.f32.mrb[0].mxu0
    %7027 = vmatprep.mubr.f32.mxu0 %v6012
    %7028 = vmatmul.mubr.f32.gmra.mrb[0].mxu0 %v6154
    %v7029 = vpop.f32.mrb[0].mxu0
    %v7030 = vadd.f32 %v6645, %v7029
    %v7031 = vpop.f32.mrb[0].mxu0
    %7032 = vmatprep.mubr.f32.mxu0 %v6013
    %7033 = vmatmul.mubr.f32.gmra.mrb[0].mxu0 %v6155
    %v7034 = vpop.f32.mrb[0].mxu0
    %v7035 = vadd.f32 %v6650, %v7034
    %v7036 = vpop.f32.mrb[0].mxu0
    %7037 = vmatprep.mubr.f32.mxu0 %v6014
    %7038 = vmatmul.mubr.f32.gmra.mrb[0].mxu0 %v6156
    %v7039 = vpop.f32.mrb[0].mxu0
    %v7040 = vadd.f32 %v6655, %v7039
    %v7041 = vpop.f32.mrb[0].mxu0
    %7042 = vmatprep.mubr.f32.mxu0 %v6015
    %7043 = vmatmul.mubr.f32.gmra.mrb[0].mxu0 %v6157
    %v7044 = vpop.f32.mrb[0].mxu0
    %v7045 = vadd.f32 %v6660, %v7044
    %v7046 = vpop.f32.mrb[0].mxu0
    %7047 = vmatprep.mubr.f32.mxu0 %v6016
    %7048 = vmatmul.mubr.f32.gmra.mrb[0].mxu0 %v6158
    %v7049 = vpop.f32.mrb[0].mxu0
    %v7050 = vadd.f32 %v6665, %v7049
    %v7051 = vpop.f32.mrb[0].mxu0
    %7052 = vmatprep.mubr.f32.mxu0 %v6017
    %7053 = vmatmul.mubr.f32.gmra.mrb[0].mxu0 %v6159
    %v7054 = vpop.f32.mrb[0].mxu0
    %v7055 = vadd.f32 %v6670, %v7054
    %v7056 = vpop.f32.mrb[0].mxu0
    %7057 = vmatprep.mubr.f32.mxu0 %v6018
    %7058 = vmatmul.mubr.f32.gmra.mrb[0].mxu0 %v6160
    %v7059 = vpop.f32.mrb[0].mxu0
    %v7060 = vadd.f32 %v6675, %v7059
    %v7061 = vpop.f32.mrb[0].mxu0
    %7062 = vmatprep.mubr.f32.mxu0 %v6019
    %7063 = vmatmul.mubr.f32.gmra.mrb[0].mxu0 %v6161
    %v7064 = vpop.f32.mrb[0].mxu0
    %v7065 = vadd.f32 %v6680, %v7064
    %v7066 = vpop.f32.mrb[0].mxu0
    %7067 = vmatprep.mubr.f32.mxu0 %v6020
    %7068 = vmatmul.mubr.f32.gmra.mrb[0].mxu0 %v6162
    %v7069 = vpop.f32.mrb[0].mxu0
    %v7070 = vadd.f32 %v6685, %v7069
    %v7071 = vpop.f32.mrb[0].mxu0
    %7072 = vmatprep.mubr.f32.mxu0 %v6021
    %7073 = vmatmul.mubr.f32.gmra.mrb[0].mxu0 %v6163
    %v7074 = vpop.f32.mrb[0].mxu0
    %v7075 = vadd.f32 %v6690, %v7074
    %v7076 = vpop.f32.mrb[0].mxu0
    %7077 = vmatprep.mubr.f32.mxu0 %v6022
    %7078 = vmatmul.mubr.f32.gmra.mrb[0].mxu0 %v6164
    %v7079 = vpop.f32.mrb[0].mxu0
    %v7080 = vadd.f32 %v6695, %v7079
    %v7081 = vpop.f32.mrb[0].mxu0
    %7082 = vdwg.mxu0
    %7083 = vmatprep.subr.mxu0 0.0
    %7084 = vmatpush1.msra.mxu0 %v6233
    %7085 = vmatprep.subr.mxu0 0.0
    %7086 = vmatpush1.msra.mxu0 %v6234
    %7087 = vmatprep.subr.mxu0 0.0
    %7088 = vmatpush1.msra.mxu0 %v6235
    %7089 = vmatprep.subr.mxu0 0.0
    %7090 = vmatpush1.msra.mxu0 %v6236
    %7091 = vmatprep.subr.mxu0 0.0
    %7092 = vmatpush1.msra.mxu0 %v6237
    %7093 = vmatprep.subr.mxu0 0.0
    %7094 = vmatpush1.msra.mxu0 %v6238
    %7095 = vmatprep.subr.mxu0 0.0
    %7096 = vmatpush1.msra.mxu0 %v6239
    %7097 = vmatprep.subr.mxu0 0.0
    %7098 = vmatpush1.msra.mxu0 %v6240
    %7099 = vmatprep.subr.mxu0 0.0
    %7100 = vmatpush1.msra.mxu0 %v6241
    %7101 = vmatprep.subr.mxu0 0.0
    %7102 = vmatpush1.msra.mxu0 %v6242
    %7103 = vmatprep.subr.mxu0 0.0
    %7104 = vmatpush1.msra.mxu0 %v6243
    %7105 = vmatprep.subr.mxu0 0.0
    %7106 = vmatpush1.msra.mxu0 %v6244
    %7107 = vmatprep.subr.mxu0 0.0
    %7108 = vmatpush1.msra.mxu0 %v6245
    %7109 = vmatprep.subr.mxu0 0.0
    %7110 = vmatpush1.msra.mxu0 %v6246
    %7111 = vmatprep.subr.mxu0 0.0
    %7112 = vmatpush1.msra.mxu0 %v6247
    %7113 = vmatprep.subr.mxu0 0.0
    %7114 = vmatpush1.msra.mxu0 %v6248
    %7115 = vmatprep.subr.mxu0 0.0
    %7116 = vmatpush1.msra.mxu0 %v6249
    %7117 = vmatprep.subr.mxu0 0.0
    %7118 = vmatpush1.msra.mxu0 %v6250
    %7119 = vmatprep.subr.mxu0 0.0
    %7120 = vmatpush1.msra.mxu0 %v6251
    %7121 = vmatprep.subr.mxu0 0.0
    %7122 = vmatpush1.msra.mxu0 %v6252
    %7123 = vmatprep.subr.mxu0 0.0
    %7124 = vmatpush1.msra.mxu0 %v6253
    %7125 = vmatprep.subr.mxu0 0.0
    %7126 = vmatpush1.msra.mxu0 %v6254
    %7127 = vmatprep.subr.mxu0 0.0
    %7128 = vmatpush1.msra.mxu0 %v6255
    %7129 = vmatprep.subr.mxu0 0.0
    %7130 = vmatpush1.msra.mxu0 %v6256
    %7131 = vmatprep.subr.mxu0 0.0
    %7132 = vmatpush1.msra.mxu0 %v6257
    %7133 = vmatprep.subr.mxu0 0.0
    %7134 = vmatpush1.msra.mxu0 %v6258
    %7135 = vmatprep.subr.mxu0 0.0
    %7136 = vmatpush1.msra.mxu0 %v6259
    %7137 = vmatprep.subr.mxu0 0.0
    %7138 = vmatpush1.msra.mxu0 %v6260
    %7139 = vmatprep.subr.mxu0 0.0
    %7140 = vmatpush1.msra.mxu0 %v6261
    %7141 = vmatprep.subr.mxu0 0.0
    %7142 = vmatpush1.msra.mxu0 %v6262
    %7143 = vmatprep.subr.mxu0 0.0
    %7144 = vmatpush1.msra.mxu0 %v6263
    %7145 = vmatprep.subr.mxu0 0.0
    %7146 = vmatpush1.msra.mxu0 %v6264
    %7147 = vmatprep.mubr.f32.mxu0 %v6099
    %7148 = vmatmul.mubr.f32.gmra.mrb[0].mxu0 %v6027
    %v7149 = vpop.f32.mrb[0].mxu0
    %v7150 = vadd.f32 %v6765, %v7149
    %v7151 = vpop.f32.mrb[0].mxu0
    %7152 = vmatprep.mubr.f32.mxu0 %v6100
    %7153 = vmatmul.mubr.f32.gmra.mrb[0].mxu0 %v6028
    %v7154 = vpop.f32.mrb[0].mxu0
    %v7155 = vadd.f32 %v6770, %v7154
    %v7156 = vpop.f32.mrb[0].mxu0
    %7157 = vmatprep.mubr.f32.mxu0 %v6101
    %7158 = vmatmul.mubr.f32.gmra.mrb[0].mxu0 %v6029
    %v7159 = vpop.f32.mrb[0].mxu0
    %v7160 = vadd.f32 %v6775, %v7159
    %v7161 = vpop.f32.mrb[0].mxu0
    %7162 = vmatprep.mubr.f32.mxu0 %v6102
    %7163 = vmatmul.mubr.f32.gmra.mrb[0].mxu0 %v6030
    %v7164 = vpop.f32.mrb[0].mxu0
    %v7165 = vadd.f32 %v6780, %v7164
    %v7166 = vpop.f32.mrb[0].mxu0
    %7167 = vmatprep.mubr.f32.mxu0 %v6103
    %7168 = vmatmul.mubr.f32.gmra.mrb[0].mxu0 %v6031
    %v7169 = vpop.f32.mrb[0].mxu0
    %v7170 = vadd.f32 %v6785, %v7169
    %v7171 = vpop.f32.mrb[0].mxu0
    %7172 = vmatprep.mubr.f32.mxu0 %v6104
    %7173 = vmatmul.mubr.f32.gmra.mrb[0].mxu0 %v6032
    %v7174 = vpop.f32.mrb[0].mxu0
    %v7175 = vadd.f32 %v6790, %v7174
    %v7176 = vpop.f32.mrb[0].mxu0
    %7177 = vmatprep.mubr.f32.mxu0 %v6105
    %7178 = vmatmul.mubr.f32.gmra.mrb[0].mxu0 %v6033
    %v7179 = vpop.f32.mrb[0].mxu0
    %v7180 = vadd.f32 %v6795, %v7179
    %v7181 = vpop.f32.mrb[0].mxu0
    %7182 = vmatprep.mubr.f32.mxu0 %v6106
    %7183 = vmatmul.mubr.f32.gmra.mrb[0].mxu0 %v6034
    %v7184 = vpop.f32.mrb[0].mxu0
    %v7185 = vadd.f32 %v6800, %v7184
    %v7186 = vpop.f32.mrb[0].mxu0
    %7187 = vmatprep.mubr.f32.mxu0 %v6107
    %7188 = vmatmul.mubr.f32.gmra.mrb[0].mxu0 %v6035
    %v7189 = vpop.f32.mrb[0].mxu0
    %v7190 = vadd.f32 %v6805, %v7189
    %v7191 = vpop.f32.mrb[0].mxu0
    %7192 = vmatprep.mubr.f32.mxu0 %v6108
    %7193 = vmatmul.mubr.f32.gmra.mrb[0].mxu0 %v6036
    %v7194 = vpop.f32.mrb[0].mxu0
    %v7195 = vadd.f32 %v6810, %v7194
    %v7196 = vpop.f32.mrb[0].mxu0
    %7197 = vmatprep.mubr.f32.mxu0 %v6109
    %7198 = vmatmul.mubr.f32.gmra.mrb[0].mxu0 %v6037
    %v7199 = vpop.f32.mrb[0].mxu0
    %v7200 = vadd.f32 %v6815, %v7199
    %v7201 = vpop.f32.mrb[0].mxu0
    %7202 = vmatprep.mubr.f32.mxu0 %v6110
    %7203 = vmatmul.mubr.f32.gmra.mrb[0].mxu0 %v6038
    %v7204 = vpop.f32.mrb[0].mxu0
    %v7205 = vadd.f32 %v6820, %v7204
    %v7206 = vpop.f32.mrb[0].mxu0
    %7207 = vmatprep.mubr.f32.mxu0 %v6111
    %7208 = vmatmul.mubr.f32.gmra.mrb[0].mxu0 %v6039
    %v7209 = vpop.f32.mrb[0].mxu0
    %v7210 = vadd.f32 %v6825, %v7209
    %v7211 = vpop.f32.mrb[0].mxu0
    %7212 = vmatprep.mubr.f32.mxu0 %v6112
    %7213 = vmatmul.mubr.f32.gmra.mrb[0].mxu0 %v6040
    %v7214 = vpop.f32.mrb[0].mxu0
    %v7215 = vadd.f32 %v6830, %v7214
    %v7216 = vpop.f32.mrb[0].mxu0
    %7217 = vmatprep.mubr.f32.mxu0 %v6113
    %7218 = vmatmul.mubr.f32.gmra.mrb[0].mxu0 %v6041
    %v7219 = vpop.f32.mrb[0].mxu0
    %v7220 = vadd.f32 %v6835, %v7219
    %v7221 = vpop.f32.mrb[0].mxu0
    %7222 = vmatprep.mubr.f32.mxu0 %v6114
    %7223 = vmatmul.mubr.f32.gmra.mrb[0].mxu0 %v6042
    %v7224 = vpop.f32.mrb[0].mxu0
    %v7225 = vadd.f32 %v6840, %v7224
    %v7226 = vpop.f32.mrb[0].mxu0
    %7227 = vmatprep.mubr.f32.mxu0 %v6115
    %7228 = vmatmul.mubr.f32.gmra.mrb[0].mxu0 %v6043
    %v7229 = vpop.f32.mrb[0].mxu0
    %v7230 = vadd.f32 %v6845, %v7229
    %v7231 = vpop.f32.mrb[0].mxu0
    %7232 = vmatprep.mubr.f32.mxu0 %v6116
    %7233 = vmatmul.mubr.f32.gmra.mrb[0].mxu0 %v6044
    %v7234 = vpop.f32.mrb[0].mxu0
    %v7235 = vadd.f32 %v6850, %v7234
    %v7236 = vpop.f32.mrb[0].mxu0
    %7237 = vmatprep.mubr.f32.mxu0 %v6117
    %7238 = vmatmul.mubr.f32.gmra.mrb[0].mxu0 %v6045
    %v7239 = vpop.f32.mrb[0].mxu0
    %v7240 = vadd.f32 %v6855, %v7239
    %v7241 = vpop.f32.mrb[0].mxu0
    %7242 = vmatprep.mubr.f32.mxu0 %v6118
    %7243 = vmatmul.mubr.f32.gmra.mrb[0].mxu0 %v6046
    %v7244 = vpop.f32.mrb[0].mxu0
    %v7245 = vadd.f32 %v6860, %v7244
    %v7246 = vpop.f32.mrb[0].mxu0
    %7247 = vmatprep.mubr.f32.mxu0 %v6119
    %7248 = vmatmul.mubr.f32.gmra.mrb[0].mxu0 %v6047
    %v7249 = vpop.f32.mrb[0].mxu0
    %v7250 = vadd.f32 %v6865, %v7249
    %v7251 = vpop.f32.mrb[0].mxu0
    %7252 = vmatprep.mubr.f32.mxu0 %v6120
    %7253 = vmatmul.mubr.f32.gmra.mrb[0].mxu0 %v6048
    %v7254 = vpop.f32.mrb[0].mxu0
    %v7255 = vadd.f32 %v6870, %v7254
    %v7256 = vpop.f32.mrb[0].mxu0
    %7257 = vmatprep.mubr.f32.mxu0 %v6121
    %7258 = vmatmul.mubr.f32.gmra.mrb[0].mxu0 %v6049
    %v7259 = vpop.f32.mrb[0].mxu0
    %v7260 = vadd.f32 %v6875, %v7259
    %v7261 = vpop.f32.mrb[0].mxu0
    %7262 = vmatprep.mubr.f32.mxu0 %v6122
    %7263 = vmatmul.mubr.f32.gmra.mrb[0].mxu0 %v6050
    %v7264 = vpop.f32.mrb[0].mxu0
    %v7265 = vadd.f32 %v6880, %v7264
    %v7266 = vpop.f32.mrb[0].mxu0
    %7267 = vmatprep.mubr.f32.mxu0 %v6123
    %7268 = vmatmul.mubr.f32.gmra.mrb[0].mxu0 %v6051
    %v7269 = vpop.f32.mrb[0].mxu0
    %v7270 = vadd.f32 %v6885, %v7269
    %v7271 = vpop.f32.mrb[0].mxu0
    %7272 = vmatprep.mubr.f32.mxu0 %v6124
    %7273 = vmatmul.mubr.f32.gmra.mrb[0].mxu0 %v6052
    %v7274 = vpop.f32.mrb[0].mxu0
    %v7275 = vadd.f32 %v6890, %v7274
    %v7276 = vpop.f32.mrb[0].mxu0
    %7277 = vmatprep.mubr.f32.mxu0 %v6125
    %7278 = vmatmul.mubr.f32.gmra.mrb[0].mxu0 %v6053
    %v7279 = vpop.f32.mrb[0].mxu0
    %v7280 = vadd.f32 %v6895, %v7279
    %v7281 = vpop.f32.mrb[0].mxu0
    %7282 = vmatprep.mubr.f32.mxu0 %v6126
    %7283 = vmatmul.mubr.f32.gmra.mrb[0].mxu0 %v6054
    %v7284 = vpop.f32.mrb[0].mxu0
    %v7285 = vadd.f32 %v6900, %v7284
    %v7286 = vpop.f32.mrb[0].mxu0
    %7287 = vmatprep.mubr.f32.mxu0 %v6127
    %7288 = vmatmul.mubr.f32.gmra.mrb[0].mxu0 %v6055
    %v7289 = vpop.f32.mrb[0].mxu0
    %v7290 = vadd.f32 %v6905, %v7289
    %v7291 = vpop.f32.mrb[0].mxu0
    %7292 = vmatprep.mubr.f32.mxu0 %v6128
    %7293 = vmatmul.mubr.f32.gmra.mrb[0].mxu0 %v6056
    %v7294 = vpop.f32.mrb[0].mxu0
    %v7295 = vadd.f32 %v6910, %v7294
    %v7296 = vpop.f32.mrb[0].mxu0
    %7297 = vmatprep.mubr.f32.mxu0 %v6129
    %7298 = vmatmul.mubr.f32.gmra.mrb[0].mxu0 %v6057
    %v7299 = vpop.f32.mrb[0].mxu0
    %v7300 = vadd.f32 %v6915, %v7299
    %v7301 = vpop.f32.mrb[0].mxu0
    %7302 = vmatprep.mubr.f32.mxu0 %v6130
    %7303 = vmatmul.mubr.f32.gmra.mrb[0].mxu0 %v6058
    %v7304 = vpop.f32.mrb[0].mxu0
    %v7305 = vadd.f32 %v6920, %v7304
    %v7306 = vpop.f32.mrb[0].mxu0
    %7307 = vmatprep.mubr.f32.mxu0 %v6135
    %7308 = vmatmul.mubr.f32.gmra.mrb[0].mxu0 %v6063
    %v7309 = vpop.f32.mrb[0].mxu0
    %v7310 = vadd.f32 %v6925, %v7309
    %v7311 = vpop.f32.mrb[0].mxu0
    %7312 = vmatprep.mubr.f32.mxu0 %v6136
    %7313 = vmatmul.mubr.f32.gmra.mrb[0].mxu0 %v6064
    %v7314 = vpop.f32.mrb[0].mxu0
    %v7315 = vadd.f32 %v6930, %v7314
    %v7316 = vpop.f32.mrb[0].mxu0
    %7317 = vmatprep.mubr.f32.mxu0 %v6137
    %7318 = vmatmul.mubr.f32.gmra.mrb[0].mxu0 %v6065
    %v7319 = vpop.f32.mrb[0].mxu0
    %v7320 = vadd.f32 %v6935, %v7319
    %v7321 = vpop.f32.mrb[0].mxu0
    %7322 = vmatprep.mubr.f32.mxu0 %v6138
    %7323 = vmatmul.mubr.f32.gmra.mrb[0].mxu0 %v6066
    %v7324 = vpop.f32.mrb[0].mxu0
    %v7325 = vadd.f32 %v6940, %v7324
    %v7326 = vpop.f32.mrb[0].mxu0
    %7327 = vmatprep.mubr.f32.mxu0 %v6139
    %7328 = vmatmul.mubr.f32.gmra.mrb[0].mxu0 %v6067
    %v7329 = vpop.f32.mrb[0].mxu0
    %v7330 = vadd.f32 %v6945, %v7329
    %v7331 = vpop.f32.mrb[0].mxu0
    %7332 = vmatprep.mubr.f32.mxu0 %v6140
    %7333 = vmatmul.mubr.f32.gmra.mrb[0].mxu0 %v6068
    %v7334 = vpop.f32.mrb[0].mxu0
    %v7335 = vadd.f32 %v6950, %v7334
    %v7336 = vpop.f32.mrb[0].mxu0
    %7337 = vmatprep.mubr.f32.mxu0 %v6141
    %7338 = vmatmul.mubr.f32.gmra.mrb[0].mxu0 %v6069
    %v7339 = vpop.f32.mrb[0].mxu0
    %v7340 = vadd.f32 %v6955, %v7339
    %v7341 = vpop.f32.mrb[0].mxu0
    %7342 = vmatprep.mubr.f32.mxu0 %v6142
    %7343 = vmatmul.mubr.f32.gmra.mrb[0].mxu0 %v6070
    %v7344 = vpop.f32.mrb[0].mxu0
    %v7345 = vadd.f32 %v6960, %v7344
    %v7346 = vpop.f32.mrb[0].mxu0
    %7347 = vmatprep.mubr.f32.mxu0 %v6143
    %7348 = vmatmul.mubr.f32.gmra.mrb[0].mxu0 %v6071
    %v7349 = vpop.f32.mrb[0].mxu0
    %v7350 = vadd.f32 %v6965, %v7349
    %v7351 = vpop.f32.mrb[0].mxu0
    %7352 = vmatprep.mubr.f32.mxu0 %v6144
    %7353 = vmatmul.mubr.f32.gmra.mrb[0].mxu0 %v6072
    %v7354 = vpop.f32.mrb[0].mxu0
    %v7355 = vadd.f32 %v6970, %v7354
    %v7356 = vpop.f32.mrb[0].mxu0
    %7357 = vmatprep.mubr.f32.mxu0 %v6145
    %7358 = vmatmul.mubr.f32.gmra.mrb[0].mxu0 %v6073
    %v7359 = vpop.f32.mrb[0].mxu0
    %v7360 = vadd.f32 %v6975, %v7359
    %v7361 = vpop.f32.mrb[0].mxu0
    %7362 = vmatprep.mubr.f32.mxu0 %v6146
    %7363 = vmatmul.mubr.f32.gmra.mrb[0].mxu0 %v6074
    %v7364 = vpop.f32.mrb[0].mxu0
    %v7365 = vadd.f32 %v6980, %v7364
    %v7366 = vpop.f32.mrb[0].mxu0
    %7367 = vmatprep.mubr.f32.mxu0 %v6147
    %7368 = vmatmul.mubr.f32.gmra.mrb[0].mxu0 %v6075
    %v7369 = vpop.f32.mrb[0].mxu0
    %v7370 = vadd.f32 %v6985, %v7369
    %v7371 = vpop.f32.mrb[0].mxu0
    %7372 = vmatprep.mubr.f32.mxu0 %v6148
    %7373 = vmatmul.mubr.f32.gmra.mrb[0].mxu0 %v6076
    %v7374 = vpop.f32.mrb[0].mxu0
    %v7375 = vadd.f32 %v6990, %v7374
    %v7376 = vpop.f32.mrb[0].mxu0
    %7377 = vmatprep.mubr.f32.mxu0 %v6149
    %7378 = vmatmul.mubr.f32.gmra.mrb[0].mxu0 %v6077
    %v7379 = vpop.f32.mrb[0].mxu0
    %v7380 = vadd.f32 %v6995, %v7379
    %v7381 = vpop.f32.mrb[0].mxu0
    %7382 = vmatprep.mubr.f32.mxu0 %v6150
    %7383 = vmatmul.mubr.f32.gmra.mrb[0].mxu0 %v6078
    %v7384 = vpop.f32.mrb[0].mxu0
    %v7385 = vadd.f32 %v7000, %v7384
    %v7386 = vpop.f32.mrb[0].mxu0
    %7387 = vmatprep.mubr.f32.mxu0 %v6151
    %7388 = vmatmul.mubr.f32.gmra.mrb[0].mxu0 %v6079
    %v7389 = vpop.f32.mrb[0].mxu0
    %v7390 = vadd.f32 %v7005, %v7389
    %v7391 = vpop.f32.mrb[0].mxu0
    %7392 = vmatprep.mubr.f32.mxu0 %v6152
    %7393 = vmatmul.mubr.f32.gmra.mrb[0].mxu0 %v6080
    %v7394 = vpop.f32.mrb[0].mxu0
    %v7395 = vadd.f32 %v7010, %v7394
    %v7396 = vpop.f32.mrb[0].mxu0
    %7397 = vmatprep.mubr.f32.mxu0 %v6153
    %7398 = vmatmul.mubr.f32.gmra.mrb[0].mxu0 %v6081
    %v7399 = vpop.f32.mrb[0].mxu0
    %v7400 = vadd.f32 %v7015, %v7399
    %v7401 = vpop.f32.mrb[0].mxu0
    %7402 = vmatprep.mubr.f32.mxu0 %v6154
    %7403 = vmatmul.mubr.f32.gmra.mrb[0].mxu0 %v6082
    %v7404 = vpop.f32.mrb[0].mxu0
    %v7405 = vadd.f32 %v7020, %v7404
    %v7406 = vpop.f32.mrb[0].mxu0
    %7407 = vmatprep.mubr.f32.mxu0 %v6155
    %7408 = vmatmul.mubr.f32.gmra.mrb[0].mxu0 %v6083
    %v7409 = vpop.f32.mrb[0].mxu0
    %v7410 = vadd.f32 %v7025, %v7409
    %v7411 = vpop.f32.mrb[0].mxu0
    %7412 = vmatprep.mubr.f32.mxu0 %v6156
    %7413 = vmatmul.mubr.f32.gmra.mrb[0].mxu0 %v6084
    %v7414 = vpop.f32.mrb[0].mxu0
    %v7415 = vadd.f32 %v7030, %v7414
    %v7416 = vpop.f32.mrb[0].mxu0
    %7417 = vmatprep.mubr.f32.mxu0 %v6157
    %7418 = vmatmul.mubr.f32.gmra.mrb[0].mxu0 %v6085
    %v7419 = vpop.f32.mrb[0].mxu0
    %v7420 = vadd.f32 %v7035, %v7419
    %v7421 = vpop.f32.mrb[0].mxu0
    %7422 = vmatprep.mubr.f32.mxu0 %v6158
    %7423 = vmatmul.mubr.f32.gmra.mrb[0].mxu0 %v6086
    %v7424 = vpop.f32.mrb[0].mxu0
    %v7425 = vadd.f32 %v7040, %v7424
    %v7426 = vpop.f32.mrb[0].mxu0
    %7427 = vmatprep.mubr.f32.mxu0 %v6159
    %7428 = vmatmul.mubr.f32.gmra.mrb[0].mxu0 %v6087
    %v7429 = vpop.f32.mrb[0].mxu0
    %v7430 = vadd.f32 %v7045, %v7429
    %v7431 = vpop.f32.mrb[0].mxu0
    %7432 = vmatprep.mubr.f32.mxu0 %v6160
    %7433 = vmatmul.mubr.f32.gmra.mrb[0].mxu0 %v6088
    %v7434 = vpop.f32.mrb[0].mxu0
    %v7435 = vadd.f32 %v7050, %v7434
    %v7436 = vpop.f32.mrb[0].mxu0
    %7437 = vmatprep.mubr.f32.mxu0 %v6161
    %7438 = vmatmul.mubr.f32.gmra.mrb[0].mxu0 %v6089
    %v7439 = vpop.f32.mrb[0].mxu0
    %v7440 = vadd.f32 %v7055, %v7439
    %v7441 = vpop.f32.mrb[0].mxu0
    %7442 = vmatprep.mubr.f32.mxu0 %v6162
    %7443 = vmatmul.mubr.f32.gmra.mrb[0].mxu0 %v6090
    %v7444 = vpop.f32.mrb[0].mxu0
    %v7445 = vadd.f32 %v7060, %v7444
    %v7446 = vpop.f32.mrb[0].mxu0
    %7447 = vmatprep.mubr.f32.mxu0 %v6163
    %7448 = vmatmul.mubr.f32.gmra.mrb[0].mxu0 %v6091
    %v7449 = vpop.f32.mrb[0].mxu0
    %v7450 = vadd.f32 %v7065, %v7449
    %v7451 = vpop.f32.mrb[0].mxu0
    %7452 = vmatprep.mubr.f32.mxu0 %v6164
    %7453 = vmatmul.mubr.f32.gmra.mrb[0].mxu0 %v6092
    %v7454 = vpop.f32.mrb[0].mxu0
    %v7455 = vadd.f32 %v7070, %v7454
    %v7456 = vpop.f32.mrb[0].mxu0
    %7457 = vmatprep.mubr.f32.mxu0 %v6165
    %7458 = vmatmul.mubr.f32.gmra.mrb[0].mxu0 %v6093
    %v7459 = vpop.f32.mrb[0].mxu0
    %v7460 = vadd.f32 %v7075, %v7459
    %v7461 = vpop.f32.mrb[0].mxu0
    %7462 = vmatprep.mubr.f32.mxu0 %v6166
    %7463 = vmatmul.mubr.f32.gmra.mrb[0].mxu0 %v6094
    %v7464 = vpop.f32.mrb[0].mxu0
    %v7465 = vadd.f32 %v7080, %v7464
    %v7466 = vpop.f32.mrb[0].mxu0
    %7467 = vdwg.mxu0
    %7468 = vmatprep.subr.mxu0 0.0
    %7469 = vmatpush1.msra.mxu0 %v6265
    %7470 = vmatprep.subr.mxu0 0.0
    %7471 = vmatpush1.msra.mxu0 %v6266
    %7472 = vmatprep.subr.mxu0 0.0
    %7473 = vmatpush1.msra.mxu0 %v6267
    %7474 = vmatprep.subr.mxu0 0.0
    %7475 = vmatpush1.msra.mxu0 %v6268
    %7476 = vmatprep.subr.mxu0 0.0
    %7477 = vmatpush1.msra.mxu0 %v6269
    %7478 = vmatprep.subr.mxu0 0.0
    %7479 = vmatpush1.msra.mxu0 %v6270
    %7480 = vmatprep.subr.mxu0 0.0
    %7481 = vmatpush1.msra.mxu0 %v6271
    %7482 = vmatprep.subr.mxu0 0.0
    %7483 = vmatpush1.msra.mxu0 %v6272
    %7484 = vmatprep.subr.mxu0 0.0
    %7485 = vmatpush1.msra.mxu0 %v6273
    %7486 = vmatprep.subr.mxu0 0.0
    %7487 = vmatpush1.msra.mxu0 %v6274
    %7488 = vmatprep.subr.mxu0 0.0
    %7489 = vmatpush1.msra.mxu0 %v6275
    %7490 = vmatprep.subr.mxu0 0.0
    %7491 = vmatpush1.msra.mxu0 %v6276
    %7492 = vmatprep.subr.mxu0 0.0
    %7493 = vmatpush1.msra.mxu0 %v6277
    %7494 = vmatprep.subr.mxu0 0.0
    %7495 = vmatpush1.msra.mxu0 %v6278
    %7496 = vmatprep.subr.mxu0 0.0
    %7497 = vmatpush1.msra.mxu0 %v6279
    %7498 = vmatprep.subr.mxu0 0.0
    %7499 = vmatpush1.msra.mxu0 %v6280
    %7500 = vmatprep.subr.mxu0 0.0
    %7501 = vmatpush1.msra.mxu0 %v6281
    %7502 = vmatprep.subr.mxu0 0.0
    %7503 = vmatpush1.msra.mxu0 %v6282
    %7504 = vmatprep.subr.mxu0 0.0
    %7505 = vmatpush1.msra.mxu0 %v6283
    %7506 = vmatprep.subr.mxu0 0.0
    %7507 = vmatpush1.msra.mxu0 %v6284
    %7508 = vmatprep.subr.mxu0 0.0
    %7509 = vmatpush1.msra.mxu0 %v6285
    %7510 = vmatprep.subr.mxu0 0.0
    %7511 = vmatpush1.msra.mxu0 %v6286
    %7512 = vmatprep.subr.mxu0 0.0
    %7513 = vmatpush1.msra.mxu0 %v6287
    %7514 = vmatprep.subr.mxu0 0.0
    %7515 = vmatpush1.msra.mxu0 %v6288
    %7516 = vmatprep.subr.mxu0 0.0
    %7517 = vmatpush1.msra.mxu0 %v6289
    %7518 = vmatprep.subr.mxu0 0.0
    %7519 = vmatpush1.msra.mxu0 %v6290
    %7520 = vmatprep.subr.mxu0 0.0
    %7521 = vmatpush1.msra.mxu0 %v6291
    %7522 = vmatprep.subr.mxu0 0.0
    %7523 = vmatpush1.msra.mxu0 %v6292
    %7524 = vmatprep.subr.mxu0 0.0
    %7525 = vmatpush1.msra.mxu0 %v6293
    %7526 = vmatprep.subr.mxu0 0.0
    %7527 = vmatpush1.msra.mxu0 %v6294
    %7528 = vmatprep.subr.mxu0 0.0
    %7529 = vmatpush1.msra.mxu0 %v6295
    %7530 = vmatprep.subr.mxu0 0.0
    %7531 = vmatpush1.msra.mxu0 %v6296
    %7532 = vmatprep.mubr.f32.mxu0 %v6029
    %7533 = vmatmul.mubr.f32.gmra.mrb[0].mxu0 %v5957
    %v7534 = vpop.f32.mrb[0].mxu0
    %v7535 = vadd.f32 %v7150, %v7534
    %v7536 = vpop.f32.mrb[0].mxu0
    %7537 = vmatprep.mubr.f32.mxu0 %v6030
    %7538 = vmatmul.mubr.f32.gmra.mrb[0].mxu0 %v5958
    %v7539 = vpop.f32.mrb[0].mxu0
    %v7540 = vadd.f32 %v7155, %v7539
    %v7541 = vpop.f32.mrb[0].mxu0
    %7542 = vmatprep.mubr.f32.mxu0 %v6031
    %7543 = vmatmul.mubr.f32.gmra.mrb[0].mxu0 %v5959
    %v7544 = vpop.f32.mrb[0].mxu0
    %v7545 = vadd.f32 %v7160, %v7544
    %v7546 = vpop.f32.mrb[0].mxu0
    %7547 = vmatprep.mubr.f32.mxu0 %v6032
    %7548 = vmatmul.mubr.f32.gmra.mrb[0].mxu0 %v5960
    %v7549 = vpop.f32.mrb[0].mxu0
    %v7550 = vadd.f32 %v7165, %v7549
    %v7551 = vpop.f32.mrb[0].mxu0
    %7552 = vmatprep.mubr.f32.mxu0 %v6033
    %7553 = vmatmul.mubr.f32.gmra.mrb[0].mxu0 %v5961
    %v7554 = vpop.f32.mrb[0].mxu0
    %v7555 = vadd.f32 %v7170, %v7554
    %v7556 = vpop.f32.mrb[0].mxu0
    %7557 = vmatprep.mubr.f32.mxu0 %v6034
    %7558 = vmatmul.mubr.f32.gmra.mrb[0].mxu0 %v5962
    %v7559 = vpop.f32.mrb[0].mxu0
    %v7560 = vadd.f32 %v7175, %v7559
    %v7561 = vpop.f32.mrb[0].mxu0
    %7562 = vmatprep.mubr.f32.mxu0 %v6035
    %7563 = vmatmul.mubr.f32.gmra.mrb[0].mxu0 %v5963
    %v7564 = vpop.f32.mrb[0].mxu0
    %v7565 = vadd.f32 %v7180, %v7564
    %v7566 = vpop.f32.mrb[0].mxu0
    %7567 = vmatprep.mubr.f32.mxu0 %v6036
    %7568 = vmatmul.mubr.f32.gmra.mrb[0].mxu0 %v5964
    %v7569 = vpop.f32.mrb[0].mxu0
    %v7570 = vadd.f32 %v7185, %v7569
    %v7571 = vpop.f32.mrb[0].mxu0
    %7572 = vmatprep.mubr.f32.mxu0 %v6037
    %7573 = vmatmul.mubr.f32.gmra.mrb[0].mxu0 %v5965
    %v7574 = vpop.f32.mrb[0].mxu0
    %v7575 = vadd.f32 %v7190, %v7574
    %v7576 = vpop.f32.mrb[0].mxu0
    %7577 = vmatprep.mubr.f32.mxu0 %v6038
    %7578 = vmatmul.mubr.f32.gmra.mrb[0].mxu0 %v5966
    %v7579 = vpop.f32.mrb[0].mxu0
    %v7580 = vadd.f32 %v7195, %v7579
    %v7581 = vpop.f32.mrb[0].mxu0
    %7582 = vmatprep.mubr.f32.mxu0 %v6039
    %7583 = vmatmul.mubr.f32.gmra.mrb[0].mxu0 %v5967
    %v7584 = vpop.f32.mrb[0].mxu0
    %v7585 = vadd.f32 %v7200, %v7584
    %v7586 = vpop.f32.mrb[0].mxu0
    %7587 = vmatprep.mubr.f32.mxu0 %v6040
    %7588 = vmatmul.mubr.f32.gmra.mrb[0].mxu0 %v5968
    %v7589 = vpop.f32.mrb[0].mxu0
    %v7590 = vadd.f32 %v7205, %v7589
    %v7591 = vpop.f32.mrb[0].mxu0
    %7592 = vmatprep.mubr.f32.mxu0 %v6041
    %7593 = vmatmul.mubr.f32.gmra.mrb[0].mxu0 %v5969
    %v7594 = vpop.f32.mrb[0].mxu0
    %v7595 = vadd.f32 %v7210, %v7594
    %v7596 = vpop.f32.mrb[0].mxu0
    %7597 = vmatprep.mubr.f32.mxu0 %v6042
    %7598 = vmatmul.mubr.f32.gmra.mrb[0].mxu0 %v5970
    %v7599 = vpop.f32.mrb[0].mxu0
    %v7600 = vadd.f32 %v7215, %v7599
    %v7601 = vpop.f32.mrb[0].mxu0
    %7602 = vmatprep.mubr.f32.mxu0 %v6043
    %7603 = vmatmul.mubr.f32.gmra.mrb[0].mxu0 %v5971
    %v7604 = vpop.f32.mrb[0].mxu0
    %v7605 = vadd.f32 %v7220, %v7604
    %v7606 = vpop.f32.mrb[0].mxu0
    %7607 = vmatprep.mubr.f32.mxu0 %v6044
    %7608 = vmatmul.mubr.f32.gmra.mrb[0].mxu0 %v5972
    %v7609 = vpop.f32.mrb[0].mxu0
    %v7610 = vadd.f32 %v7225, %v7609
    %v7611 = vpop.f32.mrb[0].mxu0
    %7612 = vmatprep.mubr.f32.mxu0 %v6045
    %7613 = vmatmul.mubr.f32.gmra.mrb[0].mxu0 %v5973
    %v7614 = vpop.f32.mrb[0].mxu0
    %v7615 = vadd.f32 %v7230, %v7614
    %v7616 = vpop.f32.mrb[0].mxu0
    %7617 = vmatprep.mubr.f32.mxu0 %v6046
    %7618 = vmatmul.mubr.f32.gmra.mrb[0].mxu0 %v5974
    %v7619 = vpop.f32.mrb[0].mxu0
    %v7620 = vadd.f32 %v7235, %v7619
    %v7621 = vpop.f32.mrb[0].mxu0
    %7622 = vmatprep.mubr.f32.mxu0 %v6047
    %7623 = vmatmul.mubr.f32.gmra.mrb[0].mxu0 %v5975
    %v7624 = vpop.f32.mrb[0].mxu0
    %v7625 = vadd.f32 %v7240, %v7624
    %v7626 = vpop.f32.mrb[0].mxu0
    %7627 = vmatprep.mubr.f32.mxu0 %v6048
    %7628 = vmatmul.mubr.f32.gmra.mrb[0].mxu0 %v5976
    %v7629 = vpop.f32.mrb[0].mxu0
    %v7630 = vadd.f32 %v7245, %v7629
    %v7631 = vpop.f32.mrb[0].mxu0
    %7632 = vmatprep.mubr.f32.mxu0 %v6049
    %7633 = vmatmul.mubr.f32.gmra.mrb[0].mxu0 %v5977
    %v7634 = vpop.f32.mrb[0].mxu0
    %v7635 = vadd.f32 %v7250, %v7634
    %v7636 = vpop.f32.mrb[0].mxu0
    %7637 = vmatprep.mubr.f32.mxu0 %v6050
    %7638 = vmatmul.mubr.f32.gmra.mrb[0].mxu0 %v5978
    %v7639 = vpop.f32.mrb[0].mxu0
    %v7640 = vadd.f32 %v7255, %v7639
    %v7641 = vpop.f32.mrb[0].mxu0
    %7642 = vmatprep.mubr.f32.mxu0 %v6051
    %7643 = vmatmul.mubr.f32.gmra.mrb[0].mxu0 %v5979
    %v7644 = vpop.f32.mrb[0].mxu0
    %v7645 = vadd.f32 %v7260, %v7644
    %v7646 = vpop.f32.mrb[0].mxu0
    %7647 = vmatprep.mubr.f32.mxu0 %v6052
    %7648 = vmatmul.mubr.f32.gmra.mrb[0].mxu0 %v5980
    %v7649 = vpop.f32.mrb[0].mxu0
    %v7650 = vadd.f32 %v7265, %v7649
    %v7651 = vpop.f32.mrb[0].mxu0
    %7652 = vmatprep.mubr.f32.mxu0 %v6053
    %7653 = vmatmul.mubr.f32.gmra.mrb[0].mxu0 %v5981
    %v7654 = vpop.f32.mrb[0].mxu0
    %v7655 = vadd.f32 %v7270, %v7654
    %v7656 = vpop.f32.mrb[0].mxu0
    %7657 = vmatprep.mubr.f32.mxu0 %v6054
    %7658 = vmatmul.mubr.f32.gmra.mrb[0].mxu0 %v5982
    %v7659 = vpop.f32.mrb[0].mxu0
    %v7660 = vadd.f32 %v7275, %v7659
    %v7661 = vpop.f32.mrb[0].mxu0
    %7662 = vmatprep.mubr.f32.mxu0 %v6055
    %7663 = vmatmul.mubr.f32.gmra.mrb[0].mxu0 %v5983
    %v7664 = vpop.f32.mrb[0].mxu0
    %v7665 = vadd.f32 %v7280, %v7664
    %v7666 = vpop.f32.mrb[0].mxu0
    %7667 = vmatprep.mubr.f32.mxu0 %v6056
    %7668 = vmatmul.mubr.f32.gmra.mrb[0].mxu0 %v5984
    %v7669 = vpop.f32.mrb[0].mxu0
    %v7670 = vadd.f32 %v7285, %v7669
    %v7671 = vpop.f32.mrb[0].mxu0
    %7672 = vmatprep.mubr.f32.mxu0 %v6057
    %7673 = vmatmul.mubr.f32.gmra.mrb[0].mxu0 %v5985
    %v7674 = vpop.f32.mrb[0].mxu0
    %v7675 = vadd.f32 %v7290, %v7674
    %v7676 = vpop.f32.mrb[0].mxu0
    %7677 = vmatprep.mubr.f32.mxu0 %v6058
    %7678 = vmatmul.mubr.f32.gmra.mrb[0].mxu0 %v5986
    %v7679 = vpop.f32.mrb[0].mxu0
    %v7680 = vadd.f32 %v7295, %v7679
    %v7681 = vpop.f32.mrb[0].mxu0
    %7682 = vmatprep.mubr.f32.mxu0 %v6059
    %7683 = vmatmul.mubr.f32.gmra.mrb[0].mxu0 %v5987
    %v7684 = vpop.f32.mrb[0].mxu0
    %v7685 = vadd.f32 %v7300, %v7684
    %v7686 = vpop.f32.mrb[0].mxu0
    %7687 = vmatprep.mubr.f32.mxu0 %v6060
    %7688 = vmatmul.mubr.f32.gmra.mrb[0].mxu0 %v5988
    %v7689 = vpop.f32.mrb[0].mxu0
    %v7690 = vadd.f32 %v7305, %v7689
    %v7691 = vpop.f32.mrb[0].mxu0
    %7692 = vmatprep.mubr.f32.mxu0 %v6065
    %7693 = vmatmul.mubr.f32.gmra.mrb[0].mxu0 %v5993
    %v7694 = vpop.f32.mrb[0].mxu0
    %v7695 = vadd.f32 %v7310, %v7694
    %v7696 = vpop.f32.mrb[0].mxu0
    %7697 = vmatprep.mubr.f32.mxu0 %v6066
    %7698 = vmatmul.mubr.f32.gmra.mrb[0].mxu0 %v5994
    %v7699 = vpop.f32.mrb[0].mxu0
    %v7700 = vadd.f32 %v7315, %v7699
    %v7701 = vpop.f32.mrb[0].mxu0
    %7702 = vmatprep.mubr.f32.mxu0 %v6067
    %7703 = vmatmul.mubr.f32.gmra.mrb[0].mxu0 %v5995
    %v7704 = vpop.f32.mrb[0].mxu0
    %v7705 = vadd.f32 %v7320, %v7704
    %v7706 = vpop.f32.mrb[0].mxu0
    %7707 = vmatprep.mubr.f32.mxu0 %v6068
    %7708 = vmatmul.mubr.f32.gmra.mrb[0].mxu0 %v5996
    %v7709 = vpop.f32.mrb[0].mxu0
    %v7710 = vadd.f32 %v7325, %v7709
    %v7711 = vpop.f32.mrb[0].mxu0
    %7712 = vmatprep.mubr.f32.mxu0 %v6069
    %7713 = vmatmul.mubr.f32.gmra.mrb[0].mxu0 %v5997
    %v7714 = vpop.f32.mrb[0].mxu0
    %v7715 = vadd.f32 %v7330, %v7714
    %v7716 = vpop.f32.mrb[0].mxu0
    %7717 = vmatprep.mubr.f32.mxu0 %v6070
    %7718 = vmatmul.mubr.f32.gmra.mrb[0].mxu0 %v5998
    %v7719 = vpop.f32.mrb[0].mxu0
    %v7720 = vadd.f32 %v7335, %v7719
    %v7721 = vpop.f32.mrb[0].mxu0
    %7722 = vmatprep.mubr.f32.mxu0 %v6071
    %7723 = vmatmul.mubr.f32.gmra.mrb[0].mxu0 %v5999
    %v7724 = vpop.f32.mrb[0].mxu0
    %v7725 = vadd.f32 %v7340, %v7724
    %v7726 = vpop.f32.mrb[0].mxu0
    %7727 = vmatprep.mubr.f32.mxu0 %v6072
    %7728 = vmatmul.mubr.f32.gmra.mrb[0].mxu0 %v6000
    %v7729 = vpop.f32.mrb[0].mxu0
    %v7730 = vadd.f32 %v7345, %v7729
    %v7731 = vpop.f32.mrb[0].mxu0
    %7732 = vmatprep.mubr.f32.mxu0 %v6073
    %7733 = vmatmul.mubr.f32.gmra.mrb[0].mxu0 %v6001
    %v7734 = vpop.f32.mrb[0].mxu0
    %v7735 = vadd.f32 %v7350, %v7734
    %v7736 = vpop.f32.mrb[0].mxu0
    %7737 = vmatprep.mubr.f32.mxu0 %v6074
    %7738 = vmatmul.mubr.f32.gmra.mrb[0].mxu0 %v6002
    %v7739 = vpop.f32.mrb[0].mxu0
    %v7740 = vadd.f32 %v7355, %v7739
    %v7741 = vpop.f32.mrb[0].mxu0
    %7742 = vmatprep.mubr.f32.mxu0 %v6075
    %7743 = vmatmul.mubr.f32.gmra.mrb[0].mxu0 %v6003
    %v7744 = vpop.f32.mrb[0].mxu0
    %v7745 = vadd.f32 %v7360, %v7744
    %v7746 = vpop.f32.mrb[0].mxu0
    %7747 = vmatprep.mubr.f32.mxu0 %v6076
    %7748 = vmatmul.mubr.f32.gmra.mrb[0].mxu0 %v6004
    %v7749 = vpop.f32.mrb[0].mxu0
    %v7750 = vadd.f32 %v7365, %v7749
    %v7751 = vpop.f32.mrb[0].mxu0
    %7752 = vmatprep.mubr.f32.mxu0 %v6077
    %7753 = vmatmul.mubr.f32.gmra.mrb[0].mxu0 %v6005
    %v7754 = vpop.f32.mrb[0].mxu0
    %v7755 = vadd.f32 %v7370, %v7754
    %v7756 = vpop.f32.mrb[0].mxu0
    %7757 = vmatprep.mubr.f32.mxu0 %v6078
    %7758 = vmatmul.mubr.f32.gmra.mrb[0].mxu0 %v6006
    %v7759 = vpop.f32.mrb[0].mxu0
    %v7760 = vadd.f32 %v7375, %v7759
    %v7761 = vpop.f32.mrb[0].mxu0
    %7762 = vmatprep.mubr.f32.mxu0 %v6079
    %7763 = vmatmul.mubr.f32.gmra.mrb[0].mxu0 %v6007
    %v7764 = vpop.f32.mrb[0].mxu0
    %v7765 = vadd.f32 %v7380, %v7764
    %v7766 = vpop.f32.mrb[0].mxu0
    %7767 = vmatprep.mubr.f32.mxu0 %v6080
    %7768 = vmatmul.mubr.f32.gmra.mrb[0].mxu0 %v6008
    %v7769 = vpop.f32.mrb[0].mxu0
    %v7770 = vadd.f32 %v7385, %v7769
    %v7771 = vpop.f32.mrb[0].mxu0
    %7772 = vmatprep.mubr.f32.mxu0 %v6081
    %7773 = vmatmul.mubr.f32.gmra.mrb[0].mxu0 %v6009
    %v7774 = vpop.f32.mrb[0].mxu0
    %v7775 = vadd.f32 %v7390, %v7774
    %v7776 = vpop.f32.mrb[0].mxu0
    %7777 = vmatprep.mubr.f32.mxu0 %v6082
    %7778 = vmatmul.mubr.f32.gmra.mrb[0].mxu0 %v6010
    %v7779 = vpop.f32.mrb[0].mxu0
    %v7780 = vadd.f32 %v7395, %v7779
    %v7781 = vpop.f32.mrb[0].mxu0
    %7782 = vmatprep.mubr.f32.mxu0 %v6083
    %7783 = vmatmul.mubr.f32.gmra.mrb[0].mxu0 %v6011
    %v7784 = vpop.f32.mrb[0].mxu0
    %v7785 = vadd.f32 %v7400, %v7784
    %v7786 = vpop.f32.mrb[0].mxu0
    %7787 = vmatprep.mubr.f32.mxu0 %v6084
    %7788 = vmatmul.mubr.f32.gmra.mrb[0].mxu0 %v6012
    %v7789 = vpop.f32.mrb[0].mxu0
    %v7790 = vadd.f32 %v7405, %v7789
    %v7791 = vpop.f32.mrb[0].mxu0
    %7792 = vmatprep.mubr.f32.mxu0 %v6085
    %7793 = vmatmul.mubr.f32.gmra.mrb[0].mxu0 %v6013
    %v7794 = vpop.f32.mrb[0].mxu0
    %v7795 = vadd.f32 %v7410, %v7794
    %v7796 = vpop.f32.mrb[0].mxu0
    %7797 = vmatprep.mubr.f32.mxu0 %v6086
    %7798 = vmatmul.mubr.f32.gmra.mrb[0].mxu0 %v6014
    %v7799 = vpop.f32.mrb[0].mxu0
    %v7800 = vadd.f32 %v7415, %v7799
    %v7801 = vpop.f32.mrb[0].mxu0
    %7802 = vmatprep.mubr.f32.mxu0 %v6087
    %7803 = vmatmul.mubr.f32.gmra.mrb[0].mxu0 %v6015
    %v7804 = vpop.f32.mrb[0].mxu0
    %v7805 = vadd.f32 %v7420, %v7804
    %v7806 = vpop.f32.mrb[0].mxu0
    %7807 = vmatprep.mubr.f32.mxu0 %v6088
    %7808 = vmatmul.mubr.f32.gmra.mrb[0].mxu0 %v6016
    %v7809 = vpop.f32.mrb[0].mxu0
    %v7810 = vadd.f32 %v7425, %v7809
    %v7811 = vpop.f32.mrb[0].mxu0
    %7812 = vmatprep.mubr.f32.mxu0 %v6089
    %7813 = vmatmul.mubr.f32.gmra.mrb[0].mxu0 %v6017
    %v7814 = vpop.f32.mrb[0].mxu0
    %v7815 = vadd.f32 %v7430, %v7814
    %v7816 = vpop.f32.mrb[0].mxu0
    %7817 = vmatprep.mubr.f32.mxu0 %v6090
    %7818 = vmatmul.mubr.f32.gmra.mrb[0].mxu0 %v6018
    %v7819 = vpop.f32.mrb[0].mxu0
    %v7820 = vadd.f32 %v7435, %v7819
    %v7821 = vpop.f32.mrb[0].mxu0
    %7822 = vmatprep.mubr.f32.mxu0 %v6091
    %7823 = vmatmul.mubr.f32.gmra.mrb[0].mxu0 %v6019
    %v7824 = vpop.f32.mrb[0].mxu0
    %v7825 = vadd.f32 %v7440, %v7824
    %v7826 = vpop.f32.mrb[0].mxu0
    %7827 = vmatprep.mubr.f32.mxu0 %v6092
    %7828 = vmatmul.mubr.f32.gmra.mrb[0].mxu0 %v6020
    %v7829 = vpop.f32.mrb[0].mxu0
    %v7830 = vadd.f32 %v7445, %v7829
    %v7831 = vpop.f32.mrb[0].mxu0
    %7832 = vmatprep.mubr.f32.mxu0 %v6093
    %7833 = vmatmul.mubr.f32.gmra.mrb[0].mxu0 %v6021
    %v7834 = vpop.f32.mrb[0].mxu0
    %v7835 = vadd.f32 %v7450, %v7834
    %v7836 = vpop.f32.mrb[0].mxu0
    %7837 = vmatprep.mubr.f32.mxu0 %v6094
    %7838 = vmatmul.mubr.f32.gmra.mrb[0].mxu0 %v6022
    %v7839 = vpop.f32.mrb[0].mxu0
    %v7840 = vadd.f32 %v7455, %v7839
    %v7841 = vpop.f32.mrb[0].mxu0
    %7842 = vmatprep.mubr.f32.mxu0 %v6095
    %7843 = vmatmul.mubr.f32.gmra.mrb[0].mxu0 %v6023
    %v7844 = vpop.f32.mrb[0].mxu0
    %v7845 = vadd.f32 %v7460, %v7844
    %v7846 = vpop.f32.mrb[0].mxu0
    %7847 = vmatprep.mubr.f32.mxu0 %v6096
    %7848 = vmatmul.mubr.f32.gmra.mrb[0].mxu0 %v6024
    %v7849 = vpop.f32.mrb[0].mxu0
    %v7850 = vadd.f32 %v7465, %v7849
    %v7851 = vpop.f32.mrb[0].mxu0
    %7852 = vdwg.mxu0
    %7853 = vmatprep.subr.mxu0 0.0
    %7854 = vmatpush1.msra.mxu0 %v6297
    %7855 = vmatprep.subr.mxu0 0.0
    %7856 = vmatpush1.msra.mxu0 %v6298
    %7857 = vmatprep.subr.mxu0 0.0
    %7858 = vmatpush1.msra.mxu0 %v6299
    %7859 = vmatprep.subr.mxu0 0.0
    %7860 = vmatpush1.msra.mxu0 %v6300
    %7861 = vmatprep.subr.mxu0 0.0
    %7862 = vmatpush1.msra.mxu0 %v6301
    %7863 = vmatprep.subr.mxu0 0.0
    %7864 = vmatpush1.msra.mxu0 %v6302
    %7865 = vmatprep.subr.mxu0 0.0
    %7866 = vmatpush1.msra.mxu0 %v6303
    %7867 = vmatprep.subr.mxu0 0.0
    %7868 = vmatpush1.msra.mxu0 %v6304
    %7869 = vmatprep.subr.mxu0 0.0
    %7870 = vmatpush1.msra.mxu0 %v6305
    %7871 = vmatprep.subr.mxu0 0.0
    %7872 = vmatpush1.msra.mxu0 %v6306
    %7873 = vmatprep.subr.mxu0 0.0
    %7874 = vmatpush1.msra.mxu0 %v6307
    %7875 = vmatprep.subr.mxu0 0.0
    %7876 = vmatpush1.msra.mxu0 %v6308
    %7877 = vmatprep.subr.mxu0 0.0
    %7878 = vmatpush1.msra.mxu0 %v6309
    %7879 = vmatprep.subr.mxu0 0.0
    %7880 = vmatpush1.msra.mxu0 %v6310
    %7881 = vmatprep.subr.mxu0 0.0
    %7882 = vmatpush1.msra.mxu0 %v6311
    %7883 = vmatprep.subr.mxu0 0.0
    %7884 = vmatpush1.msra.mxu0 %v6312
    %7885 = vmatprep.subr.mxu0 0.0
    %7886 = vmatpush1.msra.mxu0 0.0
    %7887 = vmatprep.subr.mxu0 0.0
    %7888 = vmatpush1.msra.mxu0 0.0
    %7889 = vmatprep.subr.mxu0 0.0
    %7890 = vmatpush1.msra.mxu0 0.0
    %7891 = vmatprep.subr.mxu0 0.0
    %7892 = vmatpush1.msra.mxu0 0.0
    %7893 = vmatprep.subr.mxu0 0.0
    %7894 = vmatpush1.msra.mxu0 0.0
    %7895 = vmatprep.subr.mxu0 0.0
    %7896 = vmatpush1.msra.mxu0 0.0
    %7897 = vmatprep.subr.mxu0 0.0
    %7898 = vmatpush1.msra.mxu0 0.0
    %7899 = vmatprep.subr.mxu0 0.0
    %7900 = vmatpush1.msra.mxu0 0.0
    %7901 = vmatprep.subr.mxu0 0.0
    %7902 = vmatpush1.msra.mxu0 0.0
    %7903 = vmatprep.subr.mxu0 0.0
    %7904 = vmatpush1.msra.mxu0 0.0
    %7905 = vmatprep.subr.mxu0 0.0
    %7906 = vmatpush1.msra.mxu0 0.0
    %7907 = vmatprep.subr.mxu0 0.0
    %7908 = vmatpush1.msra.mxu0 0.0
    %7909 = vmatprep.subr.mxu0 0.0
    %7910 = vmatpush1.msra.mxu0 0.0
    %7911 = vmatprep.subr.mxu0 0.0
    %7912 = vmatpush1.msra.mxu0 0.0
    %7913 = vmatprep.subr.mxu0 0.0
    %7914 = vmatpush1.msra.mxu0 0.0
    %7915 = vmatprep.subr.mxu0 0.0
    %7916 = vmatpush1.msra.mxu0 0.0
    %7917 = vmatprep.mubr.f32.mxu0 0.0
    %7918 = vmatmul.mubr.f32.gmra.mrb[0].mxu0 %v6101
    %v7919 = vpop.f32.mrb[0].mxu0
    %v7920 = vadd.f32 %v7535, %v7919
    %v7921 = vpop.f32.mrb[0].mxu0
    %7922 = vmatprep.mubr.f32.mxu0 0.0
    %7923 = vmatmul.mubr.f32.gmra.mrb[0].mxu0 %v6102
    %v7924 = vpop.f32.mrb[0].mxu0
    %v7925 = vadd.f32 %v7540, %v7924
    %v7926 = vpop.f32.mrb[0].mxu0
    %7927 = vmatprep.mubr.f32.mxu0 0.0
    %7928 = vmatmul.mubr.f32.gmra.mrb[0].mxu0 %v6103
    %v7929 = vpop.f32.mrb[0].mxu0
    %v7930 = vadd.f32 %v7545, %v7929
    %v7931 = vpop.f32.mrb[0].mxu0
    %7932 = vmatprep.mubr.f32.mxu0 0.0
    %7933 = vmatmul.mubr.f32.gmra.mrb[0].mxu0 %v6104
    %v7934 = vpop.f32.mrb[0].mxu0
    %v7935 = vadd.f32 %v7550, %v7934
    %v7936 = vpop.f32.mrb[0].mxu0
    %7937 = vmatprep.mubr.f32.mxu0 0.0
    %7938 = vmatmul.mubr.f32.gmra.mrb[0].mxu0 %v6105
    %v7939 = vpop.f32.mrb[0].mxu0
    %v7940 = vadd.f32 %v7555, %v7939
    %v7941 = vpop.f32.mrb[0].mxu0
    %7942 = vmatprep.mubr.f32.mxu0 0.0
    %7943 = vmatmul.mubr.f32.gmra.mrb[0].mxu0 %v6106
    %v7944 = vpop.f32.mrb[0].mxu0
    %v7945 = vadd.f32 %v7560, %v7944
    %v7946 = vpop.f32.mrb[0].mxu0
    %7947 = vmatprep.mubr.f32.mxu0 0.0
    %7948 = vmatmul.mubr.f32.gmra.mrb[0].mxu0 %v6107
    %v7949 = vpop.f32.mrb[0].mxu0
    %v7950 = vadd.f32 %v7565, %v7949
    %v7951 = vpop.f32.mrb[0].mxu0
    %7952 = vmatprep.mubr.f32.mxu0 0.0
    %7953 = vmatmul.mubr.f32.gmra.mrb[0].mxu0 %v6108
    %v7954 = vpop.f32.mrb[0].mxu0
    %v7955 = vadd.f32 %v7570, %v7954
    %v7956 = vpop.f32.mrb[0].mxu0
    %7957 = vmatprep.mubr.f32.mxu0 0.0
    %7958 = vmatmul.mubr.f32.gmra.mrb[0].mxu0 %v6109
    %v7959 = vpop.f32.mrb[0].mxu0
    %v7960 = vadd.f32 %v7575, %v7959
    %v7961 = vpop.f32.mrb[0].mxu0
    %7962 = vmatprep.mubr.f32.mxu0 0.0
    %7963 = vmatmul.mubr.f32.gmra.mrb[0].mxu0 %v6110
    %v7964 = vpop.f32.mrb[0].mxu0
    %v7965 = vadd.f32 %v7580, %v7964
    %v7966 = vpop.f32.mrb[0].mxu0
    %7967 = vmatprep.mubr.f32.mxu0 0.0
    %7968 = vmatmul.mubr.f32.gmra.mrb[0].mxu0 %v6111
    %v7969 = vpop.f32.mrb[0].mxu0
    %v7970 = vadd.f32 %v7585, %v7969
    %v7971 = vpop.f32.mrb[0].mxu0
    %7972 = vmatprep.mubr.f32.mxu0 0.0
    %7973 = vmatmul.mubr.f32.gmra.mrb[0].mxu0 %v6112
    %v7974 = vpop.f32.mrb[0].mxu0
    %v7975 = vadd.f32 %v7590, %v7974
    %v7976 = vpop.f32.mrb[0].mxu0
    %7977 = vmatprep.mubr.f32.mxu0 0.0
    %7978 = vmatmul.mubr.f32.gmra.mrb[0].mxu0 %v6113
    %v7979 = vpop.f32.mrb[0].mxu0
    %v7980 = vadd.f32 %v7595, %v7979
    %v7981 = vpop.f32.mrb[0].mxu0
    %7982 = vmatprep.mubr.f32.mxu0 0.0
    %7983 = vmatmul.mubr.f32.gmra.mrb[0].mxu0 %v6114
    %v7984 = vpop.f32.mrb[0].mxu0
    %v7985 = vadd.f32 %v7600, %v7984
    %v7986 = vpop.f32.mrb[0].mxu0
    %7987 = vmatprep.mubr.f32.mxu0 0.0
    %7988 = vmatmul.mubr.f32.gmra.mrb[0].mxu0 %v6115
    %v7989 = vpop.f32.mrb[0].mxu0
    %v7990 = vadd.f32 %v7605, %v7989
    %v7991 = vpop.f32.mrb[0].mxu0
    %7992 = vmatprep.mubr.f32.mxu0 0.0
    %7993 = vmatmul.mubr.f32.gmra.mrb[0].mxu0 %v6116
    %v7994 = vpop.f32.mrb[0].mxu0
    %v7995 = vadd.f32 %v7610, %v7994
    %v7996 = vpop.f32.mrb[0].mxu0
    %7997 = vmatprep.mubr.f32.mxu0 0.0
    %7998 = vmatmul.mubr.f32.gmra.mrb[0].mxu0 %v6117
    %v7999 = vpop.f32.mrb[0].mxu0
    %v8000 = vadd.f32 %v7615, %v7999
    %v8001 = vpop.f32.mrb[0].mxu0
    %8002 = vmatprep.mubr.f32.mxu0 0.0
    %8003 = vmatmul.mubr.f32.gmra.mrb[0].mxu0 %v6118
    %v8004 = vpop.f32.mrb[0].mxu0
    %v8005 = vadd.f32 %v7620, %v8004
    %v8006 = vpop.f32.mrb[0].mxu0
    %8007 = vmatprep.mubr.f32.mxu0 0.0
    %8008 = vmatmul.mubr.f32.gmra.mrb[0].mxu0 %v6119
    %v8009 = vpop.f32.mrb[0].mxu0
    %v8010 = vadd.f32 %v7625, %v8009
    %v8011 = vpop.f32.mrb[0].mxu0
    %8012 = vmatprep.mubr.f32.mxu0 0.0
    %8013 = vmatmul.mubr.f32.gmra.mrb[0].mxu0 %v6120
    %v8014 = vpop.f32.mrb[0].mxu0
    %v8015 = vadd.f32 %v7630, %v8014
    %v8016 = vpop.f32.mrb[0].mxu0
    %8017 = vmatprep.mubr.f32.mxu0 0.0
    %8018 = vmatmul.mubr.f32.gmra.mrb[0].mxu0 %v6121
    %v8019 = vpop.f32.mrb[0].mxu0
    %v8020 = vadd.f32 %v7635, %v8019
    %v8021 = vpop.f32.mrb[0].mxu0
    %8022 = vmatprep.mubr.f32.mxu0 0.0
    %8023 = vmatmul.mubr.f32.gmra.mrb[0].mxu0 %v6122
    %v8024 = vpop.f32.mrb[0].mxu0
    %v8025 = vadd.f32 %v7640, %v8024
    %v8026 = vpop.f32.mrb[0].mxu0
    %8027 = vmatprep.mubr.f32.mxu0 0.0
    %8028 = vmatmul.mubr.f32.gmra.mrb[0].mxu0 %v6123
    %v8029 = vpop.f32.mrb[0].mxu0
    %v8030 = vadd.f32 %v7645, %v8029
    %v8031 = vpop.f32.mrb[0].mxu0
    %8032 = vmatprep.mubr.f32.mxu0 0.0
    %8033 = vmatmul.mubr.f32.gmra.mrb[0].mxu0 %v6124
    %v8034 = vpop.f32.mrb[0].mxu0
    %v8035 = vadd.f32 %v7650, %v8034
    %v8036 = vpop.f32.mrb[0].mxu0
    %8037 = vmatprep.mubr.f32.mxu0 0.0
    %8038 = vmatmul.mubr.f32.gmra.mrb[0].mxu0 %v6125
    %v8039 = vpop.f32.mrb[0].mxu0
    %v8040 = vadd.f32 %v7655, %v8039
    %v8041 = vpop.f32.mrb[0].mxu0
    %8042 = vmatprep.mubr.f32.mxu0 0.0
    %8043 = vmatmul.mubr.f32.gmra.mrb[0].mxu0 %v6126
    %v8044 = vpop.f32.mrb[0].mxu0
    %v8045 = vadd.f32 %v7660, %v8044
    %v8046 = vpop.f32.mrb[0].mxu0
    %8047 = vmatprep.mubr.f32.mxu0 0.0
    %8048 = vmatmul.mubr.f32.gmra.mrb[0].mxu0 %v6127
    %v8049 = vpop.f32.mrb[0].mxu0
    %v8050 = vadd.f32 %v7665, %v8049
    %v8051 = vpop.f32.mrb[0].mxu0
    %8052 = vmatprep.mubr.f32.mxu0 0.0
    %8053 = vmatmul.mubr.f32.gmra.mrb[0].mxu0 %v6128
    %v8054 = vpop.f32.mrb[0].mxu0
    %v8055 = vadd.f32 %v7670, %v8054
    %v8056 = vpop.f32.mrb[0].mxu0
    %8057 = vmatprep.mubr.f32.mxu0 0.0
    %8058 = vmatmul.mubr.f32.gmra.mrb[0].mxu0 %v6129
    %v8059 = vpop.f32.mrb[0].mxu0
    %v8060 = vadd.f32 %v7675, %v8059
    %v8061 = vpop.f32.mrb[0].mxu0
    %8062 = vmatprep.mubr.f32.mxu0 0.0
    %8063 = vmatmul.mubr.f32.gmra.mrb[0].mxu0 %v6130
    %v8064 = vpop.f32.mrb[0].mxu0
    %v8065 = vadd.f32 %v7680, %v8064
    %v8066 = vpop.f32.mrb[0].mxu0
    %8067 = vmatprep.mubr.f32.mxu0 0.0
    %8068 = vmatmul.mubr.f32.gmra.mrb[0].mxu0 %v6131
    %v8069 = vpop.f32.mrb[0].mxu0
    %v8070 = vadd.f32 %v7685, %v8069
    %v8071 = vpop.f32.mrb[0].mxu0
    %8072 = vmatprep.mubr.f32.mxu0 0.0
    %8073 = vmatmul.mubr.f32.gmra.mrb[0].mxu0 %v6132
    %v8074 = vpop.f32.mrb[0].mxu0
    %v8075 = vadd.f32 %v7690, %v8074
    %v8076 = vpop.f32.mrb[0].mxu0
    %8077 = vmatprep.mubr.f32.mxu0 0.0
    %8078 = vmatmul.mubr.f32.gmra.mrb[0].mxu0 %v6137
    %v8079 = vpop.f32.mrb[0].mxu0
    %v8080 = vadd.f32 %v7695, %v8079
    %v8081 = vpop.f32.mrb[0].mxu0
    %8082 = vmatprep.mubr.f32.mxu0 0.0
    %8083 = vmatmul.mubr.f32.gmra.mrb[0].mxu0 %v6138
    %v8084 = vpop.f32.mrb[0].mxu0
    %v8085 = vadd.f32 %v7700, %v8084
    %v8086 = vpop.f32.mrb[0].mxu0
    %8087 = vmatprep.mubr.f32.mxu0 0.0
    %8088 = vmatmul.mubr.f32.gmra.mrb[0].mxu0 %v6139
    %v8089 = vpop.f32.mrb[0].mxu0
    %v8090 = vadd.f32 %v7705, %v8089
    %v8091 = vpop.f32.mrb[0].mxu0
    %8092 = vmatprep.mubr.f32.mxu0 0.0
    %8093 = vmatmul.mubr.f32.gmra.mrb[0].mxu0 %v6140
    %v8094 = vpop.f32.mrb[0].mxu0
    %v8095 = vadd.f32 %v7710, %v8094
    %v8096 = vpop.f32.mrb[0].mxu0
    %8097 = vmatprep.mubr.f32.mxu0 0.0
    %8098 = vmatmul.mubr.f32.gmra.mrb[0].mxu0 %v6141
    %v8099 = vpop.f32.mrb[0].mxu0
    %v8100 = vadd.f32 %v7715, %v8099
    %v8101 = vpop.f32.mrb[0].mxu0
    %8102 = vmatprep.mubr.f32.mxu0 0.0
    %8103 = vmatmul.mubr.f32.gmra.mrb[0].mxu0 %v6142
    %v8104 = vpop.f32.mrb[0].mxu0
    %v8105 = vadd.f32 %v7720, %v8104
    %v8106 = vpop.f32.mrb[0].mxu0
    %8107 = vmatprep.mubr.f32.mxu0 0.0
    %8108 = vmatmul.mubr.f32.gmra.mrb[0].mxu0 %v6143
    %v8109 = vpop.f32.mrb[0].mxu0
    %v8110 = vadd.f32 %v7725, %v8109
    %v8111 = vpop.f32.mrb[0].mxu0
    %8112 = vmatprep.mubr.f32.mxu0 0.0
    %8113 = vmatmul.mubr.f32.gmra.mrb[0].mxu0 %v6144
    %v8114 = vpop.f32.mrb[0].mxu0
    %v8115 = vadd.f32 %v7730, %v8114
    %v8116 = vpop.f32.mrb[0].mxu0
    %8117 = vmatprep.mubr.f32.mxu0 0.0
    %8118 = vmatmul.mubr.f32.gmra.mrb[0].mxu0 %v6145
    %v8119 = vpop.f32.mrb[0].mxu0
    %v8120 = vadd.f32 %v7735, %v8119
    %v8121 = vpop.f32.mrb[0].mxu0
    %8122 = vmatprep.mubr.f32.mxu0 0.0
    %8123 = vmatmul.mubr.f32.gmra.mrb[0].mxu0 %v6146
    %v8124 = vpop.f32.mrb[0].mxu0
    %v8125 = vadd.f32 %v7740, %v8124
    %v8126 = vpop.f32.mrb[0].mxu0
    %8127 = vmatprep.mubr.f32.mxu0 0.0
    %8128 = vmatmul.mubr.f32.gmra.mrb[0].mxu0 %v6147
    %v8129 = vpop.f32.mrb[0].mxu0
    %v8130 = vadd.f32 %v7745, %v8129
    %v8131 = vpop.f32.mrb[0].mxu0
    %8132 = vmatprep.mubr.f32.mxu0 0.0
    %8133 = vmatmul.mubr.f32.gmra.mrb[0].mxu0 %v6148
    %v8134 = vpop.f32.mrb[0].mxu0
    %v8135 = vadd.f32 %v7750, %v8134
    %v8136 = vpop.f32.mrb[0].mxu0
    %8137 = vmatprep.mubr.f32.mxu0 0.0
    %8138 = vmatmul.mubr.f32.gmra.mrb[0].mxu0 %v6149
    %v8139 = vpop.f32.mrb[0].mxu0
    %v8140 = vadd.f32 %v7755, %v8139
    %v8141 = vpop.f32.mrb[0].mxu0
    %8142 = vmatprep.mubr.f32.mxu0 0.0
    %8143 = vmatmul.mubr.f32.gmra.mrb[0].mxu0 %v6150
    %v8144 = vpop.f32.mrb[0].mxu0
    %v8145 = vadd.f32 %v7760, %v8144
    %v8146 = vpop.f32.mrb[0].mxu0
    %8147 = vmatprep.mubr.f32.mxu0 0.0
    %8148 = vmatmul.mubr.f32.gmra.mrb[0].mxu0 %v6151
    %v8149 = vpop.f32.mrb[0].mxu0
    %v8150 = vadd.f32 %v7765, %v8149
    %v8151 = vpop.f32.mrb[0].mxu0
    %8152 = vmatprep.mubr.f32.mxu0 0.0
    %8153 = vmatmul.mubr.f32.gmra.mrb[0].mxu0 %v6152
    %v8154 = vpop.f32.mrb[0].mxu0
    %v8155 = vadd.f32 %v7770, %v8154
    %v8156 = vpop.f32.mrb[0].mxu0
    %8157 = vmatprep.mubr.f32.mxu0 0.0
    %8158 = vmatmul.mubr.f32.gmra.mrb[0].mxu0 %v6153
    %v8159 = vpop.f32.mrb[0].mxu0
    %v8160 = vadd.f32 %v7775, %v8159
    %v8161 = vpop.f32.mrb[0].mxu0
    %8162 = vmatprep.mubr.f32.mxu0 0.0
    %8163 = vmatmul.mubr.f32.gmra.mrb[0].mxu0 %v6154
    %v8164 = vpop.f32.mrb[0].mxu0
    %v8165 = vadd.f32 %v7780, %v8164
    %v8166 = vpop.f32.mrb[0].mxu0
    %8167 = vmatprep.mubr.f32.mxu0 0.0
    %8168 = vmatmul.mubr.f32.gmra.mrb[0].mxu0 %v6155
    %v8169 = vpop.f32.mrb[0].mxu0
    %v8170 = vadd.f32 %v7785, %v8169
    %v8171 = vpop.f32.mrb[0].mxu0
    %8172 = vmatprep.mubr.f32.mxu0 0.0
    %8173 = vmatmul.mubr.f32.gmra.mrb[0].mxu0 %v6156
    %v8174 = vpop.f32.mrb[0].mxu0
    %v8175 = vadd.f32 %v7790, %v8174
    %v8176 = vpop.f32.mrb[0].mxu0
    %8177 = vmatprep.mubr.f32.mxu0 0.0
    %8178 = vmatmul.mubr.f32.gmra.mrb[0].mxu0 %v6157
    %v8179 = vpop.f32.mrb[0].mxu0
    %v8180 = vadd.f32 %v7795, %v8179
    %v8181 = vpop.f32.mrb[0].mxu0
    %8182 = vmatprep.mubr.f32.mxu0 0.0
    %8183 = vmatmul.mubr.f32.gmra.mrb[0].mxu0 %v6158
    %v8184 = vpop.f32.mrb[0].mxu0
    %v8185 = vadd.f32 %v7800, %v8184
    %v8186 = vpop.f32.mrb[0].mxu0
    %8187 = vmatprep.mubr.f32.mxu0 0.0
    %8188 = vmatmul.mubr.f32.gmra.mrb[0].mxu0 %v6159
    %v8189 = vpop.f32.mrb[0].mxu0
    %v8190 = vadd.f32 %v7805, %v8189
    %v8191 = vpop.f32.mrb[0].mxu0
    %8192 = vmatprep.mubr.f32.mxu0 0.0
    %8193 = vmatmul.mubr.f32.gmra.mrb[0].mxu0 %v6160
    %v8194 = vpop.f32.mrb[0].mxu0
    %v8195 = vadd.f32 %v7810, %v8194
    %v8196 = vpop.f32.mrb[0].mxu0
    %8197 = vmatprep.mubr.f32.mxu0 0.0
    %8198 = vmatmul.mubr.f32.gmra.mrb[0].mxu0 %v6161
    %v8199 = vpop.f32.mrb[0].mxu0
    %v8200 = vadd.f32 %v7815, %v8199
    %v8201 = vpop.f32.mrb[0].mxu0
    %8202 = vmatprep.mubr.f32.mxu0 0.0
    %8203 = vmatmul.mubr.f32.gmra.mrb[0].mxu0 %v6162
    %v8204 = vpop.f32.mrb[0].mxu0
    %v8205 = vadd.f32 %v7820, %v8204
    %v8206 = vpop.f32.mrb[0].mxu0
    %8207 = vmatprep.mubr.f32.mxu0 0.0
    %8208 = vmatmul.mubr.f32.gmra.mrb[0].mxu0 %v6163
    %v8209 = vpop.f32.mrb[0].mxu0
    %v8210 = vadd.f32 %v7825, %v8209
    %v8211 = vpop.f32.mrb[0].mxu0
    %8212 = vmatprep.mubr.f32.mxu0 0.0
    %8213 = vmatmul.mubr.f32.gmra.mrb[0].mxu0 %v6164
    %v8214 = vpop.f32.mrb[0].mxu0
    %v8215 = vadd.f32 %v7830, %v8214
    %v8216 = vpop.f32.mrb[0].mxu0
    %8217 = vmatprep.mubr.f32.mxu0 0.0
    %8218 = vmatmul.mubr.f32.gmra.mrb[0].mxu0 %v6165
    %v8219 = vpop.f32.mrb[0].mxu0
    %v8220 = vadd.f32 %v7835, %v8219
    %v8221 = vpop.f32.mrb[0].mxu0
    %8222 = vmatprep.mubr.f32.mxu0 0.0
    %8223 = vmatmul.mubr.f32.gmra.mrb[0].mxu0 %v6166
    %v8224 = vpop.f32.mrb[0].mxu0
    %v8225 = vadd.f32 %v7840, %v8224
    %v8226 = vpop.f32.mrb[0].mxu0
    %8227 = vmatprep.mubr.f32.mxu0 0.0
    %8228 = vmatmul.mubr.f32.gmra.mrb[0].mxu0 %v6167
    %v8229 = vpop.f32.mrb[0].mxu0
    %v8230 = vadd.f32 %v7845, %v8229
    %v8231 = vpop.f32.mrb[0].mxu0
    %8232 = vmatprep.mubr.f32.mxu0 0.0
    %8233 = vmatmul.mubr.f32.gmra.mrb[0].mxu0 %v6168
    %v8234 = vpop.f32.mrb[0].mxu0
    %v8235 = vadd.f32 %v7850, %v8234
    %v8236 = vpop.f32.mrb[0].mxu0
    %8237 = vdwg.mxu0
    %v8238 = vadd.f32 %v7920, %v7925
    %v8239 = vadd.f32 %v8238, %v7930
    %v8240 = vadd.f32 %v8239, %v7935
    %v8241 = vadd.f32 %v8240, %v7940
    %v8242 = vadd.f32 %v8241, %v7945
    %v8243 = vadd.f32 %v8242, %v7950
    %v8244 = vadd.f32 %v8243, %v7955
    %v8245 = vadd.f32 %v8244, %v7960
    %v8246 = vadd.f32 %v8245, %v7965
    %v8247 = vadd.f32 %v8246, %v7970
    %v8248 = vadd.f32 %v8247, %v7975
    %v8249 = vadd.f32 %v8248, %v7980
    %v8250 = vadd.f32 %v8249, %v7985
    %v8251 = vadd.f32 %v8250, %v7990
    %v8252 = vadd.f32 %v8251, %v7995
    %v8253 = vadd.f32 %v8252, %v8000
    %v8254 = vadd.f32 %v8253, %v8005
    %v8255 = vadd.f32 %v8254, %v8010
    %v8256 = vadd.f32 %v8255, %v8015
    %v8257 = vadd.f32 %v8256, %v8020
    %v8258 = vadd.f32 %v8257, %v8025
    %v8259 = vadd.f32 %v8258, %v8030
    %v8260 = vadd.f32 %v8259, %v8035
    %v8261 = vadd.f32 %v8260, %v8040
    %v8262 = vadd.f32 %v8261, %v8045
    %v8263 = vadd.f32 %v8262, %v8050
    %v8264 = vadd.f32 %v8263, %v8055
    %v8265 = vadd.f32 %v8264, %v8060
    %v8266 = vadd.f32 %v8265, %v8065
    %v8267 = vadd.f32 %v8266, %v8070
    %v8268 = vadd.f32 %v8267, %v8075
    %v8269 = vadd.f32 %v8268, %v8080
    %v8270 = vadd.f32 %v8269, %v8085
    %v8271 = vadd.f32 %v8270, %v8090
    %v8272 = vadd.f32 %v8271, %v8095
    %v8273 = vadd.f32 %v8272, %v8100
    %v8274 = vadd.f32 %v8273, %v8105
    %v8275 = vadd.f32 %v8274, %v8110
    %v8276 = vadd.f32 %v8275, %v8115
    %v8277 = vadd.f32 %v8276, %v8120
    %v8278 = vadd.f32 %v8277, %v8125
    %v8279 = vadd.f32 %v8278, %v8130
    %v8280 = vadd.f32 %v8279, %v8135
    %v8281 = vadd.f32 %v8280, %v8140
    %v8282 = vadd.f32 %v8281, %v8145
    %v8283 = vadd.f32 %v8282, %v8150
    %v8284 = vadd.f32 %v8283, %v8155
    %v8285 = vadd.f32 %v8284, %v8160
    %v8286 = vadd.f32 %v8285, %v8165
    %v8287 = vadd.f32 %v8286, %v8170
    %v8288 = vadd.f32 %v8287, %v8175
    %v8289 = vadd.f32 %v8288, %v8180
    %v8290 = vadd.f32 %v8289, %v8185
    %v8291 = vadd.f32 %v8290, %v8190
    %v8292 = vadd.f32 %v8291, %v8195
    %v8293 = vadd.f32 %v8292, %v8200
    %v8294 = vadd.f32 %v8293, %v8205
    %v8295 = vadd.f32 %v8294, %v8210
    %v8296 = vadd.f32 %v8295, %v8215
    %v8297 = vadd.f32 %v8296, %v8220
    %v8298 = vadd.f32 %v8297, %v8225
    %v8299 = vadd.f32 %v8298, %v8230
    %v8300 = vadd.f32 %v8299, %v8235
    %v8301 = vrot.slane %v8300, 4
    %v8302 = vadd.f32 %v8300, %v8301
    %v8303 = vrot.slane %v8302, 2
    %v8304 = vadd.f32 %v8302, %v8303
    %v8305 = vrot.slane %v8304, 1
    %v8306 = vadd.f32 %v8304, %v8305
    %v8307 = vmul.f32 %v8306, 0.001953125
    %v8308 = vsub.f32 %v7920, %v8307
    %v8309 = vsub.f32 %v7925, %v8307
    %v8310 = vsub.f32 %v7930, %v8307
    %v8311 = vsub.f32 %v7935, %v8307
    %v8312 = vsub.f32 %v7940, %v8307
    %v8313 = vsub.f32 %v7945, %v8307
    %v8314 = vsub.f32 %v7950, %v8307
    %v8315 = vsub.f32 %v7955, %v8307
    %v8316 = vsub.f32 %v7960, %v8307
    %v8317 = vsub.f32 %v7965, %v8307
    %v8318 = vsub.f32 %v7970, %v8307
    %v8319 = vsub.f32 %v7975, %v8307
    %v8320 = vsub.f32 %v7980, %v8307
    %v8321 = vsub.f32 %v7985, %v8307
    %v8322 = vsub.f32 %v7990, %v8307
    %v8323 = vsub.f32 %v7995, %v8307
    %v8324 = vsub.f32 %v8000, %v8307
    %v8325 = vsub.f32 %v8005, %v8307
    %v8326 = vsub.f32 %v8010, %v8307
    %v8327 = vsub.f32 %v8015, %v8307
    %v8328 = vsub.f32 %v8020, %v8307
    %v8329 = vsub.f32 %v8025, %v8307
    %v8330 = vsub.f32 %v8030, %v8307
    %v8331 = vsub.f32 %v8035, %v8307
    %v8332 = vsub.f32 %v8040, %v8307
    %v8333 = vsub.f32 %v8045, %v8307
    %v8334 = vsub.f32 %v8050, %v8307
    %v8335 = vsub.f32 %v8055, %v8307
    %v8336 = vsub.f32 %v8060, %v8307
    %v8337 = vsub.f32 %v8065, %v8307
    %v8338 = vsub.f32 %v8070, %v8307
    %v8339 = vsub.f32 %v8075, %v8307
    %v8340 = vsub.f32 %v8080, %v8307
    %v8341 = vsub.f32 %v8085, %v8307
    %v8342 = vsub.f32 %v8090, %v8307
    %v8343 = vsub.f32 %v8095, %v8307
    %v8344 = vsub.f32 %v8100, %v8307
    %v8345 = vsub.f32 %v8105, %v8307
    %v8346 = vsub.f32 %v8110, %v8307
    %v8347 = vsub.f32 %v8115, %v8307
    %v8348 = vsub.f32 %v8120, %v8307
    %v8349 = vsub.f32 %v8125, %v8307
    %v8350 = vsub.f32 %v8130, %v8307
    %v8351 = vsub.f32 %v8135, %v8307
    %v8352 = vsub.f32 %v8140, %v8307
    %v8353 = vsub.f32 %v8145, %v8307
    %v8354 = vsub.f32 %v8150, %v8307
    %v8355 = vsub.f32 %v8155, %v8307
    %v8356 = vsub.f32 %v8160, %v8307
    %v8357 = vsub.f32 %v8165, %v8307
    %v8358 = vsub.f32 %v8170, %v8307
    %v8359 = vsub.f32 %v8175, %v8307
    %v8360 = vsub.f32 %v8180, %v8307
    %v8361 = vsub.f32 %v8185, %v8307
    %v8362 = vsub.f32 %v8190, %v8307
    %v8363 = vsub.f32 %v8195, %v8307
    %v8364 = vsub.f32 %v8200, %v8307
    %v8365 = vsub.f32 %v8205, %v8307
    %v8366 = vsub.f32 %v8210, %v8307
    %v8367 = vsub.f32 %v8215, %v8307
    %v8368 = vsub.f32 %v8220, %v8307
    %v8369 = vsub.f32 %v8225, %v8307
    %v8370 = vsub.f32 %v8230, %v8307
    %v8371 = vsub.f32 %v8235, %v8307
    %v8372 = vmul.f32 %v8308, %v8308
    %v8373 = vmul.f32 %v8309, %v8309
    %v8374 = vmul.f32 %v8310, %v8310
    %v8375 = vmul.f32 %v8311, %v8311
    %v8376 = vmul.f32 %v8312, %v8312
    %v8377 = vmul.f32 %v8313, %v8313
    %v8378 = vmul.f32 %v8314, %v8314
    %v8379 = vmul.f32 %v8315, %v8315
    %v8380 = vmul.f32 %v8316, %v8316
    %v8381 = vmul.f32 %v8317, %v8317
    %v8382 = vmul.f32 %v8318, %v8318
    %v8383 = vmul.f32 %v8319, %v8319
    %v8384 = vmul.f32 %v8320, %v8320
    %v8385 = vmul.f32 %v8321, %v8321
    %v8386 = vmul.f32 %v8322, %v8322
    %v8387 = vmul.f32 %v8323, %v8323
    %v8388 = vmul.f32 %v8324, %v8324
    %v8389 = vmul.f32 %v8325, %v8325
    %v8390 = vmul.f32 %v8326, %v8326
    %v8391 = vmul.f32 %v8327, %v8327
    %v8392 = vmul.f32 %v8328, %v8328
    %v8393 = vmul.f32 %v8329, %v8329
    %v8394 = vmul.f32 %v8330, %v8330
    %v8395 = vmul.f32 %v8331, %v8331
    %v8396 = vmul.f32 %v8332, %v8332
    %v8397 = vmul.f32 %v8333, %v8333
    %v8398 = vmul.f32 %v8334, %v8334
    %v8399 = vmul.f32 %v8335, %v8335
    %v8400 = vmul.f32 %v8336, %v8336
    %v8401 = vmul.f32 %v8337, %v8337
    %v8402 = vmul.f32 %v8338, %v8338
    %v8403 = vmul.f32 %v8339, %v8339
    %v8404 = vmul.f32 %v8340, %v8340
    %v8405 = vmul.f32 %v8341, %v8341
    %v8406 = vmul.f32 %v8342, %v8342
    %v8407 = vmul.f32 %v8343, %v8343
    %v8408 = vmul.f32 %v8344, %v8344
    %v8409 = vmul.f32 %v8345, %v8345
    %v8410 = vmul.f32 %v8346, %v8346
    %v8411 = vmul.f32 %v8347, %v8347
    %v8412 = vmul.f32 %v8348, %v8348
    %v8413 = vmul.f32 %v8349, %v8349
    %v8414 = vmul.f32 %v8350, %v8350
    %v8415 = vmul.f32 %v8351, %v8351
    %v8416 = vmul.f32 %v8352, %v8352
    %v8417 = vmul.f32 %v8353, %v8353
    %v8418 = vmul.f32 %v8354, %v8354
    %v8419 = vmul.f32 %v8355, %v8355
    %v8420 = vmul.f32 %v8356, %v8356
    %v8421 = vmul.f32 %v8357, %v8357
    %v8422 = vmul.f32 %v8358, %v8358
    %v8423 = vmul.f32 %v8359, %v8359
    %v8424 = vmul.f32 %v8360, %v8360
    %v8425 = vmul.f32 %v8361, %v8361
    %v8426 = vmul.f32 %v8362, %v8362
    %v8427 = vmul.f32 %v8363, %v8363
    %v8428 = vmul.f32 %v8364, %v8364
    %v8429 = vmul.f32 %v8365, %v8365
    %v8430 = vmul.f32 %v8366, %v8366
    %v8431 = vmul.f32 %v8367, %v8367
    %v8432 = vmul.f32 %v8368, %v8368
    %v8433 = vmul.f32 %v8369, %v8369
    %v8434 = vmul.f32 %v8370, %v8370
    %v8435 = vmul.f32 %v8371, %v8371
    %v8436 = vadd.f32 %v8372, %v8373
    %v8437 = vadd.f32 %v8436, %v8374
    %v8438 = vadd.f32 %v8437, %v8375
    %v8439 = vadd.f32 %v8438, %v8376
    %v8440 = vadd.f32 %v8439, %v8377
    %v8441 = vadd.f32 %v8440, %v8378
    %v8442 = vadd.f32 %v8441, %v8379
    %v8443 = vadd.f32 %v8442, %v8380
    %v8444 = vadd.f32 %v8443, %v8381
    %v8445 = vadd.f32 %v8444, %v8382
    %v8446 = vadd.f32 %v8445, %v8383
    %v8447 = vadd.f32 %v8446, %v8384
    %v8448 = vadd.f32 %v8447, %v8385
    %v8449 = vadd.f32 %v8448, %v8386
    %v8450 = vadd.f32 %v8449, %v8387
    %v8451 = vadd.f32 %v8450, %v8388
    %v8452 = vadd.f32 %v8451, %v8389
    %v8453 = vadd.f32 %v8452, %v8390
    %v8454 = vadd.f32 %v8453, %v8391
    %v8455 = vadd.f32 %v8454, %v8392
    %v8456 = vadd.f32 %v8455, %v8393
    %v8457 = vadd.f32 %v8456, %v8394
    %v8458 = vadd.f32 %v8457, %v8395
    %v8459 = vadd.f32 %v8458, %v8396
    %v8460 = vadd.f32 %v8459, %v8397
    %v8461 = vadd.f32 %v8460, %v8398
    %v8462 = vadd.f32 %v8461, %v8399
    %v8463 = vadd.f32 %v8462, %v8400
    %v8464 = vadd.f32 %v8463, %v8401
    %v8465 = vadd.f32 %v8464, %v8402
    %v8466 = vadd.f32 %v8465, %v8403
    %v8467 = vadd.f32 %v8466, %v8404
    %v8468 = vadd.f32 %v8467, %v8405
    %v8469 = vadd.f32 %v8468, %v8406
    %v8470 = vadd.f32 %v8469, %v8407
    %v8471 = vadd.f32 %v8470, %v8408
    %v8472 = vadd.f32 %v8471, %v8409
    %v8473 = vadd.f32 %v8472, %v8410
    %v8474 = vadd.f32 %v8473, %v8411
    %v8475 = vadd.f32 %v8474, %v8412
    %v8476 = vadd.f32 %v8475, %v8413
    %v8477 = vadd.f32 %v8476, %v8414
    %v8478 = vadd.f32 %v8477, %v8415
    %v8479 = vadd.f32 %v8478, %v8416
    %v8480 = vadd.f32 %v8479, %v8417
    %v8481 = vadd.f32 %v8480, %v8418
    %v8482 = vadd.f32 %v8481, %v8419
    %v8483 = vadd.f32 %v8482, %v8420
    %v8484 = vadd.f32 %v8483, %v8421
    %v8485 = vadd.f32 %v8484, %v8422
    %v8486 = vadd.f32 %v8485, %v8423
    %v8487 = vadd.f32 %v8486, %v8424
    %v8488 = vadd.f32 %v8487, %v8425
    %v8489 = vadd.f32 %v8488, %v8426
    %v8490 = vadd.f32 %v8489, %v8427
    %v8491 = vadd.f32 %v8490, %v8428
    %v8492 = vadd.f32 %v8491, %v8429
    %v8493 = vadd.f32 %v8492, %v8430
    %v8494 = vadd.f32 %v8493, %v8431
    %v8495 = vadd.f32 %v8494, %v8432
    %v8496 = vadd.f32 %v8495, %v8433
    %v8497 = vadd.f32 %v8496, %v8434
    %v8498 = vadd.f32 %v8497, %v8435
    %v8499 = vrot.slane %v8498, 4
    %v8500 = vadd.f32 %v8498, %v8499
    %v8501 = vrot.slane %v8500, 2
    %v8502 = vadd.f32 %v8500, %v8501
    %v8503 = vrot.slane %v8502, 1
    %v8504 = vadd.f32 %v8502, %v8503
    %v8505 = vmul.f32 %v8504, 0.001953125
    %v8506 = vld [vmem:[%s8] sm:$0x1]
    %v8507 = vadd.f32 %v8505, 1e-05
    %v8508 = vrsqrt.pop %v8507
    %v8509 = vmul.f32 %v8506, %v8508
    %v8511 = vlaneseq
    %v8512 = vshrl.u32 %v8511, 7
    %v8513 = vsub.s32 0, %v8512
    %v8514 = vrot.slane %v8509, %v8513
    %v8516 = vmul.f32 %v8308, %v8514
    %v8517 = vmul.f32 %v8309, %v8514
    %v8518 = vmul.f32 %v8310, %v8514
    %v8519 = vmul.f32 %v8311, %v8514
    %v8520 = vmul.f32 %v8312, %v8514
    %v8521 = vmul.f32 %v8313, %v8514
    %v8522 = vmul.f32 %v8314, %v8514
    %v8523 = vmul.f32 %v8315, %v8514
    %v8524 = vmul.f32 %v8316, %v8514
    %v8525 = vmul.f32 %v8317, %v8514
    %v8526 = vmul.f32 %v8318, %v8514
    %v8527 = vmul.f32 %v8319, %v8514
    %v8528 = vmul.f32 %v8320, %v8514
    %v8529 = vmul.f32 %v8321, %v8514
    %v8530 = vmul.f32 %v8322, %v8514
    %v8531 = vmul.f32 %v8323, %v8514
    %v8532 = vmul.f32 %v8324, %v8514
    %v8533 = vmul.f32 %v8325, %v8514
    %v8534 = vmul.f32 %v8326, %v8514
    %v8535 = vmul.f32 %v8327, %v8514
    %v8536 = vmul.f32 %v8328, %v8514
    %v8537 = vmul.f32 %v8329, %v8514
    %v8538 = vmul.f32 %v8330, %v8514
    %v8539 = vmul.f32 %v8331, %v8514
    %v8540 = vmul.f32 %v8332, %v8514
    %v8541 = vmul.f32 %v8333, %v8514
    %v8542 = vmul.f32 %v8334, %v8514
    %v8543 = vmul.f32 %v8335, %v8514
    %v8544 = vmul.f32 %v8336, %v8514
    %v8545 = vmul.f32 %v8337, %v8514
    %v8546 = vmul.f32 %v8338, %v8514
    %v8547 = vmul.f32 %v8339, %v8514
    %v8548 = vmul.f32 %v8340, %v8514
    %v8549 = vmul.f32 %v8341, %v8514
    %v8550 = vmul.f32 %v8342, %v8514
    %v8551 = vmul.f32 %v8343, %v8514
    %v8552 = vmul.f32 %v8344, %v8514
    %v8553 = vmul.f32 %v8345, %v8514
    %v8554 = vmul.f32 %v8346, %v8514
    %v8555 = vmul.f32 %v8347, %v8514
    %v8556 = vmul.f32 %v8348, %v8514
    %v8557 = vmul.f32 %v8349, %v8514
    %v8558 = vmul.f32 %v8350, %v8514
    %v8559 = vmul.f32 %v8351, %v8514
    %v8560 = vmul.f32 %v8352, %v8514
    %v8561 = vmul.f32 %v8353, %v8514
    %v8562 = vmul.f32 %v8354, %v8514
    %v8563 = vmul.f32 %v8355, %v8514
    %v8564 = vmul.f32 %v8356, %v8514
    %v8565 = vmul.f32 %v8357, %v8514
    %v8566 = vmul.f32 %v8358, %v8514
    %v8567 = vmul.f32 %v8359, %v8514
    %v8568 = vmul.f32 %v8360, %v8514
    %v8569 = vmul.f32 %v8361, %v8514
    %v8570 = vmul.f32 %v8362, %v8514
    %v8571 = vmul.f32 %v8363, %v8514
    %v8572 = vmul.f32 %v8364, %v8514
    %v8573 = vmul.f32 %v8365, %v8514
    %v8574 = vmul.f32 %v8366, %v8514
    %v8575 = vmul.f32 %v8367, %v8514
    %v8576 = vmul.f32 %v8368, %v8514
    %v8577 = vmul.f32 %v8369, %v8514
    %v8578 = vmul.f32 %v8370, %v8514
    %v8579 = vmul.f32 %v8371, %v8514
    %v8580 = vld [vmem:[%s9] sm:$0x1]
    %v8582 = vlaneseq
    %v8583 = vshrl.u32 %v8582, 7
    %v8584 = vsub.s32 0, %v8583
    %v8585 = vrot.slane %v8580, %v8584
    %v8587 = vadd.f32 %v8516, %v8585
    %v8588 = vadd.f32 %v8517, %v8585
    %v8589 = vadd.f32 %v8518, %v8585
    %v8590 = vadd.f32 %v8519, %v8585
    %v8591 = vadd.f32 %v8520, %v8585
    %v8592 = vadd.f32 %v8521, %v8585
    %v8593 = vadd.f32 %v8522, %v8585
    %v8594 = vadd.f32 %v8523, %v8585
    %v8595 = vadd.f32 %v8524, %v8585
    %v8596 = vadd.f32 %v8525, %v8585
    %v8597 = vadd.f32 %v8526, %v8585
    %v8598 = vadd.f32 %v8527, %v8585
    %v8599 = vadd.f32 %v8528, %v8585
    %v8600 = vadd.f32 %v8529, %v8585
    %v8601 = vadd.f32 %v8530, %v8585
    %v8602 = vadd.f32 %v8531, %v8585
    %v8603 = vadd.f32 %v8532, %v8585
    %v8604 = vadd.f32 %v8533, %v8585
    %v8605 = vadd.f32 %v8534, %v8585
    %v8606 = vadd.f32 %v8535, %v8585
    %v8607 = vadd.f32 %v8536, %v8585
    %v8608 = vadd.f32 %v8537, %v8585
    %v8609 = vadd.f32 %v8538, %v8585
    %v8610 = vadd.f32 %v8539, %v8585
    %v8611 = vadd.f32 %v8540, %v8585
    %v8612 = vadd.f32 %v8541, %v8585
    %v8613 = vadd.f32 %v8542, %v8585
    %v8614 = vadd.f32 %v8543, %v8585
    %v8615 = vadd.f32 %v8544, %v8585
    %v8616 = vadd.f32 %v8545, %v8585
    %v8617 = vadd.f32 %v8546, %v8585
    %v8618 = vadd.f32 %v8547, %v8585
    %v8619 = vadd.f32 %v8548, %v8585
    %v8620 = vadd.f32 %v8549, %v8585
    %v8621 = vadd.f32 %v8550, %v8585
    %v8622 = vadd.f32 %v8551, %v8585
    %v8623 = vadd.f32 %v8552, %v8585
    %v8624 = vadd.f32 %v8553, %v8585
    %v8625 = vadd.f32 %v8554, %v8585
    %v8626 = vadd.f32 %v8555, %v8585
    %v8627 = vadd.f32 %v8556, %v8585
    %v8628 = vadd.f32 %v8557, %v8585
    %v8629 = vadd.f32 %v8558, %v8585
    %v8630 = vadd.f32 %v8559, %v8585
    %v8631 = vadd.f32 %v8560, %v8585
    %v8632 = vadd.f32 %v8561, %v8585
    %v8633 = vadd.f32 %v8562, %v8585
    %v8634 = vadd.f32 %v8563, %v8585
    %v8635 = vadd.f32 %v8564, %v8585
    %v8636 = vadd.f32 %v8565, %v8585
    %v8637 = vadd.f32 %v8566, %v8585
    %v8638 = vadd.f32 %v8567, %v8585
    %v8639 = vadd.f32 %v8568, %v8585
    %v8640 = vadd.f32 %v8569, %v8585
    %v8641 = vadd.f32 %v8570, %v8585
    %v8642 = vadd.f32 %v8571, %v8585
    %v8643 = vadd.f32 %v8572, %v8585
    %v8644 = vadd.f32 %v8573, %v8585
    %v8645 = vadd.f32 %v8574, %v8585
    %v8646 = vadd.f32 %v8575, %v8585
    %v8647 = vadd.f32 %v8576, %v8585
    %v8648 = vadd.f32 %v8577, %v8585
    %v8649 = vadd.f32 %v8578, %v8585
    %v8650 = vadd.f32 %v8579, %v8585
    %v8651 = vmax.f32 %v8587, 0.0
    %v8652 = vmax.f32 %v8588, 0.0
    %v8653 = vmax.f32 %v8589, 0.0
    %v8654 = vmax.f32 %v8590, 0.0
    %v8655 = vmax.f32 %v8591, 0.0
    %v8656 = vmax.f32 %v8592, 0.0
    %v8657 = vmax.f32 %v8593, 0.0
    %v8658 = vmax.f32 %v8594, 0.0
    %v8659 = vmax.f32 %v8595, 0.0
    %v8660 = vmax.f32 %v8596, 0.0
    %v8661 = vmax.f32 %v8597, 0.0
    %v8662 = vmax.f32 %v8598, 0.0
    %v8663 = vmax.f32 %v8599, 0.0
    %v8664 = vmax.f32 %v8600, 0.0
    %v8665 = vmax.f32 %v8601, 0.0
    %v8666 = vmax.f32 %v8602, 0.0
    %v8667 = vmax.f32 %v8603, 0.0
    %v8668 = vmax.f32 %v8604, 0.0
    %v8669 = vmax.f32 %v8605, 0.0
    %v8670 = vmax.f32 %v8606, 0.0
    %v8671 = vmax.f32 %v8607, 0.0
    %v8672 = vmax.f32 %v8608, 0.0
    %v8673 = vmax.f32 %v8609, 0.0
    %v8674 = vmax.f32 %v8610, 0.0
    %v8675 = vmax.f32 %v8611, 0.0
    %v8676 = vmax.f32 %v8612, 0.0
    %v8677 = vmax.f32 %v8613, 0.0
    %v8678 = vmax.f32 %v8614, 0.0
    %v8679 = vmax.f32 %v8615, 0.0
    %v8680 = vmax.f32 %v8616, 0.0
    %v8681 = vmax.f32 %v8617, 0.0
    %v8682 = vmax.f32 %v8618, 0.0
    %v8683 = vmax.f32 %v8619, 0.0
    %v8684 = vmax.f32 %v8620, 0.0
    %v8685 = vmax.f32 %v8621, 0.0
    %v8686 = vmax.f32 %v8622, 0.0
    %v8687 = vmax.f32 %v8623, 0.0
    %v8688 = vmax.f32 %v8624, 0.0
    %v8689 = vmax.f32 %v8625, 0.0
    %v8690 = vmax.f32 %v8626, 0.0
    %v8691 = vmax.f32 %v8627, 0.0
    %v8692 = vmax.f32 %v8628, 0.0
    %v8693 = vmax.f32 %v8629, 0.0
    %v8694 = vmax.f32 %v8630, 0.0
    %v8695 = vmax.f32 %v8631, 0.0
    %v8696 = vmax.f32 %v8632, 0.0
    %v8697 = vmax.f32 %v8633, 0.0
    %v8698 = vmax.f32 %v8634, 0.0
    %v8699 = vmax.f32 %v8635, 0.0
    %v8700 = vmax.f32 %v8636, 0.0
    %v8701 = vmax.f32 %v8637, 0.0
    %v8702 = vmax.f32 %v8638, 0.0
    %v8703 = vmax.f32 %v8639, 0.0
    %v8704 = vmax.f32 %v8640, 0.0
    %v8705 = vmax.f32 %v8641, 0.0
    %v8706 = vmax.f32 %v8642, 0.0
    %v8707 = vmax.f32 %v8643, 0.0
    %v8708 = vmax.f32 %v8644, 0.0
    %v8709 = vmax.f32 %v8645, 0.0
    %v8710 = vmax.f32 %v8646, 0.0
    %v8711 = vmax.f32 %v8647, 0.0
    %v8712 = vmax.f32 %v8648, 0.0
    %v8713 = vmax.f32 %v8649, 0.0
    %v8714 = vmax.f32 %v8650, 0.0
    %8715 = vst [vmem:[#allocation11] sm:$0xff] %v8651
    %8716 = vst [vmem:[#allocation11 + $0x8] sm:$0xff] %v8652
    %8717 = vst [vmem:[#allocation11 + $0x10] sm:$0xff] %v8653
    %8718 = vst [vmem:[#allocation11 + $0x18] sm:$0xff] %v8654
    %8719 = vst [vmem:[#allocation11 + $0x20] sm:$0xff] %v8655
    %8720 = vst [vmem:[#allocation11 + $0x28] sm:$0xff] %v8656
    %8721 = vst [vmem:[#allocation11 + $0x30] sm:$0xff] %v8657
    %8722 = vst [vmem:[#allocation11 + $0x38] sm:$0xff] %v8658
    %8723 = vst [vmem:[#allocation11 + $0x40] sm:$0xff] %v8659
    %8724 = vst [vmem:[#allocation11 + $0x48] sm:$0xff] %v8660
    %8725 = vst [vmem:[#allocation11 + $0x50] sm:$0xff] %v8661
    %8726 = vst [vmem:[#allocation11 + $0x58] sm:$0xff] %v8662
    %8727 = vst [vmem:[#allocation11 + $0x60] sm:$0xff] %v8663
    %8728 = vst [vmem:[#allocation11 + $0x68] sm:$0xff] %v8664
    %8729 = vst [vmem:[#allocation11 + $0x70] sm:$0xff] %v8665
    %8730 = vst [vmem:[#allocation11 + $0x78] sm:$0xff] %v8666
    %8731 = vst [vmem:[#allocation11 + $0x80] sm:$0xff] %v8667
    %8732 = vst [vmem:[#allocation11 + $0x88] sm:$0xff] %v8668
    %8733 = vst [vmem:[#allocation11 + $0x90] sm:$0xff] %v8669
    %8734 = vst [vmem:[#allocation11 + $0x98] sm:$0xff] %v8670
    %8735 = vst [vmem:[#allocation11 + $0xa0] sm:$0xff] %v8671
    %8736 = vst [vmem:[#allocation11 + $0xa8] sm:$0xff] %v8672
    %8737 = vst [vmem:[#allocation11 + $0xb0] sm:$0xff] %v8673
    %8738 = vst [vmem:[#allocation11 + $0xb8] sm:$0xff] %v8674
    %8739 = vst [vmem:[#allocation11 + $0xc0] sm:$0xff] %v8675
    %8740 = vst [vmem:[#allocation11 + $0xc8] sm:$0xff] %v8676
    %8741 = vst [vmem:[#allocation11 + $0xd0] sm:$0xff] %v8677
    %8742 = vst [vmem:[#allocation11 + $0xd8] sm:$0xff] %v8678
    %8743 = vst [vmem:[#allocation11 + $0xe0] sm:$0xff] %v8679
    %8744 = vst [vmem:[#allocation11 + $0xe8] sm:$0xff] %v8680
    %8745 = vst [vmem:[#allocation11 + $0xf0] sm:$0xff] %v8681
    %8746 = vst [vmem:[#allocation11 + $0xf8] sm:$0xff] %v8682
    %8747 = vst [vmem:[#allocation11 + $0x100] sm:$0xff] %v8683
    %8748 = vst [vmem:[#allocation11 + $0x108] sm:$0xff] %v8684
    %8749 = vst [vmem:[#allocation11 + $0x110] sm:$0xff] %v8685
    %8750 = vst [vmem:[#allocation11 + $0x118] sm:$0xff] %v8686
    %8751 = vst [vmem:[#allocation11 + $0x120] sm:$0xff] %v8687
    %8752 = vst [vmem:[#allocation11 + $0x128] sm:$0xff] %v8688
    %8753 = vst [vmem:[#allocation11 + $0x130] sm:$0xff] %v8689
    %8754 = vst [vmem:[#allocation11 + $0x138] sm:$0xff] %v8690
    %8755 = vst [vmem:[#allocation11 + $0x140] sm:$0xff] %v8691
    %8756 = vst [vmem:[#allocation11 + $0x148] sm:$0xff] %v8692
    %8757 = vst [vmem:[#allocation11 + $0x150] sm:$0xff] %v8693
    %8758 = vst [vmem:[#allocation11 + $0x158] sm:$0xff] %v8694
    %8759 = vst [vmem:[#allocation11 + $0x160] sm:$0xff] %v8695
    %8760 = vst [vmem:[#allocation11 + $0x168] sm:$0xff] %v8696
    %8761 = vst [vmem:[#allocation11 + $0x170] sm:$0xff] %v8697
    %8762 = vst [vmem:[#allocation11 + $0x178] sm:$0xff] %v8698
    %8763 = vst [vmem:[#allocation11 + $0x180] sm:$0xff] %v8699
    %8764 = vst [vmem:[#allocation11 + $0x188] sm:$0xff] %v8700
    %8765 = vst [vmem:[#allocation11 + $0x190] sm:$0xff] %v8701
    %8766 = vst [vmem:[#allocation11 + $0x198] sm:$0xff] %v8702
    %8767 = vst [vmem:[#allocation11 + $0x1a0] sm:$0xff] %v8703
    %8768 = vst [vmem:[#allocation11 + $0x1a8] sm:$0xff] %v8704
    %8769 = vst [vmem:[#allocation11 + $0x1b0] sm:$0xff] %v8705
    %8770 = vst [vmem:[#allocation11 + $0x1b8] sm:$0xff] %v8706
    %8771 = vst [vmem:[#allocation11 + $0x1c0] sm:$0xff] %v8707
    %8772 = vst [vmem:[#allocation11 + $0x1c8] sm:$0xff] %v8708
    %8773 = vst [vmem:[#allocation11 + $0x1d0] sm:$0xff] %v8709
    %8774 = vst [vmem:[#allocation11 + $0x1d8] sm:$0xff] %v8710
    %8775 = vst [vmem:[#allocation11 + $0x1e0] sm:$0xff] %v8711
    %8776 = vst [vmem:[#allocation11 + $0x1e8] sm:$0xff] %v8712
    %8777 = vst [vmem:[#allocation11 + $0x1f0] sm:$0xff] %v8713
    %8778 = vst [vmem:[#allocation11 + $0x1f8] sm:$0xff] %v8714
    // Predicated region
    $region58: #{tpu_custom_call.1} parent=1 // pred_check
      _
    $region59: #{tpu_custom_call.1} parent=1 // pred_check_branch
      %8780 = sbr.rel (0) target = $region61
    $region60: #{tpu_custom_call.1} parent=1 // pred_region
      %s8782 = ssub.s32 8192, 8192
      %8783 = vsyncadd [#allocation5], %s8782
      %s8784 = sshll.u32 [#allocation11], 4
      %s8785 = int_to_ptr.vmem [resolvable:$true] %s8784
      %8790 = dma.vmem_to_hbm [thread:$0]  %s8785, 8192, %s10, [#allocation5], 128, 128, 8
    $region61: #{tpu_custom_call.1} parent=1 // pred_fallthru
      _
    // Predicated region
    $region62: #{tpu_custom_call.1} parent=1 // pred_check
      _
    $region63: #{tpu_custom_call.1} parent=1 // pred_check_branch
      %8792 = sbr.rel (0) target = $region65
    $region64: #{tpu_custom_call.1} parent=1 // pred_region
      %8793 = dma.done [#allocation5], 8192
    $region65: #{tpu_custom_call.1} parent=1 // pred_fallthru
      _
    %8794 = vsyncpa [#allocation4], 1
    %8795 = vsyncpa [#allocation7], 1
    %8796 = vsyncpa [#allocation10], 1
    %8797 = vsyncpa [#allocation5], 1

</llo_original>
